<compile_context>
chip_gen: v7x
topology: tpu7x:2x2x1
jax: 0.10.0
libtpu: 0.0.40
codegen_flags: <defaults>
</compile_context>

<pallas_src>
import functools
import math

import jax
import jax.numpy as jnp
from jax.experimental import pallas as pl
from jax.experimental.pallas import tpu as pltpu

_VMEM_LIMIT = 32 * 1024 * 1024     # safe on v5e / v6e / v7x
_NP = 128                          # per-phase matmul N padding (lane-dense)
_TAPS = ((0, 0), (0, 1), (1, 0), (1, 1))     # (dh, dw); tap index t = 2*dh + dw
_PHASES = ((0, 0), (0, 1), (1, 0), (1, 1))   # (r, s);   phase index p = 2*r + s


# --------------------------------------------------------------------- kernel

def _generator_kernel(*refs, n_conv, B, s0, chans, eps):
    """Fully fused Generator forward.

    refs (in order):
      z (B, n_latent) f32, lin_w (n_latent, S) bf16, lin_b (1, S) f32,
      [conv_w (4*Cin, 4*128) bf16, gamma (1, Cout) f32, beta (1, Cout) f32]
          for each hidden conv layer,
      conv_last_w (4*Cin, 4*128) bf16,
      out (4, B*Hf*Wf, 128) f32,
      [act (B, H+1, W+1, C) bf16, patches (B*H*W, 4*C) bf16] per conv layer.
    """
    it = iter(refs)
    z_ref, lw_ref, lb_ref = next(it), next(it), next(it)
    hidden = [(next(it), next(it), next(it)) for _ in range(n_conv - 1)]
    w_last_ref = next(it)
    o_ref = next(it)
    scratch = [(next(it), next(it)) for _ in range(n_conv)]

    def build_patches(a_ref, p_ref, H, W, C):
        # p[(b*H + i)*W + j, t*C:(t+1)*C] = a[b, i+dh, j+dw, :]
        # (a_ref carries one zero row/col of bottom/right padding)
        for t, (dh, dw) in enumerate(_TAPS):
            for b in range(B):
                for i in range(H):
                    r0 = (b * H + i) * W
                    p_ref[r0:r0 + W, t * C:(t + 1) * C] = \
                        a_ref[b, i + dh, dw:dw + W, :]

    # -------- Linear (+ NHWC unflatten into padded activation scratch) ------
    c0 = chans[0]
    x0 = jnp.dot(z_ref[...].astype(jnp.bfloat16), lw_ref[...],
                 preferred_element_type=jnp.float32) + lb_ref[...]
    x0 = x0.astype(jnp.bfloat16)                              # (B, s0*s0*c0)
    a0_ref = scratch[0][0]
    a0_ref[...] = jnp.zeros(a0_ref.shape, a0_ref.dtype)       # zero pad border
    for i in range(s0):
        for j in range(s0):
            q = (i * s0 + j) * c0
            a0_ref[:, i, j, :] = x0[:, q:q + c0]

    # -------- hidden ConvT + BatchNorm + ReLU layers -------------------------
    H = W = s0
    for l in range(n_conv - 1):
        a_ref, p_ref = scratch[l]
        cin, cout = chans[l], chans[l + 1]
        w_ref, g_ref, b_ref = hidden[l]
        build_patches(a_ref, p_ref, H, W, cin)
        y = jnp.dot(p_ref[...], w_ref[...],
                    preferred_element_type=jnp.float32)       # (M, 4*128) f32
        m_rows = B * H * W
        parts = [y[:, p * _NP:p * _NP + cout] for p in range(4)]
        # single-pass batch stats over all 4 phases (count = B*(2H)*(2W))
        s1 = parts[0] + parts[1] + parts[2] + parts[3]
        s2 = (parts[0] * parts[0] + parts[1] * parts[1]
              + parts[2] * parts[2] + parts[3] * parts[3])
        inv_cnt = 1.0 / (4.0 * m_rows)
        mean = jnp.sum(s1, axis=0, keepdims=True) * inv_cnt
        var = jnp.sum(s2, axis=0, keepdims=True) * inv_cnt - mean * mean
        scale = jax.lax.rsqrt(var + eps) * g_ref[...]
        shift = b_ref[...] - mean * scale
        parts = [jnp.maximum(pt * scale + shift, 0.0).astype(jnp.bfloat16)
                 for pt in parts]

        # interleave the 4 output phases into the next padded activation
        a_next = scratch[l + 1][0]
        a_next[...] = jnp.zeros(a_next.shape, a_next.dtype)
        for p, (rp, sp) in enumerate(_PHASES):
            pt = parts[p]
            for b in range(B):
                for i in range(H):
                    for j in range(W):
                        m = (b * H + i) * W + j
                        a_next[b, 2 * i + rp,
                               2 * j + sp:2 * j + sp + 1, :] = pt[m:m + 1, :]
        H, W = 2 * H, 2 * W

    # -------- final ConvT + Tanh ---------------------------------------------
    a_ref, p_ref = scratch[n_conv - 1]
    cin = chans[n_conv - 1]
    build_patches(a_ref, p_ref, H, W, cin)
    y = jnp.dot(p_ref[...], w_last_ref[...],
                preferred_element_type=jnp.float32)           # (Mf, 4*128) f32
    for p in range(4):
        o_ref[p] = jnp.tanh(y[:, p * _NP:(p + 1) * _NP])      # lane-dense store


# ---------------------------------------------------------------- param prep

def _phase_weights(wt, npad):
    """PyTorch ConvTranspose2d weight (Cin, Cout, 3, 3) -> (4*Cin, 4*npad)
    matmul weight for the stride-2 phase decomposition, four output phases
    concatenated along N (phase p = 2*r + s occupies columns [p*npad, ...)).

    Output pixel (2m+r, 2n+s):  o_h = 2*i_h - 1 + kh  =>
      r == 0 : (dh=0, kh=1)        r == 1 : (dh=0, kh=2), (dh=1, kh=0)
    (same for columns).  Tap t = dh*2 + dw occupies K rows [t*Cin, (t+1)*Cin).
    """
    Cin, Cout = wt.shape[0], wt.shape[1]
    w32 = wt.astype(jnp.float32)
    taps = {0: ((0, 1),), 1: ((0, 2), (1, 0))}   # phase bit -> ((shift, k), ...)
    cols = []
    for r in (0, 1):
        for s in (0, 1):
            wp = jnp.zeros((4, Cin, npad), jnp.float32)
            for dh, kh in taps[r]:
                for dw, kw in taps[s]:
                    t = dh * 2 + dw
                    wp = wp.at[t, :, :Cout].set(w32[:, :, kh, kw])
            cols.append(wp.reshape(4 * Cin, npad))
    return jnp.concatenate(cols, axis=1)


def prepare_params(params, hidden_dims, input_size, n_channels, n_latent):
    """One-time parameter preprocessing (permutation / phase decomposition /
    bf16 casts) — hoisted out of the per-forward path."""
    n_conv = len(hidden_dims)
    s0 = input_size // (2 ** n_conv)
    chans = tuple(reversed(hidden_dims))
    c0 = chans[0]

    # Linear weight/bias permuted so the unflattened output is NHWC-ordered.
    lw = params["lin_w"].reshape(c0, s0, s0, n_latent).transpose(1, 2, 0, 3)
    lw = lw.reshape(s0 * s0 * c0, n_latent).T.astype(jnp.bfloat16)
    lb = params["lin_b"].reshape(c0, s0, s0).transpose(1, 2, 0)
    lb = lb.reshape(1, -1).astype(jnp.float32)

    prepped = {"lin_w": lw, "lin_b": lb}
    for l in range(n_conv - 1):
        prepped[f"conv{l}_w"] = _phase_weights(params[f"conv{l}_w"],
                                               _NP).astype(jnp.bfloat16)
        prepped[f"bn{l}_g"] = params[f"bn{l}_g"].reshape(1, -1).astype(jnp.float32)
        prepped[f"bn{l}_b"] = params[f"bn{l}_b"].reshape(1, -1).astype(jnp.float32)
    prepped["conv_last_w"] = _phase_weights(params["conv_last_w"],
                                            _NP).astype(jnp.bfloat16)
    return prepped


# ------------------------------------------------------------- generator fwd

def generator_forward(z, prepped, hidden_dims, input_size, n_channels):
    B = z.shape[0]
    n_conv = len(hidden_dims)
    s0 = input_size // (2 ** n_conv)
    chans = tuple(reversed(hidden_dims))
    Hf = s0 * 2 ** (n_conv - 1)                 # spatial size fed to last conv
    Mf = B * Hf * Hf

    # grid-free, fully-VMEM-resident design assumes a small working set.
    assert B * input_size * input_size <= 64 * 1024, \
        "TODO(synk): large configs need an M-tiled grid"

    scratch = []
    H = s0
    for l in range(n_conv):
        c = chans[l]
        scratch.append(pltpu.VMEM((B, H + 1, H + 1, c), jnp.bfloat16))  # act
        scratch.append(pltpu.VMEM((B * H * H, 4 * c), jnp.bfloat16))    # patches
        H *= 2

    args = [z, prepped["lin_w"], prepped["lin_b"]]
    for l in range(n_conv - 1):
        args += [prepped[f"conv{l}_w"], prepped[f"bn{l}_g"], prepped[f"bn{l}_b"]]
    args.append(prepped["conv_last_w"])

    out = pl.pallas_call(
        functools.partial(_generator_kernel, n_conv=n_conv, B=B, s0=s0,
                          chans=chans, eps=1e-5),
        out_shape=jax.ShapeDtypeStruct((4, Mf, _NP), jnp.float32),
        in_specs=[pl.BlockSpec(memory_space=pltpu.MemorySpace.VMEM)] * len(args),
        out_specs=pl.BlockSpec(memory_space=pltpu.MemorySpace.VMEM),
        scratch_shapes=scratch,
        compiler_params=pltpu.CompilerParams(vmem_limit_bytes=_VMEM_LIMIT),
    )(*args)

    # Un-permute the phase-decomposed kernel output straight to NCHW:
    #   out[2*r + s, (b*Hf + i)*Wf + j, c] -> img[b, c, 2*i + r, 2*j + s]
    o = out.reshape(2, 2, B, Hf, Hf, _NP).transpose(2, 5, 3, 0, 4, 1)
    return o.reshape(B, _NP, 2 * Hf, 2 * Hf)[:, :n_channels]


# ------------------------------------------------------------------ reference
# Pure-JAX reference with the same bf16-operand / f32-accumulate rounding.

def _ref_conv_transpose(x, wt):
    wc = jnp.transpose(wt[:, :, ::-1, ::-1], (1, 0, 2, 3))      # (Cout, Cin, kh, kw)
    return jax.lax.conv_general_dilated(
        x.astype(jnp.bfloat16), wc.astype(jnp.bfloat16),
        window_strides=(1, 1), padding=[(1, 2), (1, 2)],
        lhs_dilation=(2, 2),
        dimension_numbers=("NCHW", "OIHW", "NCHW"),
        preferred_element_type=jnp.float32)


def ref_forward(z, params, hidden_dims, out_size, n_channels):
    B = z.shape[0]
    y = jnp.dot(z.astype(jnp.bfloat16), params["lin_w"].T.astype(jnp.bfloat16),
                preferred_element_type=jnp.float32) + params["lin_b"]
    x = y.reshape(B, hidden_dims[-1], out_size, out_size)
    for idx in range(len(hidden_dims) - 1):
        x = _ref_conv_transpose(x, params[f"conv{idx}_w"])
        mean = x.mean(axis=(0, 2, 3), keepdims=True)
        var = jnp.square(x - mean).mean(axis=(0, 2, 3), keepdims=True)
        x = (x - mean) * jax.lax.rsqrt(var + 1e-5)
        x = x * params[f"bn{idx}_g"].reshape(1, -1, 1, 1) \
              + params[f"bn{idx}_b"].reshape(1, -1, 1, 1)
        x = jnp.maximum(x, 0.0)
    return jnp.tanh(_ref_conv_transpose(x, params["conv_last_w"]))


# ----------------------------------------------------------------------- main

if __name__ == "__main__":
    # Small config consistent with the module: Generator(n_channels=3,
    # n_latent=8, hidden_dims=[8, 16], input_size=16); batch = 2.
    n_channels, n_latent, input_size = 3, 8, 16
    hidden_dims = [8, 16]
    out_size = input_size // 2 ** len(hidden_dims)              # 4
    B = 2

    key = jax.random.PRNGKey(0)
    ks = jax.random.split(key, 8)
    out_feat = out_size ** 2 * hidden_dims[-1]                  # 256
    params = {
        "lin_w": jax.random.normal(ks[0], (out_feat, n_latent), jnp.float32) * 0.2,
        "lin_b": jax.random.normal(ks[1], (out_feat,), jnp.float32) * 0.1,
        # ConvTranspose2d weights: (Cin, Cout, kH, kW), bias=False
        "conv0_w": jax.random.normal(ks[2], (hidden_dims[1], hidden_dims[0], 3, 3),
                                     jnp.float32) / math.sqrt(hidden_dims[1] * 9),
        "bn0_g": 1.0 + 0.1 * jax.random.normal(ks[3], (hidden_dims[0],), jnp.float32),
        "bn0_b": 0.05 * jax.random.normal(ks[4], (hidden_dims[0],), jnp.float32),
        "conv_last_w": jax.random.normal(ks[5], (hidden_dims[0], n_channels, 3, 3),
                                         jnp.float32) / math.sqrt(hidden_dims[0] * 9),
    }

    z = jax.random.normal(ks[6], (B, n_latent), jnp.float32)

    # one-time parameter preprocessing (not part of the per-forward path)
    prepped = prepare_params(params, hidden_dims, input_size, n_channels, n_latent)
    prepped = {k: jax.block_until_ready(v) for k, v in prepped.items()}

    fwd = jax.jit(lambda zz, pp: generator_forward(
        zz, pp, hidden_dims, input_size, n_channels))
    out = jax.block_until_ready(fwd(z, prepped))
    assert out.shape == (B, n_channels, input_size, input_size)

    ref = ref_forward(z, params, hidden_dims, out_size, n_channels)
    assert jnp.allclose(out, ref, atol=5e-3, rtol=5e-3), \
        float(jnp.max(jnp.abs(out - ref)))

    print("KERNEL_OK")
</pallas_src>

<mosaic_0001>
module attributes {stable_mosaic.version = 11 : i64} {
  func.func @_generator_kernel(%arg0: memref<2x8xf32, #tpu.memory_space<vmem>>, %arg1: memref<8x256xbf16, #tpu.memory_space<vmem>>, %arg2: memref<1x256xf32, #tpu.memory_space<vmem>>, %arg3: memref<64x512xbf16, #tpu.memory_space<vmem>>, %arg4: memref<1x8xf32, #tpu.memory_space<vmem>>, %arg5: memref<1x8xf32, #tpu.memory_space<vmem>>, %arg6: memref<32x512xbf16, #tpu.memory_space<vmem>>, %arg7: memref<4x128x128xf32, #tpu.memory_space<vmem>>, %arg8: memref<2x5x5x16xbf16, #tpu.memory_space<vmem>>, %arg9: memref<32x64xbf16, #tpu.memory_space<vmem>>, %arg10: memref<2x9x9x8xbf16, #tpu.memory_space<vmem>>, %arg11: memref<128x32xbf16, #tpu.memory_space<vmem>>) attributes {dimension_semantics = [], scalar_prefetch = 0 : i64, scratch_operands = 4 : i64, tpu.core_type = #tpu.core_type<tc>} {
    %c0 = arith.constant 0 : index
    %c0_0 = arith.constant 0 : index
    %0 = vector.load %arg0[%c0, %c0_0] : memref<2x8xf32, #tpu.memory_space<vmem>>, vector<2x8xf32>
    %1 = arith.truncf %0 : vector<2x8xf32> to vector<2x8xbf16>
    %c0_1 = arith.constant 0 : index
    %c0_2 = arith.constant 0 : index
    %2 = vector.load %arg1[%c0_1, %c0_2] : memref<8x256xbf16, #tpu.memory_space<vmem>>, vector<8x256xbf16>
    %cst = arith.constant dense<0.000000e+00> : vector<2x256xf32>
    %3 = tpu.matmul %1, %2, %cst {dimension_numbers = #tpu.dot_dimension_numbers<[1], [0], [0], [1], [0, 0, 1, 1], [], []>} : vector<2x8xbf16>, vector<8x256xbf16>, vector<2x256xf32> -> vector<2x256xf32>
    %c0_3 = arith.constant 0 : index
    %c0_4 = arith.constant 0 : index
    %4 = vector.load %arg2[%c0_3, %c0_4] : memref<1x256xf32, #tpu.memory_space<vmem>>, vector<1x256xf32>
    %5 = vector.broadcast %4 : vector<1x256xf32> to vector<2x256xf32>
    %6 = arith.addf %3, %5 : vector<2x256xf32>
    %7 = arith.truncf %6 : vector<2x256xf32> to vector<2x256xbf16>
    %cst_5 = arith.constant 0.000000e+00 : bf16
    %8 = vector.broadcast %cst_5 : bf16 to vector<2x5x5x16xbf16>
    %c0_6 = arith.constant 0 : index
    %c0_7 = arith.constant 0 : index
    %c0_8 = arith.constant 0 : index
    %c0_9 = arith.constant 0 : index
    %9 = vector.load %arg8[%c0_6, %c0_7, %c0_8, %c0_9] : memref<2x5x5x16xbf16, #tpu.memory_space<vmem>>, vector<2x5x5x16xbf16>
    tpu.vector_store %arg8[%c0_6, %c0_7, %c0_8, %c0_9], %8 {strides = array<i32>} : memref<2x5x5x16xbf16, #tpu.memory_space<vmem>>, vector<2x5x5x16xbf16>,
    %10 = vector.extract_strided_slice %7 {offsets = [0, 0], sizes = [2, 16], strides = [1, 1]} : vector<2x256xbf16> to vector<2x16xbf16>
    %c0_10 = arith.constant 0 : index
    %c0_11 = arith.constant 0 : index
    %c0_12 = arith.constant 0 : index
    %c0_13 = arith.constant 0 : index
    %11 = vector.load %arg8[%c0_10, %c0_11, %c0_12, %c0_13] : memref<2x5x5x16xbf16, #tpu.memory_space<vmem>>, vector<2x1x1x16xbf16>
    %12 = vector.shape_cast %11 : vector<2x1x1x16xbf16> to vector<2x16xbf16>
    %13 = vector.shape_cast %10 : vector<2x16xbf16> to vector<2x1x1x16xbf16>
    tpu.vector_store %arg8[%c0_10, %c0_11, %c0_12, %c0_13], %13 {strides = array<i32>} : memref<2x5x5x16xbf16, #tpu.memory_space<vmem>>, vector<2x1x1x16xbf16>,
    %14 = vector.extract_strided_slice %7 {offsets = [0, 16], sizes = [2, 16], strides = [1, 1]} : vector<2x256xbf16> to vector<2x16xbf16>
    %c0_14 = arith.constant 0 : index
    %c0_15 = arith.constant 0 : index
    %c1 = arith.constant 1 : index
    %c0_16 = arith.constant 0 : index
    %15 = vector.load %arg8[%c0_14, %c0_15, %c1, %c0_16] : memref<2x5x5x16xbf16, #tpu.memory_space<vmem>>, vector<2x1x1x16xbf16>
    %16 = vector.shape_cast %15 : vector<2x1x1x16xbf16> to vector<2x16xbf16>
    %17 = vector.shape_cast %14 : vector<2x16xbf16> to vector<2x1x1x16xbf16>
    tpu.vector_store %arg8[%c0_14, %c0_15, %c1, %c0_16], %17 {strides = array<i32>} : memref<2x5x5x16xbf16, #tpu.memory_space<vmem>>, vector<2x1x1x16xbf16>,
    %18 = vector.extract_strided_slice %7 {offsets = [0, 32], sizes = [2, 16], strides = [1, 1]} : vector<2x256xbf16> to vector<2x16xbf16>
    %c0_17 = arith.constant 0 : index
    %c0_18 = arith.constant 0 : index
    %c2 = arith.constant 2 : index
    %c0_19 = arith.constant 0 : index
    %19 = vector.load %arg8[%c0_17, %c0_18, %c2, %c0_19] : memref<2x5x5x16xbf16, #tpu.memory_space<vmem>>, vector<2x1x1x16xbf16>
    %20 = vector.shape_cast %19 : vector<2x1x1x16xbf16> to vector<2x16xbf16>
    %21 = vector.shape_cast %18 : vector<2x16xbf16> to vector<2x1x1x16xbf16>
    tpu.vector_store %arg8[%c0_17, %c0_18, %c2, %c0_19], %21 {strides = array<i32>} : memref<2x5x5x16xbf16, #tpu.memory_space<vmem>>, vector<2x1x1x16xbf16>,
    %22 = vector.extract_strided_slice %7 {offsets = [0, 48], sizes = [2, 16], strides = [1, 1]} : vector<2x256xbf16> to vector<2x16xbf16>
    %c0_20 = arith.constant 0 : index
    %c0_21 = arith.constant 0 : index
    %c3 = arith.constant 3 : index
    %c0_22 = arith.constant 0 : index
    %23 = vector.load %arg8[%c0_20, %c0_21, %c3, %c0_22] : memref<2x5x5x16xbf16, #tpu.memory_space<vmem>>, vector<2x1x1x16xbf16>
    %24 = vector.shape_cast %23 : vector<2x1x1x16xbf16> to vector<2x16xbf16>
    %25 = vector.shape_cast %22 : vector<2x16xbf16> to vector<2x1x1x16xbf16>
    tpu.vector_store %arg8[%c0_20, %c0_21, %c3, %c0_22], %25 {strides = array<i32>} : memref<2x5x5x16xbf16, #tpu.memory_space<vmem>>, vector<2x1x1x16xbf16>,
    %26 = vector.extract_strided_slice %7 {offsets = [0, 64], sizes = [2, 16], strides = [1, 1]} : vector<2x256xbf16> to vector<2x16xbf16>
    %c0_23 = arith.constant 0 : index
    %c1_24 = arith.constant 1 : index
    %c0_25 = arith.constant 0 : index
    %c0_26 = arith.constant 0 : index
    %27 = vector.load %arg8[%c0_23, %c1_24, %c0_25, %c0_26] : memref<2x5x5x16xbf16, #tpu.memory_space<vmem>>, vector<2x1x1x16xbf16>
    %28 = vector.shape_cast %27 : vector<2x1x1x16xbf16> to vector<2x16xbf16>
    %29 = vector.shape_cast %26 : vector<2x16xbf16> to vector<2x1x1x16xbf16>
    tpu.vector_store %arg8[%c0_23, %c1_24, %c0_25, %c0_26], %29 {strides = array<i32>} : memref<2x5x5x16xbf16, #tpu.memory_space<vmem>>, vector<2x1x1x16xbf16>,
    %30 = vector.extract_strided_slice %7 {offsets = [0, 80], sizes = [2, 16], strides = [1, 1]} : vector<2x256xbf16> to vector<2x16xbf16>
    %c0_27 = arith.constant 0 : index
    %c1_28 = arith.constant 1 : index
    %c1_29 = arith.constant 1 : index
    %c0_30 = arith.constant 0 : index
    %31 = vector.load %arg8[%c0_27, %c1_28, %c1_29, %c0_30] : memref<2x5x5x16xbf16, #tpu.memory_space<vmem>>, vector<2x1x1x16xbf16>
    %32 = vector.shape_cast %31 : vector<2x1x1x16xbf16> to vector<2x16xbf16>
    %33 = vector.shape_cast %30 : vector<2x16xbf16> to vector<2x1x1x16xbf16>
    tpu.vector_store %arg8[%c0_27, %c1_28, %c1_29, %c0_30], %33 {strides = array<i32>} : memref<2x5x5x16xbf16, #tpu.memory_space<vmem>>, vector<2x1x1x16xbf16>,
    %34 = vector.extract_strided_slice %7 {offsets = [0, 96], sizes = [2, 16], strides = [1, 1]} : vector<2x256xbf16> to vector<2x16xbf16>
    %c0_31 = arith.constant 0 : index
    %c1_32 = arith.constant 1 : index
    %c2_33 = arith.constant 2 : index
    %c0_34 = arith.constant 0 : index
    %35 = vector.load %arg8[%c0_31, %c1_32, %c2_33, %c0_34] : memref<2x5x5x16xbf16, #tpu.memory_space<vmem>>, vector<2x1x1x16xbf16>
    %36 = vector.shape_cast %35 : vector<2x1x1x16xbf16> to vector<2x16xbf16>
    %37 = vector.shape_cast %34 : vector<2x16xbf16> to vector<2x1x1x16xbf16>
    tpu.vector_store %arg8[%c0_31, %c1_32, %c2_33, %c0_34], %37 {strides = array<i32>} : memref<2x5x5x16xbf16, #tpu.memory_space<vmem>>, vector<2x1x1x16xbf16>,
    %38 = vector.extract_strided_slice %7 {offsets = [0, 112], sizes = [2, 16], strides = [1, 1]} : vector<2x256xbf16> to vector<2x16xbf16>
    %c0_35 = arith.constant 0 : index
    %c1_36 = arith.constant 1 : index
    %c3_37 = arith.constant 3 : index
    %c0_38 = arith.constant 0 : index
    %39 = vector.load %arg8[%c0_35, %c1_36, %c3_37, %c0_38] : memref<2x5x5x16xbf16, #tpu.memory_space<vmem>>, vector<2x1x1x16xbf16>
    %40 = vector.shape_cast %39 : vector<2x1x1x16xbf16> to vector<2x16xbf16>
    %41 = vector.shape_cast %38 : vector<2x16xbf16> to vector<2x1x1x16xbf16>
    tpu.vector_store %arg8[%c0_35, %c1_36, %c3_37, %c0_38], %41 {strides = array<i32>} : memref<2x5x5x16xbf16, #tpu.memory_space<vmem>>, vector<2x1x1x16xbf16>,
    %42 = vector.extract_strided_slice %7 {offsets = [0, 128], sizes = [2, 16], strides = [1, 1]} : vector<2x256xbf16> to vector<2x16xbf16>
    %c0_39 = arith.constant 0 : index
    %c2_40 = arith.constant 2 : index
    %c0_41 = arith.constant 0 : index
    %c0_42 = arith.constant 0 : index
    %43 = vector.load %arg8[%c0_39, %c2_40, %c0_41, %c0_42] : memref<2x5x5x16xbf16, #tpu.memory_space<vmem>>, vector<2x1x1x16xbf16>
    %44 = vector.shape_cast %43 : vector<2x1x1x16xbf16> to vector<2x16xbf16>
    %45 = vector.shape_cast %42 : vector<2x16xbf16> to vector<2x1x1x16xbf16>
    tpu.vector_store %arg8[%c0_39, %c2_40, %c0_41, %c0_42], %45 {strides = array<i32>} : memref<2x5x5x16xbf16, #tpu.memory_space<vmem>>, vector<2x1x1x16xbf16>,
    %46 = vector.extract_strided_slice %7 {offsets = [0, 144], sizes = [2, 16], strides = [1, 1]} : vector<2x256xbf16> to vector<2x16xbf16>
    %c0_43 = arith.constant 0 : index
    %c2_44 = arith.constant 2 : index
    %c1_45 = arith.constant 1 : index
    %c0_46 = arith.constant 0 : index
    %47 = vector.load %arg8[%c0_43, %c2_44, %c1_45, %c0_46] : memref<2x5x5x16xbf16, #tpu.memory_space<vmem>>, vector<2x1x1x16xbf16>
    %48 = vector.shape_cast %47 : vector<2x1x1x16xbf16> to vector<2x16xbf16>
    %49 = vector.shape_cast %46 : vector<2x16xbf16> to vector<2x1x1x16xbf16>
    tpu.vector_store %arg8[%c0_43, %c2_44, %c1_45, %c0_46], %49 {strides = array<i32>} : memref<2x5x5x16xbf16, #tpu.memory_space<vmem>>, vector<2x1x1x16xbf16>,
    %50 = vector.extract_strided_slice %7 {offsets = [0, 160], sizes = [2, 16], strides = [1, 1]} : vector<2x256xbf16> to vector<2x16xbf16>
    %c0_47 = arith.constant 0 : index
    %c2_48 = arith.constant 2 : index
    %c2_49 = arith.constant 2 : index
    %c0_50 = arith.constant 0 : index
    %51 = vector.load %arg8[%c0_47, %c2_48, %c2_49, %c0_50] : memref<2x5x5x16xbf16, #tpu.memory_space<vmem>>, vector<2x1x1x16xbf16>
    %52 = vector.shape_cast %51 : vector<2x1x1x16xbf16> to vector<2x16xbf16>
    %53 = vector.shape_cast %50 : vector<2x16xbf16> to vector<2x1x1x16xbf16>
    tpu.vector_store %arg8[%c0_47, %c2_48, %c2_49, %c0_50], %53 {strides = array<i32>} : memref<2x5x5x16xbf16, #tpu.memory_space<vmem>>, vector<2x1x1x16xbf16>,
    %54 = vector.extract_strided_slice %7 {offsets = [0, 176], sizes = [2, 16], strides = [1, 1]} : vector<2x256xbf16> to vector<2x16xbf16>
    %c0_51 = arith.constant 0 : index
    %c2_52 = arith.constant 2 : index
    %c3_53 = arith.constant 3 : index
    %c0_54 = arith.constant 0 : index
    %55 = vector.load %arg8[%c0_51, %c2_52, %c3_53, %c0_54] : memref<2x5x5x16xbf16, #tpu.memory_space<vmem>>, vector<2x1x1x16xbf16>
    %56 = vector.shape_cast %55 : vector<2x1x1x16xbf16> to vector<2x16xbf16>
    %57 = vector.shape_cast %54 : vector<2x16xbf16> to vector<2x1x1x16xbf16>
    tpu.vector_store %arg8[%c0_51, %c2_52, %c3_53, %c0_54], %57 {strides = array<i32>} : memref<2x5x5x16xbf16, #tpu.memory_space<vmem>>, vector<2x1x1x16xbf16>,
    %58 = vector.extract_strided_slice %7 {offsets = [0, 192], sizes = [2, 16], strides = [1, 1]} : vector<2x256xbf16> to vector<2x16xbf16>
    %c0_55 = arith.constant 0 : index
    %c3_56 = arith.constant 3 : index
    %c0_57 = arith.constant 0 : index
    %c0_58 = arith.constant 0 : index
    %59 = vector.load %arg8[%c0_55, %c3_56, %c0_57, %c0_58] : memref<2x5x5x16xbf16, #tpu.memory_space<vmem>>, vector<2x1x1x16xbf16>
    %60 = vector.shape_cast %59 : vector<2x1x1x16xbf16> to vector<2x16xbf16>
    %61 = vector.shape_cast %58 : vector<2x16xbf16> to vector<2x1x1x16xbf16>
    tpu.vector_store %arg8[%c0_55, %c3_56, %c0_57, %c0_58], %61 {strides = array<i32>} : memref<2x5x5x16xbf16, #tpu.memory_space<vmem>>, vector<2x1x1x16xbf16>,
    %62 = vector.extract_strided_slice %7 {offsets = [0, 208], sizes = [2, 16], strides = [1, 1]} : vector<2x256xbf16> to vector<2x16xbf16>
    %c0_59 = arith.constant 0 : index
    %c3_60 = arith.constant 3 : index
    %c1_61 = arith.constant 1 : index
    %c0_62 = arith.constant 0 : index
    %63 = vector.load %arg8[%c0_59, %c3_60, %c1_61, %c0_62] : memref<2x5x5x16xbf16, #tpu.memory_space<vmem>>, vector<2x1x1x16xbf16>
    %64 = vector.shape_cast %63 : vector<2x1x1x16xbf16> to vector<2x16xbf16>
    %65 = vector.shape_cast %62 : vector<2x16xbf16> to vector<2x1x1x16xbf16>
    tpu.vector_store %arg8[%c0_59, %c3_60, %c1_61, %c0_62], %65 {strides = array<i32>} : memref<2x5x5x16xbf16, #tpu.memory_space<vmem>>, vector<2x1x1x16xbf16>,
    %66 = vector.extract_strided_slice %7 {offsets = [0, 224], sizes = [2, 16], strides = [1, 1]} : vector<2x256xbf16> to vector<2x16xbf16>
    %c0_63 = arith.constant 0 : index
    %c3_64 = arith.constant 3 : index
    %c2_65 = arith.constant 2 : index
    %c0_66 = arith.constant 0 : index
    %67 = vector.load %arg8[%c0_63, %c3_64, %c2_65, %c0_66] : memref<2x5x5x16xbf16, #tpu.memory_space<vmem>>, vector<2x1x1x16xbf16>
    %68 = vector.shape_cast %67 : vector<2x1x1x16xbf16> to vector<2x16xbf16>
    %69 = vector.shape_cast %66 : vector<2x16xbf16> to vector<2x1x1x16xbf16>
    tpu.vector_store %arg8[%c0_63, %c3_64, %c2_65, %c0_66], %69 {strides = array<i32>} : memref<2x5x5x16xbf16, #tpu.memory_space<vmem>>, vector<2x1x1x16xbf16>,
    %70 = vector.extract_strided_slice %7 {offsets = [0, 240], sizes = [2, 16], strides = [1, 1]} : vector<2x256xbf16> to vector<2x16xbf16>
    %c0_67 = arith.constant 0 : index
    %c3_68 = arith.constant 3 : index
    %c3_69 = arith.constant 3 : index
    %c0_70 = arith.constant 0 : index
    %71 = vector.load %arg8[%c0_67, %c3_68, %c3_69, %c0_70] : memref<2x5x5x16xbf16, #tpu.memory_space<vmem>>, vector<2x1x1x16xbf16>
    %72 = vector.shape_cast %71 : vector<2x1x1x16xbf16> to vector<2x16xbf16>
    %73 = vector.shape_cast %70 : vector<2x16xbf16> to vector<2x1x1x16xbf16>
    tpu.vector_store %arg8[%c0_67, %c3_68, %c3_69, %c0_70], %73 {strides = array<i32>} : memref<2x5x5x16xbf16, #tpu.memory_space<vmem>>, vector<2x1x1x16xbf16>,
    %c0_71 = arith.constant 0 : index
    %c0_72 = arith.constant 0 : index
    %c0_73 = arith.constant 0 : index
    %c0_74 = arith.constant 0 : index
    %74 = vector.load %arg8[%c0_71, %c0_72, %c0_73, %c0_74] : memref<2x5x5x16xbf16, #tpu.memory_space<vmem>>, vector<1x1x4x16xbf16>
    %75 = vector.shape_cast %74 : vector<1x1x4x16xbf16> to vector<4x16xbf16>
    %c0_75 = arith.constant 0 : index
    %c0_76 = arith.constant 0 : index
    %76 = vector.load %arg9[%c0_75, %c0_76] : memref<32x64xbf16, #tpu.memory_space<vmem>>, vector<4x16xbf16>
    tpu.vector_store %arg9[%c0_75, %c0_76], %75 {strides = array<i32>} : memref<32x64xbf16, #tpu.memory_space<vmem>>, vector<4x16xbf16>,
    %c0_77 = arith.constant 0 : index
    %c1_78 = arith.constant 1 : index
    %c0_79 = arith.constant 0 : index
    %c0_80 = arith.constant 0 : index
    %77 = vector.load %arg8[%c0_77, %c1_78, %c0_79, %c0_80] : memref<2x5x5x16xbf16, #tpu.memory_space<vmem>>, vector<1x1x4x16xbf16>
    %78 = vector.shape_cast %77 : vector<1x1x4x16xbf16> to vector<4x16xbf16>
    %c4 = arith.constant 4 : index
    %c0_81 = arith.constant 0 : index
    %79 = vector.load %arg9[%c4, %c0_81] : memref<32x64xbf16, #tpu.memory_space<vmem>>, vector<4x16xbf16>
    tpu.vector_store %arg9[%c4, %c0_81], %78 {strides = array<i32>} : memref<32x64xbf16, #tpu.memory_space<vmem>>, vector<4x16xbf16>,
    %c0_82 = arith.constant 0 : index
    %c2_83 = arith.constant 2 : index
    %c0_84 = arith.constant 0 : index
    %c0_85 = arith.constant 0 : index
    %80 = vector.load %arg8[%c0_82, %c2_83, %c0_84, %c0_85] : memref<2x5x5x16xbf16, #tpu.memory_space<vmem>>, vector<1x1x4x16xbf16>
    %81 = vector.shape_cast %80 : vector<1x1x4x16xbf16> to vector<4x16xbf16>
    %c8 = arith.constant 8 : index
    %c0_86 = arith.constant 0 : index
    %82 = vector.load %arg9[%c8, %c0_86] : memref<32x64xbf16, #tpu.memory_space<vmem>>, vector<4x16xbf16>
    tpu.vector_store %arg9[%c8, %c0_86], %81 {strides = array<i32>} : memref<32x64xbf16, #tpu.memory_space<vmem>>, vector<4x16xbf16>,
    %c0_87 = arith.constant 0 : index
    %c3_88 = arith.constant 3 : index
    %c0_89 = arith.constant 0 : index
    %c0_90 = arith.constant 0 : index
    %83 = vector.load %arg8[%c0_87, %c3_88, %c0_89, %c0_90] : memref<2x5x5x16xbf16, #tpu.memory_space<vmem>>, vector<1x1x4x16xbf16>
    %84 = vector.shape_cast %83 : vector<1x1x4x16xbf16> to vector<4x16xbf16>
    %c12 = arith.constant 12 : index
    %c0_91 = arith.constant 0 : index
    %85 = vector.load %arg9[%c12, %c0_91] : memref<32x64xbf16, #tpu.memory_space<vmem>>, vector<4x16xbf16>
    tpu.vector_store %arg9[%c12, %c0_91], %84 {strides = array<i32>} : memref<32x64xbf16, #tpu.memory_space<vmem>>, vector<4x16xbf16>,
    %c1_92 = arith.constant 1 : index
    %c0_93 = arith.constant 0 : index
    %c0_94 = arith.constant 0 : index
    %c0_95 = arith.constant 0 : index
    %86 = vector.load %arg8[%c1_92, %c0_93, %c0_94, %c0_95] : memref<2x5x5x16xbf16, #tpu.memory_space<vmem>>, vector<1x1x4x16xbf16>
    %87 = vector.shape_cast %86 : vector<1x1x4x16xbf16> to vector<4x16xbf16>
    %c16 = arith.constant 16 : index
    %c0_96 = arith.constant 0 : index
    %88 = vector.load %arg9[%c16, %c0_96] : memref<32x64xbf16, #tpu.memory_space<vmem>>, vector<4x16xbf16>
    tpu.vector_store %arg9[%c16, %c0_96], %87 {strides = array<i32>} : memref<32x64xbf16, #tpu.memory_space<vmem>>, vector<4x16xbf16>,
    %c1_97 = arith.constant 1 : index
    %c1_98 = arith.constant 1 : index
    %c0_99 = arith.constant 0 : index
    %c0_100 = arith.constant 0 : index
    %89 = vector.load %arg8[%c1_97, %c1_98, %c0_99, %c0_100] : memref<2x5x5x16xbf16, #tpu.memory_space<vmem>>, vector<1x1x4x16xbf16>
    %90 = vector.shape_cast %89 : vector<1x1x4x16xbf16> to vector<4x16xbf16>
    %c20 = arith.constant 20 : index
    %c0_101 = arith.constant 0 : index
    %91 = vector.load %arg9[%c20, %c0_101] : memref<32x64xbf16, #tpu.memory_space<vmem>>, vector<4x16xbf16>
    tpu.vector_store %arg9[%c20, %c0_101], %90 {strides = array<i32>} : memref<32x64xbf16, #tpu.memory_space<vmem>>, vector<4x16xbf16>,
    %c1_102 = arith.constant 1 : index
    %c2_103 = arith.constant 2 : index
    %c0_104 = arith.constant 0 : index
    %c0_105 = arith.constant 0 : index
    %92 = vector.load %arg8[%c1_102, %c2_103, %c0_104, %c0_105] : memref<2x5x5x16xbf16, #tpu.memory_space<vmem>>, vector<1x1x4x16xbf16>
    %93 = vector.shape_cast %92 : vector<1x1x4x16xbf16> to vector<4x16xbf16>
    %c24 = arith.constant 24 : index
    %c0_106 = arith.constant 0 : index
    %94 = vector.load %arg9[%c24, %c0_106] : memref<32x64xbf16, #tpu.memory_space<vmem>>, vector<4x16xbf16>
    tpu.vector_store %arg9[%c24, %c0_106], %93 {strides = array<i32>} : memref<32x64xbf16, #tpu.memory_space<vmem>>, vector<4x16xbf16>,
    %c1_107 = arith.constant 1 : index
    %c3_108 = arith.constant 3 : index
    %c0_109 = arith.constant 0 : index
    %c0_110 = arith.constant 0 : index
    %95 = vector.load %arg8[%c1_107, %c3_108, %c0_109, %c0_110] : memref<2x5x5x16xbf16, #tpu.memory_space<vmem>>, vector<1x1x4x16xbf16>
    %96 = vector.shape_cast %95 : vector<1x1x4x16xbf16> to vector<4x16xbf16>
    %c28 = arith.constant 28 : index
    %c0_111 = arith.constant 0 : index
    %97 = vector.load %arg9[%c28, %c0_111] : memref<32x64xbf16, #tpu.memory_space<vmem>>, vector<4x16xbf16>
    tpu.vector_store %arg9[%c28, %c0_111], %96 {strides = array<i32>} : memref<32x64xbf16, #tpu.memory_space<vmem>>, vector<4x16xbf16>,
    %c0_112 = arith.constant 0 : index
    %c0_113 = arith.constant 0 : index
    %c1_114 = arith.constant 1 : index
    %c0_115 = arith.constant 0 : index
    %98 = vector.load %arg8[%c0_112, %c0_113, %c1_114, %c0_115] : memref<2x5x5x16xbf16, #tpu.memory_space<vmem>>, vector<1x1x4x16xbf16>
    %99 = vector.shape_cast %98 : vector<1x1x4x16xbf16> to vector<4x16xbf16>
    %c0_116 = arith.constant 0 : index
    %c16_117 = arith.constant 16 : index
    %100 = vector.load %arg9[%c0_116, %c16_117] : memref<32x64xbf16, #tpu.memory_space<vmem>>, vector<4x16xbf16>
    tpu.vector_store %arg9[%c0_116, %c16_117], %99 {strides = array<i32>} : memref<32x64xbf16, #tpu.memory_space<vmem>>, vector<4x16xbf16>,
    %c0_118 = arith.constant 0 : index
    %c1_119 = arith.constant 1 : index
    %c1_120 = arith.constant 1 : index
    %c0_121 = arith.constant 0 : index
    %101 = vector.load %arg8[%c0_118, %c1_119, %c1_120, %c0_121] : memref<2x5x5x16xbf16, #tpu.memory_space<vmem>>, vector<1x1x4x16xbf16>
    %102 = vector.shape_cast %101 : vector<1x1x4x16xbf16> to vector<4x16xbf16>
    %c4_122 = arith.constant 4 : index
    %c16_123 = arith.constant 16 : index
    %103 = vector.load %arg9[%c4_122, %c16_123] : memref<32x64xbf16, #tpu.memory_space<vmem>>, vector<4x16xbf16>
    tpu.vector_store %arg9[%c4_122, %c16_123], %102 {strides = array<i32>} : memref<32x64xbf16, #tpu.memory_space<vmem>>, vector<4x16xbf16>,
    %c0_124 = arith.constant 0 : index
    %c2_125 = arith.constant 2 : index
    %c1_126 = arith.constant 1 : index
    %c0_127 = arith.constant 0 : index
    %104 = vector.load %arg8[%c0_124, %c2_125, %c1_126, %c0_127] : memref<2x5x5x16xbf16, #tpu.memory_space<vmem>>, vector<1x1x4x16xbf16>
    %105 = vector.shape_cast %104 : vector<1x1x4x16xbf16> to vector<4x16xbf16>
    %c8_128 = arith.constant 8 : index
    %c16_129 = arith.constant 16 : index
    %106 = vector.load %arg9[%c8_128, %c16_129] : memref<32x64xbf16, #tpu.memory_space<vmem>>, vector<4x16xbf16>
    tpu.vector_store %arg9[%c8_128, %c16_129], %105 {strides = array<i32>} : memref<32x64xbf16, #tpu.memory_space<vmem>>, vector<4x16xbf16>,
    %c0_130 = arith.constant 0 : index
    %c3_131 = arith.constant 3 : index
    %c1_132 = arith.constant 1 : index
    %c0_133 = arith.constant 0 : index
    %107 = vector.load %arg8[%c0_130, %c3_131, %c1_132, %c0_133] : memref<2x5x5x16xbf16, #tpu.memory_space<vmem>>, vector<1x1x4x16xbf16>
    %108 = vector.shape_cast %107 : vector<1x1x4x16xbf16> to vector<4x16xbf16>
    %c12_134 = arith.constant 12 : index
    %c16_135 = arith.constant 16 : index
    %109 = vector.load %arg9[%c12_134, %c16_135] : memref<32x64xbf16, #tpu.memory_space<vmem>>, vector<4x16xbf16>
    tpu.vector_store %arg9[%c12_134, %c16_135], %108 {strides = array<i32>} : memref<32x64xbf16, #tpu.memory_space<vmem>>, vector<4x16xbf16>,
    %c1_136 = arith.constant 1 : index
    %c0_137 = arith.constant 0 : index
    %c1_138 = arith.constant 1 : index
    %c0_139 = arith.constant 0 : index
    %110 = vector.load %arg8[%c1_136, %c0_137, %c1_138, %c0_139] : memref<2x5x5x16xbf16, #tpu.memory_space<vmem>>, vector<1x1x4x16xbf16>
    %111 = vector.shape_cast %110 : vector<1x1x4x16xbf16> to vector<4x16xbf16>
    %c16_140 = arith.constant 16 : index
    %c16_141 = arith.constant 16 : index
    %112 = vector.load %arg9[%c16_140, %c16_141] : memref<32x64xbf16, #tpu.memory_space<vmem>>, vector<4x16xbf16>
    tpu.vector_store %arg9[%c16_140, %c16_141], %111 {strides = array<i32>} : memref<32x64xbf16, #tpu.memory_space<vmem>>, vector<4x16xbf16>,
    %c1_142 = arith.constant 1 : index
    %c1_143 = arith.constant 1 : index
    %c1_144 = arith.constant 1 : index
    %c0_145 = arith.constant 0 : index
    %113 = vector.load %arg8[%c1_142, %c1_143, %c1_144, %c0_145] : memref<2x5x5x16xbf16, #tpu.memory_space<vmem>>, vector<1x1x4x16xbf16>
    %114 = vector.shape_cast %113 : vector<1x1x4x16xbf16> to vector<4x16xbf16>
    %c20_146 = arith.constant 20 : index
    %c16_147 = arith.constant 16 : index
    %115 = vector.load %arg9[%c20_146, %c16_147] : memref<32x64xbf16, #tpu.memory_space<vmem>>, vector<4x16xbf16>
    tpu.vector_store %arg9[%c20_146, %c16_147], %114 {strides = array<i32>} : memref<32x64xbf16, #tpu.memory_space<vmem>>, vector<4x16xbf16>,
    %c1_148 = arith.constant 1 : index
    %c2_149 = arith.constant 2 : index
    %c1_150 = arith.constant 1 : index
    %c0_151 = arith.constant 0 : index
    %116 = vector.load %arg8[%c1_148, %c2_149, %c1_150, %c0_151] : memref<2x5x5x16xbf16, #tpu.memory_space<vmem>>, vector<1x1x4x16xbf16>
    %117 = vector.shape_cast %116 : vector<1x1x4x16xbf16> to vector<4x16xbf16>
    %c24_152 = arith.constant 24 : index
    %c16_153 = arith.constant 16 : index
    %118 = vector.load %arg9[%c24_152, %c16_153] : memref<32x64xbf16, #tpu.memory_space<vmem>>, vector<4x16xbf16>
    tpu.vector_store %arg9[%c24_152, %c16_153], %117 {strides = array<i32>} : memref<32x64xbf16, #tpu.memory_space<vmem>>, vector<4x16xbf16>,
    %c1_154 = arith.constant 1 : index
    %c3_155 = arith.constant 3 : index
    %c1_156 = arith.constant 1 : index
    %c0_157 = arith.constant 0 : index
    %119 = vector.load %arg8[%c1_154, %c3_155, %c1_156, %c0_157] : memref<2x5x5x16xbf16, #tpu.memory_space<vmem>>, vector<1x1x4x16xbf16>
    %120 = vector.shape_cast %119 : vector<1x1x4x16xbf16> to vector<4x16xbf16>
    %c28_158 = arith.constant 28 : index
    %c16_159 = arith.constant 16 : index
    %121 = vector.load %arg9[%c28_158, %c16_159] : memref<32x64xbf16, #tpu.memory_space<vmem>>, vector<4x16xbf16>
    tpu.vector_store %arg9[%c28_158, %c16_159], %120 {strides = array<i32>} : memref<32x64xbf16, #tpu.memory_space<vmem>>, vector<4x16xbf16>,
    %c0_160 = arith.constant 0 : index
    %c1_161 = arith.constant 1 : index
    %c0_162 = arith.constant 0 : index
    %c0_163 = arith.constant 0 : index
    %122 = vector.load %arg8[%c0_160, %c1_161, %c0_162, %c0_163] : memref<2x5x5x16xbf16, #tpu.memory_space<vmem>>, vector<1x1x4x16xbf16>
    %123 = vector.shape_cast %122 : vector<1x1x4x16xbf16> to vector<4x16xbf16>
    %c0_164 = arith.constant 0 : index
    %c32 = arith.constant 32 : index
    %124 = vector.load %arg9[%c0_164, %c32] : memref<32x64xbf16, #tpu.memory_space<vmem>>, vector<4x16xbf16>
    tpu.vector_store %arg9[%c0_164, %c32], %123 {strides = array<i32>} : memref<32x64xbf16, #tpu.memory_space<vmem>>, vector<4x16xbf16>,
    %c0_165 = arith.constant 0 : index
    %c2_166 = arith.constant 2 : index
    %c0_167 = arith.constant 0 : index
    %c0_168 = arith.constant 0 : index
    %125 = vector.load %arg8[%c0_165, %c2_166, %c0_167, %c0_168] : memref<2x5x5x16xbf16, #tpu.memory_space<vmem>>, vector<1x1x4x16xbf16>
    %126 = vector.shape_cast %125 : vector<1x1x4x16xbf16> to vector<4x16xbf16>
    %c4_169 = arith.constant 4 : index
    %c32_170 = arith.constant 32 : index
    %127 = vector.load %arg9[%c4_169, %c32_170] : memref<32x64xbf16, #tpu.memory_space<vmem>>, vector<4x16xbf16>
    tpu.vector_store %arg9[%c4_169, %c32_170], %126 {strides = array<i32>} : memref<32x64xbf16, #tpu.memory_space<vmem>>, vector<4x16xbf16>,
    %c0_171 = arith.constant 0 : index
    %c3_172 = arith.constant 3 : index
    %c0_173 = arith.constant 0 : index
    %c0_174 = arith.constant 0 : index
    %128 = vector.load %arg8[%c0_171, %c3_172, %c0_173, %c0_174] : memref<2x5x5x16xbf16, #tpu.memory_space<vmem>>, vector<1x1x4x16xbf16>
    %129 = vector.shape_cast %128 : vector<1x1x4x16xbf16> to vector<4x16xbf16>
    %c8_175 = arith.constant 8 : index
    %c32_176 = arith.constant 32 : index
    %130 = vector.load %arg9[%c8_175, %c32_176] : memref<32x64xbf16, #tpu.memory_space<vmem>>, vector<4x16xbf16>
    tpu.vector_store %arg9[%c8_175, %c32_176], %129 {strides = array<i32>} : memref<32x64xbf16, #tpu.memory_space<vmem>>, vector<4x16xbf16>,
    %c0_177 = arith.constant 0 : index
    %c4_178 = arith.constant 4 : index
    %c0_179 = arith.constant 0 : index
    %c0_180 = arith.constant 0 : index
    %131 = vector.load %arg8[%c0_177, %c4_178, %c0_179, %c0_180] : memref<2x5x5x16xbf16, #tpu.memory_space<vmem>>, vector<1x1x4x16xbf16>
    %132 = vector.shape_cast %131 : vector<1x1x4x16xbf16> to vector<4x16xbf16>
    %c12_181 = arith.constant 12 : index
    %c32_182 = arith.constant 32 : index
    %133 = vector.load %arg9[%c12_181, %c32_182] : memref<32x64xbf16, #tpu.memory_space<vmem>>, vector<4x16xbf16>
    tpu.vector_store %arg9[%c12_181, %c32_182], %132 {strides = array<i32>} : memref<32x64xbf16, #tpu.memory_space<vmem>>, vector<4x16xbf16>,
    %c1_183 = arith.constant 1 : index
    %c1_184 = arith.constant 1 : index
    %c0_185 = arith.constant 0 : index
    %c0_186 = arith.constant 0 : index
    %134 = vector.load %arg8[%c1_183, %c1_184, %c0_185, %c0_186] : memref<2x5x5x16xbf16, #tpu.memory_space<vmem>>, vector<1x1x4x16xbf16>
    %135 = vector.shape_cast %134 : vector<1x1x4x16xbf16> to vector<4x16xbf16>
    %c16_187 = arith.constant 16 : index
    %c32_188 = arith.constant 32 : index
    %136 = vector.load %arg9[%c16_187, %c32_188] : memref<32x64xbf16, #tpu.memory_space<vmem>>, vector<4x16xbf16>
    tpu.vector_store %arg9[%c16_187, %c32_188], %135 {strides = array<i32>} : memref<32x64xbf16, #tpu.memory_space<vmem>>, vector<4x16xbf16>,
    %c1_189 = arith.constant 1 : index
    %c2_190 = arith.constant 2 : index
    %c0_191 = arith.constant 0 : index
    %c0_192 = arith.constant 0 : index
    %137 = vector.load %arg8[%c1_189, %c2_190, %c0_191, %c0_192] : memref<2x5x5x16xbf16, #tpu.memory_space<vmem>>, vector<1x1x4x16xbf16>
    %138 = vector.shape_cast %137 : vector<1x1x4x16xbf16> to vector<4x16xbf16>
    %c20_193 = arith.constant 20 : index
    %c32_194 = arith.constant 32 : index
    %139 = vector.load %arg9[%c20_193, %c32_194] : memref<32x64xbf16, #tpu.memory_space<vmem>>, vector<4x16xbf16>
    tpu.vector_store %arg9[%c20_193, %c32_194], %138 {strides = array<i32>} : memref<32x64xbf16, #tpu.memory_space<vmem>>, vector<4x16xbf16>,
    %c1_195 = arith.constant 1 : index
    %c3_196 = arith.constant 3 : index
    %c0_197 = arith.constant 0 : index
    %c0_198 = arith.constant 0 : index
    %140 = vector.load %arg8[%c1_195, %c3_196, %c0_197, %c0_198] : memref<2x5x5x16xbf16, #tpu.memory_space<vmem>>, vector<1x1x4x16xbf16>
    %141 = vector.shape_cast %140 : vector<1x1x4x16xbf16> to vector<4x16xbf16>
    %c24_199 = arith.constant 24 : index
    %c32_200 = arith.constant 32 : index
    %142 = vector.load %arg9[%c24_199, %c32_200] : memref<32x64xbf16, #tpu.memory_space<vmem>>, vector<4x16xbf16>
    tpu.vector_store %arg9[%c24_199, %c32_200], %141 {strides = array<i32>} : memref<32x64xbf16, #tpu.memory_space<vmem>>, vector<4x16xbf16>,
    %c1_201 = arith.constant 1 : index
    %c4_202 = arith.constant 4 : index
    %c0_203 = arith.constant 0 : index
    %c0_204 = arith.constant 0 : index
    %143 = vector.load %arg8[%c1_201, %c4_202, %c0_203, %c0_204] : memref<2x5x5x16xbf16, #tpu.memory_space<vmem>>, vector<1x1x4x16xbf16>
    %144 = vector.shape_cast %143 : vector<1x1x4x16xbf16> to vector<4x16xbf16>
    %c28_205 = arith.constant 28 : index
    %c32_206 = arith.constant 32 : index
    %145 = vector.load %arg9[%c28_205, %c32_206] : memref<32x64xbf16, #tpu.memory_space<vmem>>, vector<4x16xbf16>
    tpu.vector_store %arg9[%c28_205, %c32_206], %144 {strides = array<i32>} : memref<32x64xbf16, #tpu.memory_space<vmem>>, vector<4x16xbf16>,
    %c0_207 = arith.constant 0 : index
    %c1_208 = arith.constant 1 : index
    %c1_209 = arith.constant 1 : index
    %c0_210 = arith.constant 0 : index
    %146 = vector.load %arg8[%c0_207, %c1_208, %c1_209, %c0_210] : memref<2x5x5x16xbf16, #tpu.memory_space<vmem>>, vector<1x1x4x16xbf16>
    %147 = vector.shape_cast %146 : vector<1x1x4x16xbf16> to vector<4x16xbf16>
    %c0_211 = arith.constant 0 : index
    %c48 = arith.constant 48 : index
    %148 = vector.load %arg9[%c0_211, %c48] : memref<32x64xbf16, #tpu.memory_space<vmem>>, vector<4x16xbf16>
    tpu.vector_store %arg9[%c0_211, %c48], %147 {strides = array<i32>} : memref<32x64xbf16, #tpu.memory_space<vmem>>, vector<4x16xbf16>,
    %c0_212 = arith.constant 0 : index
    %c2_213 = arith.constant 2 : index
    %c1_214 = arith.constant 1 : index
    %c0_215 = arith.constant 0 : index
    %149 = vector.load %arg8[%c0_212, %c2_213, %c1_214, %c0_215] : memref<2x5x5x16xbf16, #tpu.memory_space<vmem>>, vector<1x1x4x16xbf16>
    %150 = vector.shape_cast %149 : vector<1x1x4x16xbf16> to vector<4x16xbf16>
    %c4_216 = arith.constant 4 : index
    %c48_217 = arith.constant 48 : index
    %151 = vector.load %arg9[%c4_216, %c48_217] : memref<32x64xbf16, #tpu.memory_space<vmem>>, vector<4x16xbf16>
    tpu.vector_store %arg9[%c4_216, %c48_217], %150 {strides = array<i32>} : memref<32x64xbf16, #tpu.memory_space<vmem>>, vector<4x16xbf16>,
    %c0_218 = arith.constant 0 : index
    %c3_219 = arith.constant 3 : index
    %c1_220 = arith.constant 1 : index
    %c0_221 = arith.constant 0 : index
    %152 = vector.load %arg8[%c0_218, %c3_219, %c1_220, %c0_221] : memref<2x5x5x16xbf16, #tpu.memory_space<vmem>>, vector<1x1x4x16xbf16>
    %153 = vector.shape_cast %152 : vector<1x1x4x16xbf16> to vector<4x16xbf16>
    %c8_222 = arith.constant 8 : index
    %c48_223 = arith.constant 48 : index
    %154 = vector.load %arg9[%c8_222, %c48_223] : memref<32x64xbf16, #tpu.memory_space<vmem>>, vector<4x16xbf16>
    tpu.vector_store %arg9[%c8_222, %c48_223], %153 {strides = array<i32>} : memref<32x64xbf16, #tpu.memory_space<vmem>>, vector<4x16xbf16>,
    %c0_224 = arith.constant 0 : index
    %c4_225 = arith.constant 4 : index
    %c1_226 = arith.constant 1 : index
    %c0_227 = arith.constant 0 : index
    %155 = vector.load %arg8[%c0_224, %c4_225, %c1_226, %c0_227] : memref<2x5x5x16xbf16, #tpu.memory_space<vmem>>, vector<1x1x4x16xbf16>
    %156 = vector.shape_cast %155 : vector<1x1x4x16xbf16> to vector<4x16xbf16>
    %c12_228 = arith.constant 12 : index
    %c48_229 = arith.constant 48 : index
    %157 = vector.load %arg9[%c12_228, %c48_229] : memref<32x64xbf16, #tpu.memory_space<vmem>>, vector<4x16xbf16>
    tpu.vector_store %arg9[%c12_228, %c48_229], %156 {strides = array<i32>} : memref<32x64xbf16, #tpu.memory_space<vmem>>, vector<4x16xbf16>,
    %c1_230 = arith.constant 1 : index
    %c1_231 = arith.constant 1 : index
    %c1_232 = arith.constant 1 : index
    %c0_233 = arith.constant 0 : index
    %158 = vector.load %arg8[%c1_230, %c1_231, %c1_232, %c0_233] : memref<2x5x5x16xbf16, #tpu.memory_space<vmem>>, vector<1x1x4x16xbf16>
    %159 = vector.shape_cast %158 : vector<1x1x4x16xbf16> to vector<4x16xbf16>
    %c16_234 = arith.constant 16 : index
    %c48_235 = arith.constant 48 : index
    %160 = vector.load %arg9[%c16_234, %c48_235] : memref<32x64xbf16, #tpu.memory_space<vmem>>, vector<4x16xbf16>
    tpu.vector_store %arg9[%c16_234, %c48_235], %159 {strides = array<i32>} : memref<32x64xbf16, #tpu.memory_space<vmem>>, vector<4x16xbf16>,
    %c1_236 = arith.constant 1 : index
    %c2_237 = arith.constant 2 : index
    %c1_238 = arith.constant 1 : index
    %c0_239 = arith.constant 0 : index
    %161 = vector.load %arg8[%c1_236, %c2_237, %c1_238, %c0_239] : memref<2x5x5x16xbf16, #tpu.memory_space<vmem>>, vector<1x1x4x16xbf16>
    %162 = vector.shape_cast %161 : vector<1x1x4x16xbf16> to vector<4x16xbf16>
    %c20_240 = arith.constant 20 : index
    %c48_241 = arith.constant 48 : index
    %163 = vector.load %arg9[%c20_240, %c48_241] : memref<32x64xbf16, #tpu.memory_space<vmem>>, vector<4x16xbf16>
    tpu.vector_store %arg9[%c20_240, %c48_241], %162 {strides = array<i32>} : memref<32x64xbf16, #tpu.memory_space<vmem>>, vector<4x16xbf16>,
    %c1_242 = arith.constant 1 : index
    %c3_243 = arith.constant 3 : index
    %c1_244 = arith.constant 1 : index
    %c0_245 = arith.constant 0 : index
    %164 = vector.load %arg8[%c1_242, %c3_243, %c1_244, %c0_245] : memref<2x5x5x16xbf16, #tpu.memory_space<vmem>>, vector<1x1x4x16xbf16>
    %165 = vector.shape_cast %164 : vector<1x1x4x16xbf16> to vector<4x16xbf16>
    %c24_246 = arith.constant 24 : index
    %c48_247 = arith.constant 48 : index
    %166 = vector.load %arg9[%c24_246, %c48_247] : memref<32x64xbf16, #tpu.memory_space<vmem>>, vector<4x16xbf16>
    tpu.vector_store %arg9[%c24_246, %c48_247], %165 {strides = array<i32>} : memref<32x64xbf16, #tpu.memory_space<vmem>>, vector<4x16xbf16>,
    %c1_248 = arith.constant 1 : index
    %c4_249 = arith.constant 4 : index
    %c1_250 = arith.constant 1 : index
    %c0_251 = arith.constant 0 : index
    %167 = vector.load %arg8[%c1_248, %c4_249, %c1_250, %c0_251] : memref<2x5x5x16xbf16, #tpu.memory_space<vmem>>, vector<1x1x4x16xbf16>
    %168 = vector.shape_cast %167 : vector<1x1x4x16xbf16> to vector<4x16xbf16>
    %c28_252 = arith.constant 28 : index
    %c48_253 = arith.constant 48 : index
    %169 = vector.load %arg9[%c28_252, %c48_253] : memref<32x64xbf16, #tpu.memory_space<vmem>>, vector<4x16xbf16>
    tpu.vector_store %arg9[%c28_252, %c48_253], %168 {strides = array<i32>} : memref<32x64xbf16, #tpu.memory_space<vmem>>, vector<4x16xbf16>,
    %c0_254 = arith.constant 0 : index
    %c0_255 = arith.constant 0 : index
    %170 = vector.load %arg9[%c0_254, %c0_255] : memref<32x64xbf16, #tpu.memory_space<vmem>>, vector<32x64xbf16>
    %c0_256 = arith.constant 0 : index
    %c0_257 = arith.constant 0 : index
    %171 = vector.load %arg3[%c0_256, %c0_257] : memref<64x512xbf16, #tpu.memory_space<vmem>>, vector<64x512xbf16>
    %cst_258 = arith.constant dense<0.000000e+00> : vector<32x512xf32>
    %172 = tpu.matmul %170, %171, %cst_258 {dimension_numbers = #tpu.dot_dimension_numbers<[1], [0], [0], [1], [0, 0, 1, 1], [], []>} : vector<32x64xbf16>, vector<64x512xbf16>, vector<32x512xf32> -> vector<32x512xf32>
    %173 = vector.extract_strided_slice %172 {offsets = [0, 0], sizes = [32, 8], strides = [1, 1]} : vector<32x512xf32> to vector<32x8xf32>
    %174 = vector.extract_strided_slice %172 {offsets = [0, 128], sizes = [32, 8], strides = [1, 1]} : vector<32x512xf32> to vector<32x8xf32>
    %175 = vector.extract_strided_slice %172 {offsets = [0, 256], sizes = [32, 8], strides = [1, 1]} : vector<32x512xf32> to vector<32x8xf32>
    %176 = vector.extract_strided_slice %172 {offsets = [0, 384], sizes = [32, 8], strides = [1, 1]} : vector<32x512xf32> to vector<32x8xf32>
    %177 = arith.addf %173, %174 : vector<32x8xf32>
    %178 = arith.addf %177, %175 : vector<32x8xf32>
    %179 = arith.addf %178, %176 : vector<32x8xf32>
    %180 = arith.mulf %173, %173 : vector<32x8xf32>
    %181 = arith.mulf %174, %174 : vector<32x8xf32>
    %182 = arith.addf %180, %181 : vector<32x8xf32>
    %183 = arith.mulf %175, %175 : vector<32x8xf32>
    %184 = arith.addf %182, %183 : vector<32x8xf32>
    %185 = arith.mulf %176, %176 : vector<32x8xf32>
    %186 = arith.addf %184, %185 : vector<32x8xf32>
    %cst_259 = arith.constant dense<0.000000e+00> : vector<8xf32>
    %187 = vector.multi_reduction <add>, %179, %cst_259 [0] : vector<32x8xf32> to vector<8xf32>
    %188 = vector.shape_cast %187 : vector<8xf32> to vector<1x8xf32>
    %cst_260 = arith.constant 7.812500e-03 : f32
    %189 = vector.broadcast %cst_260 : f32 to vector<1x8xf32>
    %190 = arith.mulf %188, %189 : vector<1x8xf32>
    %cst_261 = arith.constant dense<0.000000e+00> : vector<8xf32>
    %191 = vector.multi_reduction <add>, %186, %cst_261 [0] : vector<32x8xf32> to vector<8xf32>
    %192 = vector.shape_cast %191 : vector<8xf32> to vector<1x8xf32>
    %cst_262 = arith.constant 7.812500e-03 : f32
    %193 = vector.broadcast %cst_262 : f32 to vector<1x8xf32>
    %194 = arith.mulf %192, %193 : vector<1x8xf32>
    %195 = arith.mulf %190, %190 : vector<1x8xf32>
    %196 = arith.subf %194, %195 : vector<1x8xf32>
    %cst_263 = arith.constant 9.99999974E-6 : f32
    %197 = vector.broadcast %cst_263 : f32 to vector<1x8xf32>
    %198 = arith.addf %196, %197 : vector<1x8xf32>
    %199 = math.rsqrt %198 : vector<1x8xf32>
    %c0_264 = arith.constant 0 : index
    %c0_265 = arith.constant 0 : index
    %200 = vector.load %arg4[%c0_264, %c0_265] : memref<1x8xf32, #tpu.memory_space<vmem>>, vector<1x8xf32>
    %201 = arith.mulf %199, %200 : vector<1x8xf32>
    %c0_266 = arith.constant 0 : index
    %c0_267 = arith.constant 0 : index
    %202 = vector.load %arg5[%c0_266, %c0_267] : memref<1x8xf32, #tpu.memory_space<vmem>>, vector<1x8xf32>
    %203 = arith.mulf %190, %201 : vector<1x8xf32>
    %204 = arith.subf %202, %203 : vector<1x8xf32>
    %205 = vector.broadcast %201 : vector<1x8xf32> to vector<32x8xf32>
    %206 = arith.mulf %173, %205 : vector<32x8xf32>
    %207 = vector.broadcast %204 : vector<1x8xf32> to vector<32x8xf32>
    %208 = arith.addf %206, %207 : vector<32x8xf32>
    %cst_268 = arith.constant 0.000000e+00 : f32
    %209 = vector.broadcast %cst_268 : f32 to vector<32x8xf32>
    %210 = arith.maximumf %208, %209 : vector<32x8xf32>
    %211 = arith.truncf %210 : vector<32x8xf32> to vector<32x8xbf16>
    %212 = vector.broadcast %201 : vector<1x8xf32> to vector<32x8xf32>
    %213 = arith.mulf %174, %212 : vector<32x8xf32>
    %214 = vector.broadcast %204 : vector<1x8xf32> to vector<32x8xf32>
    %215 = arith.addf %213, %214 : vector<32x8xf32>
    %cst_269 = arith.constant 0.000000e+00 : f32
    %216 = vector.broadcast %cst_269 : f32 to vector<32x8xf32>
    %217 = arith.maximumf %215, %216 : vector<32x8xf32>
    %218 = arith.truncf %217 : vector<32x8xf32> to vector<32x8xbf16>
    %219 = vector.broadcast %201 : vector<1x8xf32> to vector<32x8xf32>
    %220 = arith.mulf %175, %219 : vector<32x8xf32>
    %221 = vector.broadcast %204 : vector<1x8xf32> to vector<32x8xf32>
    %222 = arith.addf %220, %221 : vector<32x8xf32>
    %cst_270 = arith.constant 0.000000e+00 : f32
    %223 = vector.broadcast %cst_270 : f32 to vector<32x8xf32>
    %224 = arith.maximumf %222, %223 : vector<32x8xf32>
    %225 = arith.truncf %224 : vector<32x8xf32> to vector<32x8xbf16>
    %226 = vector.broadcast %201 : vector<1x8xf32> to vector<32x8xf32>
    %227 = arith.mulf %176, %226 : vector<32x8xf32>
    %228 = vector.broadcast %204 : vector<1x8xf32> to vector<32x8xf32>
    %229 = arith.addf %227, %228 : vector<32x8xf32>
    %cst_271 = arith.constant 0.000000e+00 : f32
    %230 = vector.broadcast %cst_271 : f32 to vector<32x8xf32>
    %231 = arith.maximumf %229, %230 : vector<32x8xf32>
    %232 = arith.truncf %231 : vector<32x8xf32> to vector<32x8xbf16>
    %cst_272 = arith.constant 0.000000e+00 : bf16
    %233 = vector.broadcast %cst_272 : bf16 to vector<2x9x9x8xbf16>
    %c0_273 = arith.constant 0 : index
    %c0_274 = arith.constant 0 : index
    %c0_275 = arith.constant 0 : index
    %c0_276 = arith.constant 0 : index
    %234 = vector.load %arg10[%c0_273, %c0_274, %c0_275, %c0_276] : memref<2x9x9x8xbf16, #tpu.memory_space<vmem>>, vector<2x9x9x8xbf16>
    tpu.vector_store %arg10[%c0_273, %c0_274, %c0_275, %c0_276], %233 {strides = array<i32>} : memref<2x9x9x8xbf16, #tpu.memory_space<vmem>>, vector<2x9x9x8xbf16>,
    %235 = vector.extract_strided_slice %211 {offsets = [0, 0], sizes = [1, 8], strides = [1, 1]} : vector<32x8xbf16> to vector<1x8xbf16>
    %c0_277 = arith.constant 0 : index
    %c0_278 = arith.constant 0 : index
    %c0_279 = arith.constant 0 : index
    %c0_280 = arith.constant 0 : index
    %236 = vector.load %arg10[%c0_277, %c0_278, %c0_279, %c0_280] : memref<2x9x9x8xbf16, #tpu.memory_space<vmem>>, vector<1x1x1x8xbf16>
    %237 = vector.shape_cast %236 : vector<1x1x1x8xbf16> to vector<1x8xbf16>
    %238 = vector.shape_cast %235 : vector<1x8xbf16> to vector<1x1x1x8xbf16>
    tpu.vector_store %arg10[%c0_277, %c0_278, %c0_279, %c0_280], %238 {strides = array<i32>} : memref<2x9x9x8xbf16, #tpu.memory_space<vmem>>, vector<1x1x1x8xbf16>,
    %239 = vector.extract_strided_slice %211 {offsets = [1, 0], sizes = [1, 8], strides = [1, 1]} : vector<32x8xbf16> to vector<1x8xbf16>
    %c0_281 = arith.constant 0 : index
    %c0_282 = arith.constant 0 : index
    %c2_283 = arith.constant 2 : index
    %c0_284 = arith.constant 0 : index
    %240 = vector.load %arg10[%c0_281, %c0_282, %c2_283, %c0_284] : memref<2x9x9x8xbf16, #tpu.memory_space<vmem>>, vector<1x1x1x8xbf16>
    %241 = vector.shape_cast %240 : vector<1x1x1x8xbf16> to vector<1x8xbf16>
    %242 = vector.shape_cast %239 : vector<1x8xbf16> to vector<1x1x1x8xbf16>
    tpu.vector_store %arg10[%c0_281, %c0_282, %c2_283, %c0_284], %242 {strides = array<i32>} : memref<2x9x9x8xbf16, #tpu.memory_space<vmem>>, vector<1x1x1x8xbf16>,
    %243 = vector.extract_strided_slice %211 {offsets = [2, 0], sizes = [1, 8], strides = [1, 1]} : vector<32x8xbf16> to vector<1x8xbf16>
    %c0_285 = arith.constant 0 : index
    %c0_286 = arith.constant 0 : index
    %c4_287 = arith.constant 4 : index
    %c0_288 = arith.constant 0 : index
    %244 = vector.load %arg10[%c0_285, %c0_286, %c4_287, %c0_288] : memref<2x9x9x8xbf16, #tpu.memory_space<vmem>>, vector<1x1x1x8xbf16>
    %245 = vector.shape_cast %244 : vector<1x1x1x8xbf16> to vector<1x8xbf16>
    %246 = vector.shape_cast %243 : vector<1x8xbf16> to vector<1x1x1x8xbf16>
    tpu.vector_store %arg10[%c0_285, %c0_286, %c4_287, %c0_288], %246 {strides = array<i32>} : memref<2x9x9x8xbf16, #tpu.memory_space<vmem>>, vector<1x1x1x8xbf16>,
    %247 = vector.extract_strided_slice %211 {offsets = [3, 0], sizes = [1, 8], strides = [1, 1]} : vector<32x8xbf16> to vector<1x8xbf16>
    %c0_289 = arith.constant 0 : index
    %c0_290 = arith.constant 0 : index
    %c6 = arith.constant 6 : index
    %c0_291 = arith.constant 0 : index
    %248 = vector.load %arg10[%c0_289, %c0_290, %c6, %c0_291] : memref<2x9x9x8xbf16, #tpu.memory_space<vmem>>, vector<1x1x1x8xbf16>
    %249 = vector.shape_cast %248 : vector<1x1x1x8xbf16> to vector<1x8xbf16>
    %250 = vector.shape_cast %247 : vector<1x8xbf16> to vector<1x1x1x8xbf16>
    tpu.vector_store %arg10[%c0_289, %c0_290, %c6, %c0_291], %250 {strides = array<i32>} : memref<2x9x9x8xbf16, #tpu.memory_space<vmem>>, vector<1x1x1x8xbf16>,
    %251 = vector.extract_strided_slice %211 {offsets = [4, 0], sizes = [1, 8], strides = [1, 1]} : vector<32x8xbf16> to vector<1x8xbf16>
    %c0_292 = arith.constant 0 : index
    %c2_293 = arith.constant 2 : index
    %c0_294 = arith.constant 0 : index
    %c0_295 = arith.constant 0 : index
    %252 = vector.load %arg10[%c0_292, %c2_293, %c0_294, %c0_295] : memref<2x9x9x8xbf16, #tpu.memory_space<vmem>>, vector<1x1x1x8xbf16>
    %253 = vector.shape_cast %252 : vector<1x1x1x8xbf16> to vector<1x8xbf16>
    %254 = vector.shape_cast %251 : vector<1x8xbf16> to vector<1x1x1x8xbf16>
    tpu.vector_store %arg10[%c0_292, %c2_293, %c0_294, %c0_295], %254 {strides = array<i32>} : memref<2x9x9x8xbf16, #tpu.memory_space<vmem>>, vector<1x1x1x8xbf16>,
    %255 = vector.extract_strided_slice %211 {offsets = [5, 0], sizes = [1, 8], strides = [1, 1]} : vector<32x8xbf16> to vector<1x8xbf16>
    %c0_296 = arith.constant 0 : index
    %c2_297 = arith.constant 2 : index
    %c2_298 = arith.constant 2 : index
    %c0_299 = arith.constant 0 : index
    %256 = vector.load %arg10[%c0_296, %c2_297, %c2_298, %c0_299] : memref<2x9x9x8xbf16, #tpu.memory_space<vmem>>, vector<1x1x1x8xbf16>
    %257 = vector.shape_cast %256 : vector<1x1x1x8xbf16> to vector<1x8xbf16>
    %258 = vector.shape_cast %255 : vector<1x8xbf16> to vector<1x1x1x8xbf16>
    tpu.vector_store %arg10[%c0_296, %c2_297, %c2_298, %c0_299], %258 {strides = array<i32>} : memref<2x9x9x8xbf16, #tpu.memory_space<vmem>>, vector<1x1x1x8xbf16>,
    %259 = vector.extract_strided_slice %211 {offsets = [6, 0], sizes = [1, 8], strides = [1, 1]} : vector<32x8xbf16> to vector<1x8xbf16>
    %c0_300 = arith.constant 0 : index
    %c2_301 = arith.constant 2 : index
    %c4_302 = arith.constant 4 : index
    %c0_303 = arith.constant 0 : index
    %260 = vector.load %arg10[%c0_300, %c2_301, %c4_302, %c0_303] : memref<2x9x9x8xbf16, #tpu.memory_space<vmem>>, vector<1x1x1x8xbf16>
    %261 = vector.shape_cast %260 : vector<1x1x1x8xbf16> to vector<1x8xbf16>
    %262 = vector.shape_cast %259 : vector<1x8xbf16> to vector<1x1x1x8xbf16>
    tpu.vector_store %arg10[%c0_300, %c2_301, %c4_302, %c0_303], %262 {strides = array<i32>} : memref<2x9x9x8xbf16, #tpu.memory_space<vmem>>, vector<1x1x1x8xbf16>,
    %263 = vector.extract_strided_slice %211 {offsets = [7, 0], sizes = [1, 8], strides = [1, 1]} : vector<32x8xbf16> to vector<1x8xbf16>
    %c0_304 = arith.constant 0 : index
    %c2_305 = arith.constant 2 : index
    %c6_306 = arith.constant 6 : index
    %c0_307 = arith.constant 0 : index
    %264 = vector.load %arg10[%c0_304, %c2_305, %c6_306, %c0_307] : memref<2x9x9x8xbf16, #tpu.memory_space<vmem>>, vector<1x1x1x8xbf16>
    %265 = vector.shape_cast %264 : vector<1x1x1x8xbf16> to vector<1x8xbf16>
    %266 = vector.shape_cast %263 : vector<1x8xbf16> to vector<1x1x1x8xbf16>
    tpu.vector_store %arg10[%c0_304, %c2_305, %c6_306, %c0_307], %266 {strides = array<i32>} : memref<2x9x9x8xbf16, #tpu.memory_space<vmem>>, vector<1x1x1x8xbf16>,
    %267 = vector.extract_strided_slice %211 {offsets = [8, 0], sizes = [1, 8], strides = [1, 1]} : vector<32x8xbf16> to vector<1x8xbf16>
    %c0_308 = arith.constant 0 : index
    %c4_309 = arith.constant 4 : index
    %c0_310 = arith.constant 0 : index
    %c0_311 = arith.constant 0 : index
    %268 = vector.load %arg10[%c0_308, %c4_309, %c0_310, %c0_311] : memref<2x9x9x8xbf16, #tpu.memory_space<vmem>>, vector<1x1x1x8xbf16>
    %269 = vector.shape_cast %268 : vector<1x1x1x8xbf16> to vector<1x8xbf16>
    %270 = vector.shape_cast %267 : vector<1x8xbf16> to vector<1x1x1x8xbf16>
    tpu.vector_store %arg10[%c0_308, %c4_309, %c0_310, %c0_311], %270 {strides = array<i32>} : memref<2x9x9x8xbf16, #tpu.memory_space<vmem>>, vector<1x1x1x8xbf16>,
    %271 = vector.extract_strided_slice %211 {offsets = [9, 0], sizes = [1, 8], strides = [1, 1]} : vector<32x8xbf16> to vector<1x8xbf16>
    %c0_312 = arith.constant 0 : index
    %c4_313 = arith.constant 4 : index
    %c2_314 = arith.constant 2 : index
    %c0_315 = arith.constant 0 : index
    %272 = vector.load %arg10[%c0_312, %c4_313, %c2_314, %c0_315] : memref<2x9x9x8xbf16, #tpu.memory_space<vmem>>, vector<1x1x1x8xbf16>
    %273 = vector.shape_cast %272 : vector<1x1x1x8xbf16> to vector<1x8xbf16>
    %274 = vector.shape_cast %271 : vector<1x8xbf16> to vector<1x1x1x8xbf16>
    tpu.vector_store %arg10[%c0_312, %c4_313, %c2_314, %c0_315], %274 {strides = array<i32>} : memref<2x9x9x8xbf16, #tpu.memory_space<vmem>>, vector<1x1x1x8xbf16>,
    %275 = vector.extract_strided_slice %211 {offsets = [10, 0], sizes = [1, 8], strides = [1, 1]} : vector<32x8xbf16> to vector<1x8xbf16>
    %c0_316 = arith.constant 0 : index
    %c4_317 = arith.constant 4 : index
    %c4_318 = arith.constant 4 : index
    %c0_319 = arith.constant 0 : index
    %276 = vector.load %arg10[%c0_316, %c4_317, %c4_318, %c0_319] : memref<2x9x9x8xbf16, #tpu.memory_space<vmem>>, vector<1x1x1x8xbf16>
    %277 = vector.shape_cast %276 : vector<1x1x1x8xbf16> to vector<1x8xbf16>
    %278 = vector.shape_cast %275 : vector<1x8xbf16> to vector<1x1x1x8xbf16>
    tpu.vector_store %arg10[%c0_316, %c4_317, %c4_318, %c0_319], %278 {strides = array<i32>} : memref<2x9x9x8xbf16, #tpu.memory_space<vmem>>, vector<1x1x1x8xbf16>,
    %279 = vector.extract_strided_slice %211 {offsets = [11, 0], sizes = [1, 8], strides = [1, 1]} : vector<32x8xbf16> to vector<1x8xbf16>
    %c0_320 = arith.constant 0 : index
    %c4_321 = arith.constant 4 : index
    %c6_322 = arith.constant 6 : index
    %c0_323 = arith.constant 0 : index
    %280 = vector.load %arg10[%c0_320, %c4_321, %c6_322, %c0_323] : memref<2x9x9x8xbf16, #tpu.memory_space<vmem>>, vector<1x1x1x8xbf16>
    %281 = vector.shape_cast %280 : vector<1x1x1x8xbf16> to vector<1x8xbf16>
    %282 = vector.shape_cast %279 : vector<1x8xbf16> to vector<1x1x1x8xbf16>
    tpu.vector_store %arg10[%c0_320, %c4_321, %c6_322, %c0_323], %282 {strides = array<i32>} : memref<2x9x9x8xbf16, #tpu.memory_space<vmem>>, vector<1x1x1x8xbf16>,
    %283 = vector.extract_strided_slice %211 {offsets = [12, 0], sizes = [1, 8], strides = [1, 1]} : vector<32x8xbf16> to vector<1x8xbf16>
    %c0_324 = arith.constant 0 : index
    %c6_325 = arith.constant 6 : index
    %c0_326 = arith.constant 0 : index
    %c0_327 = arith.constant 0 : index
    %284 = vector.load %arg10[%c0_324, %c6_325, %c0_326, %c0_327] : memref<2x9x9x8xbf16, #tpu.memory_space<vmem>>, vector<1x1x1x8xbf16>
    %285 = vector.shape_cast %284 : vector<1x1x1x8xbf16> to vector<1x8xbf16>
    %286 = vector.shape_cast %283 : vector<1x8xbf16> to vector<1x1x1x8xbf16>
    tpu.vector_store %arg10[%c0_324, %c6_325, %c0_326, %c0_327], %286 {strides = array<i32>} : memref<2x9x9x8xbf16, #tpu.memory_space<vmem>>, vector<1x1x1x8xbf16>,
    %287 = vector.extract_strided_slice %211 {offsets = [13, 0], sizes = [1, 8], strides = [1, 1]} : vector<32x8xbf16> to vector<1x8xbf16>
    %c0_328 = arith.constant 0 : index
    %c6_329 = arith.constant 6 : index
    %c2_330 = arith.constant 2 : index
    %c0_331 = arith.constant 0 : index
    %288 = vector.load %arg10[%c0_328, %c6_329, %c2_330, %c0_331] : memref<2x9x9x8xbf16, #tpu.memory_space<vmem>>, vector<1x1x1x8xbf16>
    %289 = vector.shape_cast %288 : vector<1x1x1x8xbf16> to vector<1x8xbf16>
    %290 = vector.shape_cast %287 : vector<1x8xbf16> to vector<1x1x1x8xbf16>
    tpu.vector_store %arg10[%c0_328, %c6_329, %c2_330, %c0_331], %290 {strides = array<i32>} : memref<2x9x9x8xbf16, #tpu.memory_space<vmem>>, vector<1x1x1x8xbf16>,
    %291 = vector.extract_strided_slice %211 {offsets = [14, 0], sizes = [1, 8], strides = [1, 1]} : vector<32x8xbf16> to vector<1x8xbf16>
    %c0_332 = arith.constant 0 : index
    %c6_333 = arith.constant 6 : index
    %c4_334 = arith.constant 4 : index
    %c0_335 = arith.constant 0 : index
    %292 = vector.load %arg10[%c0_332, %c6_333, %c4_334, %c0_335] : memref<2x9x9x8xbf16, #tpu.memory_space<vmem>>, vector<1x1x1x8xbf16>
    %293 = vector.shape_cast %292 : vector<1x1x1x8xbf16> to vector<1x8xbf16>
    %294 = vector.shape_cast %291 : vector<1x8xbf16> to vector<1x1x1x8xbf16>
    tpu.vector_store %arg10[%c0_332, %c6_333, %c4_334, %c0_335], %294 {strides = array<i32>} : memref<2x9x9x8xbf16, #tpu.memory_space<vmem>>, vector<1x1x1x8xbf16>,
    %295 = vector.extract_strided_slice %211 {offsets = [15, 0], sizes = [1, 8], strides = [1, 1]} : vector<32x8xbf16> to vector<1x8xbf16>
    %c0_336 = arith.constant 0 : index
    %c6_337 = arith.constant 6 : index
    %c6_338 = arith.constant 6 : index
    %c0_339 = arith.constant 0 : index
    %296 = vector.load %arg10[%c0_336, %c6_337, %c6_338, %c0_339] : memref<2x9x9x8xbf16, #tpu.memory_space<vmem>>, vector<1x1x1x8xbf16>
    %297 = vector.shape_cast %296 : vector<1x1x1x8xbf16> to vector<1x8xbf16>
    %298 = vector.shape_cast %295 : vector<1x8xbf16> to vector<1x1x1x8xbf16>
    tpu.vector_store %arg10[%c0_336, %c6_337, %c6_338, %c0_339], %298 {strides = array<i32>} : memref<2x9x9x8xbf16, #tpu.memory_space<vmem>>, vector<1x1x1x8xbf16>,
    %299 = vector.extract_strided_slice %211 {offsets = [16, 0], sizes = [1, 8], strides = [1, 1]} : vector<32x8xbf16> to vector<1x8xbf16>
    %c1_340 = arith.constant 1 : index
    %c0_341 = arith.constant 0 : index
    %c0_342 = arith.constant 0 : index
    %c0_343 = arith.constant 0 : index
    %300 = vector.load %arg10[%c1_340, %c0_341, %c0_342, %c0_343] : memref<2x9x9x8xbf16, #tpu.memory_space<vmem>>, vector<1x1x1x8xbf16>
    %301 = vector.shape_cast %300 : vector<1x1x1x8xbf16> to vector<1x8xbf16>
    %302 = vector.shape_cast %299 : vector<1x8xbf16> to vector<1x1x1x8xbf16>
    tpu.vector_store %arg10[%c1_340, %c0_341, %c0_342, %c0_343], %302 {strides = array<i32>} : memref<2x9x9x8xbf16, #tpu.memory_space<vmem>>, vector<1x1x1x8xbf16>,
    %303 = vector.extract_strided_slice %211 {offsets = [17, 0], sizes = [1, 8], strides = [1, 1]} : vector<32x8xbf16> to vector<1x8xbf16>
    %c1_344 = arith.constant 1 : index
    %c0_345 = arith.constant 0 : index
    %c2_346 = arith.constant 2 : index
    %c0_347 = arith.constant 0 : index
    %304 = vector.load %arg10[%c1_344, %c0_345, %c2_346, %c0_347] : memref<2x9x9x8xbf16, #tpu.memory_space<vmem>>, vector<1x1x1x8xbf16>
    %305 = vector.shape_cast %304 : vector<1x1x1x8xbf16> to vector<1x8xbf16>
    %306 = vector.shape_cast %303 : vector<1x8xbf16> to vector<1x1x1x8xbf16>
    tpu.vector_store %arg10[%c1_344, %c0_345, %c2_346, %c0_347], %306 {strides = array<i32>} : memref<2x9x9x8xbf16, #tpu.memory_space<vmem>>, vector<1x1x1x8xbf16>,
    %307 = vector.extract_strided_slice %211 {offsets = [18, 0], sizes = [1, 8], strides = [1, 1]} : vector<32x8xbf16> to vector<1x8xbf16>
    %c1_348 = arith.constant 1 : index
    %c0_349 = arith.constant 0 : index
    %c4_350 = arith.constant 4 : index
    %c0_351 = arith.constant 0 : index
    %308 = vector.load %arg10[%c1_348, %c0_349, %c4_350, %c0_351] : memref<2x9x9x8xbf16, #tpu.memory_space<vmem>>, vector<1x1x1x8xbf16>
    %309 = vector.shape_cast %308 : vector<1x1x1x8xbf16> to vector<1x8xbf16>
    %310 = vector.shape_cast %307 : vector<1x8xbf16> to vector<1x1x1x8xbf16>
    tpu.vector_store %arg10[%c1_348, %c0_349, %c4_350, %c0_351], %310 {strides = array<i32>} : memref<2x9x9x8xbf16, #tpu.memory_space<vmem>>, vector<1x1x1x8xbf16>,
    %311 = vector.extract_strided_slice %211 {offsets = [19, 0], sizes = [1, 8], strides = [1, 1]} : vector<32x8xbf16> to vector<1x8xbf16>
    %c1_352 = arith.constant 1 : index
    %c0_353 = arith.constant 0 : index
    %c6_354 = arith.constant 6 : index
    %c0_355 = arith.constant 0 : index
    %312 = vector.load %arg10[%c1_352, %c0_353, %c6_354, %c0_355] : memref<2x9x9x8xbf16, #tpu.memory_space<vmem>>, vector<1x1x1x8xbf16>
    %313 = vector.shape_cast %312 : vector<1x1x1x8xbf16> to vector<1x8xbf16>
    %314 = vector.shape_cast %311 : vector<1x8xbf16> to vector<1x1x1x8xbf16>
    tpu.vector_store %arg10[%c1_352, %c0_353, %c6_354, %c0_355], %314 {strides = array<i32>} : memref<2x9x9x8xbf16, #tpu.memory_space<vmem>>, vector<1x1x1x8xbf16>,
    %315 = vector.extract_strided_slice %211 {offsets = [20, 0], sizes = [1, 8], strides = [1, 1]} : vector<32x8xbf16> to vector<1x8xbf16>
    %c1_356 = arith.constant 1 : index
    %c2_357 = arith.constant 2 : index
    %c0_358 = arith.constant 0 : index
    %c0_359 = arith.constant 0 : index
    %316 = vector.load %arg10[%c1_356, %c2_357, %c0_358, %c0_359] : memref<2x9x9x8xbf16, #tpu.memory_space<vmem>>, vector<1x1x1x8xbf16>
    %317 = vector.shape_cast %316 : vector<1x1x1x8xbf16> to vector<1x8xbf16>
    %318 = vector.shape_cast %315 : vector<1x8xbf16> to vector<1x1x1x8xbf16>
    tpu.vector_store %arg10[%c1_356, %c2_357, %c0_358, %c0_359], %318 {strides = array<i32>} : memref<2x9x9x8xbf16, #tpu.memory_space<vmem>>, vector<1x1x1x8xbf16>,
    %319 = vector.extract_strided_slice %211 {offsets = [21, 0], sizes = [1, 8], strides = [1, 1]} : vector<32x8xbf16> to vector<1x8xbf16>
    %c1_360 = arith.constant 1 : index
    %c2_361 = arith.constant 2 : index
    %c2_362 = arith.constant 2 : index
    %c0_363 = arith.constant 0 : index
    %320 = vector.load %arg10[%c1_360, %c2_361, %c2_362, %c0_363] : memref<2x9x9x8xbf16, #tpu.memory_space<vmem>>, vector<1x1x1x8xbf16>
    %321 = vector.shape_cast %320 : vector<1x1x1x8xbf16> to vector<1x8xbf16>
    %322 = vector.shape_cast %319 : vector<1x8xbf16> to vector<1x1x1x8xbf16>
    tpu.vector_store %arg10[%c1_360, %c2_361, %c2_362, %c0_363], %322 {strides = array<i32>} : memref<2x9x9x8xbf16, #tpu.memory_space<vmem>>, vector<1x1x1x8xbf16>,
    %323 = vector.extract_strided_slice %211 {offsets = [22, 0], sizes = [1, 8], strides = [1, 1]} : vector<32x8xbf16> to vector<1x8xbf16>
    %c1_364 = arith.constant 1 : index
    %c2_365 = arith.constant 2 : index
    %c4_366 = arith.constant 4 : index
    %c0_367 = arith.constant 0 : index
    %324 = vector.load %arg10[%c1_364, %c2_365, %c4_366, %c0_367] : memref<2x9x9x8xbf16, #tpu.memory_space<vmem>>, vector<1x1x1x8xbf16>
    %325 = vector.shape_cast %324 : vector<1x1x1x8xbf16> to vector<1x8xbf16>
    %326 = vector.shape_cast %323 : vector<1x8xbf16> to vector<1x1x1x8xbf16>
    tpu.vector_store %arg10[%c1_364, %c2_365, %c4_366, %c0_367], %326 {strides = array<i32>} : memref<2x9x9x8xbf16, #tpu.memory_space<vmem>>, vector<1x1x1x8xbf16>,
    %327 = vector.extract_strided_slice %211 {offsets = [23, 0], sizes = [1, 8], strides = [1, 1]} : vector<32x8xbf16> to vector<1x8xbf16>
    %c1_368 = arith.constant 1 : index
    %c2_369 = arith.constant 2 : index
    %c6_370 = arith.constant 6 : index
    %c0_371 = arith.constant 0 : index
    %328 = vector.load %arg10[%c1_368, %c2_369, %c6_370, %c0_371] : memref<2x9x9x8xbf16, #tpu.memory_space<vmem>>, vector<1x1x1x8xbf16>
    %329 = vector.shape_cast %328 : vector<1x1x1x8xbf16> to vector<1x8xbf16>
    %330 = vector.shape_cast %327 : vector<1x8xbf16> to vector<1x1x1x8xbf16>
    tpu.vector_store %arg10[%c1_368, %c2_369, %c6_370, %c0_371], %330 {strides = array<i32>} : memref<2x9x9x8xbf16, #tpu.memory_space<vmem>>, vector<1x1x1x8xbf16>,
    %331 = vector.extract_strided_slice %211 {offsets = [24, 0], sizes = [1, 8], strides = [1, 1]} : vector<32x8xbf16> to vector<1x8xbf16>
    %c1_372 = arith.constant 1 : index
    %c4_373 = arith.constant 4 : index
    %c0_374 = arith.constant 0 : index
    %c0_375 = arith.constant 0 : index
    %332 = vector.load %arg10[%c1_372, %c4_373, %c0_374, %c0_375] : memref<2x9x9x8xbf16, #tpu.memory_space<vmem>>, vector<1x1x1x8xbf16>
    %333 = vector.shape_cast %332 : vector<1x1x1x8xbf16> to vector<1x8xbf16>
    %334 = vector.shape_cast %331 : vector<1x8xbf16> to vector<1x1x1x8xbf16>
    tpu.vector_store %arg10[%c1_372, %c4_373, %c0_374, %c0_375], %334 {strides = array<i32>} : memref<2x9x9x8xbf16, #tpu.memory_space<vmem>>, vector<1x1x1x8xbf16>,
    %335 = vector.extract_strided_slice %211 {offsets = [25, 0], sizes = [1, 8], strides = [1, 1]} : vector<32x8xbf16> to vector<1x8xbf16>
    %c1_376 = arith.constant 1 : index
    %c4_377 = arith.constant 4 : index
    %c2_378 = arith.constant 2 : index
    %c0_379 = arith.constant 0 : index
    %336 = vector.load %arg10[%c1_376, %c4_377, %c2_378, %c0_379] : memref<2x9x9x8xbf16, #tpu.memory_space<vmem>>, vector<1x1x1x8xbf16>
    %337 = vector.shape_cast %336 : vector<1x1x1x8xbf16> to vector<1x8xbf16>
    %338 = vector.shape_cast %335 : vector<1x8xbf16> to vector<1x1x1x8xbf16>
    tpu.vector_store %arg10[%c1_376, %c4_377, %c2_378, %c0_379], %338 {strides = array<i32>} : memref<2x9x9x8xbf16, #tpu.memory_space<vmem>>, vector<1x1x1x8xbf16>,
    %339 = vector.extract_strided_slice %211 {offsets = [26, 0], sizes = [1, 8], strides = [1, 1]} : vector<32x8xbf16> to vector<1x8xbf16>
    %c1_380 = arith.constant 1 : index
    %c4_381 = arith.constant 4 : index
    %c4_382 = arith.constant 4 : index
    %c0_383 = arith.constant 0 : index
    %340 = vector.load %arg10[%c1_380, %c4_381, %c4_382, %c0_383] : memref<2x9x9x8xbf16, #tpu.memory_space<vmem>>, vector<1x1x1x8xbf16>
    %341 = vector.shape_cast %340 : vector<1x1x1x8xbf16> to vector<1x8xbf16>
    %342 = vector.shape_cast %339 : vector<1x8xbf16> to vector<1x1x1x8xbf16>
    tpu.vector_store %arg10[%c1_380, %c4_381, %c4_382, %c0_383], %342 {strides = array<i32>} : memref<2x9x9x8xbf16, #tpu.memory_space<vmem>>, vector<1x1x1x8xbf16>,
    %343 = vector.extract_strided_slice %211 {offsets = [27, 0], sizes = [1, 8], strides = [1, 1]} : vector<32x8xbf16> to vector<1x8xbf16>
    %c1_384 = arith.constant 1 : index
    %c4_385 = arith.constant 4 : index
    %c6_386 = arith.constant 6 : index
    %c0_387 = arith.constant 0 : index
    %344 = vector.load %arg10[%c1_384, %c4_385, %c6_386, %c0_387] : memref<2x9x9x8xbf16, #tpu.memory_space<vmem>>, vector<1x1x1x8xbf16>
    %345 = vector.shape_cast %344 : vector<1x1x1x8xbf16> to vector<1x8xbf16>
    %346 = vector.shape_cast %343 : vector<1x8xbf16> to vector<1x1x1x8xbf16>
    tpu.vector_store %arg10[%c1_384, %c4_385, %c6_386, %c0_387], %346 {strides = array<i32>} : memref<2x9x9x8xbf16, #tpu.memory_space<vmem>>, vector<1x1x1x8xbf16>,
    %347 = vector.extract_strided_slice %211 {offsets = [28, 0], sizes = [1, 8], strides = [1, 1]} : vector<32x8xbf16> to vector<1x8xbf16>
    %c1_388 = arith.constant 1 : index
    %c6_389 = arith.constant 6 : index
    %c0_390 = arith.constant 0 : index
    %c0_391 = arith.constant 0 : index
    %348 = vector.load %arg10[%c1_388, %c6_389, %c0_390, %c0_391] : memref<2x9x9x8xbf16, #tpu.memory_space<vmem>>, vector<1x1x1x8xbf16>
    %349 = vector.shape_cast %348 : vector<1x1x1x8xbf16> to vector<1x8xbf16>
    %350 = vector.shape_cast %347 : vector<1x8xbf16> to vector<1x1x1x8xbf16>
    tpu.vector_store %arg10[%c1_388, %c6_389, %c0_390, %c0_391], %350 {strides = array<i32>} : memref<2x9x9x8xbf16, #tpu.memory_space<vmem>>, vector<1x1x1x8xbf16>,
    %351 = vector.extract_strided_slice %211 {offsets = [29, 0], sizes = [1, 8], strides = [1, 1]} : vector<32x8xbf16> to vector<1x8xbf16>
    %c1_392 = arith.constant 1 : index
    %c6_393 = arith.constant 6 : index
    %c2_394 = arith.constant 2 : index
    %c0_395 = arith.constant 0 : index
    %352 = vector.load %arg10[%c1_392, %c6_393, %c2_394, %c0_395] : memref<2x9x9x8xbf16, #tpu.memory_space<vmem>>, vector<1x1x1x8xbf16>
    %353 = vector.shape_cast %352 : vector<1x1x1x8xbf16> to vector<1x8xbf16>
    %354 = vector.shape_cast %351 : vector<1x8xbf16> to vector<1x1x1x8xbf16>
    tpu.vector_store %arg10[%c1_392, %c6_393, %c2_394, %c0_395], %354 {strides = array<i32>} : memref<2x9x9x8xbf16, #tpu.memory_space<vmem>>, vector<1x1x1x8xbf16>,
    %355 = vector.extract_strided_slice %211 {offsets = [30, 0], sizes = [1, 8], strides = [1, 1]} : vector<32x8xbf16> to vector<1x8xbf16>
    %c1_396 = arith.constant 1 : index
    %c6_397 = arith.constant 6 : index
    %c4_398 = arith.constant 4 : index
    %c0_399 = arith.constant 0 : index
    %356 = vector.load %arg10[%c1_396, %c6_397, %c4_398, %c0_399] : memref<2x9x9x8xbf16, #tpu.memory_space<vmem>>, vector<1x1x1x8xbf16>
    %357 = vector.shape_cast %356 : vector<1x1x1x8xbf16> to vector<1x8xbf16>
    %358 = vector.shape_cast %355 : vector<1x8xbf16> to vector<1x1x1x8xbf16>
    tpu.vector_store %arg10[%c1_396, %c6_397, %c4_398, %c0_399], %358 {strides = array<i32>} : memref<2x9x9x8xbf16, #tpu.memory_space<vmem>>, vector<1x1x1x8xbf16>,
    %359 = vector.extract_strided_slice %211 {offsets = [31, 0], sizes = [1, 8], strides = [1, 1]} : vector<32x8xbf16> to vector<1x8xbf16>
    %c1_400 = arith.constant 1 : index
    %c6_401 = arith.constant 6 : index
    %c6_402 = arith.constant 6 : index
    %c0_403 = arith.constant 0 : index
    %360 = vector.load %arg10[%c1_400, %c6_401, %c6_402, %c0_403] : memref<2x9x9x8xbf16, #tpu.memory_space<vmem>>, vector<1x1x1x8xbf16>
    %361 = vector.shape_cast %360 : vector<1x1x1x8xbf16> to vector<1x8xbf16>
    %362 = vector.shape_cast %359 : vector<1x8xbf16> to vector<1x1x1x8xbf16>
    tpu.vector_store %arg10[%c1_400, %c6_401, %c6_402, %c0_403], %362 {strides = array<i32>} : memref<2x9x9x8xbf16, #tpu.memory_space<vmem>>, vector<1x1x1x8xbf16>,
    %363 = vector.extract_strided_slice %218 {offsets = [0, 0], sizes = [1, 8], strides = [1, 1]} : vector<32x8xbf16> to vector<1x8xbf16>
    %c0_404 = arith.constant 0 : index
    %c0_405 = arith.constant 0 : index
    %c1_406 = arith.constant 1 : index
    %c0_407 = arith.constant 0 : index
    %364 = vector.load %arg10[%c0_404, %c0_405, %c1_406, %c0_407] : memref<2x9x9x8xbf16, #tpu.memory_space<vmem>>, vector<1x1x1x8xbf16>
    %365 = vector.shape_cast %364 : vector<1x1x1x8xbf16> to vector<1x8xbf16>
    %366 = vector.shape_cast %363 : vector<1x8xbf16> to vector<1x1x1x8xbf16>
    tpu.vector_store %arg10[%c0_404, %c0_405, %c1_406, %c0_407], %366 {strides = array<i32>} : memref<2x9x9x8xbf16, #tpu.memory_space<vmem>>, vector<1x1x1x8xbf16>,
    %367 = vector.extract_strided_slice %218 {offsets = [1, 0], sizes = [1, 8], strides = [1, 1]} : vector<32x8xbf16> to vector<1x8xbf16>
    %c0_408 = arith.constant 0 : index
    %c0_409 = arith.constant 0 : index
    %c3_410 = arith.constant 3 : index
    %c0_411 = arith.constant 0 : index
    %368 = vector.load %arg10[%c0_408, %c0_409, %c3_410, %c0_411] : memref<2x9x9x8xbf16, #tpu.memory_space<vmem>>, vector<1x1x1x8xbf16>
    %369 = vector.shape_cast %368 : vector<1x1x1x8xbf16> to vector<1x8xbf16>
    %370 = vector.shape_cast %367 : vector<1x8xbf16> to vector<1x1x1x8xbf16>
    tpu.vector_store %arg10[%c0_408, %c0_409, %c3_410, %c0_411], %370 {strides = array<i32>} : memref<2x9x9x8xbf16, #tpu.memory_space<vmem>>, vector<1x1x1x8xbf16>,
    %371 = vector.extract_strided_slice %218 {offsets = [2, 0], sizes = [1, 8], strides = [1, 1]} : vector<32x8xbf16> to vector<1x8xbf16>
    %c0_412 = arith.constant 0 : index
    %c0_413 = arith.constant 0 : index
    %c5 = arith.constant 5 : index
    %c0_414 = arith.constant 0 : index
    %372 = vector.load %arg10[%c0_412, %c0_413, %c5, %c0_414] : memref<2x9x9x8xbf16, #tpu.memory_space<vmem>>, vector<1x1x1x8xbf16>
    %373 = vector.shape_cast %372 : vector<1x1x1x8xbf16> to vector<1x8xbf16>
    %374 = vector.shape_cast %371 : vector<1x8xbf16> to vector<1x1x1x8xbf16>
    tpu.vector_store %arg10[%c0_412, %c0_413, %c5, %c0_414], %374 {strides = array<i32>} : memref<2x9x9x8xbf16, #tpu.memory_space<vmem>>, vector<1x1x1x8xbf16>,
    %375 = vector.extract_strided_slice %218 {offsets = [3, 0], sizes = [1, 8], strides = [1, 1]} : vector<32x8xbf16> to vector<1x8xbf16>
    %c0_415 = arith.constant 0 : index
    %c0_416 = arith.constant 0 : index
    %c7 = arith.constant 7 : index
    %c0_417 = arith.constant 0 : index
    %376 = vector.load %arg10[%c0_415, %c0_416, %c7, %c0_417] : memref<2x9x9x8xbf16, #tpu.memory_space<vmem>>, vector<1x1x1x8xbf16>
    %377 = vector.shape_cast %376 : vector<1x1x1x8xbf16> to vector<1x8xbf16>
    %378 = vector.shape_cast %375 : vector<1x8xbf16> to vector<1x1x1x8xbf16>
    tpu.vector_store %arg10[%c0_415, %c0_416, %c7, %c0_417], %378 {strides = array<i32>} : memref<2x9x9x8xbf16, #tpu.memory_space<vmem>>, vector<1x1x1x8xbf16>,
    %379 = vector.extract_strided_slice %218 {offsets = [4, 0], sizes = [1, 8], strides = [1, 1]} : vector<32x8xbf16> to vector<1x8xbf16>
    %c0_418 = arith.constant 0 : index
    %c2_419 = arith.constant 2 : index
    %c1_420 = arith.constant 1 : index
    %c0_421 = arith.constant 0 : index
    %380 = vector.load %arg10[%c0_418, %c2_419, %c1_420, %c0_421] : memref<2x9x9x8xbf16, #tpu.memory_space<vmem>>, vector<1x1x1x8xbf16>
    %381 = vector.shape_cast %380 : vector<1x1x1x8xbf16> to vector<1x8xbf16>
    %382 = vector.shape_cast %379 : vector<1x8xbf16> to vector<1x1x1x8xbf16>
    tpu.vector_store %arg10[%c0_418, %c2_419, %c1_420, %c0_421], %382 {strides = array<i32>} : memref<2x9x9x8xbf16, #tpu.memory_space<vmem>>, vector<1x1x1x8xbf16>,
    %383 = vector.extract_strided_slice %218 {offsets = [5, 0], sizes = [1, 8], strides = [1, 1]} : vector<32x8xbf16> to vector<1x8xbf16>
    %c0_422 = arith.constant 0 : index
    %c2_423 = arith.constant 2 : index
    %c3_424 = arith.constant 3 : index
    %c0_425 = arith.constant 0 : index
    %384 = vector.load %arg10[%c0_422, %c2_423, %c3_424, %c0_425] : memref<2x9x9x8xbf16, #tpu.memory_space<vmem>>, vector<1x1x1x8xbf16>
    %385 = vector.shape_cast %384 : vector<1x1x1x8xbf16> to vector<1x8xbf16>
    %386 = vector.shape_cast %383 : vector<1x8xbf16> to vector<1x1x1x8xbf16>
    tpu.vector_store %arg10[%c0_422, %c2_423, %c3_424, %c0_425], %386 {strides = array<i32>} : memref<2x9x9x8xbf16, #tpu.memory_space<vmem>>, vector<1x1x1x8xbf16>,
    %387 = vector.extract_strided_slice %218 {offsets = [6, 0], sizes = [1, 8], strides = [1, 1]} : vector<32x8xbf16> to vector<1x8xbf16>
    %c0_426 = arith.constant 0 : index
    %c2_427 = arith.constant 2 : index
    %c5_428 = arith.constant 5 : index
    %c0_429 = arith.constant 0 : index
    %388 = vector.load %arg10[%c0_426, %c2_427, %c5_428, %c0_429] : memref<2x9x9x8xbf16, #tpu.memory_space<vmem>>, vector<1x1x1x8xbf16>
    %389 = vector.shape_cast %388 : vector<1x1x1x8xbf16> to vector<1x8xbf16>
    %390 = vector.shape_cast %387 : vector<1x8xbf16> to vector<1x1x1x8xbf16>
    tpu.vector_store %arg10[%c0_426, %c2_427, %c5_428, %c0_429], %390 {strides = array<i32>} : memref<2x9x9x8xbf16, #tpu.memory_space<vmem>>, vector<1x1x1x8xbf16>,
    %391 = vector.extract_strided_slice %218 {offsets = [7, 0], sizes = [1, 8], strides = [1, 1]} : vector<32x8xbf16> to vector<1x8xbf16>
    %c0_430 = arith.constant 0 : index
    %c2_431 = arith.constant 2 : index
    %c7_432 = arith.constant 7 : index
    %c0_433 = arith.constant 0 : index
    %392 = vector.load %arg10[%c0_430, %c2_431, %c7_432, %c0_433] : memref<2x9x9x8xbf16, #tpu.memory_space<vmem>>, vector<1x1x1x8xbf16>
    %393 = vector.shape_cast %392 : vector<1x1x1x8xbf16> to vector<1x8xbf16>
    %394 = vector.shape_cast %391 : vector<1x8xbf16> to vector<1x1x1x8xbf16>
    tpu.vector_store %arg10[%c0_430, %c2_431, %c7_432, %c0_433], %394 {strides = array<i32>} : memref<2x9x9x8xbf16, #tpu.memory_space<vmem>>, vector<1x1x1x8xbf16>,
    %395 = vector.extract_strided_slice %218 {offsets = [8, 0], sizes = [1, 8], strides = [1, 1]} : vector<32x8xbf16> to vector<1x8xbf16>
    %c0_434 = arith.constant 0 : index
    %c4_435 = arith.constant 4 : index
    %c1_436 = arith.constant 1 : index
    %c0_437 = arith.constant 0 : index
    %396 = vector.load %arg10[%c0_434, %c4_435, %c1_436, %c0_437] : memref<2x9x9x8xbf16, #tpu.memory_space<vmem>>, vector<1x1x1x8xbf16>
    %397 = vector.shape_cast %396 : vector<1x1x1x8xbf16> to vector<1x8xbf16>
    %398 = vector.shape_cast %395 : vector<1x8xbf16> to vector<1x1x1x8xbf16>
    tpu.vector_store %arg10[%c0_434, %c4_435, %c1_436, %c0_437], %398 {strides = array<i32>} : memref<2x9x9x8xbf16, #tpu.memory_space<vmem>>, vector<1x1x1x8xbf16>,
    %399 = vector.extract_strided_slice %218 {offsets = [9, 0], sizes = [1, 8], strides = [1, 1]} : vector<32x8xbf16> to vector<1x8xbf16>
    %c0_438 = arith.constant 0 : index
    %c4_439 = arith.constant 4 : index
    %c3_440 = arith.constant 3 : index
    %c0_441 = arith.constant 0 : index
    %400 = vector.load %arg10[%c0_438, %c4_439, %c3_440, %c0_441] : memref<2x9x9x8xbf16, #tpu.memory_space<vmem>>, vector<1x1x1x8xbf16>
    %401 = vector.shape_cast %400 : vector<1x1x1x8xbf16> to vector<1x8xbf16>
    %402 = vector.shape_cast %399 : vector<1x8xbf16> to vector<1x1x1x8xbf16>
    tpu.vector_store %arg10[%c0_438, %c4_439, %c3_440, %c0_441], %402 {strides = array<i32>} : memref<2x9x9x8xbf16, #tpu.memory_space<vmem>>, vector<1x1x1x8xbf16>,
    %403 = vector.extract_strided_slice %218 {offsets = [10, 0], sizes = [1, 8], strides = [1, 1]} : vector<32x8xbf16> to vector<1x8xbf16>
    %c0_442 = arith.constant 0 : index
    %c4_443 = arith.constant 4 : index
    %c5_444 = arith.constant 5 : index
    %c0_445 = arith.constant 0 : index
    %404 = vector.load %arg10[%c0_442, %c4_443, %c5_444, %c0_445] : memref<2x9x9x8xbf16, #tpu.memory_space<vmem>>, vector<1x1x1x8xbf16>
    %405 = vector.shape_cast %404 : vector<1x1x1x8xbf16> to vector<1x8xbf16>
    %406 = vector.shape_cast %403 : vector<1x8xbf16> to vector<1x1x1x8xbf16>
    tpu.vector_store %arg10[%c0_442, %c4_443, %c5_444, %c0_445], %406 {strides = array<i32>} : memref<2x9x9x8xbf16, #tpu.memory_space<vmem>>, vector<1x1x1x8xbf16>,
    %407 = vector.extract_strided_slice %218 {offsets = [11, 0], sizes = [1, 8], strides = [1, 1]} : vector<32x8xbf16> to vector<1x8xbf16>
    %c0_446 = arith.constant 0 : index
    %c4_447 = arith.constant 4 : index
    %c7_448 = arith.constant 7 : index
    %c0_449 = arith.constant 0 : index
    %408 = vector.load %arg10[%c0_446, %c4_447, %c7_448, %c0_449] : memref<2x9x9x8xbf16, #tpu.memory_space<vmem>>, vector<1x1x1x8xbf16>
    %409 = vector.shape_cast %408 : vector<1x1x1x8xbf16> to vector<1x8xbf16>
    %410 = vector.shape_cast %407 : vector<1x8xbf16> to vector<1x1x1x8xbf16>
    tpu.vector_store %arg10[%c0_446, %c4_447, %c7_448, %c0_449], %410 {strides = array<i32>} : memref<2x9x9x8xbf16, #tpu.memory_space<vmem>>, vector<1x1x1x8xbf16>,
    %411 = vector.extract_strided_slice %218 {offsets = [12, 0], sizes = [1, 8], strides = [1, 1]} : vector<32x8xbf16> to vector<1x8xbf16>
    %c0_450 = arith.constant 0 : index
    %c6_451 = arith.constant 6 : index
    %c1_452 = arith.constant 1 : index
    %c0_453 = arith.constant 0 : index
    %412 = vector.load %arg10[%c0_450, %c6_451, %c1_452, %c0_453] : memref<2x9x9x8xbf16, #tpu.memory_space<vmem>>, vector<1x1x1x8xbf16>
    %413 = vector.shape_cast %412 : vector<1x1x1x8xbf16> to vector<1x8xbf16>
    %414 = vector.shape_cast %411 : vector<1x8xbf16> to vector<1x1x1x8xbf16>
    tpu.vector_store %arg10[%c0_450, %c6_451, %c1_452, %c0_453], %414 {strides = array<i32>} : memref<2x9x9x8xbf16, #tpu.memory_space<vmem>>, vector<1x1x1x8xbf16>,
    %415 = vector.extract_strided_slice %218 {offsets = [13, 0], sizes = [1, 8], strides = [1, 1]} : vector<32x8xbf16> to vector<1x8xbf16>
    %c0_454 = arith.constant 0 : index
    %c6_455 = arith.constant 6 : index
    %c3_456 = arith.constant 3 : index
    %c0_457 = arith.constant 0 : index
    %416 = vector.load %arg10[%c0_454, %c6_455, %c3_456, %c0_457] : memref<2x9x9x8xbf16, #tpu.memory_space<vmem>>, vector<1x1x1x8xbf16>
    %417 = vector.shape_cast %416 : vector<1x1x1x8xbf16> to vector<1x8xbf16>
    %418 = vector.shape_cast %415 : vector<1x8xbf16> to vector<1x1x1x8xbf16>
    tpu.vector_store %arg10[%c0_454, %c6_455, %c3_456, %c0_457], %418 {strides = array<i32>} : memref<2x9x9x8xbf16, #tpu.memory_space<vmem>>, vector<1x1x1x8xbf16>,
    %419 = vector.extract_strided_slice %218 {offsets = [14, 0], sizes = [1, 8], strides = [1, 1]} : vector<32x8xbf16> to vector<1x8xbf16>
    %c0_458 = arith.constant 0 : index
    %c6_459 = arith.constant 6 : index
    %c5_460 = arith.constant 5 : index
    %c0_461 = arith.constant 0 : index
    %420 = vector.load %arg10[%c0_458, %c6_459, %c5_460, %c0_461] : memref<2x9x9x8xbf16, #tpu.memory_space<vmem>>, vector<1x1x1x8xbf16>
    %421 = vector.shape_cast %420 : vector<1x1x1x8xbf16> to vector<1x8xbf16>
    %422 = vector.shape_cast %419 : vector<1x8xbf16> to vector<1x1x1x8xbf16>
    tpu.vector_store %arg10[%c0_458, %c6_459, %c5_460, %c0_461], %422 {strides = array<i32>} : memref<2x9x9x8xbf16, #tpu.memory_space<vmem>>, vector<1x1x1x8xbf16>,
    %423 = vector.extract_strided_slice %218 {offsets = [15, 0], sizes = [1, 8], strides = [1, 1]} : vector<32x8xbf16> to vector<1x8xbf16>
    %c0_462 = arith.constant 0 : index
    %c6_463 = arith.constant 6 : index
    %c7_464 = arith.constant 7 : index
    %c0_465 = arith.constant 0 : index
    %424 = vector.load %arg10[%c0_462, %c6_463, %c7_464, %c0_465] : memref<2x9x9x8xbf16, #tpu.memory_space<vmem>>, vector<1x1x1x8xbf16>
    %425 = vector.shape_cast %424 : vector<1x1x1x8xbf16> to vector<1x8xbf16>
    %426 = vector.shape_cast %423 : vector<1x8xbf16> to vector<1x1x1x8xbf16>
    tpu.vector_store %arg10[%c0_462, %c6_463, %c7_464, %c0_465], %426 {strides = array<i32>} : memref<2x9x9x8xbf16, #tpu.memory_space<vmem>>, vector<1x1x1x8xbf16>,
    %427 = vector.extract_strided_slice %218 {offsets = [16, 0], sizes = [1, 8], strides = [1, 1]} : vector<32x8xbf16> to vector<1x8xbf16>
    %c1_466 = arith.constant 1 : index
    %c0_467 = arith.constant 0 : index
    %c1_468 = arith.constant 1 : index
    %c0_469 = arith.constant 0 : index
    %428 = vector.load %arg10[%c1_466, %c0_467, %c1_468, %c0_469] : memref<2x9x9x8xbf16, #tpu.memory_space<vmem>>, vector<1x1x1x8xbf16>
    %429 = vector.shape_cast %428 : vector<1x1x1x8xbf16> to vector<1x8xbf16>
    %430 = vector.shape_cast %427 : vector<1x8xbf16> to vector<1x1x1x8xbf16>
    tpu.vector_store %arg10[%c1_466, %c0_467, %c1_468, %c0_469], %430 {strides = array<i32>} : memref<2x9x9x8xbf16, #tpu.memory_space<vmem>>, vector<1x1x1x8xbf16>,
    %431 = vector.extract_strided_slice %218 {offsets = [17, 0], sizes = [1, 8], strides = [1, 1]} : vector<32x8xbf16> to vector<1x8xbf16>
    %c1_470 = arith.constant 1 : index
    %c0_471 = arith.constant 0 : index
    %c3_472 = arith.constant 3 : index
    %c0_473 = arith.constant 0 : index
    %432 = vector.load %arg10[%c1_470, %c0_471, %c3_472, %c0_473] : memref<2x9x9x8xbf16, #tpu.memory_space<vmem>>, vector<1x1x1x8xbf16>
    %433 = vector.shape_cast %432 : vector<1x1x1x8xbf16> to vector<1x8xbf16>
    %434 = vector.shape_cast %431 : vector<1x8xbf16> to vector<1x1x1x8xbf16>
    tpu.vector_store %arg10[%c1_470, %c0_471, %c3_472, %c0_473], %434 {strides = array<i32>} : memref<2x9x9x8xbf16, #tpu.memory_space<vmem>>, vector<1x1x1x8xbf16>,
    %435 = vector.extract_strided_slice %218 {offsets = [18, 0], sizes = [1, 8], strides = [1, 1]} : vector<32x8xbf16> to vector<1x8xbf16>
    %c1_474 = arith.constant 1 : index
    %c0_475 = arith.constant 0 : index
    %c5_476 = arith.constant 5 : index
    %c0_477 = arith.constant 0 : index
    %436 = vector.load %arg10[%c1_474, %c0_475, %c5_476, %c0_477] : memref<2x9x9x8xbf16, #tpu.memory_space<vmem>>, vector<1x1x1x8xbf16>
    %437 = vector.shape_cast %436 : vector<1x1x1x8xbf16> to vector<1x8xbf16>
    %438 = vector.shape_cast %435 : vector<1x8xbf16> to vector<1x1x1x8xbf16>
    tpu.vector_store %arg10[%c1_474, %c0_475, %c5_476, %c0_477], %438 {strides = array<i32>} : memref<2x9x9x8xbf16, #tpu.memory_space<vmem>>, vector<1x1x1x8xbf16>,
    %439 = vector.extract_strided_slice %218 {offsets = [19, 0], sizes = [1, 8], strides = [1, 1]} : vector<32x8xbf16> to vector<1x8xbf16>
    %c1_478 = arith.constant 1 : index
    %c0_479 = arith.constant 0 : index
    %c7_480 = arith.constant 7 : index
    %c0_481 = arith.constant 0 : index
    %440 = vector.load %arg10[%c1_478, %c0_479, %c7_480, %c0_481] : memref<2x9x9x8xbf16, #tpu.memory_space<vmem>>, vector<1x1x1x8xbf16>
    %441 = vector.shape_cast %440 : vector<1x1x1x8xbf16> to vector<1x8xbf16>
    %442 = vector.shape_cast %439 : vector<1x8xbf16> to vector<1x1x1x8xbf16>
    tpu.vector_store %arg10[%c1_478, %c0_479, %c7_480, %c0_481], %442 {strides = array<i32>} : memref<2x9x9x8xbf16, #tpu.memory_space<vmem>>, vector<1x1x1x8xbf16>,
    %443 = vector.extract_strided_slice %218 {offsets = [20, 0], sizes = [1, 8], strides = [1, 1]} : vector<32x8xbf16> to vector<1x8xbf16>
    %c1_482 = arith.constant 1 : index
    %c2_483 = arith.constant 2 : index
    %c1_484 = arith.constant 1 : index
    %c0_485 = arith.constant 0 : index
    %444 = vector.load %arg10[%c1_482, %c2_483, %c1_484, %c0_485] : memref<2x9x9x8xbf16, #tpu.memory_space<vmem>>, vector<1x1x1x8xbf16>
    %445 = vector.shape_cast %444 : vector<1x1x1x8xbf16> to vector<1x8xbf16>
    %446 = vector.shape_cast %443 : vector<1x8xbf16> to vector<1x1x1x8xbf16>
    tpu.vector_store %arg10[%c1_482, %c2_483, %c1_484, %c0_485], %446 {strides = array<i32>} : memref<2x9x9x8xbf16, #tpu.memory_space<vmem>>, vector<1x1x1x8xbf16>,
    %447 = vector.extract_strided_slice %218 {offsets = [21, 0], sizes = [1, 8], strides = [1, 1]} : vector<32x8xbf16> to vector<1x8xbf16>
    %c1_486 = arith.constant 1 : index
    %c2_487 = arith.constant 2 : index
    %c3_488 = arith.constant 3 : index
    %c0_489 = arith.constant 0 : index
    %448 = vector.load %arg10[%c1_486, %c2_487, %c3_488, %c0_489] : memref<2x9x9x8xbf16, #tpu.memory_space<vmem>>, vector<1x1x1x8xbf16>
    %449 = vector.shape_cast %448 : vector<1x1x1x8xbf16> to vector<1x8xbf16>
    %450 = vector.shape_cast %447 : vector<1x8xbf16> to vector<1x1x1x8xbf16>
    tpu.vector_store %arg10[%c1_486, %c2_487, %c3_488, %c0_489], %450 {strides = array<i32>} : memref<2x9x9x8xbf16, #tpu.memory_space<vmem>>, vector<1x1x1x8xbf16>,
    %451 = vector.extract_strided_slice %218 {offsets = [22, 0], sizes = [1, 8], strides = [1, 1]} : vector<32x8xbf16> to vector<1x8xbf16>
    %c1_490 = arith.constant 1 : index
    %c2_491 = arith.constant 2 : index
    %c5_492 = arith.constant 5 : index
    %c0_493 = arith.constant 0 : index
    %452 = vector.load %arg10[%c1_490, %c2_491, %c5_492, %c0_493] : memref<2x9x9x8xbf16, #tpu.memory_space<vmem>>, vector<1x1x1x8xbf16>
    %453 = vector.shape_cast %452 : vector<1x1x1x8xbf16> to vector<1x8xbf16>
    %454 = vector.shape_cast %451 : vector<1x8xbf16> to vector<1x1x1x8xbf16>
    tpu.vector_store %arg10[%c1_490, %c2_491, %c5_492, %c0_493], %454 {strides = array<i32>} : memref<2x9x9x8xbf16, #tpu.memory_space<vmem>>, vector<1x1x1x8xbf16>,
    %455 = vector.extract_strided_slice %218 {offsets = [23, 0], sizes = [1, 8], strides = [1, 1]} : vector<32x8xbf16> to vector<1x8xbf16>
    %c1_494 = arith.constant 1 : index
    %c2_495 = arith.constant 2 : index
    %c7_496 = arith.constant 7 : index
    %c0_497 = arith.constant 0 : index
    %456 = vector.load %arg10[%c1_494, %c2_495, %c7_496, %c0_497] : memref<2x9x9x8xbf16, #tpu.memory_space<vmem>>, vector<1x1x1x8xbf16>
    %457 = vector.shape_cast %456 : vector<1x1x1x8xbf16> to vector<1x8xbf16>
    %458 = vector.shape_cast %455 : vector<1x8xbf16> to vector<1x1x1x8xbf16>
    tpu.vector_store %arg10[%c1_494, %c2_495, %c7_496, %c0_497], %458 {strides = array<i32>} : memref<2x9x9x8xbf16, #tpu.memory_space<vmem>>, vector<1x1x1x8xbf16>,
    %459 = vector.extract_strided_slice %218 {offsets = [24, 0], sizes = [1, 8], strides = [1, 1]} : vector<32x8xbf16> to vector<1x8xbf16>
    %c1_498 = arith.constant 1 : index
    %c4_499 = arith.constant 4 : index
    %c1_500 = arith.constant 1 : index
    %c0_501 = arith.constant 0 : index
    %460 = vector.load %arg10[%c1_498, %c4_499, %c1_500, %c0_501] : memref<2x9x9x8xbf16, #tpu.memory_space<vmem>>, vector<1x1x1x8xbf16>
    %461 = vector.shape_cast %460 : vector<1x1x1x8xbf16> to vector<1x8xbf16>
    %462 = vector.shape_cast %459 : vector<1x8xbf16> to vector<1x1x1x8xbf16>
    tpu.vector_store %arg10[%c1_498, %c4_499, %c1_500, %c0_501], %462 {strides = array<i32>} : memref<2x9x9x8xbf16, #tpu.memory_space<vmem>>, vector<1x1x1x8xbf16>,
    %463 = vector.extract_strided_slice %218 {offsets = [25, 0], sizes = [1, 8], strides = [1, 1]} : vector<32x8xbf16> to vector<1x8xbf16>
    %c1_502 = arith.constant 1 : index
    %c4_503 = arith.constant 4 : index
    %c3_504 = arith.constant 3 : index
    %c0_505 = arith.constant 0 : index
    %464 = vector.load %arg10[%c1_502, %c4_503, %c3_504, %c0_505] : memref<2x9x9x8xbf16, #tpu.memory_space<vmem>>, vector<1x1x1x8xbf16>
    %465 = vector.shape_cast %464 : vector<1x1x1x8xbf16> to vector<1x8xbf16>
    %466 = vector.shape_cast %463 : vector<1x8xbf16> to vector<1x1x1x8xbf16>
    tpu.vector_store %arg10[%c1_502, %c4_503, %c3_504, %c0_505], %466 {strides = array<i32>} : memref<2x9x9x8xbf16, #tpu.memory_space<vmem>>, vector<1x1x1x8xbf16>,
    %467 = vector.extract_strided_slice %218 {offsets = [26, 0], sizes = [1, 8], strides = [1, 1]} : vector<32x8xbf16> to vector<1x8xbf16>
    %c1_506 = arith.constant 1 : index
    %c4_507 = arith.constant 4 : index
    %c5_508 = arith.constant 5 : index
    %c0_509 = arith.constant 0 : index
    %468 = vector.load %arg10[%c1_506, %c4_507, %c5_508, %c0_509] : memref<2x9x9x8xbf16, #tpu.memory_space<vmem>>, vector<1x1x1x8xbf16>
    %469 = vector.shape_cast %468 : vector<1x1x1x8xbf16> to vector<1x8xbf16>
    %470 = vector.shape_cast %467 : vector<1x8xbf16> to vector<1x1x1x8xbf16>
    tpu.vector_store %arg10[%c1_506, %c4_507, %c5_508, %c0_509], %470 {strides = array<i32>} : memref<2x9x9x8xbf16, #tpu.memory_space<vmem>>, vector<1x1x1x8xbf16>,
    %471 = vector.extract_strided_slice %218 {offsets = [27, 0], sizes = [1, 8], strides = [1, 1]} : vector<32x8xbf16> to vector<1x8xbf16>
    %c1_510 = arith.constant 1 : index
    %c4_511 = arith.constant 4 : index
    %c7_512 = arith.constant 7 : index
    %c0_513 = arith.constant 0 : index
    %472 = vector.load %arg10[%c1_510, %c4_511, %c7_512, %c0_513] : memref<2x9x9x8xbf16, #tpu.memory_space<vmem>>, vector<1x1x1x8xbf16>
    %473 = vector.shape_cast %472 : vector<1x1x1x8xbf16> to vector<1x8xbf16>
    %474 = vector.shape_cast %471 : vector<1x8xbf16> to vector<1x1x1x8xbf16>
    tpu.vector_store %arg10[%c1_510, %c4_511, %c7_512, %c0_513], %474 {strides = array<i32>} : memref<2x9x9x8xbf16, #tpu.memory_space<vmem>>, vector<1x1x1x8xbf16>,
    %475 = vector.extract_strided_slice %218 {offsets = [28, 0], sizes = [1, 8], strides = [1, 1]} : vector<32x8xbf16> to vector<1x8xbf16>
    %c1_514 = arith.constant 1 : index
    %c6_515 = arith.constant 6 : index
    %c1_516 = arith.constant 1 : index
    %c0_517 = arith.constant 0 : index
    %476 = vector.load %arg10[%c1_514, %c6_515, %c1_516, %c0_517] : memref<2x9x9x8xbf16, #tpu.memory_space<vmem>>, vector<1x1x1x8xbf16>
    %477 = vector.shape_cast %476 : vector<1x1x1x8xbf16> to vector<1x8xbf16>
    %478 = vector.shape_cast %475 : vector<1x8xbf16> to vector<1x1x1x8xbf16>
    tpu.vector_store %arg10[%c1_514, %c6_515, %c1_516, %c0_517], %478 {strides = array<i32>} : memref<2x9x9x8xbf16, #tpu.memory_space<vmem>>, vector<1x1x1x8xbf16>,
    %479 = vector.extract_strided_slice %218 {offsets = [29, 0], sizes = [1, 8], strides = [1, 1]} : vector<32x8xbf16> to vector<1x8xbf16>
    %c1_518 = arith.constant 1 : index
    %c6_519 = arith.constant 6 : index
    %c3_520 = arith.constant 3 : index
    %c0_521 = arith.constant 0 : index
    %480 = vector.load %arg10[%c1_518, %c6_519, %c3_520, %c0_521] : memref<2x9x9x8xbf16, #tpu.memory_space<vmem>>, vector<1x1x1x8xbf16>
    %481 = vector.shape_cast %480 : vector<1x1x1x8xbf16> to vector<1x8xbf16>
    %482 = vector.shape_cast %479 : vector<1x8xbf16> to vector<1x1x1x8xbf16>
    tpu.vector_store %arg10[%c1_518, %c6_519, %c3_520, %c0_521], %482 {strides = array<i32>} : memref<2x9x9x8xbf16, #tpu.memory_space<vmem>>, vector<1x1x1x8xbf16>,
    %483 = vector.extract_strided_slice %218 {offsets = [30, 0], sizes = [1, 8], strides = [1, 1]} : vector<32x8xbf16> to vector<1x8xbf16>
    %c1_522 = arith.constant 1 : index
    %c6_523 = arith.constant 6 : index
    %c5_524 = arith.constant 5 : index
    %c0_525 = arith.constant 0 : index
    %484 = vector.load %arg10[%c1_522, %c6_523, %c5_524, %c0_525] : memref<2x9x9x8xbf16, #tpu.memory_space<vmem>>, vector<1x1x1x8xbf16>
    %485 = vector.shape_cast %484 : vector<1x1x1x8xbf16> to vector<1x8xbf16>
    %486 = vector.shape_cast %483 : vector<1x8xbf16> to vector<1x1x1x8xbf16>
    tpu.vector_store %arg10[%c1_522, %c6_523, %c5_524, %c0_525], %486 {strides = array<i32>} : memref<2x9x9x8xbf16, #tpu.memory_space<vmem>>, vector<1x1x1x8xbf16>,
    %487 = vector.extract_strided_slice %218 {offsets = [31, 0], sizes = [1, 8], strides = [1, 1]} : vector<32x8xbf16> to vector<1x8xbf16>
    %c1_526 = arith.constant 1 : index
    %c6_527 = arith.constant 6 : index
    %c7_528 = arith.constant 7 : index
    %c0_529 = arith.constant 0 : index
    %488 = vector.load %arg10[%c1_526, %c6_527, %c7_528, %c0_529] : memref<2x9x9x8xbf16, #tpu.memory_space<vmem>>, vector<1x1x1x8xbf16>
    %489 = vector.shape_cast %488 : vector<1x1x1x8xbf16> to vector<1x8xbf16>
    %490 = vector.shape_cast %487 : vector<1x8xbf16> to vector<1x1x1x8xbf16>
    tpu.vector_store %arg10[%c1_526, %c6_527, %c7_528, %c0_529], %490 {strides = array<i32>} : memref<2x9x9x8xbf16, #tpu.memory_space<vmem>>, vector<1x1x1x8xbf16>,
    %491 = vector.extract_strided_slice %225 {offsets = [0, 0], sizes = [1, 8], strides = [1, 1]} : vector<32x8xbf16> to vector<1x8xbf16>
    %c0_530 = arith.constant 0 : index
    %c1_531 = arith.constant 1 : index
    %c0_532 = arith.constant 0 : index
    %c0_533 = arith.constant 0 : index
    %492 = vector.load %arg10[%c0_530, %c1_531, %c0_532, %c0_533] : memref<2x9x9x8xbf16, #tpu.memory_space<vmem>>, vector<1x1x1x8xbf16>
    %493 = vector.shape_cast %492 : vector<1x1x1x8xbf16> to vector<1x8xbf16>
    %494 = vector.shape_cast %491 : vector<1x8xbf16> to vector<1x1x1x8xbf16>
    tpu.vector_store %arg10[%c0_530, %c1_531, %c0_532, %c0_533], %494 {strides = array<i32>} : memref<2x9x9x8xbf16, #tpu.memory_space<vmem>>, vector<1x1x1x8xbf16>,
    %495 = vector.extract_strided_slice %225 {offsets = [1, 0], sizes = [1, 8], strides = [1, 1]} : vector<32x8xbf16> to vector<1x8xbf16>
    %c0_534 = arith.constant 0 : index
    %c1_535 = arith.constant 1 : index
    %c2_536 = arith.constant 2 : index
    %c0_537 = arith.constant 0 : index
    %496 = vector.load %arg10[%c0_534, %c1_535, %c2_536, %c0_537] : memref<2x9x9x8xbf16, #tpu.memory_space<vmem>>, vector<1x1x1x8xbf16>
    %497 = vector.shape_cast %496 : vector<1x1x1x8xbf16> to vector<1x8xbf16>
    %498 = vector.shape_cast %495 : vector<1x8xbf16> to vector<1x1x1x8xbf16>
    tpu.vector_store %arg10[%c0_534, %c1_535, %c2_536, %c0_537], %498 {strides = array<i32>} : memref<2x9x9x8xbf16, #tpu.memory_space<vmem>>, vector<1x1x1x8xbf16>,
    %499 = vector.extract_strided_slice %225 {offsets = [2, 0], sizes = [1, 8], strides = [1, 1]} : vector<32x8xbf16> to vector<1x8xbf16>
    %c0_538 = arith.constant 0 : index
    %c1_539 = arith.constant 1 : index
    %c4_540 = arith.constant 4 : index
    %c0_541 = arith.constant 0 : index
    %500 = vector.load %arg10[%c0_538, %c1_539, %c4_540, %c0_541] : memref<2x9x9x8xbf16, #tpu.memory_space<vmem>>, vector<1x1x1x8xbf16>
    %501 = vector.shape_cast %500 : vector<1x1x1x8xbf16> to vector<1x8xbf16>
    %502 = vector.shape_cast %499 : vector<1x8xbf16> to vector<1x1x1x8xbf16>
    tpu.vector_store %arg10[%c0_538, %c1_539, %c4_540, %c0_541], %502 {strides = array<i32>} : memref<2x9x9x8xbf16, #tpu.memory_space<vmem>>, vector<1x1x1x8xbf16>,
    %503 = vector.extract_strided_slice %225 {offsets = [3, 0], sizes = [1, 8], strides = [1, 1]} : vector<32x8xbf16> to vector<1x8xbf16>
    %c0_542 = arith.constant 0 : index
    %c1_543 = arith.constant 1 : index
    %c6_544 = arith.constant 6 : index
    %c0_545 = arith.constant 0 : index
    %504 = vector.load %arg10[%c0_542, %c1_543, %c6_544, %c0_545] : memref<2x9x9x8xbf16, #tpu.memory_space<vmem>>, vector<1x1x1x8xbf16>
    %505 = vector.shape_cast %504 : vector<1x1x1x8xbf16> to vector<1x8xbf16>
    %506 = vector.shape_cast %503 : vector<1x8xbf16> to vector<1x1x1x8xbf16>
    tpu.vector_store %arg10[%c0_542, %c1_543, %c6_544, %c0_545], %506 {strides = array<i32>} : memref<2x9x9x8xbf16, #tpu.memory_space<vmem>>, vector<1x1x1x8xbf16>,
    %507 = vector.extract_strided_slice %225 {offsets = [4, 0], sizes = [1, 8], strides = [1, 1]} : vector<32x8xbf16> to vector<1x8xbf16>
    %c0_546 = arith.constant 0 : index
    %c3_547 = arith.constant 3 : index
    %c0_548 = arith.constant 0 : index
    %c0_549 = arith.constant 0 : index
    %508 = vector.load %arg10[%c0_546, %c3_547, %c0_548, %c0_549] : memref<2x9x9x8xbf16, #tpu.memory_space<vmem>>, vector<1x1x1x8xbf16>
    %509 = vector.shape_cast %508 : vector<1x1x1x8xbf16> to vector<1x8xbf16>
    %510 = vector.shape_cast %507 : vector<1x8xbf16> to vector<1x1x1x8xbf16>
    tpu.vector_store %arg10[%c0_546, %c3_547, %c0_548, %c0_549], %510 {strides = array<i32>} : memref<2x9x9x8xbf16, #tpu.memory_space<vmem>>, vector<1x1x1x8xbf16>,
    %511 = vector.extract_strided_slice %225 {offsets = [5, 0], sizes = [1, 8], strides = [1, 1]} : vector<32x8xbf16> to vector<1x8xbf16>
    %c0_550 = arith.constant 0 : index
    %c3_551 = arith.constant 3 : index
    %c2_552 = arith.constant 2 : index
    %c0_553 = arith.constant 0 : index
    %512 = vector.load %arg10[%c0_550, %c3_551, %c2_552, %c0_553] : memref<2x9x9x8xbf16, #tpu.memory_space<vmem>>, vector<1x1x1x8xbf16>
    %513 = vector.shape_cast %512 : vector<1x1x1x8xbf16> to vector<1x8xbf16>
    %514 = vector.shape_cast %511 : vector<1x8xbf16> to vector<1x1x1x8xbf16>
    tpu.vector_store %arg10[%c0_550, %c3_551, %c2_552, %c0_553], %514 {strides = array<i32>} : memref<2x9x9x8xbf16, #tpu.memory_space<vmem>>, vector<1x1x1x8xbf16>,
    %515 = vector.extract_strided_slice %225 {offsets = [6, 0], sizes = [1, 8], strides = [1, 1]} : vector<32x8xbf16> to vector<1x8xbf16>
    %c0_554 = arith.constant 0 : index
    %c3_555 = arith.constant 3 : index
    %c4_556 = arith.constant 4 : index
    %c0_557 = arith.constant 0 : index
    %516 = vector.load %arg10[%c0_554, %c3_555, %c4_556, %c0_557] : memref<2x9x9x8xbf16, #tpu.memory_space<vmem>>, vector<1x1x1x8xbf16>
    %517 = vector.shape_cast %516 : vector<1x1x1x8xbf16> to vector<1x8xbf16>
    %518 = vector.shape_cast %515 : vector<1x8xbf16> to vector<1x1x1x8xbf16>
    tpu.vector_store %arg10[%c0_554, %c3_555, %c4_556, %c0_557], %518 {strides = array<i32>} : memref<2x9x9x8xbf16, #tpu.memory_space<vmem>>, vector<1x1x1x8xbf16>,
    %519 = vector.extract_strided_slice %225 {offsets = [7, 0], sizes = [1, 8], strides = [1, 1]} : vector<32x8xbf16> to vector<1x8xbf16>
    %c0_558 = arith.constant 0 : index
    %c3_559 = arith.constant 3 : index
    %c6_560 = arith.constant 6 : index
    %c0_561 = arith.constant 0 : index
    %520 = vector.load %arg10[%c0_558, %c3_559, %c6_560, %c0_561] : memref<2x9x9x8xbf16, #tpu.memory_space<vmem>>, vector<1x1x1x8xbf16>
    %521 = vector.shape_cast %520 : vector<1x1x1x8xbf16> to vector<1x8xbf16>
    %522 = vector.shape_cast %519 : vector<1x8xbf16> to vector<1x1x1x8xbf16>
    tpu.vector_store %arg10[%c0_558, %c3_559, %c6_560, %c0_561], %522 {strides = array<i32>} : memref<2x9x9x8xbf16, #tpu.memory_space<vmem>>, vector<1x1x1x8xbf16>,
    %523 = vector.extract_strided_slice %225 {offsets = [8, 0], sizes = [1, 8], strides = [1, 1]} : vector<32x8xbf16> to vector<1x8xbf16>
    %c0_562 = arith.constant 0 : index
    %c5_563 = arith.constant 5 : index
    %c0_564 = arith.constant 0 : index
    %c0_565 = arith.constant 0 : index
    %524 = vector.load %arg10[%c0_562, %c5_563, %c0_564, %c0_565] : memref<2x9x9x8xbf16, #tpu.memory_space<vmem>>, vector<1x1x1x8xbf16>
    %525 = vector.shape_cast %524 : vector<1x1x1x8xbf16> to vector<1x8xbf16>
    %526 = vector.shape_cast %523 : vector<1x8xbf16> to vector<1x1x1x8xbf16>
    tpu.vector_store %arg10[%c0_562, %c5_563, %c0_564, %c0_565], %526 {strides = array<i32>} : memref<2x9x9x8xbf16, #tpu.memory_space<vmem>>, vector<1x1x1x8xbf16>,
    %527 = vector.extract_strided_slice %225 {offsets = [9, 0], sizes = [1, 8], strides = [1, 1]} : vector<32x8xbf16> to vector<1x8xbf16>
    %c0_566 = arith.constant 0 : index
    %c5_567 = arith.constant 5 : index
    %c2_568 = arith.constant 2 : index
    %c0_569 = arith.constant 0 : index
    %528 = vector.load %arg10[%c0_566, %c5_567, %c2_568, %c0_569] : memref<2x9x9x8xbf16, #tpu.memory_space<vmem>>, vector<1x1x1x8xbf16>
    %529 = vector.shape_cast %528 : vector<1x1x1x8xbf16> to vector<1x8xbf16>
    %530 = vector.shape_cast %527 : vector<1x8xbf16> to vector<1x1x1x8xbf16>
    tpu.vector_store %arg10[%c0_566, %c5_567, %c2_568, %c0_569], %530 {strides = array<i32>} : memref<2x9x9x8xbf16, #tpu.memory_space<vmem>>, vector<1x1x1x8xbf16>,
    %531 = vector.extract_strided_slice %225 {offsets = [10, 0], sizes = [1, 8], strides = [1, 1]} : vector<32x8xbf16> to vector<1x8xbf16>
    %c0_570 = arith.constant 0 : index
    %c5_571 = arith.constant 5 : index
    %c4_572 = arith.constant 4 : index
    %c0_573 = arith.constant 0 : index
    %532 = vector.load %arg10[%c0_570, %c5_571, %c4_572, %c0_573] : memref<2x9x9x8xbf16, #tpu.memory_space<vmem>>, vector<1x1x1x8xbf16>
    %533 = vector.shape_cast %532 : vector<1x1x1x8xbf16> to vector<1x8xbf16>
    %534 = vector.shape_cast %531 : vector<1x8xbf16> to vector<1x1x1x8xbf16>
    tpu.vector_store %arg10[%c0_570, %c5_571, %c4_572, %c0_573], %534 {strides = array<i32>} : memref<2x9x9x8xbf16, #tpu.memory_space<vmem>>, vector<1x1x1x8xbf16>,
    %535 = vector.extract_strided_slice %225 {offsets = [11, 0], sizes = [1, 8], strides = [1, 1]} : vector<32x8xbf16> to vector<1x8xbf16>
    %c0_574 = arith.constant 0 : index
    %c5_575 = arith.constant 5 : index
    %c6_576 = arith.constant 6 : index
    %c0_577 = arith.constant 0 : index
    %536 = vector.load %arg10[%c0_574, %c5_575, %c6_576, %c0_577] : memref<2x9x9x8xbf16, #tpu.memory_space<vmem>>, vector<1x1x1x8xbf16>
    %537 = vector.shape_cast %536 : vector<1x1x1x8xbf16> to vector<1x8xbf16>
    %538 = vector.shape_cast %535 : vector<1x8xbf16> to vector<1x1x1x8xbf16>
    tpu.vector_store %arg10[%c0_574, %c5_575, %c6_576, %c0_577], %538 {strides = array<i32>} : memref<2x9x9x8xbf16, #tpu.memory_space<vmem>>, vector<1x1x1x8xbf16>,
    %539 = vector.extract_strided_slice %225 {offsets = [12, 0], sizes = [1, 8], strides = [1, 1]} : vector<32x8xbf16> to vector<1x8xbf16>
    %c0_578 = arith.constant 0 : index
    %c7_579 = arith.constant 7 : index
    %c0_580 = arith.constant 0 : index
    %c0_581 = arith.constant 0 : index
    %540 = vector.load %arg10[%c0_578, %c7_579, %c0_580, %c0_581] : memref<2x9x9x8xbf16, #tpu.memory_space<vmem>>, vector<1x1x1x8xbf16>
    %541 = vector.shape_cast %540 : vector<1x1x1x8xbf16> to vector<1x8xbf16>
    %542 = vector.shape_cast %539 : vector<1x8xbf16> to vector<1x1x1x8xbf16>
    tpu.vector_store %arg10[%c0_578, %c7_579, %c0_580, %c0_581], %542 {strides = array<i32>} : memref<2x9x9x8xbf16, #tpu.memory_space<vmem>>, vector<1x1x1x8xbf16>,
    %543 = vector.extract_strided_slice %225 {offsets = [13, 0], sizes = [1, 8], strides = [1, 1]} : vector<32x8xbf16> to vector<1x8xbf16>
    %c0_582 = arith.constant 0 : index
    %c7_583 = arith.constant 7 : index
    %c2_584 = arith.constant 2 : index
    %c0_585 = arith.constant 0 : index
    %544 = vector.load %arg10[%c0_582, %c7_583, %c2_584, %c0_585] : memref<2x9x9x8xbf16, #tpu.memory_space<vmem>>, vector<1x1x1x8xbf16>
    %545 = vector.shape_cast %544 : vector<1x1x1x8xbf16> to vector<1x8xbf16>
    %546 = vector.shape_cast %543 : vector<1x8xbf16> to vector<1x1x1x8xbf16>
    tpu.vector_store %arg10[%c0_582, %c7_583, %c2_584, %c0_585], %546 {strides = array<i32>} : memref<2x9x9x8xbf16, #tpu.memory_space<vmem>>, vector<1x1x1x8xbf16>,
    %547 = vector.extract_strided_slice %225 {offsets = [14, 0], sizes = [1, 8], strides = [1, 1]} : vector<32x8xbf16> to vector<1x8xbf16>
    %c0_586 = arith.constant 0 : index
    %c7_587 = arith.constant 7 : index
    %c4_588 = arith.constant 4 : index
    %c0_589 = arith.constant 0 : index
    %548 = vector.load %arg10[%c0_586, %c7_587, %c4_588, %c0_589] : memref<2x9x9x8xbf16, #tpu.memory_space<vmem>>, vector<1x1x1x8xbf16>
    %549 = vector.shape_cast %548 : vector<1x1x1x8xbf16> to vector<1x8xbf16>
    %550 = vector.shape_cast %547 : vector<1x8xbf16> to vector<1x1x1x8xbf16>
    tpu.vector_store %arg10[%c0_586, %c7_587, %c4_588, %c0_589], %550 {strides = array<i32>} : memref<2x9x9x8xbf16, #tpu.memory_space<vmem>>, vector<1x1x1x8xbf16>,
    %551 = vector.extract_strided_slice %225 {offsets = [15, 0], sizes = [1, 8], strides = [1, 1]} : vector<32x8xbf16> to vector<1x8xbf16>
    %c0_590 = arith.constant 0 : index
    %c7_591 = arith.constant 7 : index
    %c6_592 = arith.constant 6 : index
    %c0_593 = arith.constant 0 : index
    %552 = vector.load %arg10[%c0_590, %c7_591, %c6_592, %c0_593] : memref<2x9x9x8xbf16, #tpu.memory_space<vmem>>, vector<1x1x1x8xbf16>
    %553 = vector.shape_cast %552 : vector<1x1x1x8xbf16> to vector<1x8xbf16>
    %554 = vector.shape_cast %551 : vector<1x8xbf16> to vector<1x1x1x8xbf16>
    tpu.vector_store %arg10[%c0_590, %c7_591, %c6_592, %c0_593], %554 {strides = array<i32>} : memref<2x9x9x8xbf16, #tpu.memory_space<vmem>>, vector<1x1x1x8xbf16>,
    %555 = vector.extract_strided_slice %225 {offsets = [16, 0], sizes = [1, 8], strides = [1, 1]} : vector<32x8xbf16> to vector<1x8xbf16>
    %c1_594 = arith.constant 1 : index
    %c1_595 = arith.constant 1 : index
    %c0_596 = arith.constant 0 : index
    %c0_597 = arith.constant 0 : index
    %556 = vector.load %arg10[%c1_594, %c1_595, %c0_596, %c0_597] : memref<2x9x9x8xbf16, #tpu.memory_space<vmem>>, vector<1x1x1x8xbf16>
    %557 = vector.shape_cast %556 : vector<1x1x1x8xbf16> to vector<1x8xbf16>
    %558 = vector.shape_cast %555 : vector<1x8xbf16> to vector<1x1x1x8xbf16>
    tpu.vector_store %arg10[%c1_594, %c1_595, %c0_596, %c0_597], %558 {strides = array<i32>} : memref<2x9x9x8xbf16, #tpu.memory_space<vmem>>, vector<1x1x1x8xbf16>,
    %559 = vector.extract_strided_slice %225 {offsets = [17, 0], sizes = [1, 8], strides = [1, 1]} : vector<32x8xbf16> to vector<1x8xbf16>
    %c1_598 = arith.constant 1 : index
    %c1_599 = arith.constant 1 : index
    %c2_600 = arith.constant 2 : index
    %c0_601 = arith.constant 0 : index
    %560 = vector.load %arg10[%c1_598, %c1_599, %c2_600, %c0_601] : memref<2x9x9x8xbf16, #tpu.memory_space<vmem>>, vector<1x1x1x8xbf16>
    %561 = vector.shape_cast %560 : vector<1x1x1x8xbf16> to vector<1x8xbf16>
    %562 = vector.shape_cast %559 : vector<1x8xbf16> to vector<1x1x1x8xbf16>
    tpu.vector_store %arg10[%c1_598, %c1_599, %c2_600, %c0_601], %562 {strides = array<i32>} : memref<2x9x9x8xbf16, #tpu.memory_space<vmem>>, vector<1x1x1x8xbf16>,
    %563 = vector.extract_strided_slice %225 {offsets = [18, 0], sizes = [1, 8], strides = [1, 1]} : vector<32x8xbf16> to vector<1x8xbf16>
    %c1_602 = arith.constant 1 : index
    %c1_603 = arith.constant 1 : index
    %c4_604 = arith.constant 4 : index
    %c0_605 = arith.constant 0 : index
    %564 = vector.load %arg10[%c1_602, %c1_603, %c4_604, %c0_605] : memref<2x9x9x8xbf16, #tpu.memory_space<vmem>>, vector<1x1x1x8xbf16>
    %565 = vector.shape_cast %564 : vector<1x1x1x8xbf16> to vector<1x8xbf16>
    %566 = vector.shape_cast %563 : vector<1x8xbf16> to vector<1x1x1x8xbf16>
    tpu.vector_store %arg10[%c1_602, %c1_603, %c4_604, %c0_605], %566 {strides = array<i32>} : memref<2x9x9x8xbf16, #tpu.memory_space<vmem>>, vector<1x1x1x8xbf16>,
    %567 = vector.extract_strided_slice %225 {offsets = [19, 0], sizes = [1, 8], strides = [1, 1]} : vector<32x8xbf16> to vector<1x8xbf16>
    %c1_606 = arith.constant 1 : index
    %c1_607 = arith.constant 1 : index
    %c6_608 = arith.constant 6 : index
    %c0_609 = arith.constant 0 : index
    %568 = vector.load %arg10[%c1_606, %c1_607, %c6_608, %c0_609] : memref<2x9x9x8xbf16, #tpu.memory_space<vmem>>, vector<1x1x1x8xbf16>
    %569 = vector.shape_cast %568 : vector<1x1x1x8xbf16> to vector<1x8xbf16>
    %570 = vector.shape_cast %567 : vector<1x8xbf16> to vector<1x1x1x8xbf16>
    tpu.vector_store %arg10[%c1_606, %c1_607, %c6_608, %c0_609], %570 {strides = array<i32>} : memref<2x9x9x8xbf16, #tpu.memory_space<vmem>>, vector<1x1x1x8xbf16>,
    %571 = vector.extract_strided_slice %225 {offsets = [20, 0], sizes = [1, 8], strides = [1, 1]} : vector<32x8xbf16> to vector<1x8xbf16>
    %c1_610 = arith.constant 1 : index
    %c3_611 = arith.constant 3 : index
    %c0_612 = arith.constant 0 : index
    %c0_613 = arith.constant 0 : index
    %572 = vector.load %arg10[%c1_610, %c3_611, %c0_612, %c0_613] : memref<2x9x9x8xbf16, #tpu.memory_space<vmem>>, vector<1x1x1x8xbf16>
    %573 = vector.shape_cast %572 : vector<1x1x1x8xbf16> to vector<1x8xbf16>
    %574 = vector.shape_cast %571 : vector<1x8xbf16> to vector<1x1x1x8xbf16>
    tpu.vector_store %arg10[%c1_610, %c3_611, %c0_612, %c0_613], %574 {strides = array<i32>} : memref<2x9x9x8xbf16, #tpu.memory_space<vmem>>, vector<1x1x1x8xbf16>,
    %575 = vector.extract_strided_slice %225 {offsets = [21, 0], sizes = [1, 8], strides = [1, 1]} : vector<32x8xbf16> to vector<1x8xbf16>
    %c1_614 = arith.constant 1 : index
    %c3_615 = arith.constant 3 : index
    %c2_616 = arith.constant 2 : index
    %c0_617 = arith.constant 0 : index
    %576 = vector.load %arg10[%c1_614, %c3_615, %c2_616, %c0_617] : memref<2x9x9x8xbf16, #tpu.memory_space<vmem>>, vector<1x1x1x8xbf16>
    %577 = vector.shape_cast %576 : vector<1x1x1x8xbf16> to vector<1x8xbf16>
    %578 = vector.shape_cast %575 : vector<1x8xbf16> to vector<1x1x1x8xbf16>
    tpu.vector_store %arg10[%c1_614, %c3_615, %c2_616, %c0_617], %578 {strides = array<i32>} : memref<2x9x9x8xbf16, #tpu.memory_space<vmem>>, vector<1x1x1x8xbf16>,
    %579 = vector.extract_strided_slice %225 {offsets = [22, 0], sizes = [1, 8], strides = [1, 1]} : vector<32x8xbf16> to vector<1x8xbf16>
    %c1_618 = arith.constant 1 : index
    %c3_619 = arith.constant 3 : index
    %c4_620 = arith.constant 4 : index
    %c0_621 = arith.constant 0 : index
    %580 = vector.load %arg10[%c1_618, %c3_619, %c4_620, %c0_621] : memref<2x9x9x8xbf16, #tpu.memory_space<vmem>>, vector<1x1x1x8xbf16>
    %581 = vector.shape_cast %580 : vector<1x1x1x8xbf16> to vector<1x8xbf16>
    %582 = vector.shape_cast %579 : vector<1x8xbf16> to vector<1x1x1x8xbf16>
    tpu.vector_store %arg10[%c1_618, %c3_619, %c4_620, %c0_621], %582 {strides = array<i32>} : memref<2x9x9x8xbf16, #tpu.memory_space<vmem>>, vector<1x1x1x8xbf16>,
    %583 = vector.extract_strided_slice %225 {offsets = [23, 0], sizes = [1, 8], strides = [1, 1]} : vector<32x8xbf16> to vector<1x8xbf16>
    %c1_622 = arith.constant 1 : index
    %c3_623 = arith.constant 3 : index
    %c6_624 = arith.constant 6 : index
    %c0_625 = arith.constant 0 : index
    %584 = vector.load %arg10[%c1_622, %c3_623, %c6_624, %c0_625] : memref<2x9x9x8xbf16, #tpu.memory_space<vmem>>, vector<1x1x1x8xbf16>
    %585 = vector.shape_cast %584 : vector<1x1x1x8xbf16> to vector<1x8xbf16>
    %586 = vector.shape_cast %583 : vector<1x8xbf16> to vector<1x1x1x8xbf16>
    tpu.vector_store %arg10[%c1_622, %c3_623, %c6_624, %c0_625], %586 {strides = array<i32>} : memref<2x9x9x8xbf16, #tpu.memory_space<vmem>>, vector<1x1x1x8xbf16>,
    %587 = vector.extract_strided_slice %225 {offsets = [24, 0], sizes = [1, 8], strides = [1, 1]} : vector<32x8xbf16> to vector<1x8xbf16>
    %c1_626 = arith.constant 1 : index
    %c5_627 = arith.constant 5 : index
    %c0_628 = arith.constant 0 : index
    %c0_629 = arith.constant 0 : index
    %588 = vector.load %arg10[%c1_626, %c5_627, %c0_628, %c0_629] : memref<2x9x9x8xbf16, #tpu.memory_space<vmem>>, vector<1x1x1x8xbf16>
    %589 = vector.shape_cast %588 : vector<1x1x1x8xbf16> to vector<1x8xbf16>
    %590 = vector.shape_cast %587 : vector<1x8xbf16> to vector<1x1x1x8xbf16>
    tpu.vector_store %arg10[%c1_626, %c5_627, %c0_628, %c0_629], %590 {strides = array<i32>} : memref<2x9x9x8xbf16, #tpu.memory_space<vmem>>, vector<1x1x1x8xbf16>,
    %591 = vector.extract_strided_slice %225 {offsets = [25, 0], sizes = [1, 8], strides = [1, 1]} : vector<32x8xbf16> to vector<1x8xbf16>
    %c1_630 = arith.constant 1 : index
    %c5_631 = arith.constant 5 : index
    %c2_632 = arith.constant 2 : index
    %c0_633 = arith.constant 0 : index
    %592 = vector.load %arg10[%c1_630, %c5_631, %c2_632, %c0_633] : memref<2x9x9x8xbf16, #tpu.memory_space<vmem>>, vector<1x1x1x8xbf16>
    %593 = vector.shape_cast %592 : vector<1x1x1x8xbf16> to vector<1x8xbf16>
    %594 = vector.shape_cast %591 : vector<1x8xbf16> to vector<1x1x1x8xbf16>
    tpu.vector_store %arg10[%c1_630, %c5_631, %c2_632, %c0_633], %594 {strides = array<i32>} : memref<2x9x9x8xbf16, #tpu.memory_space<vmem>>, vector<1x1x1x8xbf16>,
    %595 = vector.extract_strided_slice %225 {offsets = [26, 0], sizes = [1, 8], strides = [1, 1]} : vector<32x8xbf16> to vector<1x8xbf16>
    %c1_634 = arith.constant 1 : index
    %c5_635 = arith.constant 5 : index
    %c4_636 = arith.constant 4 : index
    %c0_637 = arith.constant 0 : index
    %596 = vector.load %arg10[%c1_634, %c5_635, %c4_636, %c0_637] : memref<2x9x9x8xbf16, #tpu.memory_space<vmem>>, vector<1x1x1x8xbf16>
    %597 = vector.shape_cast %596 : vector<1x1x1x8xbf16> to vector<1x8xbf16>
    %598 = vector.shape_cast %595 : vector<1x8xbf16> to vector<1x1x1x8xbf16>
    tpu.vector_store %arg10[%c1_634, %c5_635, %c4_636, %c0_637], %598 {strides = array<i32>} : memref<2x9x9x8xbf16, #tpu.memory_space<vmem>>, vector<1x1x1x8xbf16>,
    %599 = vector.extract_strided_slice %225 {offsets = [27, 0], sizes = [1, 8], strides = [1, 1]} : vector<32x8xbf16> to vector<1x8xbf16>
    %c1_638 = arith.constant 1 : index
    %c5_639 = arith.constant 5 : index
    %c6_640 = arith.constant 6 : index
    %c0_641 = arith.constant 0 : index
    %600 = vector.load %arg10[%c1_638, %c5_639, %c6_640, %c0_641] : memref<2x9x9x8xbf16, #tpu.memory_space<vmem>>, vector<1x1x1x8xbf16>
    %601 = vector.shape_cast %600 : vector<1x1x1x8xbf16> to vector<1x8xbf16>
    %602 = vector.shape_cast %599 : vector<1x8xbf16> to vector<1x1x1x8xbf16>
    tpu.vector_store %arg10[%c1_638, %c5_639, %c6_640, %c0_641], %602 {strides = array<i32>} : memref<2x9x9x8xbf16, #tpu.memory_space<vmem>>, vector<1x1x1x8xbf16>,
    %603 = vector.extract_strided_slice %225 {offsets = [28, 0], sizes = [1, 8], strides = [1, 1]} : vector<32x8xbf16> to vector<1x8xbf16>
    %c1_642 = arith.constant 1 : index
    %c7_643 = arith.constant 7 : index
    %c0_644 = arith.constant 0 : index
    %c0_645 = arith.constant 0 : index
    %604 = vector.load %arg10[%c1_642, %c7_643, %c0_644, %c0_645] : memref<2x9x9x8xbf16, #tpu.memory_space<vmem>>, vector<1x1x1x8xbf16>
    %605 = vector.shape_cast %604 : vector<1x1x1x8xbf16> to vector<1x8xbf16>
    %606 = vector.shape_cast %603 : vector<1x8xbf16> to vector<1x1x1x8xbf16>
    tpu.vector_store %arg10[%c1_642, %c7_643, %c0_644, %c0_645], %606 {strides = array<i32>} : memref<2x9x9x8xbf16, #tpu.memory_space<vmem>>, vector<1x1x1x8xbf16>,
    %607 = vector.extract_strided_slice %225 {offsets = [29, 0], sizes = [1, 8], strides = [1, 1]} : vector<32x8xbf16> to vector<1x8xbf16>
    %c1_646 = arith.constant 1 : index
    %c7_647 = arith.constant 7 : index
    %c2_648 = arith.constant 2 : index
    %c0_649 = arith.constant 0 : index
    %608 = vector.load %arg10[%c1_646, %c7_647, %c2_648, %c0_649] : memref<2x9x9x8xbf16, #tpu.memory_space<vmem>>, vector<1x1x1x8xbf16>
    %609 = vector.shape_cast %608 : vector<1x1x1x8xbf16> to vector<1x8xbf16>
    %610 = vector.shape_cast %607 : vector<1x8xbf16> to vector<1x1x1x8xbf16>
    tpu.vector_store %arg10[%c1_646, %c7_647, %c2_648, %c0_649], %610 {strides = array<i32>} : memref<2x9x9x8xbf16, #tpu.memory_space<vmem>>, vector<1x1x1x8xbf16>,
    %611 = vector.extract_strided_slice %225 {offsets = [30, 0], sizes = [1, 8], strides = [1, 1]} : vector<32x8xbf16> to vector<1x8xbf16>
    %c1_650 = arith.constant 1 : index
    %c7_651 = arith.constant 7 : index
    %c4_652 = arith.constant 4 : index
    %c0_653 = arith.constant 0 : index
    %612 = vector.load %arg10[%c1_650, %c7_651, %c4_652, %c0_653] : memref<2x9x9x8xbf16, #tpu.memory_space<vmem>>, vector<1x1x1x8xbf16>
    %613 = vector.shape_cast %612 : vector<1x1x1x8xbf16> to vector<1x8xbf16>
    %614 = vector.shape_cast %611 : vector<1x8xbf16> to vector<1x1x1x8xbf16>
    tpu.vector_store %arg10[%c1_650, %c7_651, %c4_652, %c0_653], %614 {strides = array<i32>} : memref<2x9x9x8xbf16, #tpu.memory_space<vmem>>, vector<1x1x1x8xbf16>,
    %615 = vector.extract_strided_slice %225 {offsets = [31, 0], sizes = [1, 8], strides = [1, 1]} : vector<32x8xbf16> to vector<1x8xbf16>
    %c1_654 = arith.constant 1 : index
    %c7_655 = arith.constant 7 : index
    %c6_656 = arith.constant 6 : index
    %c0_657 = arith.constant 0 : index
    %616 = vector.load %arg10[%c1_654, %c7_655, %c6_656, %c0_657] : memref<2x9x9x8xbf16, #tpu.memory_space<vmem>>, vector<1x1x1x8xbf16>
    %617 = vector.shape_cast %616 : vector<1x1x1x8xbf16> to vector<1x8xbf16>
    %618 = vector.shape_cast %615 : vector<1x8xbf16> to vector<1x1x1x8xbf16>
    tpu.vector_store %arg10[%c1_654, %c7_655, %c6_656, %c0_657], %618 {strides = array<i32>} : memref<2x9x9x8xbf16, #tpu.memory_space<vmem>>, vector<1x1x1x8xbf16>,
    %619 = vector.extract_strided_slice %232 {offsets = [0, 0], sizes = [1, 8], strides = [1, 1]} : vector<32x8xbf16> to vector<1x8xbf16>
    %c0_658 = arith.constant 0 : index
    %c1_659 = arith.constant 1 : index
    %c1_660 = arith.constant 1 : index
    %c0_661 = arith.constant 0 : index
    %620 = vector.load %arg10[%c0_658, %c1_659, %c1_660, %c0_661] : memref<2x9x9x8xbf16, #tpu.memory_space<vmem>>, vector<1x1x1x8xbf16>
    %621 = vector.shape_cast %620 : vector<1x1x1x8xbf16> to vector<1x8xbf16>
    %622 = vector.shape_cast %619 : vector<1x8xbf16> to vector<1x1x1x8xbf16>
    tpu.vector_store %arg10[%c0_658, %c1_659, %c1_660, %c0_661], %622 {strides = array<i32>} : memref<2x9x9x8xbf16, #tpu.memory_space<vmem>>, vector<1x1x1x8xbf16>,
    %623 = vector.extract_strided_slice %232 {offsets = [1, 0], sizes = [1, 8], strides = [1, 1]} : vector<32x8xbf16> to vector<1x8xbf16>
    %c0_662 = arith.constant 0 : index
    %c1_663 = arith.constant 1 : index
    %c3_664 = arith.constant 3 : index
    %c0_665 = arith.constant 0 : index
    %624 = vector.load %arg10[%c0_662, %c1_663, %c3_664, %c0_665] : memref<2x9x9x8xbf16, #tpu.memory_space<vmem>>, vector<1x1x1x8xbf16>
    %625 = vector.shape_cast %624 : vector<1x1x1x8xbf16> to vector<1x8xbf16>
    %626 = vector.shape_cast %623 : vector<1x8xbf16> to vector<1x1x1x8xbf16>
    tpu.vector_store %arg10[%c0_662, %c1_663, %c3_664, %c0_665], %626 {strides = array<i32>} : memref<2x9x9x8xbf16, #tpu.memory_space<vmem>>, vector<1x1x1x8xbf16>,
    %627 = vector.extract_strided_slice %232 {offsets = [2, 0], sizes = [1, 8], strides = [1, 1]} : vector<32x8xbf16> to vector<1x8xbf16>
    %c0_666 = arith.constant 0 : index
    %c1_667 = arith.constant 1 : index
    %c5_668 = arith.constant 5 : index
    %c0_669 = arith.constant 0 : index
    %628 = vector.load %arg10[%c0_666, %c1_667, %c5_668, %c0_669] : memref<2x9x9x8xbf16, #tpu.memory_space<vmem>>, vector<1x1x1x8xbf16>
    %629 = vector.shape_cast %628 : vector<1x1x1x8xbf16> to vector<1x8xbf16>
    %630 = vector.shape_cast %627 : vector<1x8xbf16> to vector<1x1x1x8xbf16>
    tpu.vector_store %arg10[%c0_666, %c1_667, %c5_668, %c0_669], %630 {strides = array<i32>} : memref<2x9x9x8xbf16, #tpu.memory_space<vmem>>, vector<1x1x1x8xbf16>,
    %631 = vector.extract_strided_slice %232 {offsets = [3, 0], sizes = [1, 8], strides = [1, 1]} : vector<32x8xbf16> to vector<1x8xbf16>
    %c0_670 = arith.constant 0 : index
    %c1_671 = arith.constant 1 : index
    %c7_672 = arith.constant 7 : index
    %c0_673 = arith.constant 0 : index
    %632 = vector.load %arg10[%c0_670, %c1_671, %c7_672, %c0_673] : memref<2x9x9x8xbf16, #tpu.memory_space<vmem>>, vector<1x1x1x8xbf16>
    %633 = vector.shape_cast %632 : vector<1x1x1x8xbf16> to vector<1x8xbf16>
    %634 = vector.shape_cast %631 : vector<1x8xbf16> to vector<1x1x1x8xbf16>
    tpu.vector_store %arg10[%c0_670, %c1_671, %c7_672, %c0_673], %634 {strides = array<i32>} : memref<2x9x9x8xbf16, #tpu.memory_space<vmem>>, vector<1x1x1x8xbf16>,
    %635 = vector.extract_strided_slice %232 {offsets = [4, 0], sizes = [1, 8], strides = [1, 1]} : vector<32x8xbf16> to vector<1x8xbf16>
    %c0_674 = arith.constant 0 : index
    %c3_675 = arith.constant 3 : index
    %c1_676 = arith.constant 1 : index
    %c0_677 = arith.constant 0 : index
    %636 = vector.load %arg10[%c0_674, %c3_675, %c1_676, %c0_677] : memref<2x9x9x8xbf16, #tpu.memory_space<vmem>>, vector<1x1x1x8xbf16>
    %637 = vector.shape_cast %636 : vector<1x1x1x8xbf16> to vector<1x8xbf16>
    %638 = vector.shape_cast %635 : vector<1x8xbf16> to vector<1x1x1x8xbf16>
    tpu.vector_store %arg10[%c0_674, %c3_675, %c1_676, %c0_677], %638 {strides = array<i32>} : memref<2x9x9x8xbf16, #tpu.memory_space<vmem>>, vector<1x1x1x8xbf16>,
    %639 = vector.extract_strided_slice %232 {offsets = [5, 0], sizes = [1, 8], strides = [1, 1]} : vector<32x8xbf16> to vector<1x8xbf16>
    %c0_678 = arith.constant 0 : index
    %c3_679 = arith.constant 3 : index
    %c3_680 = arith.constant 3 : index
    %c0_681 = arith.constant 0 : index
    %640 = vector.load %arg10[%c0_678, %c3_679, %c3_680, %c0_681] : memref<2x9x9x8xbf16, #tpu.memory_space<vmem>>, vector<1x1x1x8xbf16>
    %641 = vector.shape_cast %640 : vector<1x1x1x8xbf16> to vector<1x8xbf16>
    %642 = vector.shape_cast %639 : vector<1x8xbf16> to vector<1x1x1x8xbf16>
    tpu.vector_store %arg10[%c0_678, %c3_679, %c3_680, %c0_681], %642 {strides = array<i32>} : memref<2x9x9x8xbf16, #tpu.memory_space<vmem>>, vector<1x1x1x8xbf16>,
    %643 = vector.extract_strided_slice %232 {offsets = [6, 0], sizes = [1, 8], strides = [1, 1]} : vector<32x8xbf16> to vector<1x8xbf16>
    %c0_682 = arith.constant 0 : index
    %c3_683 = arith.constant 3 : index
    %c5_684 = arith.constant 5 : index
    %c0_685 = arith.constant 0 : index
    %644 = vector.load %arg10[%c0_682, %c3_683, %c5_684, %c0_685] : memref<2x9x9x8xbf16, #tpu.memory_space<vmem>>, vector<1x1x1x8xbf16>
    %645 = vector.shape_cast %644 : vector<1x1x1x8xbf16> to vector<1x8xbf16>
    %646 = vector.shape_cast %643 : vector<1x8xbf16> to vector<1x1x1x8xbf16>
    tpu.vector_store %arg10[%c0_682, %c3_683, %c5_684, %c0_685], %646 {strides = array<i32>} : memref<2x9x9x8xbf16, #tpu.memory_space<vmem>>, vector<1x1x1x8xbf16>,
    %647 = vector.extract_strided_slice %232 {offsets = [7, 0], sizes = [1, 8], strides = [1, 1]} : vector<32x8xbf16> to vector<1x8xbf16>
    %c0_686 = arith.constant 0 : index
    %c3_687 = arith.constant 3 : index
    %c7_688 = arith.constant 7 : index
    %c0_689 = arith.constant 0 : index
    %648 = vector.load %arg10[%c0_686, %c3_687, %c7_688, %c0_689] : memref<2x9x9x8xbf16, #tpu.memory_space<vmem>>, vector<1x1x1x8xbf16>
    %649 = vector.shape_cast %648 : vector<1x1x1x8xbf16> to vector<1x8xbf16>
    %650 = vector.shape_cast %647 : vector<1x8xbf16> to vector<1x1x1x8xbf16>
    tpu.vector_store %arg10[%c0_686, %c3_687, %c7_688, %c0_689], %650 {strides = array<i32>} : memref<2x9x9x8xbf16, #tpu.memory_space<vmem>>, vector<1x1x1x8xbf16>,
    %651 = vector.extract_strided_slice %232 {offsets = [8, 0], sizes = [1, 8], strides = [1, 1]} : vector<32x8xbf16> to vector<1x8xbf16>
    %c0_690 = arith.constant 0 : index
    %c5_691 = arith.constant 5 : index
    %c1_692 = arith.constant 1 : index
    %c0_693 = arith.constant 0 : index
    %652 = vector.load %arg10[%c0_690, %c5_691, %c1_692, %c0_693] : memref<2x9x9x8xbf16, #tpu.memory_space<vmem>>, vector<1x1x1x8xbf16>
    %653 = vector.shape_cast %652 : vector<1x1x1x8xbf16> to vector<1x8xbf16>
    %654 = vector.shape_cast %651 : vector<1x8xbf16> to vector<1x1x1x8xbf16>
    tpu.vector_store %arg10[%c0_690, %c5_691, %c1_692, %c0_693], %654 {strides = array<i32>} : memref<2x9x9x8xbf16, #tpu.memory_space<vmem>>, vector<1x1x1x8xbf16>,
    %655 = vector.extract_strided_slice %232 {offsets = [9, 0], sizes = [1, 8], strides = [1, 1]} : vector<32x8xbf16> to vector<1x8xbf16>
    %c0_694 = arith.constant 0 : index
    %c5_695 = arith.constant 5 : index
    %c3_696 = arith.constant 3 : index
    %c0_697 = arith.constant 0 : index
    %656 = vector.load %arg10[%c0_694, %c5_695, %c3_696, %c0_697] : memref<2x9x9x8xbf16, #tpu.memory_space<vmem>>, vector<1x1x1x8xbf16>
    %657 = vector.shape_cast %656 : vector<1x1x1x8xbf16> to vector<1x8xbf16>
    %658 = vector.shape_cast %655 : vector<1x8xbf16> to vector<1x1x1x8xbf16>
    tpu.vector_store %arg10[%c0_694, %c5_695, %c3_696, %c0_697], %658 {strides = array<i32>} : memref<2x9x9x8xbf16, #tpu.memory_space<vmem>>, vector<1x1x1x8xbf16>,
    %659 = vector.extract_strided_slice %232 {offsets = [10, 0], sizes = [1, 8], strides = [1, 1]} : vector<32x8xbf16> to vector<1x8xbf16>
    %c0_698 = arith.constant 0 : index
    %c5_699 = arith.constant 5 : index
    %c5_700 = arith.constant 5 : index
    %c0_701 = arith.constant 0 : index
    %660 = vector.load %arg10[%c0_698, %c5_699, %c5_700, %c0_701] : memref<2x9x9x8xbf16, #tpu.memory_space<vmem>>, vector<1x1x1x8xbf16>
    %661 = vector.shape_cast %660 : vector<1x1x1x8xbf16> to vector<1x8xbf16>
    %662 = vector.shape_cast %659 : vector<1x8xbf16> to vector<1x1x1x8xbf16>
    tpu.vector_store %arg10[%c0_698, %c5_699, %c5_700, %c0_701], %662 {strides = array<i32>} : memref<2x9x9x8xbf16, #tpu.memory_space<vmem>>, vector<1x1x1x8xbf16>,
    %663 = vector.extract_strided_slice %232 {offsets = [11, 0], sizes = [1, 8], strides = [1, 1]} : vector<32x8xbf16> to vector<1x8xbf16>
    %c0_702 = arith.constant 0 : index
    %c5_703 = arith.constant 5 : index
    %c7_704 = arith.constant 7 : index
    %c0_705 = arith.constant 0 : index
    %664 = vector.load %arg10[%c0_702, %c5_703, %c7_704, %c0_705] : memref<2x9x9x8xbf16, #tpu.memory_space<vmem>>, vector<1x1x1x8xbf16>
    %665 = vector.shape_cast %664 : vector<1x1x1x8xbf16> to vector<1x8xbf16>
    %666 = vector.shape_cast %663 : vector<1x8xbf16> to vector<1x1x1x8xbf16>
    tpu.vector_store %arg10[%c0_702, %c5_703, %c7_704, %c0_705], %666 {strides = array<i32>} : memref<2x9x9x8xbf16, #tpu.memory_space<vmem>>, vector<1x1x1x8xbf16>,
    %667 = vector.extract_strided_slice %232 {offsets = [12, 0], sizes = [1, 8], strides = [1, 1]} : vector<32x8xbf16> to vector<1x8xbf16>
    %c0_706 = arith.constant 0 : index
    %c7_707 = arith.constant 7 : index
    %c1_708 = arith.constant 1 : index
    %c0_709 = arith.constant 0 : index
    %668 = vector.load %arg10[%c0_706, %c7_707, %c1_708, %c0_709] : memref<2x9x9x8xbf16, #tpu.memory_space<vmem>>, vector<1x1x1x8xbf16>
    %669 = vector.shape_cast %668 : vector<1x1x1x8xbf16> to vector<1x8xbf16>
    %670 = vector.shape_cast %667 : vector<1x8xbf16> to vector<1x1x1x8xbf16>
    tpu.vector_store %arg10[%c0_706, %c7_707, %c1_708, %c0_709], %670 {strides = array<i32>} : memref<2x9x9x8xbf16, #tpu.memory_space<vmem>>, vector<1x1x1x8xbf16>,
    %671 = vector.extract_strided_slice %232 {offsets = [13, 0], sizes = [1, 8], strides = [1, 1]} : vector<32x8xbf16> to vector<1x8xbf16>
    %c0_710 = arith.constant 0 : index
    %c7_711 = arith.constant 7 : index
    %c3_712 = arith.constant 3 : index
    %c0_713 = arith.constant 0 : index
    %672 = vector.load %arg10[%c0_710, %c7_711, %c3_712, %c0_713] : memref<2x9x9x8xbf16, #tpu.memory_space<vmem>>, vector<1x1x1x8xbf16>
    %673 = vector.shape_cast %672 : vector<1x1x1x8xbf16> to vector<1x8xbf16>
    %674 = vector.shape_cast %671 : vector<1x8xbf16> to vector<1x1x1x8xbf16>
    tpu.vector_store %arg10[%c0_710, %c7_711, %c3_712, %c0_713], %674 {strides = array<i32>} : memref<2x9x9x8xbf16, #tpu.memory_space<vmem>>, vector<1x1x1x8xbf16>,
    %675 = vector.extract_strided_slice %232 {offsets = [14, 0], sizes = [1, 8], strides = [1, 1]} : vector<32x8xbf16> to vector<1x8xbf16>
    %c0_714 = arith.constant 0 : index
    %c7_715 = arith.constant 7 : index
    %c5_716 = arith.constant 5 : index
    %c0_717 = arith.constant 0 : index
    %676 = vector.load %arg10[%c0_714, %c7_715, %c5_716, %c0_717] : memref<2x9x9x8xbf16, #tpu.memory_space<vmem>>, vector<1x1x1x8xbf16>
    %677 = vector.shape_cast %676 : vector<1x1x1x8xbf16> to vector<1x8xbf16>
    %678 = vector.shape_cast %675 : vector<1x8xbf16> to vector<1x1x1x8xbf16>
    tpu.vector_store %arg10[%c0_714, %c7_715, %c5_716, %c0_717], %678 {strides = array<i32>} : memref<2x9x9x8xbf16, #tpu.memory_space<vmem>>, vector<1x1x1x8xbf16>,
    %679 = vector.extract_strided_slice %232 {offsets = [15, 0], sizes = [1, 8], strides = [1, 1]} : vector<32x8xbf16> to vector<1x8xbf16>
    %c0_718 = arith.constant 0 : index
    %c7_719 = arith.constant 7 : index
    %c7_720 = arith.constant 7 : index
    %c0_721 = arith.constant 0 : index
    %680 = vector.load %arg10[%c0_718, %c7_719, %c7_720, %c0_721] : memref<2x9x9x8xbf16, #tpu.memory_space<vmem>>, vector<1x1x1x8xbf16>
    %681 = vector.shape_cast %680 : vector<1x1x1x8xbf16> to vector<1x8xbf16>
    %682 = vector.shape_cast %679 : vector<1x8xbf16> to vector<1x1x1x8xbf16>
    tpu.vector_store %arg10[%c0_718, %c7_719, %c7_720, %c0_721], %682 {strides = array<i32>} : memref<2x9x9x8xbf16, #tpu.memory_space<vmem>>, vector<1x1x1x8xbf16>,
    %683 = vector.extract_strided_slice %232 {offsets = [16, 0], sizes = [1, 8], strides = [1, 1]} : vector<32x8xbf16> to vector<1x8xbf16>
    %c1_722 = arith.constant 1 : index
    %c1_723 = arith.constant 1 : index
    %c1_724 = arith.constant 1 : index
    %c0_725 = arith.constant 0 : index
    %684 = vector.load %arg10[%c1_722, %c1_723, %c1_724, %c0_725] : memref<2x9x9x8xbf16, #tpu.memory_space<vmem>>, vector<1x1x1x8xbf16>
    %685 = vector.shape_cast %684 : vector<1x1x1x8xbf16> to vector<1x8xbf16>
    %686 = vector.shape_cast %683 : vector<1x8xbf16> to vector<1x1x1x8xbf16>
    tpu.vector_store %arg10[%c1_722, %c1_723, %c1_724, %c0_725], %686 {strides = array<i32>} : memref<2x9x9x8xbf16, #tpu.memory_space<vmem>>, vector<1x1x1x8xbf16>,
    %687 = vector.extract_strided_slice %232 {offsets = [17, 0], sizes = [1, 8], strides = [1, 1]} : vector<32x8xbf16> to vector<1x8xbf16>
    %c1_726 = arith.constant 1 : index
    %c1_727 = arith.constant 1 : index
    %c3_728 = arith.constant 3 : index
    %c0_729 = arith.constant 0 : index
    %688 = vector.load %arg10[%c1_726, %c1_727, %c3_728, %c0_729] : memref<2x9x9x8xbf16, #tpu.memory_space<vmem>>, vector<1x1x1x8xbf16>
    %689 = vector.shape_cast %688 : vector<1x1x1x8xbf16> to vector<1x8xbf16>
    %690 = vector.shape_cast %687 : vector<1x8xbf16> to vector<1x1x1x8xbf16>
    tpu.vector_store %arg10[%c1_726, %c1_727, %c3_728, %c0_729], %690 {strides = array<i32>} : memref<2x9x9x8xbf16, #tpu.memory_space<vmem>>, vector<1x1x1x8xbf16>,
    %691 = vector.extract_strided_slice %232 {offsets = [18, 0], sizes = [1, 8], strides = [1, 1]} : vector<32x8xbf16> to vector<1x8xbf16>
    %c1_730 = arith.constant 1 : index
    %c1_731 = arith.constant 1 : index
    %c5_732 = arith.constant 5 : index
    %c0_733 = arith.constant 0 : index
    %692 = vector.load %arg10[%c1_730, %c1_731, %c5_732, %c0_733] : memref<2x9x9x8xbf16, #tpu.memory_space<vmem>>, vector<1x1x1x8xbf16>
    %693 = vector.shape_cast %692 : vector<1x1x1x8xbf16> to vector<1x8xbf16>
    %694 = vector.shape_cast %691 : vector<1x8xbf16> to vector<1x1x1x8xbf16>
    tpu.vector_store %arg10[%c1_730, %c1_731, %c5_732, %c0_733], %694 {strides = array<i32>} : memref<2x9x9x8xbf16, #tpu.memory_space<vmem>>, vector<1x1x1x8xbf16>,
    %695 = vector.extract_strided_slice %232 {offsets = [19, 0], sizes = [1, 8], strides = [1, 1]} : vector<32x8xbf16> to vector<1x8xbf16>
    %c1_734 = arith.constant 1 : index
    %c1_735 = arith.constant 1 : index
    %c7_736 = arith.constant 7 : index
    %c0_737 = arith.constant 0 : index
    %696 = vector.load %arg10[%c1_734, %c1_735, %c7_736, %c0_737] : memref<2x9x9x8xbf16, #tpu.memory_space<vmem>>, vector<1x1x1x8xbf16>
    %697 = vector.shape_cast %696 : vector<1x1x1x8xbf16> to vector<1x8xbf16>
    %698 = vector.shape_cast %695 : vector<1x8xbf16> to vector<1x1x1x8xbf16>
    tpu.vector_store %arg10[%c1_734, %c1_735, %c7_736, %c0_737], %698 {strides = array<i32>} : memref<2x9x9x8xbf16, #tpu.memory_space<vmem>>, vector<1x1x1x8xbf16>,
    %699 = vector.extract_strided_slice %232 {offsets = [20, 0], sizes = [1, 8], strides = [1, 1]} : vector<32x8xbf16> to vector<1x8xbf16>
    %c1_738 = arith.constant 1 : index
    %c3_739 = arith.constant 3 : index
    %c1_740 = arith.constant 1 : index
    %c0_741 = arith.constant 0 : index
    %700 = vector.load %arg10[%c1_738, %c3_739, %c1_740, %c0_741] : memref<2x9x9x8xbf16, #tpu.memory_space<vmem>>, vector<1x1x1x8xbf16>
    %701 = vector.shape_cast %700 : vector<1x1x1x8xbf16> to vector<1x8xbf16>
    %702 = vector.shape_cast %699 : vector<1x8xbf16> to vector<1x1x1x8xbf16>
    tpu.vector_store %arg10[%c1_738, %c3_739, %c1_740, %c0_741], %702 {strides = array<i32>} : memref<2x9x9x8xbf16, #tpu.memory_space<vmem>>, vector<1x1x1x8xbf16>,
    %703 = vector.extract_strided_slice %232 {offsets = [21, 0], sizes = [1, 8], strides = [1, 1]} : vector<32x8xbf16> to vector<1x8xbf16>
    %c1_742 = arith.constant 1 : index
    %c3_743 = arith.constant 3 : index
    %c3_744 = arith.constant 3 : index
    %c0_745 = arith.constant 0 : index
    %704 = vector.load %arg10[%c1_742, %c3_743, %c3_744, %c0_745] : memref<2x9x9x8xbf16, #tpu.memory_space<vmem>>, vector<1x1x1x8xbf16>
    %705 = vector.shape_cast %704 : vector<1x1x1x8xbf16> to vector<1x8xbf16>
    %706 = vector.shape_cast %703 : vector<1x8xbf16> to vector<1x1x1x8xbf16>
    tpu.vector_store %arg10[%c1_742, %c3_743, %c3_744, %c0_745], %706 {strides = array<i32>} : memref<2x9x9x8xbf16, #tpu.memory_space<vmem>>, vector<1x1x1x8xbf16>,
    %707 = vector.extract_strided_slice %232 {offsets = [22, 0], sizes = [1, 8], strides = [1, 1]} : vector<32x8xbf16> to vector<1x8xbf16>
    %c1_746 = arith.constant 1 : index
    %c3_747 = arith.constant 3 : index
    %c5_748 = arith.constant 5 : index
    %c0_749 = arith.constant 0 : index
    %708 = vector.load %arg10[%c1_746, %c3_747, %c5_748, %c0_749] : memref<2x9x9x8xbf16, #tpu.memory_space<vmem>>, vector<1x1x1x8xbf16>
    %709 = vector.shape_cast %708 : vector<1x1x1x8xbf16> to vector<1x8xbf16>
    %710 = vector.shape_cast %707 : vector<1x8xbf16> to vector<1x1x1x8xbf16>
    tpu.vector_store %arg10[%c1_746, %c3_747, %c5_748, %c0_749], %710 {strides = array<i32>} : memref<2x9x9x8xbf16, #tpu.memory_space<vmem>>, vector<1x1x1x8xbf16>,
    %711 = vector.extract_strided_slice %232 {offsets = [23, 0], sizes = [1, 8], strides = [1, 1]} : vector<32x8xbf16> to vector<1x8xbf16>
    %c1_750 = arith.constant 1 : index
    %c3_751 = arith.constant 3 : index
    %c7_752 = arith.constant 7 : index
    %c0_753 = arith.constant 0 : index
    %712 = vector.load %arg10[%c1_750, %c3_751, %c7_752, %c0_753] : memref<2x9x9x8xbf16, #tpu.memory_space<vmem>>, vector<1x1x1x8xbf16>
    %713 = vector.shape_cast %712 : vector<1x1x1x8xbf16> to vector<1x8xbf16>
    %714 = vector.shape_cast %711 : vector<1x8xbf16> to vector<1x1x1x8xbf16>
    tpu.vector_store %arg10[%c1_750, %c3_751, %c7_752, %c0_753], %714 {strides = array<i32>} : memref<2x9x9x8xbf16, #tpu.memory_space<vmem>>, vector<1x1x1x8xbf16>,
    %715 = vector.extract_strided_slice %232 {offsets = [24, 0], sizes = [1, 8], strides = [1, 1]} : vector<32x8xbf16> to vector<1x8xbf16>
    %c1_754 = arith.constant 1 : index
    %c5_755 = arith.constant 5 : index
    %c1_756 = arith.constant 1 : index
    %c0_757 = arith.constant 0 : index
    %716 = vector.load %arg10[%c1_754, %c5_755, %c1_756, %c0_757] : memref<2x9x9x8xbf16, #tpu.memory_space<vmem>>, vector<1x1x1x8xbf16>
    %717 = vector.shape_cast %716 : vector<1x1x1x8xbf16> to vector<1x8xbf16>
    %718 = vector.shape_cast %715 : vector<1x8xbf16> to vector<1x1x1x8xbf16>
    tpu.vector_store %arg10[%c1_754, %c5_755, %c1_756, %c0_757], %718 {strides = array<i32>} : memref<2x9x9x8xbf16, #tpu.memory_space<vmem>>, vector<1x1x1x8xbf16>,
    %719 = vector.extract_strided_slice %232 {offsets = [25, 0], sizes = [1, 8], strides = [1, 1]} : vector<32x8xbf16> to vector<1x8xbf16>
    %c1_758 = arith.constant 1 : index
    %c5_759 = arith.constant 5 : index
    %c3_760 = arith.constant 3 : index
    %c0_761 = arith.constant 0 : index
    %720 = vector.load %arg10[%c1_758, %c5_759, %c3_760, %c0_761] : memref<2x9x9x8xbf16, #tpu.memory_space<vmem>>, vector<1x1x1x8xbf16>
    %721 = vector.shape_cast %720 : vector<1x1x1x8xbf16> to vector<1x8xbf16>
    %722 = vector.shape_cast %719 : vector<1x8xbf16> to vector<1x1x1x8xbf16>
    tpu.vector_store %arg10[%c1_758, %c5_759, %c3_760, %c0_761], %722 {strides = array<i32>} : memref<2x9x9x8xbf16, #tpu.memory_space<vmem>>, vector<1x1x1x8xbf16>,
    %723 = vector.extract_strided_slice %232 {offsets = [26, 0], sizes = [1, 8], strides = [1, 1]} : vector<32x8xbf16> to vector<1x8xbf16>
    %c1_762 = arith.constant 1 : index
    %c5_763 = arith.constant 5 : index
    %c5_764 = arith.constant 5 : index
    %c0_765 = arith.constant 0 : index
    %724 = vector.load %arg10[%c1_762, %c5_763, %c5_764, %c0_765] : memref<2x9x9x8xbf16, #tpu.memory_space<vmem>>, vector<1x1x1x8xbf16>
    %725 = vector.shape_cast %724 : vector<1x1x1x8xbf16> to vector<1x8xbf16>
    %726 = vector.shape_cast %723 : vector<1x8xbf16> to vector<1x1x1x8xbf16>
    tpu.vector_store %arg10[%c1_762, %c5_763, %c5_764, %c0_765], %726 {strides = array<i32>} : memref<2x9x9x8xbf16, #tpu.memory_space<vmem>>, vector<1x1x1x8xbf16>,
    %727 = vector.extract_strided_slice %232 {offsets = [27, 0], sizes = [1, 8], strides = [1, 1]} : vector<32x8xbf16> to vector<1x8xbf16>
    %c1_766 = arith.constant 1 : index
    %c5_767 = arith.constant 5 : index
    %c7_768 = arith.constant 7 : index
    %c0_769 = arith.constant 0 : index
    %728 = vector.load %arg10[%c1_766, %c5_767, %c7_768, %c0_769] : memref<2x9x9x8xbf16, #tpu.memory_space<vmem>>, vector<1x1x1x8xbf16>
    %729 = vector.shape_cast %728 : vector<1x1x1x8xbf16> to vector<1x8xbf16>
    %730 = vector.shape_cast %727 : vector<1x8xbf16> to vector<1x1x1x8xbf16>
    tpu.vector_store %arg10[%c1_766, %c5_767, %c7_768, %c0_769], %730 {strides = array<i32>} : memref<2x9x9x8xbf16, #tpu.memory_space<vmem>>, vector<1x1x1x8xbf16>,
    %731 = vector.extract_strided_slice %232 {offsets = [28, 0], sizes = [1, 8], strides = [1, 1]} : vector<32x8xbf16> to vector<1x8xbf16>
    %c1_770 = arith.constant 1 : index
    %c7_771 = arith.constant 7 : index
    %c1_772 = arith.constant 1 : index
    %c0_773 = arith.constant 0 : index
    %732 = vector.load %arg10[%c1_770, %c7_771, %c1_772, %c0_773] : memref<2x9x9x8xbf16, #tpu.memory_space<vmem>>, vector<1x1x1x8xbf16>
    %733 = vector.shape_cast %732 : vector<1x1x1x8xbf16> to vector<1x8xbf16>
    %734 = vector.shape_cast %731 : vector<1x8xbf16> to vector<1x1x1x8xbf16>
    tpu.vector_store %arg10[%c1_770, %c7_771, %c1_772, %c0_773], %734 {strides = array<i32>} : memref<2x9x9x8xbf16, #tpu.memory_space<vmem>>, vector<1x1x1x8xbf16>,
    %735 = vector.extract_strided_slice %232 {offsets = [29, 0], sizes = [1, 8], strides = [1, 1]} : vector<32x8xbf16> to vector<1x8xbf16>
    %c1_774 = arith.constant 1 : index
    %c7_775 = arith.constant 7 : index
    %c3_776 = arith.constant 3 : index
    %c0_777 = arith.constant 0 : index
    %736 = vector.load %arg10[%c1_774, %c7_775, %c3_776, %c0_777] : memref<2x9x9x8xbf16, #tpu.memory_space<vmem>>, vector<1x1x1x8xbf16>
    %737 = vector.shape_cast %736 : vector<1x1x1x8xbf16> to vector<1x8xbf16>
    %738 = vector.shape_cast %735 : vector<1x8xbf16> to vector<1x1x1x8xbf16>
    tpu.vector_store %arg10[%c1_774, %c7_775, %c3_776, %c0_777], %738 {strides = array<i32>} : memref<2x9x9x8xbf16, #tpu.memory_space<vmem>>, vector<1x1x1x8xbf16>,
    %739 = vector.extract_strided_slice %232 {offsets = [30, 0], sizes = [1, 8], strides = [1, 1]} : vector<32x8xbf16> to vector<1x8xbf16>
    %c1_778 = arith.constant 1 : index
    %c7_779 = arith.constant 7 : index
    %c5_780 = arith.constant 5 : index
    %c0_781 = arith.constant 0 : index
    %740 = vector.load %arg10[%c1_778, %c7_779, %c5_780, %c0_781] : memref<2x9x9x8xbf16, #tpu.memory_space<vmem>>, vector<1x1x1x8xbf16>
    %741 = vector.shape_cast %740 : vector<1x1x1x8xbf16> to vector<1x8xbf16>
    %742 = vector.shape_cast %739 : vector<1x8xbf16> to vector<1x1x1x8xbf16>
    tpu.vector_store %arg10[%c1_778, %c7_779, %c5_780, %c0_781], %742 {strides = array<i32>} : memref<2x9x9x8xbf16, #tpu.memory_space<vmem>>, vector<1x1x1x8xbf16>,
    %743 = vector.extract_strided_slice %232 {offsets = [31, 0], sizes = [1, 8], strides = [1, 1]} : vector<32x8xbf16> to vector<1x8xbf16>
    %c1_782 = arith.constant 1 : index
    %c7_783 = arith.constant 7 : index
    %c7_784 = arith.constant 7 : index
    %c0_785 = arith.constant 0 : index
    %744 = vector.load %arg10[%c1_782, %c7_783, %c7_784, %c0_785] : memref<2x9x9x8xbf16, #tpu.memory_space<vmem>>, vector<1x1x1x8xbf16>
    %745 = vector.shape_cast %744 : vector<1x1x1x8xbf16> to vector<1x8xbf16>
    %746 = vector.shape_cast %743 : vector<1x8xbf16> to vector<1x1x1x8xbf16>
    tpu.vector_store %arg10[%c1_782, %c7_783, %c7_784, %c0_785], %746 {strides = array<i32>} : memref<2x9x9x8xbf16, #tpu.memory_space<vmem>>, vector<1x1x1x8xbf16>,
    %c0_786 = arith.constant 0 : index
    %c0_787 = arith.constant 0 : index
    %c0_788 = arith.constant 0 : index
    %c0_789 = arith.constant 0 : index
    %747 = vector.load %arg10[%c0_786, %c0_787, %c0_788, %c0_789] : memref<2x9x9x8xbf16, #tpu.memory_space<vmem>>, vector<1x1x8x8xbf16>
    %748 = vector.shape_cast %747 : vector<1x1x8x8xbf16> to vector<8x8xbf16>
    %c0_790 = arith.constant 0 : index
    %c0_791 = arith.constant 0 : index
    %749 = vector.load %arg11[%c0_790, %c0_791] : memref<128x32xbf16, #tpu.memory_space<vmem>>, vector<8x8xbf16>
    tpu.vector_store %arg11[%c0_790, %c0_791], %748 {strides = array<i32>} : memref<128x32xbf16, #tpu.memory_space<vmem>>, vector<8x8xbf16>,
    %c0_792 = arith.constant 0 : index
    %c1_793 = arith.constant 1 : index
    %c0_794 = arith.constant 0 : index
    %c0_795 = arith.constant 0 : index
    %750 = vector.load %arg10[%c0_792, %c1_793, %c0_794, %c0_795] : memref<2x9x9x8xbf16, #tpu.memory_space<vmem>>, vector<1x1x8x8xbf16>
    %751 = vector.shape_cast %750 : vector<1x1x8x8xbf16> to vector<8x8xbf16>
    %c8_796 = arith.constant 8 : index
    %c0_797 = arith.constant 0 : index
    %752 = vector.load %arg11[%c8_796, %c0_797] : memref<128x32xbf16, #tpu.memory_space<vmem>>, vector<8x8xbf16>
    tpu.vector_store %arg11[%c8_796, %c0_797], %751 {strides = array<i32>} : memref<128x32xbf16, #tpu.memory_space<vmem>>, vector<8x8xbf16>,
    %c0_798 = arith.constant 0 : index
    %c2_799 = arith.constant 2 : index
    %c0_800 = arith.constant 0 : index
    %c0_801 = arith.constant 0 : index
    %753 = vector.load %arg10[%c0_798, %c2_799, %c0_800, %c0_801] : memref<2x9x9x8xbf16, #tpu.memory_space<vmem>>, vector<1x1x8x8xbf16>
    %754 = vector.shape_cast %753 : vector<1x1x8x8xbf16> to vector<8x8xbf16>
    %c16_802 = arith.constant 16 : index
    %c0_803 = arith.constant 0 : index
    %755 = vector.load %arg11[%c16_802, %c0_803] : memref<128x32xbf16, #tpu.memory_space<vmem>>, vector<8x8xbf16>
    tpu.vector_store %arg11[%c16_802, %c0_803], %754 {strides = array<i32>} : memref<128x32xbf16, #tpu.memory_space<vmem>>, vector<8x8xbf16>,
    %c0_804 = arith.constant 0 : index
    %c3_805 = arith.constant 3 : index
    %c0_806 = arith.constant 0 : index
    %c0_807 = arith.constant 0 : index
    %756 = vector.load %arg10[%c0_804, %c3_805, %c0_806, %c0_807] : memref<2x9x9x8xbf16, #tpu.memory_space<vmem>>, vector<1x1x8x8xbf16>
    %757 = vector.shape_cast %756 : vector<1x1x8x8xbf16> to vector<8x8xbf16>
    %c24_808 = arith.constant 24 : index
    %c0_809 = arith.constant 0 : index
    %758 = vector.load %arg11[%c24_808, %c0_809] : memref<128x32xbf16, #tpu.memory_space<vmem>>, vector<8x8xbf16>
    tpu.vector_store %arg11[%c24_808, %c0_809], %757 {strides = array<i32>} : memref<128x32xbf16, #tpu.memory_space<vmem>>, vector<8x8xbf16>,
    %c0_810 = arith.constant 0 : index
    %c4_811 = arith.constant 4 : index
    %c0_812 = arith.constant 0 : index
    %c0_813 = arith.constant 0 : index
    %759 = vector.load %arg10[%c0_810, %c4_811, %c0_812, %c0_813] : memref<2x9x9x8xbf16, #tpu.memory_space<vmem>>, vector<1x1x8x8xbf16>
    %760 = vector.shape_cast %759 : vector<1x1x8x8xbf16> to vector<8x8xbf16>
    %c32_814 = arith.constant 32 : index
    %c0_815 = arith.constant 0 : index
    %761 = vector.load %arg11[%c32_814, %c0_815] : memref<128x32xbf16, #tpu.memory_space<vmem>>, vector<8x8xbf16>
    tpu.vector_store %arg11[%c32_814, %c0_815], %760 {strides = array<i32>} : memref<128x32xbf16, #tpu.memory_space<vmem>>, vector<8x8xbf16>,
    %c0_816 = arith.constant 0 : index
    %c5_817 = arith.constant 5 : index
    %c0_818 = arith.constant 0 : index
    %c0_819 = arith.constant 0 : index
    %762 = vector.load %arg10[%c0_816, %c5_817, %c0_818, %c0_819] : memref<2x9x9x8xbf16, #tpu.memory_space<vmem>>, vector<1x1x8x8xbf16>
    %763 = vector.shape_cast %762 : vector<1x1x8x8xbf16> to vector<8x8xbf16>
    %c40 = arith.constant 40 : index
    %c0_820 = arith.constant 0 : index
    %764 = vector.load %arg11[%c40, %c0_820] : memref<128x32xbf16, #tpu.memory_space<vmem>>, vector<8x8xbf16>
    tpu.vector_store %arg11[%c40, %c0_820], %763 {strides = array<i32>} : memref<128x32xbf16, #tpu.memory_space<vmem>>, vector<8x8xbf16>,
    %c0_821 = arith.constant 0 : index
    %c6_822 = arith.constant 6 : index
    %c0_823 = arith.constant 0 : index
    %c0_824 = arith.constant 0 : index
    %765 = vector.load %arg10[%c0_821, %c6_822, %c0_823, %c0_824] : memref<2x9x9x8xbf16, #tpu.memory_space<vmem>>, vector<1x1x8x8xbf16>
    %766 = vector.shape_cast %765 : vector<1x1x8x8xbf16> to vector<8x8xbf16>
    %c48_825 = arith.constant 48 : index
    %c0_826 = arith.constant 0 : index
    %767 = vector.load %arg11[%c48_825, %c0_826] : memref<128x32xbf16, #tpu.memory_space<vmem>>, vector<8x8xbf16>
    tpu.vector_store %arg11[%c48_825, %c0_826], %766 {strides = array<i32>} : memref<128x32xbf16, #tpu.memory_space<vmem>>, vector<8x8xbf16>,
    %c0_827 = arith.constant 0 : index
    %c7_828 = arith.constant 7 : index
    %c0_829 = arith.constant 0 : index
    %c0_830 = arith.constant 0 : index
    %768 = vector.load %arg10[%c0_827, %c7_828, %c0_829, %c0_830] : memref<2x9x9x8xbf16, #tpu.memory_space<vmem>>, vector<1x1x8x8xbf16>
    %769 = vector.shape_cast %768 : vector<1x1x8x8xbf16> to vector<8x8xbf16>
    %c56 = arith.constant 56 : index
    %c0_831 = arith.constant 0 : index
    %770 = vector.load %arg11[%c56, %c0_831] : memref<128x32xbf16, #tpu.memory_space<vmem>>, vector<8x8xbf16>
    tpu.vector_store %arg11[%c56, %c0_831], %769 {strides = array<i32>} : memref<128x32xbf16, #tpu.memory_space<vmem>>, vector<8x8xbf16>,
    %c1_832 = arith.constant 1 : index
    %c0_833 = arith.constant 0 : index
    %c0_834 = arith.constant 0 : index
    %c0_835 = arith.constant 0 : index
    %771 = vector.load %arg10[%c1_832, %c0_833, %c0_834, %c0_835] : memref<2x9x9x8xbf16, #tpu.memory_space<vmem>>, vector<1x1x8x8xbf16>
    %772 = vector.shape_cast %771 : vector<1x1x8x8xbf16> to vector<8x8xbf16>
    %c64 = arith.constant 64 : index
    %c0_836 = arith.constant 0 : index
    %773 = vector.load %arg11[%c64, %c0_836] : memref<128x32xbf16, #tpu.memory_space<vmem>>, vector<8x8xbf16>
    tpu.vector_store %arg11[%c64, %c0_836], %772 {strides = array<i32>} : memref<128x32xbf16, #tpu.memory_space<vmem>>, vector<8x8xbf16>,
    %c1_837 = arith.constant 1 : index
    %c1_838 = arith.constant 1 : index
    %c0_839 = arith.constant 0 : index
    %c0_840 = arith.constant 0 : index
    %774 = vector.load %arg10[%c1_837, %c1_838, %c0_839, %c0_840] : memref<2x9x9x8xbf16, #tpu.memory_space<vmem>>, vector<1x1x8x8xbf16>
    %775 = vector.shape_cast %774 : vector<1x1x8x8xbf16> to vector<8x8xbf16>
    %c72 = arith.constant 72 : index
    %c0_841 = arith.constant 0 : index
    %776 = vector.load %arg11[%c72, %c0_841] : memref<128x32xbf16, #tpu.memory_space<vmem>>, vector<8x8xbf16>
    tpu.vector_store %arg11[%c72, %c0_841], %775 {strides = array<i32>} : memref<128x32xbf16, #tpu.memory_space<vmem>>, vector<8x8xbf16>,
    %c1_842 = arith.constant 1 : index
    %c2_843 = arith.constant 2 : index
    %c0_844 = arith.constant 0 : index
    %c0_845 = arith.constant 0 : index
    %777 = vector.load %arg10[%c1_842, %c2_843, %c0_844, %c0_845] : memref<2x9x9x8xbf16, #tpu.memory_space<vmem>>, vector<1x1x8x8xbf16>
    %778 = vector.shape_cast %777 : vector<1x1x8x8xbf16> to vector<8x8xbf16>
    %c80 = arith.constant 80 : index
    %c0_846 = arith.constant 0 : index
    %779 = vector.load %arg11[%c80, %c0_846] : memref<128x32xbf16, #tpu.memory_space<vmem>>, vector<8x8xbf16>
    tpu.vector_store %arg11[%c80, %c0_846], %778 {strides = array<i32>} : memref<128x32xbf16, #tpu.memory_space<vmem>>, vector<8x8xbf16>,
    %c1_847 = arith.constant 1 : index
    %c3_848 = arith.constant 3 : index
    %c0_849 = arith.constant 0 : index
    %c0_850 = arith.constant 0 : index
    %780 = vector.load %arg10[%c1_847, %c3_848, %c0_849, %c0_850] : memref<2x9x9x8xbf16, #tpu.memory_space<vmem>>, vector<1x1x8x8xbf16>
    %781 = vector.shape_cast %780 : vector<1x1x8x8xbf16> to vector<8x8xbf16>
    %c88 = arith.constant 88 : index
    %c0_851 = arith.constant 0 : index
    %782 = vector.load %arg11[%c88, %c0_851] : memref<128x32xbf16, #tpu.memory_space<vmem>>, vector<8x8xbf16>
    tpu.vector_store %arg11[%c88, %c0_851], %781 {strides = array<i32>} : memref<128x32xbf16, #tpu.memory_space<vmem>>, vector<8x8xbf16>,
    %c1_852 = arith.constant 1 : index
    %c4_853 = arith.constant 4 : index
    %c0_854 = arith.constant 0 : index
    %c0_855 = arith.constant 0 : index
    %783 = vector.load %arg10[%c1_852, %c4_853, %c0_854, %c0_855] : memref<2x9x9x8xbf16, #tpu.memory_space<vmem>>, vector<1x1x8x8xbf16>
    %784 = vector.shape_cast %783 : vector<1x1x8x8xbf16> to vector<8x8xbf16>
    %c96 = arith.constant 96 : index
    %c0_856 = arith.constant 0 : index
    %785 = vector.load %arg11[%c96, %c0_856] : memref<128x32xbf16, #tpu.memory_space<vmem>>, vector<8x8xbf16>
    tpu.vector_store %arg11[%c96, %c0_856], %784 {strides = array<i32>} : memref<128x32xbf16, #tpu.memory_space<vmem>>, vector<8x8xbf16>,
    %c1_857 = arith.constant 1 : index
    %c5_858 = arith.constant 5 : index
    %c0_859 = arith.constant 0 : index
    %c0_860 = arith.constant 0 : index
    %786 = vector.load %arg10[%c1_857, %c5_858, %c0_859, %c0_860] : memref<2x9x9x8xbf16, #tpu.memory_space<vmem>>, vector<1x1x8x8xbf16>
    %787 = vector.shape_cast %786 : vector<1x1x8x8xbf16> to vector<8x8xbf16>
    %c104 = arith.constant 104 : index
    %c0_861 = arith.constant 0 : index
    %788 = vector.load %arg11[%c104, %c0_861] : memref<128x32xbf16, #tpu.memory_space<vmem>>, vector<8x8xbf16>
    tpu.vector_store %arg11[%c104, %c0_861], %787 {strides = array<i32>} : memref<128x32xbf16, #tpu.memory_space<vmem>>, vector<8x8xbf16>,
    %c1_862 = arith.constant 1 : index
    %c6_863 = arith.constant 6 : index
    %c0_864 = arith.constant 0 : index
    %c0_865 = arith.constant 0 : index
    %789 = vector.load %arg10[%c1_862, %c6_863, %c0_864, %c0_865] : memref<2x9x9x8xbf16, #tpu.memory_space<vmem>>, vector<1x1x8x8xbf16>
    %790 = vector.shape_cast %789 : vector<1x1x8x8xbf16> to vector<8x8xbf16>
    %c112 = arith.constant 112 : index
    %c0_866 = arith.constant 0 : index
    %791 = vector.load %arg11[%c112, %c0_866] : memref<128x32xbf16, #tpu.memory_space<vmem>>, vector<8x8xbf16>
    tpu.vector_store %arg11[%c112, %c0_866], %790 {strides = array<i32>} : memref<128x32xbf16, #tpu.memory_space<vmem>>, vector<8x8xbf16>,
    %c1_867 = arith.constant 1 : index
    %c7_868 = arith.constant 7 : index
    %c0_869 = arith.constant 0 : index
    %c0_870 = arith.constant 0 : index
    %792 = vector.load %arg10[%c1_867, %c7_868, %c0_869, %c0_870] : memref<2x9x9x8xbf16, #tpu.memory_space<vmem>>, vector<1x1x8x8xbf16>
    %793 = vector.shape_cast %792 : vector<1x1x8x8xbf16> to vector<8x8xbf16>
    %c120 = arith.constant 120 : index
    %c0_871 = arith.constant 0 : index
    %794 = vector.load %arg11[%c120, %c0_871] : memref<128x32xbf16, #tpu.memory_space<vmem>>, vector<8x8xbf16>
    tpu.vector_store %arg11[%c120, %c0_871], %793 {strides = array<i32>} : memref<128x32xbf16, #tpu.memory_space<vmem>>, vector<8x8xbf16>,
    %c0_872 = arith.constant 0 : index
    %c0_873 = arith.constant 0 : index
    %c1_874 = arith.constant 1 : index
    %c0_875 = arith.constant 0 : index
    %795 = vector.load %arg10[%c0_872, %c0_873, %c1_874, %c0_875] : memref<2x9x9x8xbf16, #tpu.memory_space<vmem>>, vector<1x1x8x8xbf16>
    %796 = vector.shape_cast %795 : vector<1x1x8x8xbf16> to vector<8x8xbf16>
    %c0_876 = arith.constant 0 : index
    %c8_877 = arith.constant 8 : index
    %797 = vector.load %arg11[%c0_876, %c8_877] : memref<128x32xbf16, #tpu.memory_space<vmem>>, vector<8x8xbf16>
    tpu.vector_store %arg11[%c0_876, %c8_877], %796 {strides = array<i32>} : memref<128x32xbf16, #tpu.memory_space<vmem>>, vector<8x8xbf16>,
    %c0_878 = arith.constant 0 : index
    %c1_879 = arith.constant 1 : index
    %c1_880 = arith.constant 1 : index
    %c0_881 = arith.constant 0 : index
    %798 = vector.load %arg10[%c0_878, %c1_879, %c1_880, %c0_881] : memref<2x9x9x8xbf16, #tpu.memory_space<vmem>>, vector<1x1x8x8xbf16>
    %799 = vector.shape_cast %798 : vector<1x1x8x8xbf16> to vector<8x8xbf16>
    %c8_882 = arith.constant 8 : index
    %c8_883 = arith.constant 8 : index
    %800 = vector.load %arg11[%c8_882, %c8_883] : memref<128x32xbf16, #tpu.memory_space<vmem>>, vector<8x8xbf16>
    tpu.vector_store %arg11[%c8_882, %c8_883], %799 {strides = array<i32>} : memref<128x32xbf16, #tpu.memory_space<vmem>>, vector<8x8xbf16>,
    %c0_884 = arith.constant 0 : index
    %c2_885 = arith.constant 2 : index
    %c1_886 = arith.constant 1 : index
    %c0_887 = arith.constant 0 : index
    %801 = vector.load %arg10[%c0_884, %c2_885, %c1_886, %c0_887] : memref<2x9x9x8xbf16, #tpu.memory_space<vmem>>, vector<1x1x8x8xbf16>
    %802 = vector.shape_cast %801 : vector<1x1x8x8xbf16> to vector<8x8xbf16>
    %c16_888 = arith.constant 16 : index
    %c8_889 = arith.constant 8 : index
    %803 = vector.load %arg11[%c16_888, %c8_889] : memref<128x32xbf16, #tpu.memory_space<vmem>>, vector<8x8xbf16>
    tpu.vector_store %arg11[%c16_888, %c8_889], %802 {strides = array<i32>} : memref<128x32xbf16, #tpu.memory_space<vmem>>, vector<8x8xbf16>,
    %c0_890 = arith.constant 0 : index
    %c3_891 = arith.constant 3 : index
    %c1_892 = arith.constant 1 : index
    %c0_893 = arith.constant 0 : index
    %804 = vector.load %arg10[%c0_890, %c3_891, %c1_892, %c0_893] : memref<2x9x9x8xbf16, #tpu.memory_space<vmem>>, vector<1x1x8x8xbf16>
    %805 = vector.shape_cast %804 : vector<1x1x8x8xbf16> to vector<8x8xbf16>
    %c24_894 = arith.constant 24 : index
    %c8_895 = arith.constant 8 : index
    %806 = vector.load %arg11[%c24_894, %c8_895] : memref<128x32xbf16, #tpu.memory_space<vmem>>, vector<8x8xbf16>
    tpu.vector_store %arg11[%c24_894, %c8_895], %805 {strides = array<i32>} : memref<128x32xbf16, #tpu.memory_space<vmem>>, vector<8x8xbf16>,
    %c0_896 = arith.constant 0 : index
    %c4_897 = arith.constant 4 : index
    %c1_898 = arith.constant 1 : index
    %c0_899 = arith.constant 0 : index
    %807 = vector.load %arg10[%c0_896, %c4_897, %c1_898, %c0_899] : memref<2x9x9x8xbf16, #tpu.memory_space<vmem>>, vector<1x1x8x8xbf16>
    %808 = vector.shape_cast %807 : vector<1x1x8x8xbf16> to vector<8x8xbf16>
    %c32_900 = arith.constant 32 : index
    %c8_901 = arith.constant 8 : index
    %809 = vector.load %arg11[%c32_900, %c8_901] : memref<128x32xbf16, #tpu.memory_space<vmem>>, vector<8x8xbf16>
    tpu.vector_store %arg11[%c32_900, %c8_901], %808 {strides = array<i32>} : memref<128x32xbf16, #tpu.memory_space<vmem>>, vector<8x8xbf16>,
    %c0_902 = arith.constant 0 : index
    %c5_903 = arith.constant 5 : index
    %c1_904 = arith.constant 1 : index
    %c0_905 = arith.constant 0 : index
    %810 = vector.load %arg10[%c0_902, %c5_903, %c1_904, %c0_905] : memref<2x9x9x8xbf16, #tpu.memory_space<vmem>>, vector<1x1x8x8xbf16>
    %811 = vector.shape_cast %810 : vector<1x1x8x8xbf16> to vector<8x8xbf16>
    %c40_906 = arith.constant 40 : index
    %c8_907 = arith.constant 8 : index
    %812 = vector.load %arg11[%c40_906, %c8_907] : memref<128x32xbf16, #tpu.memory_space<vmem>>, vector<8x8xbf16>
    tpu.vector_store %arg11[%c40_906, %c8_907], %811 {strides = array<i32>} : memref<128x32xbf16, #tpu.memory_space<vmem>>, vector<8x8xbf16>,
    %c0_908 = arith.constant 0 : index
    %c6_909 = arith.constant 6 : index
    %c1_910 = arith.constant 1 : index
    %c0_911 = arith.constant 0 : index
    %813 = vector.load %arg10[%c0_908, %c6_909, %c1_910, %c0_911] : memref<2x9x9x8xbf16, #tpu.memory_space<vmem>>, vector<1x1x8x8xbf16>
    %814 = vector.shape_cast %813 : vector<1x1x8x8xbf16> to vector<8x8xbf16>
    %c48_912 = arith.constant 48 : index
    %c8_913 = arith.constant 8 : index
    %815 = vector.load %arg11[%c48_912, %c8_913] : memref<128x32xbf16, #tpu.memory_space<vmem>>, vector<8x8xbf16>
    tpu.vector_store %arg11[%c48_912, %c8_913], %814 {strides = array<i32>} : memref<128x32xbf16, #tpu.memory_space<vmem>>, vector<8x8xbf16>,
    %c0_914 = arith.constant 0 : index
    %c7_915 = arith.constant 7 : index
    %c1_916 = arith.constant 1 : index
    %c0_917 = arith.constant 0 : index
    %816 = vector.load %arg10[%c0_914, %c7_915, %c1_916, %c0_917] : memref<2x9x9x8xbf16, #tpu.memory_space<vmem>>, vector<1x1x8x8xbf16>
    %817 = vector.shape_cast %816 : vector<1x1x8x8xbf16> to vector<8x8xbf16>
    %c56_918 = arith.constant 56 : index
    %c8_919 = arith.constant 8 : index
    %818 = vector.load %arg11[%c56_918, %c8_919] : memref<128x32xbf16, #tpu.memory_space<vmem>>, vector<8x8xbf16>
    tpu.vector_store %arg11[%c56_918, %c8_919], %817 {strides = array<i32>} : memref<128x32xbf16, #tpu.memory_space<vmem>>, vector<8x8xbf16>,
    %c1_920 = arith.constant 1 : index
    %c0_921 = arith.constant 0 : index
    %c1_922 = arith.constant 1 : index
    %c0_923 = arith.constant 0 : index
    %819 = vector.load %arg10[%c1_920, %c0_921, %c1_922, %c0_923] : memref<2x9x9x8xbf16, #tpu.memory_space<vmem>>, vector<1x1x8x8xbf16>
    %820 = vector.shape_cast %819 : vector<1x1x8x8xbf16> to vector<8x8xbf16>
    %c64_924 = arith.constant 64 : index
    %c8_925 = arith.constant 8 : index
    %821 = vector.load %arg11[%c64_924, %c8_925] : memref<128x32xbf16, #tpu.memory_space<vmem>>, vector<8x8xbf16>
    tpu.vector_store %arg11[%c64_924, %c8_925], %820 {strides = array<i32>} : memref<128x32xbf16, #tpu.memory_space<vmem>>, vector<8x8xbf16>,
    %c1_926 = arith.constant 1 : index
    %c1_927 = arith.constant 1 : index
    %c1_928 = arith.constant 1 : index
    %c0_929 = arith.constant 0 : index
    %822 = vector.load %arg10[%c1_926, %c1_927, %c1_928, %c0_929] : memref<2x9x9x8xbf16, #tpu.memory_space<vmem>>, vector<1x1x8x8xbf16>
    %823 = vector.shape_cast %822 : vector<1x1x8x8xbf16> to vector<8x8xbf16>
    %c72_930 = arith.constant 72 : index
    %c8_931 = arith.constant 8 : index
    %824 = vector.load %arg11[%c72_930, %c8_931] : memref<128x32xbf16, #tpu.memory_space<vmem>>, vector<8x8xbf16>
    tpu.vector_store %arg11[%c72_930, %c8_931], %823 {strides = array<i32>} : memref<128x32xbf16, #tpu.memory_space<vmem>>, vector<8x8xbf16>,
    %c1_932 = arith.constant 1 : index
    %c2_933 = arith.constant 2 : index
    %c1_934 = arith.constant 1 : index
    %c0_935 = arith.constant 0 : index
    %825 = vector.load %arg10[%c1_932, %c2_933, %c1_934, %c0_935] : memref<2x9x9x8xbf16, #tpu.memory_space<vmem>>, vector<1x1x8x8xbf16>
    %826 = vector.shape_cast %825 : vector<1x1x8x8xbf16> to vector<8x8xbf16>
    %c80_936 = arith.constant 80 : index
    %c8_937 = arith.constant 8 : index
    %827 = vector.load %arg11[%c80_936, %c8_937] : memref<128x32xbf16, #tpu.memory_space<vmem>>, vector<8x8xbf16>
    tpu.vector_store %arg11[%c80_936, %c8_937], %826 {strides = array<i32>} : memref<128x32xbf16, #tpu.memory_space<vmem>>, vector<8x8xbf16>,
    %c1_938 = arith.constant 1 : index
    %c3_939 = arith.constant 3 : index
    %c1_940 = arith.constant 1 : index
    %c0_941 = arith.constant 0 : index
    %828 = vector.load %arg10[%c1_938, %c3_939, %c1_940, %c0_941] : memref<2x9x9x8xbf16, #tpu.memory_space<vmem>>, vector<1x1x8x8xbf16>
    %829 = vector.shape_cast %828 : vector<1x1x8x8xbf16> to vector<8x8xbf16>
    %c88_942 = arith.constant 88 : index
    %c8_943 = arith.constant 8 : index
    %830 = vector.load %arg11[%c88_942, %c8_943] : memref<128x32xbf16, #tpu.memory_space<vmem>>, vector<8x8xbf16>
    tpu.vector_store %arg11[%c88_942, %c8_943], %829 {strides = array<i32>} : memref<128x32xbf16, #tpu.memory_space<vmem>>, vector<8x8xbf16>,
    %c1_944 = arith.constant 1 : index
    %c4_945 = arith.constant 4 : index
    %c1_946 = arith.constant 1 : index
    %c0_947 = arith.constant 0 : index
    %831 = vector.load %arg10[%c1_944, %c4_945, %c1_946, %c0_947] : memref<2x9x9x8xbf16, #tpu.memory_space<vmem>>, vector<1x1x8x8xbf16>
    %832 = vector.shape_cast %831 : vector<1x1x8x8xbf16> to vector<8x8xbf16>
    %c96_948 = arith.constant 96 : index
    %c8_949 = arith.constant 8 : index
    %833 = vector.load %arg11[%c96_948, %c8_949] : memref<128x32xbf16, #tpu.memory_space<vmem>>, vector<8x8xbf16>
    tpu.vector_store %arg11[%c96_948, %c8_949], %832 {strides = array<i32>} : memref<128x32xbf16, #tpu.memory_space<vmem>>, vector<8x8xbf16>,
    %c1_950 = arith.constant 1 : index
    %c5_951 = arith.constant 5 : index
    %c1_952 = arith.constant 1 : index
    %c0_953 = arith.constant 0 : index
    %834 = vector.load %arg10[%c1_950, %c5_951, %c1_952, %c0_953] : memref<2x9x9x8xbf16, #tpu.memory_space<vmem>>, vector<1x1x8x8xbf16>
    %835 = vector.shape_cast %834 : vector<1x1x8x8xbf16> to vector<8x8xbf16>
    %c104_954 = arith.constant 104 : index
    %c8_955 = arith.constant 8 : index
    %836 = vector.load %arg11[%c104_954, %c8_955] : memref<128x32xbf16, #tpu.memory_space<vmem>>, vector<8x8xbf16>
    tpu.vector_store %arg11[%c104_954, %c8_955], %835 {strides = array<i32>} : memref<128x32xbf16, #tpu.memory_space<vmem>>, vector<8x8xbf16>,
    %c1_956 = arith.constant 1 : index
    %c6_957 = arith.constant 6 : index
    %c1_958 = arith.constant 1 : index
    %c0_959 = arith.constant 0 : index
    %837 = vector.load %arg10[%c1_956, %c6_957, %c1_958, %c0_959] : memref<2x9x9x8xbf16, #tpu.memory_space<vmem>>, vector<1x1x8x8xbf16>
    %838 = vector.shape_cast %837 : vector<1x1x8x8xbf16> to vector<8x8xbf16>
    %c112_960 = arith.constant 112 : index
    %c8_961 = arith.constant 8 : index
    %839 = vector.load %arg11[%c112_960, %c8_961] : memref<128x32xbf16, #tpu.memory_space<vmem>>, vector<8x8xbf16>
    tpu.vector_store %arg11[%c112_960, %c8_961], %838 {strides = array<i32>} : memref<128x32xbf16, #tpu.memory_space<vmem>>, vector<8x8xbf16>,
    %c1_962 = arith.constant 1 : index
    %c7_963 = arith.constant 7 : index
    %c1_964 = arith.constant 1 : index
    %c0_965 = arith.constant 0 : index
    %840 = vector.load %arg10[%c1_962, %c7_963, %c1_964, %c0_965] : memref<2x9x9x8xbf16, #tpu.memory_space<vmem>>, vector<1x1x8x8xbf16>
    %841 = vector.shape_cast %840 : vector<1x1x8x8xbf16> to vector<8x8xbf16>
    %c120_966 = arith.constant 120 : index
    %c8_967 = arith.constant 8 : index
    %842 = vector.load %arg11[%c120_966, %c8_967] : memref<128x32xbf16, #tpu.memory_space<vmem>>, vector<8x8xbf16>
    tpu.vector_store %arg11[%c120_966, %c8_967], %841 {strides = array<i32>} : memref<128x32xbf16, #tpu.memory_space<vmem>>, vector<8x8xbf16>,
    %c0_968 = arith.constant 0 : index
    %c1_969 = arith.constant 1 : index
    %c0_970 = arith.constant 0 : index
    %c0_971 = arith.constant 0 : index
    %843 = vector.load %arg10[%c0_968, %c1_969, %c0_970, %c0_971] : memref<2x9x9x8xbf16, #tpu.memory_space<vmem>>, vector<1x1x8x8xbf16>
    %844 = vector.shape_cast %843 : vector<1x1x8x8xbf16> to vector<8x8xbf16>
    %c0_972 = arith.constant 0 : index
    %c16_973 = arith.constant 16 : index
    %845 = vector.load %arg11[%c0_972, %c16_973] : memref<128x32xbf16, #tpu.memory_space<vmem>>, vector<8x8xbf16>
    tpu.vector_store %arg11[%c0_972, %c16_973], %844 {strides = array<i32>} : memref<128x32xbf16, #tpu.memory_space<vmem>>, vector<8x8xbf16>,
    %c0_974 = arith.constant 0 : index
    %c2_975 = arith.constant 2 : index
    %c0_976 = arith.constant 0 : index
    %c0_977 = arith.constant 0 : index
    %846 = vector.load %arg10[%c0_974, %c2_975, %c0_976, %c0_977] : memref<2x9x9x8xbf16, #tpu.memory_space<vmem>>, vector<1x1x8x8xbf16>
    %847 = vector.shape_cast %846 : vector<1x1x8x8xbf16> to vector<8x8xbf16>
    %c8_978 = arith.constant 8 : index
    %c16_979 = arith.constant 16 : index
    %848 = vector.load %arg11[%c8_978, %c16_979] : memref<128x32xbf16, #tpu.memory_space<vmem>>, vector<8x8xbf16>
    tpu.vector_store %arg11[%c8_978, %c16_979], %847 {strides = array<i32>} : memref<128x32xbf16, #tpu.memory_space<vmem>>, vector<8x8xbf16>,
    %c0_980 = arith.constant 0 : index
    %c3_981 = arith.constant 3 : index
    %c0_982 = arith.constant 0 : index
    %c0_983 = arith.constant 0 : index
    %849 = vector.load %arg10[%c0_980, %c3_981, %c0_982, %c0_983] : memref<2x9x9x8xbf16, #tpu.memory_space<vmem>>, vector<1x1x8x8xbf16>
    %850 = vector.shape_cast %849 : vector<1x1x8x8xbf16> to vector<8x8xbf16>
    %c16_984 = arith.constant 16 : index
    %c16_985 = arith.constant 16 : index
    %851 = vector.load %arg11[%c16_984, %c16_985] : memref<128x32xbf16, #tpu.memory_space<vmem>>, vector<8x8xbf16>
    tpu.vector_store %arg11[%c16_984, %c16_985], %850 {strides = array<i32>} : memref<128x32xbf16, #tpu.memory_space<vmem>>, vector<8x8xbf16>,
    %c0_986 = arith.constant 0 : index
    %c4_987 = arith.constant 4 : index
    %c0_988 = arith.constant 0 : index
    %c0_989 = arith.constant 0 : index
    %852 = vector.load %arg10[%c0_986, %c4_987, %c0_988, %c0_989] : memref<2x9x9x8xbf16, #tpu.memory_space<vmem>>, vector<1x1x8x8xbf16>
    %853 = vector.shape_cast %852 : vector<1x1x8x8xbf16> to vector<8x8xbf16>
    %c24_990 = arith.constant 24 : index
    %c16_991 = arith.constant 16 : index
    %854 = vector.load %arg11[%c24_990, %c16_991] : memref<128x32xbf16, #tpu.memory_space<vmem>>, vector<8x8xbf16>
    tpu.vector_store %arg11[%c24_990, %c16_991], %853 {strides = array<i32>} : memref<128x32xbf16, #tpu.memory_space<vmem>>, vector<8x8xbf16>,
    %c0_992 = arith.constant 0 : index
    %c5_993 = arith.constant 5 : index
    %c0_994 = arith.constant 0 : index
    %c0_995 = arith.constant 0 : index
    %855 = vector.load %arg10[%c0_992, %c5_993, %c0_994, %c0_995] : memref<2x9x9x8xbf16, #tpu.memory_space<vmem>>, vector<1x1x8x8xbf16>
    %856 = vector.shape_cast %855 : vector<1x1x8x8xbf16> to vector<8x8xbf16>
    %c32_996 = arith.constant 32 : index
    %c16_997 = arith.constant 16 : index
    %857 = vector.load %arg11[%c32_996, %c16_997] : memref<128x32xbf16, #tpu.memory_space<vmem>>, vector<8x8xbf16>
    tpu.vector_store %arg11[%c32_996, %c16_997], %856 {strides = array<i32>} : memref<128x32xbf16, #tpu.memory_space<vmem>>, vector<8x8xbf16>,
    %c0_998 = arith.constant 0 : index
    %c6_999 = arith.constant 6 : index
    %c0_1000 = arith.constant 0 : index
    %c0_1001 = arith.constant 0 : index
    %858 = vector.load %arg10[%c0_998, %c6_999, %c0_1000, %c0_1001] : memref<2x9x9x8xbf16, #tpu.memory_space<vmem>>, vector<1x1x8x8xbf16>
    %859 = vector.shape_cast %858 : vector<1x1x8x8xbf16> to vector<8x8xbf16>
    %c40_1002 = arith.constant 40 : index
    %c16_1003 = arith.constant 16 : index
    %860 = vector.load %arg11[%c40_1002, %c16_1003] : memref<128x32xbf16, #tpu.memory_space<vmem>>, vector<8x8xbf16>
    tpu.vector_store %arg11[%c40_1002, %c16_1003], %859 {strides = array<i32>} : memref<128x32xbf16, #tpu.memory_space<vmem>>, vector<8x8xbf16>,
    %c0_1004 = arith.constant 0 : index
    %c7_1005 = arith.constant 7 : index
    %c0_1006 = arith.constant 0 : index
    %c0_1007 = arith.constant 0 : index
    %861 = vector.load %arg10[%c0_1004, %c7_1005, %c0_1006, %c0_1007] : memref<2x9x9x8xbf16, #tpu.memory_space<vmem>>, vector<1x1x8x8xbf16>
    %862 = vector.shape_cast %861 : vector<1x1x8x8xbf16> to vector<8x8xbf16>
    %c48_1008 = arith.constant 48 : index
    %c16_1009 = arith.constant 16 : index
    %863 = vector.load %arg11[%c48_1008, %c16_1009] : memref<128x32xbf16, #tpu.memory_space<vmem>>, vector<8x8xbf16>
    tpu.vector_store %arg11[%c48_1008, %c16_1009], %862 {strides = array<i32>} : memref<128x32xbf16, #tpu.memory_space<vmem>>, vector<8x8xbf16>,
    %c0_1010 = arith.constant 0 : index
    %c8_1011 = arith.constant 8 : index
    %c0_1012 = arith.constant 0 : index
    %c0_1013 = arith.constant 0 : index
    %864 = vector.load %arg10[%c0_1010, %c8_1011, %c0_1012, %c0_1013] : memref<2x9x9x8xbf16, #tpu.memory_space<vmem>>, vector<1x1x8x8xbf16>
    %865 = vector.shape_cast %864 : vector<1x1x8x8xbf16> to vector<8x8xbf16>
    %c56_1014 = arith.constant 56 : index
    %c16_1015 = arith.constant 16 : index
    %866 = vector.load %arg11[%c56_1014, %c16_1015] : memref<128x32xbf16, #tpu.memory_space<vmem>>, vector<8x8xbf16>
    tpu.vector_store %arg11[%c56_1014, %c16_1015], %865 {strides = array<i32>} : memref<128x32xbf16, #tpu.memory_space<vmem>>, vector<8x8xbf16>,
    %c1_1016 = arith.constant 1 : index
    %c1_1017 = arith.constant 1 : index
    %c0_1018 = arith.constant 0 : index
    %c0_1019 = arith.constant 0 : index
    %867 = vector.load %arg10[%c1_1016, %c1_1017, %c0_1018, %c0_1019] : memref<2x9x9x8xbf16, #tpu.memory_space<vmem>>, vector<1x1x8x8xbf16>
    %868 = vector.shape_cast %867 : vector<1x1x8x8xbf16> to vector<8x8xbf16>
    %c64_1020 = arith.constant 64 : index
    %c16_1021 = arith.constant 16 : index
    %869 = vector.load %arg11[%c64_1020, %c16_1021] : memref<128x32xbf16, #tpu.memory_space<vmem>>, vector<8x8xbf16>
    tpu.vector_store %arg11[%c64_1020, %c16_1021], %868 {strides = array<i32>} : memref<128x32xbf16, #tpu.memory_space<vmem>>, vector<8x8xbf16>,
    %c1_1022 = arith.constant 1 : index
    %c2_1023 = arith.constant 2 : index
    %c0_1024 = arith.constant 0 : index
    %c0_1025 = arith.constant 0 : index
    %870 = vector.load %arg10[%c1_1022, %c2_1023, %c0_1024, %c0_1025] : memref<2x9x9x8xbf16, #tpu.memory_space<vmem>>, vector<1x1x8x8xbf16>
    %871 = vector.shape_cast %870 : vector<1x1x8x8xbf16> to vector<8x8xbf16>
    %c72_1026 = arith.constant 72 : index
    %c16_1027 = arith.constant 16 : index
    %872 = vector.load %arg11[%c72_1026, %c16_1027] : memref<128x32xbf16, #tpu.memory_space<vmem>>, vector<8x8xbf16>
    tpu.vector_store %arg11[%c72_1026, %c16_1027], %871 {strides = array<i32>} : memref<128x32xbf16, #tpu.memory_space<vmem>>, vector<8x8xbf16>,
    %c1_1028 = arith.constant 1 : index
    %c3_1029 = arith.constant 3 : index
    %c0_1030 = arith.constant 0 : index
    %c0_1031 = arith.constant 0 : index
    %873 = vector.load %arg10[%c1_1028, %c3_1029, %c0_1030, %c0_1031] : memref<2x9x9x8xbf16, #tpu.memory_space<vmem>>, vector<1x1x8x8xbf16>
    %874 = vector.shape_cast %873 : vector<1x1x8x8xbf16> to vector<8x8xbf16>
    %c80_1032 = arith.constant 80 : index
    %c16_1033 = arith.constant 16 : index
    %875 = vector.load %arg11[%c80_1032, %c16_1033] : memref<128x32xbf16, #tpu.memory_space<vmem>>, vector<8x8xbf16>
    tpu.vector_store %arg11[%c80_1032, %c16_1033], %874 {strides = array<i32>} : memref<128x32xbf16, #tpu.memory_space<vmem>>, vector<8x8xbf16>,
    %c1_1034 = arith.constant 1 : index
    %c4_1035 = arith.constant 4 : index
    %c0_1036 = arith.constant 0 : index
    %c0_1037 = arith.constant 0 : index
    %876 = vector.load %arg10[%c1_1034, %c4_1035, %c0_1036, %c0_1037] : memref<2x9x9x8xbf16, #tpu.memory_space<vmem>>, vector<1x1x8x8xbf16>
    %877 = vector.shape_cast %876 : vector<1x1x8x8xbf16> to vector<8x8xbf16>
    %c88_1038 = arith.constant 88 : index
    %c16_1039 = arith.constant 16 : index
    %878 = vector.load %arg11[%c88_1038, %c16_1039] : memref<128x32xbf16, #tpu.memory_space<vmem>>, vector<8x8xbf16>
    tpu.vector_store %arg11[%c88_1038, %c16_1039], %877 {strides = array<i32>} : memref<128x32xbf16, #tpu.memory_space<vmem>>, vector<8x8xbf16>,
    %c1_1040 = arith.constant 1 : index
    %c5_1041 = arith.constant 5 : index
    %c0_1042 = arith.constant 0 : index
    %c0_1043 = arith.constant 0 : index
    %879 = vector.load %arg10[%c1_1040, %c5_1041, %c0_1042, %c0_1043] : memref<2x9x9x8xbf16, #tpu.memory_space<vmem>>, vector<1x1x8x8xbf16>
    %880 = vector.shape_cast %879 : vector<1x1x8x8xbf16> to vector<8x8xbf16>
    %c96_1044 = arith.constant 96 : index
    %c16_1045 = arith.constant 16 : index
    %881 = vector.load %arg11[%c96_1044, %c16_1045] : memref<128x32xbf16, #tpu.memory_space<vmem>>, vector<8x8xbf16>
    tpu.vector_store %arg11[%c96_1044, %c16_1045], %880 {strides = array<i32>} : memref<128x32xbf16, #tpu.memory_space<vmem>>, vector<8x8xbf16>,
    %c1_1046 = arith.constant 1 : index
    %c6_1047 = arith.constant 6 : index
    %c0_1048 = arith.constant 0 : index
    %c0_1049 = arith.constant 0 : index
    %882 = vector.load %arg10[%c1_1046, %c6_1047, %c0_1048, %c0_1049] : memref<2x9x9x8xbf16, #tpu.memory_space<vmem>>, vector<1x1x8x8xbf16>
    %883 = vector.shape_cast %882 : vector<1x1x8x8xbf16> to vector<8x8xbf16>
    %c104_1050 = arith.constant 104 : index
    %c16_1051 = arith.constant 16 : index
    %884 = vector.load %arg11[%c104_1050, %c16_1051] : memref<128x32xbf16, #tpu.memory_space<vmem>>, vector<8x8xbf16>
    tpu.vector_store %arg11[%c104_1050, %c16_1051], %883 {strides = array<i32>} : memref<128x32xbf16, #tpu.memory_space<vmem>>, vector<8x8xbf16>,
    %c1_1052 = arith.constant 1 : index
    %c7_1053 = arith.constant 7 : index
    %c0_1054 = arith.constant 0 : index
    %c0_1055 = arith.constant 0 : index
    %885 = vector.load %arg10[%c1_1052, %c7_1053, %c0_1054, %c0_1055] : memref<2x9x9x8xbf16, #tpu.memory_space<vmem>>, vector<1x1x8x8xbf16>
    %886 = vector.shape_cast %885 : vector<1x1x8x8xbf16> to vector<8x8xbf16>
    %c112_1056 = arith.constant 112 : index
    %c16_1057 = arith.constant 16 : index
    %887 = vector.load %arg11[%c112_1056, %c16_1057] : memref<128x32xbf16, #tpu.memory_space<vmem>>, vector<8x8xbf16>
    tpu.vector_store %arg11[%c112_1056, %c16_1057], %886 {strides = array<i32>} : memref<128x32xbf16, #tpu.memory_space<vmem>>, vector<8x8xbf16>,
    %c1_1058 = arith.constant 1 : index
    %c8_1059 = arith.constant 8 : index
    %c0_1060 = arith.constant 0 : index
    %c0_1061 = arith.constant 0 : index
    %888 = vector.load %arg10[%c1_1058, %c8_1059, %c0_1060, %c0_1061] : memref<2x9x9x8xbf16, #tpu.memory_space<vmem>>, vector<1x1x8x8xbf16>
    %889 = vector.shape_cast %888 : vector<1x1x8x8xbf16> to vector<8x8xbf16>
    %c120_1062 = arith.constant 120 : index
    %c16_1063 = arith.constant 16 : index
    %890 = vector.load %arg11[%c120_1062, %c16_1063] : memref<128x32xbf16, #tpu.memory_space<vmem>>, vector<8x8xbf16>
    tpu.vector_store %arg11[%c120_1062, %c16_1063], %889 {strides = array<i32>} : memref<128x32xbf16, #tpu.memory_space<vmem>>, vector<8x8xbf16>,
    %c0_1064 = arith.constant 0 : index
    %c1_1065 = arith.constant 1 : index
    %c1_1066 = arith.constant 1 : index
    %c0_1067 = arith.constant 0 : index
    %891 = vector.load %arg10[%c0_1064, %c1_1065, %c1_1066, %c0_1067] : memref<2x9x9x8xbf16, #tpu.memory_space<vmem>>, vector<1x1x8x8xbf16>
    %892 = vector.shape_cast %891 : vector<1x1x8x8xbf16> to vector<8x8xbf16>
    %c0_1068 = arith.constant 0 : index
    %c24_1069 = arith.constant 24 : index
    %893 = vector.load %arg11[%c0_1068, %c24_1069] : memref<128x32xbf16, #tpu.memory_space<vmem>>, vector<8x8xbf16>
    tpu.vector_store %arg11[%c0_1068, %c24_1069], %892 {strides = array<i32>} : memref<128x32xbf16, #tpu.memory_space<vmem>>, vector<8x8xbf16>,
    %c0_1070 = arith.constant 0 : index
    %c2_1071 = arith.constant 2 : index
    %c1_1072 = arith.constant 1 : index
    %c0_1073 = arith.constant 0 : index
    %894 = vector.load %arg10[%c0_1070, %c2_1071, %c1_1072, %c0_1073] : memref<2x9x9x8xbf16, #tpu.memory_space<vmem>>, vector<1x1x8x8xbf16>
    %895 = vector.shape_cast %894 : vector<1x1x8x8xbf16> to vector<8x8xbf16>
    %c8_1074 = arith.constant 8 : index
    %c24_1075 = arith.constant 24 : index
    %896 = vector.load %arg11[%c8_1074, %c24_1075] : memref<128x32xbf16, #tpu.memory_space<vmem>>, vector<8x8xbf16>
    tpu.vector_store %arg11[%c8_1074, %c24_1075], %895 {strides = array<i32>} : memref<128x32xbf16, #tpu.memory_space<vmem>>, vector<8x8xbf16>,
    %c0_1076 = arith.constant 0 : index
    %c3_1077 = arith.constant 3 : index
    %c1_1078 = arith.constant 1 : index
    %c0_1079 = arith.constant 0 : index
    %897 = vector.load %arg10[%c0_1076, %c3_1077, %c1_1078, %c0_1079] : memref<2x9x9x8xbf16, #tpu.memory_space<vmem>>, vector<1x1x8x8xbf16>
    %898 = vector.shape_cast %897 : vector<1x1x8x8xbf16> to vector<8x8xbf16>
    %c16_1080 = arith.constant 16 : index
    %c24_1081 = arith.constant 24 : index
    %899 = vector.load %arg11[%c16_1080, %c24_1081] : memref<128x32xbf16, #tpu.memory_space<vmem>>, vector<8x8xbf16>
    tpu.vector_store %arg11[%c16_1080, %c24_1081], %898 {strides = array<i32>} : memref<128x32xbf16, #tpu.memory_space<vmem>>, vector<8x8xbf16>,
    %c0_1082 = arith.constant 0 : index
    %c4_1083 = arith.constant 4 : index
    %c1_1084 = arith.constant 1 : index
    %c0_1085 = arith.constant 0 : index
    %900 = vector.load %arg10[%c0_1082, %c4_1083, %c1_1084, %c0_1085] : memref<2x9x9x8xbf16, #tpu.memory_space<vmem>>, vector<1x1x8x8xbf16>
    %901 = vector.shape_cast %900 : vector<1x1x8x8xbf16> to vector<8x8xbf16>
    %c24_1086 = arith.constant 24 : index
    %c24_1087 = arith.constant 24 : index
    %902 = vector.load %arg11[%c24_1086, %c24_1087] : memref<128x32xbf16, #tpu.memory_space<vmem>>, vector<8x8xbf16>
    tpu.vector_store %arg11[%c24_1086, %c24_1087], %901 {strides = array<i32>} : memref<128x32xbf16, #tpu.memory_space<vmem>>, vector<8x8xbf16>,
    %c0_1088 = arith.constant 0 : index
    %c5_1089 = arith.constant 5 : index
    %c1_1090 = arith.constant 1 : index
    %c0_1091 = arith.constant 0 : index
    %903 = vector.load %arg10[%c0_1088, %c5_1089, %c1_1090, %c0_1091] : memref<2x9x9x8xbf16, #tpu.memory_space<vmem>>, vector<1x1x8x8xbf16>
    %904 = vector.shape_cast %903 : vector<1x1x8x8xbf16> to vector<8x8xbf16>
    %c32_1092 = arith.constant 32 : index
    %c24_1093 = arith.constant 24 : index
    %905 = vector.load %arg11[%c32_1092, %c24_1093] : memref<128x32xbf16, #tpu.memory_space<vmem>>, vector<8x8xbf16>
    tpu.vector_store %arg11[%c32_1092, %c24_1093], %904 {strides = array<i32>} : memref<128x32xbf16, #tpu.memory_space<vmem>>, vector<8x8xbf16>,
    %c0_1094 = arith.constant 0 : index
    %c6_1095 = arith.constant 6 : index
    %c1_1096 = arith.constant 1 : index
    %c0_1097 = arith.constant 0 : index
    %906 = vector.load %arg10[%c0_1094, %c6_1095, %c1_1096, %c0_1097] : memref<2x9x9x8xbf16, #tpu.memory_space<vmem>>, vector<1x1x8x8xbf16>
    %907 = vector.shape_cast %906 : vector<1x1x8x8xbf16> to vector<8x8xbf16>
    %c40_1098 = arith.constant 40 : index
    %c24_1099 = arith.constant 24 : index
    %908 = vector.load %arg11[%c40_1098, %c24_1099] : memref<128x32xbf16, #tpu.memory_space<vmem>>, vector<8x8xbf16>
    tpu.vector_store %arg11[%c40_1098, %c24_1099], %907 {strides = array<i32>} : memref<128x32xbf16, #tpu.memory_space<vmem>>, vector<8x8xbf16>,
    %c0_1100 = arith.constant 0 : index
    %c7_1101 = arith.constant 7 : index
    %c1_1102 = arith.constant 1 : index
    %c0_1103 = arith.constant 0 : index
    %909 = vector.load %arg10[%c0_1100, %c7_1101, %c1_1102, %c0_1103] : memref<2x9x9x8xbf16, #tpu.memory_space<vmem>>, vector<1x1x8x8xbf16>
    %910 = vector.shape_cast %909 : vector<1x1x8x8xbf16> to vector<8x8xbf16>
    %c48_1104 = arith.constant 48 : index
    %c24_1105 = arith.constant 24 : index
    %911 = vector.load %arg11[%c48_1104, %c24_1105] : memref<128x32xbf16, #tpu.memory_space<vmem>>, vector<8x8xbf16>
    tpu.vector_store %arg11[%c48_1104, %c24_1105], %910 {strides = array<i32>} : memref<128x32xbf16, #tpu.memory_space<vmem>>, vector<8x8xbf16>,
    %c0_1106 = arith.constant 0 : index
    %c8_1107 = arith.constant 8 : index
    %c1_1108 = arith.constant 1 : index
    %c0_1109 = arith.constant 0 : index
    %912 = vector.load %arg10[%c0_1106, %c8_1107, %c1_1108, %c0_1109] : memref<2x9x9x8xbf16, #tpu.memory_space<vmem>>, vector<1x1x8x8xbf16>
    %913 = vector.shape_cast %912 : vector<1x1x8x8xbf16> to vector<8x8xbf16>
    %c56_1110 = arith.constant 56 : index
    %c24_1111 = arith.constant 24 : index
    %914 = vector.load %arg11[%c56_1110, %c24_1111] : memref<128x32xbf16, #tpu.memory_space<vmem>>, vector<8x8xbf16>
    tpu.vector_store %arg11[%c56_1110, %c24_1111], %913 {strides = array<i32>} : memref<128x32xbf16, #tpu.memory_space<vmem>>, vector<8x8xbf16>,
    %c1_1112 = arith.constant 1 : index
    %c1_1113 = arith.constant 1 : index
    %c1_1114 = arith.constant 1 : index
    %c0_1115 = arith.constant 0 : index
    %915 = vector.load %arg10[%c1_1112, %c1_1113, %c1_1114, %c0_1115] : memref<2x9x9x8xbf16, #tpu.memory_space<vmem>>, vector<1x1x8x8xbf16>
    %916 = vector.shape_cast %915 : vector<1x1x8x8xbf16> to vector<8x8xbf16>
    %c64_1116 = arith.constant 64 : index
    %c24_1117 = arith.constant 24 : index
    %917 = vector.load %arg11[%c64_1116, %c24_1117] : memref<128x32xbf16, #tpu.memory_space<vmem>>, vector<8x8xbf16>
    tpu.vector_store %arg11[%c64_1116, %c24_1117], %916 {strides = array<i32>} : memref<128x32xbf16, #tpu.memory_space<vmem>>, vector<8x8xbf16>,
    %c1_1118 = arith.constant 1 : index
    %c2_1119 = arith.constant 2 : index
    %c1_1120 = arith.constant 1 : index
    %c0_1121 = arith.constant 0 : index
    %918 = vector.load %arg10[%c1_1118, %c2_1119, %c1_1120, %c0_1121] : memref<2x9x9x8xbf16, #tpu.memory_space<vmem>>, vector<1x1x8x8xbf16>
    %919 = vector.shape_cast %918 : vector<1x1x8x8xbf16> to vector<8x8xbf16>
    %c72_1122 = arith.constant 72 : index
    %c24_1123 = arith.constant 24 : index
    %920 = vector.load %arg11[%c72_1122, %c24_1123] : memref<128x32xbf16, #tpu.memory_space<vmem>>, vector<8x8xbf16>
    tpu.vector_store %arg11[%c72_1122, %c24_1123], %919 {strides = array<i32>} : memref<128x32xbf16, #tpu.memory_space<vmem>>, vector<8x8xbf16>,
    %c1_1124 = arith.constant 1 : index
    %c3_1125 = arith.constant 3 : index
    %c1_1126 = arith.constant 1 : index
    %c0_1127 = arith.constant 0 : index
    %921 = vector.load %arg10[%c1_1124, %c3_1125, %c1_1126, %c0_1127] : memref<2x9x9x8xbf16, #tpu.memory_space<vmem>>, vector<1x1x8x8xbf16>
    %922 = vector.shape_cast %921 : vector<1x1x8x8xbf16> to vector<8x8xbf16>
    %c80_1128 = arith.constant 80 : index
    %c24_1129 = arith.constant 24 : index
    %923 = vector.load %arg11[%c80_1128, %c24_1129] : memref<128x32xbf16, #tpu.memory_space<vmem>>, vector<8x8xbf16>
    tpu.vector_store %arg11[%c80_1128, %c24_1129], %922 {strides = array<i32>} : memref<128x32xbf16, #tpu.memory_space<vmem>>, vector<8x8xbf16>,
    %c1_1130 = arith.constant 1 : index
    %c4_1131 = arith.constant 4 : index
    %c1_1132 = arith.constant 1 : index
    %c0_1133 = arith.constant 0 : index
    %924 = vector.load %arg10[%c1_1130, %c4_1131, %c1_1132, %c0_1133] : memref<2x9x9x8xbf16, #tpu.memory_space<vmem>>, vector<1x1x8x8xbf16>
    %925 = vector.shape_cast %924 : vector<1x1x8x8xbf16> to vector<8x8xbf16>
    %c88_1134 = arith.constant 88 : index
    %c24_1135 = arith.constant 24 : index
    %926 = vector.load %arg11[%c88_1134, %c24_1135] : memref<128x32xbf16, #tpu.memory_space<vmem>>, vector<8x8xbf16>
    tpu.vector_store %arg11[%c88_1134, %c24_1135], %925 {strides = array<i32>} : memref<128x32xbf16, #tpu.memory_space<vmem>>, vector<8x8xbf16>,
    %c1_1136 = arith.constant 1 : index
    %c5_1137 = arith.constant 5 : index
    %c1_1138 = arith.constant 1 : index
    %c0_1139 = arith.constant 0 : index
    %927 = vector.load %arg10[%c1_1136, %c5_1137, %c1_1138, %c0_1139] : memref<2x9x9x8xbf16, #tpu.memory_space<vmem>>, vector<1x1x8x8xbf16>
    %928 = vector.shape_cast %927 : vector<1x1x8x8xbf16> to vector<8x8xbf16>
    %c96_1140 = arith.constant 96 : index
    %c24_1141 = arith.constant 24 : index
    %929 = vector.load %arg11[%c96_1140, %c24_1141] : memref<128x32xbf16, #tpu.memory_space<vmem>>, vector<8x8xbf16>
    tpu.vector_store %arg11[%c96_1140, %c24_1141], %928 {strides = array<i32>} : memref<128x32xbf16, #tpu.memory_space<vmem>>, vector<8x8xbf16>,
    %c1_1142 = arith.constant 1 : index
    %c6_1143 = arith.constant 6 : index
    %c1_1144 = arith.constant 1 : index
    %c0_1145 = arith.constant 0 : index
    %930 = vector.load %arg10[%c1_1142, %c6_1143, %c1_1144, %c0_1145] : memref<2x9x9x8xbf16, #tpu.memory_space<vmem>>, vector<1x1x8x8xbf16>
    %931 = vector.shape_cast %930 : vector<1x1x8x8xbf16> to vector<8x8xbf16>
    %c104_1146 = arith.constant 104 : index
    %c24_1147 = arith.constant 24 : index
    %932 = vector.load %arg11[%c104_1146, %c24_1147] : memref<128x32xbf16, #tpu.memory_space<vmem>>, vector<8x8xbf16>
    tpu.vector_store %arg11[%c104_1146, %c24_1147], %931 {strides = array<i32>} : memref<128x32xbf16, #tpu.memory_space<vmem>>, vector<8x8xbf16>,
    %c1_1148 = arith.constant 1 : index
    %c7_1149 = arith.constant 7 : index
    %c1_1150 = arith.constant 1 : index
    %c0_1151 = arith.constant 0 : index
    %933 = vector.load %arg10[%c1_1148, %c7_1149, %c1_1150, %c0_1151] : memref<2x9x9x8xbf16, #tpu.memory_space<vmem>>, vector<1x1x8x8xbf16>
    %934 = vector.shape_cast %933 : vector<1x1x8x8xbf16> to vector<8x8xbf16>
    %c112_1152 = arith.constant 112 : index
    %c24_1153 = arith.constant 24 : index
    %935 = vector.load %arg11[%c112_1152, %c24_1153] : memref<128x32xbf16, #tpu.memory_space<vmem>>, vector<8x8xbf16>
    tpu.vector_store %arg11[%c112_1152, %c24_1153], %934 {strides = array<i32>} : memref<128x32xbf16, #tpu.memory_space<vmem>>, vector<8x8xbf16>,
    %c1_1154 = arith.constant 1 : index
    %c8_1155 = arith.constant 8 : index
    %c1_1156 = arith.constant 1 : index
    %c0_1157 = arith.constant 0 : index
    %936 = vector.load %arg10[%c1_1154, %c8_1155, %c1_1156, %c0_1157] : memref<2x9x9x8xbf16, #tpu.memory_space<vmem>>, vector<1x1x8x8xbf16>
    %937 = vector.shape_cast %936 : vector<1x1x8x8xbf16> to vector<8x8xbf16>
    %c120_1158 = arith.constant 120 : index
    %c24_1159 = arith.constant 24 : index
    %938 = vector.load %arg11[%c120_1158, %c24_1159] : memref<128x32xbf16, #tpu.memory_space<vmem>>, vector<8x8xbf16>
    tpu.vector_store %arg11[%c120_1158, %c24_1159], %937 {strides = array<i32>} : memref<128x32xbf16, #tpu.memory_space<vmem>>, vector<8x8xbf16>,
    %c0_1160 = arith.constant 0 : index
    %c0_1161 = arith.constant 0 : index
    %939 = vector.load %arg11[%c0_1160, %c0_1161] : memref<128x32xbf16, #tpu.memory_space<vmem>>, vector<128x32xbf16>
    %c0_1162 = arith.constant 0 : index
    %c0_1163 = arith.constant 0 : index
    %940 = vector.load %arg6[%c0_1162, %c0_1163] : memref<32x512xbf16, #tpu.memory_space<vmem>>, vector<32x512xbf16>
    %cst_1164 = arith.constant dense<0.000000e+00> : vector<128x512xf32>
    %941 = tpu.matmul %939, %940, %cst_1164 {dimension_numbers = #tpu.dot_dimension_numbers<[1], [0], [0], [1], [0, 0, 1, 1], [], []>} : vector<128x32xbf16>, vector<32x512xbf16>, vector<128x512xf32> -> vector<128x512xf32>
    %942 = vector.extract_strided_slice %941 {offsets = [0, 0], sizes = [128, 128], strides = [1, 1]} : vector<128x512xf32> to vector<128x128xf32>
    %943 = math.tanh %942 : vector<128x128xf32>
    %c0_1165 = arith.constant 0 : index
    %c0_1166 = arith.constant 0 : index
    %c0_1167 = arith.constant 0 : index
    %944 = vector.load %arg7[%c0_1165, %c0_1166, %c0_1167] : memref<4x128x128xf32, #tpu.memory_space<vmem>>, vector<1x128x128xf32>
    %945 = vector.shape_cast %944 : vector<1x128x128xf32> to vector<128x128xf32>
    %946 = vector.shape_cast %943 : vector<128x128xf32> to vector<1x128x128xf32>
    tpu.vector_store %arg7[%c0_1165, %c0_1166, %c0_1167], %946 {strides = array<i32>} : memref<4x128x128xf32, #tpu.memory_space<vmem>>, vector<1x128x128xf32>,
    %947 = vector.extract_strided_slice %941 {offsets = [0, 128], sizes = [128, 128], strides = [1, 1]} : vector<128x512xf32> to vector<128x128xf32>
    %948 = math.tanh %947 : vector<128x128xf32>
    %c1_1168 = arith.constant 1 : index
    %c0_1169 = arith.constant 0 : index
    %c0_1170 = arith.constant 0 : index
    %949 = vector.load %arg7[%c1_1168, %c0_1169, %c0_1170] : memref<4x128x128xf32, #tpu.memory_space<vmem>>, vector<1x128x128xf32>
    %950 = vector.shape_cast %949 : vector<1x128x128xf32> to vector<128x128xf32>
    %951 = vector.shape_cast %948 : vector<128x128xf32> to vector<1x128x128xf32>
    tpu.vector_store %arg7[%c1_1168, %c0_1169, %c0_1170], %951 {strides = array<i32>} : memref<4x128x128xf32, #tpu.memory_space<vmem>>, vector<1x128x128xf32>,
    %952 = vector.extract_strided_slice %941 {offsets = [0, 256], sizes = [128, 128], strides = [1, 1]} : vector<128x512xf32> to vector<128x128xf32>
    %953 = math.tanh %952 : vector<128x128xf32>
    %c2_1171 = arith.constant 2 : index
    %c0_1172 = arith.constant 0 : index
    %c0_1173 = arith.constant 0 : index
    %954 = vector.load %arg7[%c2_1171, %c0_1172, %c0_1173] : memref<4x128x128xf32, #tpu.memory_space<vmem>>, vector<1x128x128xf32>
    %955 = vector.shape_cast %954 : vector<1x128x128xf32> to vector<128x128xf32>
    %956 = vector.shape_cast %953 : vector<128x128xf32> to vector<1x128x128xf32>
    tpu.vector_store %arg7[%c2_1171, %c0_1172, %c0_1173], %956 {strides = array<i32>} : memref<4x128x128xf32, #tpu.memory_space<vmem>>, vector<1x128x128xf32>,
    %957 = vector.extract_strided_slice %941 {offsets = [0, 384], sizes = [128, 128], strides = [1, 1]} : vector<128x512xf32> to vector<128x128xf32>
    %958 = math.tanh %957 : vector<128x128xf32>
    %c3_1174 = arith.constant 3 : index
    %c0_1175 = arith.constant 0 : index
    %c0_1176 = arith.constant 0 : index
    %959 = vector.load %arg7[%c3_1174, %c0_1175, %c0_1176] : memref<4x128x128xf32, #tpu.memory_space<vmem>>, vector<1x128x128xf32>
    %960 = vector.shape_cast %959 : vector<1x128x128xf32> to vector<128x128xf32>
    %961 = vector.shape_cast %958 : vector<128x128xf32> to vector<1x128x128xf32>
    tpu.vector_store %arg7[%c3_1174, %c0_1175, %c0_1176], %961 {strides = array<i32>} : memref<4x128x128xf32, #tpu.memory_space<vmem>>, vector<1x128x128xf32>,
    return
  }
}

</mosaic_0001>

<llo_original>
// kernel: _lambda_.1
$region0: #{_lambda_.1}
  #allocation0 [shape = 'u32[]', space=smem, size = 0x4, offset = 0x4, fixed_abs, tag = 'smem constant byte address 0x4 - core index']
  #allocation1 [shape = 'u32[144,128]{1,0:T(1,128)}', space=vmem, size = 0x12000, scoped, tag = 'internal scratch']
  #allocation2 [shape = 'bf16[2,5,5,16]{3,2,1,0:T(8,128)(2,1)}', space=vmem, size = 0x5000, scoped, tag = 'scratch operand']
  #allocation3 [shape = 'bf16[32,64]{1,0:T(16,128)(2,1)}', space=vmem, size = 0x2000, scoped, tag = 'scratch operand']
  #allocation4 [shape = 'bf16[2,9,9,8]{3,2,1,0:T(8,128)(2,1)}', space=vmem, size = 0x12000, scoped, tag = 'scratch operand']
  #allocation5 [shape = 'bf16[128,32]{1,0:T(16,128)(2,1)}', space=vmem, size = 0x8000, scoped, tag = 'scratch operand']
  %s0 = inlined_call_operand.hbm [shape: f32[2,8], index: 0, kind: input, shape index: {}]
  %s1 = inlined_call_operand.vmem [shape: bf16[8,256], index: 1, kind: input, shape index: {}]
  %s2 = inlined_call_operand.vmem [shape: f32[1,256], index: 2, kind: input, shape index: {}]
  %s3 = inlined_call_operand.hbm [shape: bf16[64,512], index: 3, kind: input, shape index: {}]
  %s4 = inlined_call_operand.vmem [shape: f32[1,8], index: 4, kind: input, shape index: {}]
  %s5 = inlined_call_operand.hbm [shape: f32[1,8], index: 5, kind: input, shape index: {}]
  %s6 = inlined_call_operand.hbm [shape: bf16[32,512], index: 6, kind: input, shape index: {}]
  %s7 = inlined_call_operand.vmem [shape: f32[4,128,128], index: 7, kind: output, shape index: {}]
  %s8 = sld [smem:[#allocation0]]
  $region54: #{_lambda_.1} parent=0
    _
  %s10 = ssub.s32 1, %s8
  %s11 = scalar_select 0, %s10, %s8
  $region1: #{_lambda_.1} parent=0
    #allocation6 [shape = 'u8[1024]{0}', space=vmem, size = 0x400, scoped, tag = 'input window, operand 0, single buffered']
    #allocation7 [shape = 's32[1]{0}', space=sflag, size = 0x4, scoped, tag = 'scoped memory for _lambda_.1']
    #allocation8 [shape = 'u8[65536]{0}', space=vmem, size = 0x10000, scoped, tag = 'input window, operand 3, single buffered']
    #allocation9 [shape = 's32[1]{0}', space=sflag, size = 0x4, scoped, tag = 'scoped memory for _lambda_.1']
    #allocation10 [shape = 'u8[512]{0}', space=vmem, size = 0x400, scoped, tag = 'input window, operand 5, single buffered']
    #allocation11 [shape = 'u8[32768]{0}', space=vmem, size = 0x8000, scoped, tag = 'input window, operand 6, single buffered']
    #allocation12 [shape = 's32[1]{0}', space=sflag, size = 0x4, scoped, tag = 'scoped memory for _lambda_.1']
    %12 = vsyncpa [#allocation7], 0
    %13 = vsyncpa [#allocation9], 0
    %14 = vsyncpa [#allocation12], 0
    // Predicated region
    $region2: #{_lambda_.1} parent=1 // pred_check
      _
    $region3: #{_lambda_.1} parent=1 // pred_check_branch
      %16 = sbr.rel (0) target = $region5
    $region4: #{_lambda_.1} parent=1 // pred_region
      %s18 = ssub.s32 32, 32
      %19 = vsyncadd [#allocation7], %s18
      %s21 = sshll.u32 [#allocation6], 4
      %s22 = int_to_ptr.vmem [resolvable:$true] %s21
      %24 = dma.hbm_to_vmem [thread:$0]  %s0, 32, %s22, [#allocation7]
    $region5: #{_lambda_.1} parent=1 // pred_fallthru
      _
    // Predicated region
    $region6: #{_lambda_.1} parent=1 // pred_check
      _
    $region7: #{_lambda_.1} parent=1 // pred_check_branch
      %26 = sbr.rel (0) target = $region9
    $region8: #{_lambda_.1} parent=1 // pred_region
      _
    $region9: #{_lambda_.1} parent=1 // pred_fallthru
      _
    // Predicated region
    $region10: #{_lambda_.1} parent=1 // pred_check
      _
    $region11: #{_lambda_.1} parent=1 // pred_check_branch
      %28 = sbr.rel (0) target = $region13
    $region12: #{_lambda_.1} parent=1 // pred_region
      _
    $region13: #{_lambda_.1} parent=1 // pred_fallthru
      _
    // Predicated region
    $region14: #{_lambda_.1} parent=1 // pred_check
      _
    $region15: #{_lambda_.1} parent=1 // pred_check_branch
      %30 = sbr.rel (0) target = $region17
    $region16: #{_lambda_.1} parent=1 // pred_region
      %s32 = ssub.s32 2048, 2048
      %33 = vsyncadd [#allocation9], %s32
      %s34 = sshll.u32 [#allocation8], 4
      %s35 = int_to_ptr.vmem [resolvable:$true] %s34
      %40 = dma.hbm_to_vmem [thread:$0]  %s3, 2048, %s35, [#allocation9], 256, 256, 16
    $region17: #{_lambda_.1} parent=1 // pred_fallthru
      _
    // Predicated region
    $region18: #{_lambda_.1} parent=1 // pred_check
      _
    $region19: #{_lambda_.1} parent=1 // pred_check_branch
      %42 = sbr.rel (0) target = $region21
    $region20: #{_lambda_.1} parent=1 // pred_region
      _
    $region21: #{_lambda_.1} parent=1 // pred_fallthru
      _
    // Predicated region
    $region22: #{_lambda_.1} parent=1 // pred_check
      _
    $region23: #{_lambda_.1} parent=1 // pred_check_branch
      %44 = sbr.rel (0) target = $region25
    $region24: #{_lambda_.1} parent=1 // pred_region
      %s46 = ssub.s32 16, 16
      %47 = vsyncadd [#allocation9], %s46
      %s49 = sshll.u32 [#allocation10], 4
      %s50 = int_to_ptr.vmem [resolvable:$true] %s49
      %52 = dma.hbm_to_vmem [thread:$0]  %s5, 16, %s50, [#allocation9]
    $region25: #{_lambda_.1} parent=1 // pred_fallthru
      _
    // Predicated region
    $region26: #{_lambda_.1} parent=1 // pred_check
      _
    $region27: #{_lambda_.1} parent=1 // pred_check_branch
      %54 = sbr.rel (0) target = $region29
    $region28: #{_lambda_.1} parent=1 // pred_region
      %s56 = ssub.s32 1024, 1024
      %57 = vsyncadd [#allocation12], %s56
      %s58 = sshll.u32 [#allocation11], 4
      %s59 = int_to_ptr.vmem [resolvable:$true] %s58
      %64 = dma.hbm_to_vmem [thread:$0]  %s6, 1024, %s59, [#allocation12], 256, 256, 16
    $region29: #{_lambda_.1} parent=1 // pred_fallthru
      _
    // Predicated region
    $region30: #{_lambda_.1} parent=1 // pred_check
      _
    $region31: #{_lambda_.1} parent=1 // pred_check_branch
      %66 = sbr.rel (0) target = $region33
    $region32: #{_lambda_.1} parent=1 // pred_region
      %67 = dma.done [#allocation7], 32
    $region33: #{_lambda_.1} parent=1 // pred_fallthru
      _
    // Predicated region
    $region34: #{_lambda_.1} parent=1 // pred_check
      _
    $region35: #{_lambda_.1} parent=1 // pred_check_branch
      %69 = sbr.rel (0) target = $region37
    $region36: #{_lambda_.1} parent=1 // pred_region
      %70 = dma.done [#allocation9], 2048
    $region37: #{_lambda_.1} parent=1 // pred_fallthru
      _
    // Predicated region
    $region38: #{_lambda_.1} parent=1 // pred_check
      _
    $region39: #{_lambda_.1} parent=1 // pred_check_branch
      %72 = sbr.rel (0) target = $region41
    $region40: #{_lambda_.1} parent=1 // pred_region
      %73 = dma.done [#allocation9], 16
    $region41: #{_lambda_.1} parent=1 // pred_fallthru
      _
    // Predicated region
    $region42: #{_lambda_.1} parent=1 // pred_check
      _
    $region43: #{_lambda_.1} parent=1 // pred_check_branch
      %75 = sbr.rel (0) target = $region45
    $region44: #{_lambda_.1} parent=1 // pred_region
      %76 = dma.done [#allocation12], 1024
    $region45: #{_lambda_.1} parent=1 // pred_fallthru
      _
    %v78 = vld [vmem:[#allocation6] sm:$0x3]
    %v79 = vpack.c.bf16 %v78, %v78
    %v80 = vld [vmem:[%s1] sm:$0xff]
    %v81 = vld [vmem:[%s2] sm:$0x3]
    %v83 = vlaneseq
    %v84 = vshrl.u32 %v83, 7
    %v85 = vsub.s32 0, %v84
    %v86 = vrot.slane %v81, %v85
    %v87 = vlaneseq
    %v88 = vshrl.u32 %v87, 7
    %v89 = vsub.s32 1, %v88
    %v90 = vrot.slane %v81, %v89
    %v94 = vunpack.c.l.b16 %v80
    %v95 = vunpack.c.h.b16 %v80
    %v96 = vpack.c.b16 %v94, %v94
    %v97 = vpack.c.b16 %v95, %v95
    %vm98 = vcmask 64512
    %v100 = vsel %vm98, %v79, 0
    %vm102 = vcmask 1043456
    %v104 = vsel %vm102, %v96, 0
    %v107 = vsel %vm102, %v97, 0
    %109 = vmatprep.subr.bf16.mxu0 %v107
    %110 = vmatpush1.bf16.msra.mxu0 %v104
    %111 = vmatprep.subr.bf16.mxu0 0
    %112 = vmatpush1.bf16.msra.mxu0 0
    %113 = vmatprep.subr.bf16.mxu0 0
    %114 = vmatpush1.bf16.msra.mxu0 0
    %115 = vmatprep.subr.bf16.mxu0 0
    %116 = vmatpush1.bf16.msra.mxu0 0
    %117 = vmatprep.subr.bf16.mxu0 0
    %118 = vmatpush1.bf16.msra.mxu0 0
    %119 = vmatprep.subr.bf16.mxu0 0
    %120 = vmatpush1.bf16.msra.mxu0 0
    %121 = vmatprep.subr.bf16.mxu0 0
    %122 = vmatpush1.bf16.msra.mxu0 0
    %123 = vmatprep.subr.bf16.mxu0 0
    %124 = vmatpush1.bf16.msra.mxu0 0
    %125 = vmatprep.subr.bf16.mxu0 0
    %126 = vmatpush1.bf16.msra.mxu0 0
    %127 = vmatprep.subr.bf16.mxu0 0
    %128 = vmatpush1.bf16.msra.mxu0 0
    %129 = vmatprep.subr.bf16.mxu0 0
    %130 = vmatpush1.bf16.msra.mxu0 0
    %131 = vmatprep.subr.bf16.mxu0 0
    %132 = vmatpush1.bf16.msra.mxu0 0
    %133 = vmatprep.subr.bf16.mxu0 0
    %134 = vmatpush1.bf16.msra.mxu0 0
    %135 = vmatprep.subr.bf16.mxu0 0
    %136 = vmatpush1.bf16.msra.mxu0 0
    %137 = vmatprep.subr.bf16.mxu0 0
    %138 = vmatpush1.bf16.msra.mxu0 0
    %139 = vmatprep.subr.bf16.mxu0 0
    %140 = vmatpush1.bf16.msra.mxu0 0
    %141 = vmatprep.mubr.bf16.mxu0 0
    %142 = vmatmul.mubr.bf16.gmra.mrb[0].mxu0 %v100
    %v143 = vpop.f32.mrb[0].mxu0
    %v144 = vadd.f32 %v86, %v143
    %v145 = vpop.f32.mrb[0].mxu0
    %v146 = vadd.f32 %v90, %v145
    %v147 = vpop.f32.mrb[0].mxu0
    %v148 = vpop.f32.mrb[0].mxu0
    %149 = vdwg.mxu0
    %v150 = vpack.c.bf16 %v144, %v144
    %v151 = vpack.c.bf16 %v146, %v146
    %vm152 = vcmask 124928
    %vm153 = vsmask.f32 2304
    %vm154 = vmand %vm152, %vm153
    %v155 = vld [vmem:[#allocation2] sm:$0x7]
    %v156 = vsel %vm154, 0, %v155
    %157 = vst [vmem:[#allocation2] sm:$0x7] %v156
    %v158 = vld [vmem:[#allocation2 + $0x4] sm:$0x7]
    %v159 = vsel %vm154, 0, %v158
    %160 = vst [vmem:[#allocation2 + $0x4] sm:$0x7] %v159
    %v161 = vld [vmem:[#allocation2 + $0x8] sm:$0x7]
    %v162 = vsel %vm154, 0, %v161
    %163 = vst [vmem:[#allocation2 + $0x8] sm:$0x7] %v162
    %v164 = vld [vmem:[#allocation2 + $0xc] sm:$0x7]
    %v165 = vsel %vm154, 0, %v164
    %166 = vst [vmem:[#allocation2 + $0xc] sm:$0x7] %v165
    %v167 = vld [vmem:[#allocation2 + $0x10] sm:$0x7]
    %v168 = vsel %vm154, 0, %v167
    %169 = vst [vmem:[#allocation2 + $0x10] sm:$0x7] %v168
    %v170 = vld [vmem:[#allocation2 + $0x14] sm:$0x7]
    %v171 = vsel %vm154, 0, %v170
    %172 = vst [vmem:[#allocation2 + $0x14] sm:$0x7] %v171
    %v173 = vld [vmem:[#allocation2 + $0x18] sm:$0x7]
    %v174 = vsel %vm154, 0, %v173
    %175 = vst [vmem:[#allocation2 + $0x18] sm:$0x7] %v174
    %v176 = vld [vmem:[#allocation2 + $0x1c] sm:$0x7]
    %v177 = vsel %vm154, 0, %v176
    %178 = vst [vmem:[#allocation2 + $0x1c] sm:$0x7] %v177
    %v179 = vld [vmem:[#allocation2 + $0x20] sm:$0x7]
    %v180 = vsel %vm154, 0, %v179
    %181 = vst [vmem:[#allocation2 + $0x20] sm:$0x7] %v180
    %v182 = vld [vmem:[#allocation2 + $0x24] sm:$0x7]
    %v183 = vsel %vm154, 0, %v182
    %184 = vst [vmem:[#allocation2 + $0x24] sm:$0x7] %v183
    %v187 = vunpack.c.l.s4 1966171168
    %v188 = vunpack.c.0.s8 %v187
    %v189 = vlaneseq
    %v190 = vshrl.u32 %v189, 7
    %v191 = vsub.s32 %v188, %v190
    %v192 = vrot.slane %v150, %v191
    %v194 = vunpack.c.l.s4 1966171168
    %v195 = vunpack.c.0.s8 %v194
    %v196 = vlaneseq
    %v197 = vshrl.u32 %v196, 7
    %v198 = vsub.s32 %v195, %v197
    %v199 = vrot.slane %v192, %v198
    %v200 = vunpack.i.l.s16 %v199
    %v201 = vunpack.i.h.s16 %v199
    %v202 = vpack.i.b16 %v200, %v200
    %v203 = vpack.i.b16 %v201, %v201
    %v205 = vunpack.c.l.s4 286326784
    %v206 = vunpack.c.0.s8 %v205
    %v207 = vlaneseq
    %v208 = vshrl.u32 %v207, 7
    %v209 = vsub.s32 %v206, %v208
    %v210 = vrot.slane %v202, %v209
    %v212 = vunpack.c.l.s4 286326784
    %v213 = vunpack.c.0.s8 %v212
    %v214 = vlaneseq
    %v215 = vshrl.u32 %v214, 7
    %v216 = vsub.s32 %v213, %v215
    %v217 = vrot.slane %v203, %v216
    %vm220 = vcmask 122880
    %vm221 = vsmask.f32 256
    %vm222 = vmand %vm220, %vm221
    %v223 = vld [vmem:[#allocation2] sm:$0x1]
    %v224 = vsel %vm222, %v210, %v223
    %225 = vst [vmem:[#allocation2] sm:$0x1] %v224
    %v226 = vld [vmem:[#allocation2 + $0x14] sm:$0x1]
    %v227 = vsel %vm222, %v217, %v226
    %228 = vst [vmem:[#allocation2 + $0x14] sm:$0x1] %v227
    %229 = vrot.lane.b32.xlu0 %v210, 112
    %v230 = vpop.permute.xlu0 %229
    %231 = vrot.lane.b32.xlu0 %v217, 112
    %v232 = vpop.permute.xlu0 %231
    %vm235 = vsmask.f32 7938
    %vm236 = vmand %vm220, %vm235
    %v237 = vld [vmem:[#allocation2] sm:$0x1]
    %v238 = vsel %vm236, %v230, %v237
    %239 = vst [vmem:[#allocation2] sm:$0x1] %v238
    %v240 = vld [vmem:[#allocation2 + $0x14] sm:$0x1]
    %v241 = vsel %vm236, %v232, %v240
    %242 = vst [vmem:[#allocation2 + $0x14] sm:$0x1] %v241
    %243 = vrot.lane.b32.xlu0 %v210, 96
    %v244 = vpop.permute.xlu0 %243
    %245 = vrot.lane.b32.xlu0 %v217, 96
    %v246 = vpop.permute.xlu0 %245
    %vm249 = vcmask 123905
    %vm250 = vsmask.f32 1280
    %vm251 = vmand %vm249, %vm250
    %v252 = vld [vmem:[#allocation2] sm:$0x2]
    %v253 = vsel %vm251, %v244, %v252
    %254 = vst [vmem:[#allocation2] sm:$0x2] %v253
    %v255 = vld [vmem:[#allocation2 + $0x14] sm:$0x2]
    %v256 = vsel %vm251, %v246, %v255
    %257 = vst [vmem:[#allocation2 + $0x14] sm:$0x2] %v256
    %258 = vrot.lane.b32.xlu0 %v210, 80
    %v259 = vpop.permute.xlu0 %258
    %260 = vrot.lane.b32.xlu0 %v217, 80
    %v261 = vpop.permute.xlu0 %260
    %vm264 = vsmask.f32 7942
    %vm265 = vmand %vm249, %vm264
    %v266 = vld [vmem:[#allocation2] sm:$0x2]
    %v267 = vsel %vm265, %v259, %v266
    %268 = vst [vmem:[#allocation2] sm:$0x2] %v267
    %v269 = vld [vmem:[#allocation2 + $0x14] sm:$0x2]
    %v270 = vsel %vm265, %v261, %v269
    %271 = vst [vmem:[#allocation2 + $0x14] sm:$0x2] %v270
    %272 = vrot.lane.b32.xlu0 %v210, 64
    %v273 = vpop.permute.xlu0 %272
    %274 = vrot.lane.b32.xlu0 %v217, 64
    %v275 = vpop.permute.xlu0 %274
    %s278 = scalar_lea.vmem [#allocation2], 4
    %v279 = vld [vmem:[%s278] sm:$0x1]
    %v280 = vsel %vm222, %v273, %v279
    %281 = vst [vmem:[%s278] sm:$0x1] %v280
    %v282 = vld [vmem:[%s278 + $0x14] sm:$0x1]
    %v283 = vsel %vm222, %v275, %v282
    %284 = vst [vmem:[%s278 + $0x14] sm:$0x1] %v283
    %285 = vrot.lane.b32.xlu0 %v210, 48
    %v286 = vpop.permute.xlu0 %285
    %287 = vrot.lane.b32.xlu0 %v217, 48
    %v288 = vpop.permute.xlu0 %287
    %v291 = vld [vmem:[%s278] sm:$0x1]
    %v292 = vsel %vm236, %v286, %v291
    %293 = vst [vmem:[%s278] sm:$0x1] %v292
    %v294 = vld [vmem:[%s278 + $0x14] sm:$0x1]
    %v295 = vsel %vm236, %v288, %v294
    %296 = vst [vmem:[%s278 + $0x14] sm:$0x1] %v295
    %297 = vrot.lane.b32.xlu0 %v210, 32
    %v298 = vpop.permute.xlu0 %297
    %299 = vrot.lane.b32.xlu0 %v217, 32
    %v300 = vpop.permute.xlu0 %299
    %v303 = vld [vmem:[%s278] sm:$0x2]
    %v304 = vsel %vm251, %v298, %v303
    %305 = vst [vmem:[%s278] sm:$0x2] %v304
    %v306 = vld [vmem:[%s278 + $0x14] sm:$0x2]
    %v307 = vsel %vm251, %v300, %v306
    %308 = vst [vmem:[%s278 + $0x14] sm:$0x2] %v307
    %309 = vrot.lane.b32.xlu0 %v210, 16
    %v310 = vpop.permute.xlu0 %309
    %311 = vrot.lane.b32.xlu0 %v217, 16
    %v312 = vpop.permute.xlu0 %311
    %v315 = vld [vmem:[%s278] sm:$0x2]
    %v316 = vsel %vm265, %v310, %v315
    %317 = vst [vmem:[%s278] sm:$0x2] %v316
    %v318 = vld [vmem:[%s278 + $0x14] sm:$0x2]
    %v319 = vsel %vm265, %v312, %v318
    %320 = vst [vmem:[%s278 + $0x14] sm:$0x2] %v319
    %v323 = vunpack.c.l.s4 1966171168
    %v324 = vunpack.c.0.s8 %v323
    %v325 = vlaneseq
    %v326 = vshrl.u32 %v325, 7
    %v327 = vsub.s32 %v324, %v326
    %v328 = vrot.slane %v151, %v327
    %v330 = vunpack.c.l.s4 1966171168
    %v331 = vunpack.c.0.s8 %v330
    %v332 = vlaneseq
    %v333 = vshrl.u32 %v332, 7
    %v334 = vsub.s32 %v331, %v333
    %v335 = vrot.slane %v328, %v334
    %v336 = vunpack.i.l.s16 %v335
    %v337 = vunpack.i.h.s16 %v335
    %v338 = vpack.i.b16 %v336, %v336
    %v339 = vpack.i.b16 %v337, %v337
    %v341 = vunpack.c.l.s4 286326784
    %v342 = vunpack.c.0.s8 %v341
    %v343 = vlaneseq
    %v344 = vshrl.u32 %v343, 7
    %v345 = vsub.s32 %v342, %v344
    %v346 = vrot.slane %v338, %v345
    %v348 = vunpack.c.l.s4 286326784
    %v349 = vunpack.c.0.s8 %v348
    %v350 = vlaneseq
    %v351 = vshrl.u32 %v350, 7
    %v352 = vsub.s32 %v349, %v351
    %v353 = vrot.slane %v339, %v352
    %s356 = scalar_lea.vmem [#allocation2], 8
    %v357 = vld [vmem:[%s356] sm:$0x1]
    %v358 = vsel %vm222, %v346, %v357
    %359 = vst [vmem:[%s356] sm:$0x1] %v358
    %v360 = vld [vmem:[%s356 + $0x14] sm:$0x1]
    %v361 = vsel %vm222, %v353, %v360
    %362 = vst [vmem:[%s356 + $0x14] sm:$0x1] %v361
    %363 = vrot.lane.b32.xlu0 %v346, 112
    %v364 = vpop.permute.xlu0 %363
    %365 = vrot.lane.b32.xlu0 %v353, 112
    %v366 = vpop.permute.xlu0 %365
    %v369 = vld [vmem:[%s356] sm:$0x1]
    %v370 = vsel %vm236, %v364, %v369
    %371 = vst [vmem:[%s356] sm:$0x1] %v370
    %v372 = vld [vmem:[%s356 + $0x14] sm:$0x1]
    %v373 = vsel %vm236, %v366, %v372
    %374 = vst [vmem:[%s356 + $0x14] sm:$0x1] %v373
    %375 = vrot.lane.b32.xlu0 %v346, 96
    %v376 = vpop.permute.xlu0 %375
    %377 = vrot.lane.b32.xlu0 %v353, 96
    %v378 = vpop.permute.xlu0 %377
    %v381 = vld [vmem:[%s356] sm:$0x2]
    %v382 = vsel %vm251, %v376, %v381
    %383 = vst [vmem:[%s356] sm:$0x2] %v382
    %v384 = vld [vmem:[%s356 + $0x14] sm:$0x2]
    %v385 = vsel %vm251, %v378, %v384
    %386 = vst [vmem:[%s356 + $0x14] sm:$0x2] %v385
    %387 = vrot.lane.b32.xlu0 %v346, 80
    %v388 = vpop.permute.xlu0 %387
    %389 = vrot.lane.b32.xlu0 %v353, 80
    %v390 = vpop.permute.xlu0 %389
    %v393 = vld [vmem:[%s356] sm:$0x2]
    %v394 = vsel %vm265, %v388, %v393
    %395 = vst [vmem:[%s356] sm:$0x2] %v394
    %v396 = vld [vmem:[%s356 + $0x14] sm:$0x2]
    %v397 = vsel %vm265, %v390, %v396
    %398 = vst [vmem:[%s356 + $0x14] sm:$0x2] %v397
    %399 = vrot.lane.b32.xlu0 %v346, 64
    %v400 = vpop.permute.xlu0 %399
    %401 = vrot.lane.b32.xlu0 %v353, 64
    %v402 = vpop.permute.xlu0 %401
    %s405 = scalar_lea.vmem [#allocation2], 12
    %v406 = vld [vmem:[%s405] sm:$0x1]
    %v407 = vsel %vm222, %v400, %v406
    %408 = vst [vmem:[%s405] sm:$0x1] %v407
    %v409 = vld [vmem:[%s405 + $0x14] sm:$0x1]
    %v410 = vsel %vm222, %v402, %v409
    %411 = vst [vmem:[%s405 + $0x14] sm:$0x1] %v410
    %412 = vrot.lane.b32.xlu0 %v346, 48
    %v413 = vpop.permute.xlu0 %412
    %414 = vrot.lane.b32.xlu0 %v353, 48
    %v415 = vpop.permute.xlu0 %414
    %v418 = vld [vmem:[%s405] sm:$0x1]
    %v419 = vsel %vm236, %v413, %v418
    %420 = vst [vmem:[%s405] sm:$0x1] %v419
    %v421 = vld [vmem:[%s405 + $0x14] sm:$0x1]
    %v422 = vsel %vm236, %v415, %v421
    %423 = vst [vmem:[%s405 + $0x14] sm:$0x1] %v422
    %424 = vrot.lane.b32.xlu0 %v346, 32
    %v425 = vpop.permute.xlu0 %424
    %426 = vrot.lane.b32.xlu0 %v353, 32
    %v427 = vpop.permute.xlu0 %426
    %v430 = vld [vmem:[%s405] sm:$0x2]
    %v431 = vsel %vm251, %v425, %v430
    %432 = vst [vmem:[%s405] sm:$0x2] %v431
    %v433 = vld [vmem:[%s405 + $0x14] sm:$0x2]
    %v434 = vsel %vm251, %v427, %v433
    %435 = vst [vmem:[%s405 + $0x14] sm:$0x2] %v434
    %436 = vrot.lane.b32.xlu0 %v346, 16
    %v437 = vpop.permute.xlu0 %436
    %438 = vrot.lane.b32.xlu0 %v353, 16
    %v439 = vpop.permute.xlu0 %438
    %v442 = vld [vmem:[%s405] sm:$0x2]
    %v443 = vsel %vm265, %v437, %v442
    %444 = vst [vmem:[%s405] sm:$0x2] %v443
    %v445 = vld [vmem:[%s405 + $0x14] sm:$0x2]
    %v446 = vsel %vm265, %v439, %v445
    %447 = vst [vmem:[%s405 + $0x14] sm:$0x2] %v446
    %v448 = vld [vmem:[#allocation2] sm:$0x3]
    %vm449 = vcmask 123904
    %450 = vst.msk [vmem:[#allocation3] sm:$0x3] %vm449, %v448
    %v451 = vld [vmem:[%s278] sm:$0x3]
    %v453 = vunpack.c.l.b16 %v451
    %v454 = vpack.c.b16 %v453, %v453
    %v455 = vrot.slane %v454, 6
    %vm457 = vcmask 125954
    %458 = vst.msk [vmem:[#allocation3] sm:$0xc] %vm457, %v455
    %v459 = vld [vmem:[%s356] sm:$0x3]
    %v461 = vunpack.c.l.b16 %v459
    %v462 = vpack.c.b16 %v461, %v461
    %vm464 = vcmask 128004
    %465 = vst.msk [vmem:[#allocation3] sm:$0x30] %vm464, %v462
    %v466 = vld [vmem:[%s405] sm:$0x3]
    %v468 = vunpack.c.l.b16 %v466
    %v469 = vpack.c.b16 %v468, %v468
    %v470 = vrot.slane %v469, 2
    %vm472 = vcmask 130054
    %473 = vst.msk [vmem:[#allocation3] sm:$0xc0] %vm472, %v470
    %s474 = scalar_lea.vmem [#allocation2], 20
    %v475 = vld [vmem:[%s474] sm:$0x3]
    %476 = vst.msk [vmem:[#allocation3 + $0x8] sm:$0x3] %vm449, %v475
    %s477 = scalar_lea.vmem [#allocation2], 24
    %v478 = vld [vmem:[%s477] sm:$0x3]
    %v480 = vunpack.c.l.b16 %v478
    %v481 = vpack.c.b16 %v480, %v480
    %v482 = vrot.slane %v481, 6
    %484 = vst.msk [vmem:[#allocation3 + $0x8] sm:$0xc] %vm457, %v482
    %s485 = scalar_lea.vmem [#allocation2], 28
    %v486 = vld [vmem:[%s485] sm:$0x3]
    %v488 = vunpack.c.l.b16 %v486
    %v489 = vpack.c.b16 %v488, %v488
    %491 = vst.msk [vmem:[#allocation3 + $0x8] sm:$0x30] %vm464, %v489
    %s492 = scalar_lea.vmem [#allocation2], 32
    %v493 = vld [vmem:[%s492] sm:$0x3]
    %v495 = vunpack.c.l.b16 %v493
    %v496 = vpack.c.b16 %v495, %v495
    %v497 = vrot.slane %v496, 2
    %499 = vst.msk [vmem:[#allocation3 + $0x8] sm:$0xc0] %vm472, %v497
    %v500 = vld [vmem:[#allocation2] sm:$0x7]
    %v502 = vunpack.c.l.b16 %v500
    %v503 = vpack.c.b16 %v502, %v502
    %v505 = vshrl.u32 %v503, 16
    %v507 = vshll.u32 %v503, 16
    %v509 = vrot.slane %v507, 1
    %v510 = vor.u32 %v505, %v509
    %511 = vrot.lane.b32.xlu0 %v510, 16
    %v512 = vpop.permute.xlu0 %511
    %vm514 = vcmask 255104
    %515 = vst.msk [vmem:[#allocation3] sm:$0x3] %vm514, %v512
    %v516 = vld [vmem:[%s278] sm:$0x7]
    %v518 = vunpack.c.l.b16 %v516
    %v519 = vpack.c.b16 %v518, %v518
    %v521 = vshrl.u32 %v519, 16
    %v523 = vrot.slane %v521, 6
    %v524 = vshll.u32 %v519, 16
    %v526 = vrot.slane %v524, 7
    %v527 = vor.u32 %v523, %v526
    %528 = vrot.lane.b32.xlu0 %v527, 16
    %v529 = vpop.permute.xlu0 %528
    %vm531 = vcmask 257154
    %532 = vst.msk [vmem:[#allocation3] sm:$0xc] %vm531, %v529
    %v533 = vld [vmem:[%s356] sm:$0x7]
    %v535 = vunpack.c.l.b16 %v533
    %v536 = vpack.c.b16 %v535, %v535
    %v538 = vshrl.u32 %v536, 16
    %v540 = vrot.slane %v538, 4
    %v541 = vshll.u32 %v536, 16
    %v543 = vrot.slane %v541, 5
    %v544 = vor.u32 %v540, %v543
    %545 = vrot.lane.b32.xlu0 %v544, 16
    %v546 = vpop.permute.xlu0 %545
    %vm548 = vcmask 259204
    %549 = vst.msk [vmem:[#allocation3] sm:$0x30] %vm548, %v546
    %v550 = vld [vmem:[%s405] sm:$0x7]
    %v552 = vunpack.c.l.b16 %v550
    %v553 = vpack.c.b16 %v552, %v552
    %v555 = vshrl.u32 %v553, 16
    %v557 = vrot.slane %v555, 2
    %v558 = vshll.u32 %v553, 16
    %v560 = vrot.slane %v558, 3
    %v561 = vor.u32 %v557, %v560
    %562 = vrot.lane.b32.xlu0 %v561, 16
    %v563 = vpop.permute.xlu0 %562
    %vm565 = vcmask 261254
    %566 = vst.msk [vmem:[#allocation3] sm:$0xc0] %vm565, %v563
    %v567 = vld [vmem:[%s474] sm:$0x7]
    %v569 = vunpack.c.l.b16 %v567
    %v570 = vpack.c.b16 %v569, %v569
    %v572 = vshrl.u32 %v570, 16
    %v574 = vshll.u32 %v570, 16
    %v576 = vrot.slane %v574, 1
    %v577 = vor.u32 %v572, %v576
    %578 = vrot.lane.b32.xlu0 %v577, 16
    %v579 = vpop.permute.xlu0 %578
    %581 = vst.msk [vmem:[#allocation3 + $0x8] sm:$0x3] %vm514, %v579
    %v582 = vld [vmem:[%s477] sm:$0x7]
    %v584 = vunpack.c.l.b16 %v582
    %v585 = vpack.c.b16 %v584, %v584
    %v587 = vshrl.u32 %v585, 16
    %v589 = vrot.slane %v587, 6
    %v590 = vshll.u32 %v585, 16
    %v592 = vrot.slane %v590, 7
    %v593 = vor.u32 %v589, %v592
    %594 = vrot.lane.b32.xlu0 %v593, 16
    %v595 = vpop.permute.xlu0 %594
    %597 = vst.msk [vmem:[#allocation3 + $0x8] sm:$0xc] %vm531, %v595
    %v598 = vld [vmem:[%s485] sm:$0x7]
    %v600 = vunpack.c.l.b16 %v598
    %v601 = vpack.c.b16 %v600, %v600
    %v603 = vshrl.u32 %v601, 16
    %v605 = vrot.slane %v603, 4
    %v606 = vshll.u32 %v601, 16
    %v608 = vrot.slane %v606, 5
    %v609 = vor.u32 %v605, %v608
    %610 = vrot.lane.b32.xlu0 %v609, 16
    %v611 = vpop.permute.xlu0 %610
    %613 = vst.msk [vmem:[#allocation3 + $0x8] sm:$0x30] %vm548, %v611
    %v614 = vld [vmem:[%s492] sm:$0x7]
    %v616 = vunpack.c.l.b16 %v614
    %v617 = vpack.c.b16 %v616, %v616
    %v619 = vshrl.u32 %v617, 16
    %v621 = vrot.slane %v619, 2
    %v622 = vshll.u32 %v617, 16
    %v624 = vrot.slane %v622, 3
    %v625 = vor.u32 %v621, %v624
    %626 = vrot.lane.b32.xlu0 %v625, 16
    %v627 = vpop.permute.xlu0 %626
    %629 = vst.msk [vmem:[#allocation3 + $0x8] sm:$0xc0] %vm565, %v627
    %v630 = vld [vmem:[%s278] sm:$0x3]
    %v632 = vunpack.c.l.b16 %v630
    %v633 = vpack.c.b16 %v632, %v632
    %634 = vrot.lane.b32.xlu0 %v633, 32
    %v635 = vpop.permute.xlu0 %634
    %vm637 = vcmask 386304
    %638 = vst.msk [vmem:[#allocation3] sm:$0x3] %vm637, %v635
    %v639 = vld [vmem:[%s356] sm:$0x3]
    %v641 = vunpack.c.l.b16 %v639
    %v642 = vpack.c.b16 %v641, %v641
    %v643 = vrot.slane %v642, 6
    %644 = vrot.lane.b32.xlu0 %v643, 32
    %v645 = vpop.permute.xlu0 %644
    %vm647 = vcmask 388354
    %648 = vst.msk [vmem:[#allocation3] sm:$0xc] %vm647, %v645
    %v649 = vld [vmem:[%s405] sm:$0x3]
    %v651 = vunpack.c.l.b16 %v649
    %v652 = vpack.c.b16 %v651, %v651
    %653 = vrot.lane.b32.xlu0 %v652, 32
    %v654 = vpop.permute.xlu0 %653
    %vm656 = vcmask 390404
    %657 = vst.msk [vmem:[#allocation3] sm:$0x30] %vm656, %v654
    %s658 = scalar_lea.vmem [#allocation2], 16
    %v659 = vld [vmem:[%s658] sm:$0x3]
    %v661 = vunpack.c.l.b16 %v659
    %v662 = vpack.c.b16 %v661, %v661
    %v663 = vrot.slane %v662, 2
    %664 = vrot.lane.b32.xlu0 %v663, 32
    %v665 = vpop.permute.xlu0 %664
    %vm667 = vcmask 392454
    %668 = vst.msk [vmem:[#allocation3] sm:$0xc0] %vm667, %v665
    %v669 = vld [vmem:[%s477] sm:$0x3]
    %v671 = vunpack.c.l.b16 %v669
    %v672 = vpack.c.b16 %v671, %v671
    %673 = vrot.lane.b32.xlu0 %v672, 32
    %v674 = vpop.permute.xlu0 %673
    %676 = vst.msk [vmem:[#allocation3 + $0x8] sm:$0x3] %vm637, %v674
    %v677 = vld [vmem:[%s485] sm:$0x3]
    %v679 = vunpack.c.l.b16 %v677
    %v680 = vpack.c.b16 %v679, %v679
    %v681 = vrot.slane %v680, 6
    %682 = vrot.lane.b32.xlu0 %v681, 32
    %v683 = vpop.permute.xlu0 %682
    %685 = vst.msk [vmem:[#allocation3 + $0x8] sm:$0xc] %vm647, %v683
    %v686 = vld [vmem:[%s492] sm:$0x3]
    %v688 = vunpack.c.l.b16 %v686
    %v689 = vpack.c.b16 %v688, %v688
    %690 = vrot.lane.b32.xlu0 %v689, 32
    %v691 = vpop.permute.xlu0 %690
    %693 = vst.msk [vmem:[#allocation3 + $0x8] sm:$0x30] %vm656, %v691
    %s694 = scalar_lea.vmem [#allocation2], 36
    %v695 = vld [vmem:[%s694] sm:$0x3]
    %v697 = vunpack.c.l.b16 %v695
    %v698 = vpack.c.b16 %v697, %v697
    %v699 = vrot.slane %v698, 2
    %700 = vrot.lane.b32.xlu0 %v699, 32
    %v701 = vpop.permute.xlu0 %700
    %703 = vst.msk [vmem:[#allocation3 + $0x8] sm:$0xc0] %vm667, %v701
    %v704 = vld [vmem:[%s278] sm:$0x7]
    %v706 = vunpack.c.l.b16 %v704
    %v707 = vpack.c.b16 %v706, %v706
    %v709 = vshrl.u32 %v707, 16
    %v711 = vshll.u32 %v707, 16
    %v713 = vrot.slane %v711, 1
    %v714 = vor.u32 %v709, %v713
    %715 = vrot.lane.b32.xlu0 %v714, 48
    %v716 = vpop.permute.xlu0 %715
    %vm718 = vcmask 517504
    %719 = vst.msk [vmem:[#allocation3] sm:$0x3] %vm718, %v716
    %v720 = vld [vmem:[%s356] sm:$0x7]
    %v722 = vunpack.c.l.b16 %v720
    %v723 = vpack.c.b16 %v722, %v722
    %v725 = vshrl.u32 %v723, 16
    %v727 = vrot.slane %v725, 6
    %v728 = vshll.u32 %v723, 16
    %v730 = vrot.slane %v728, 7
    %v731 = vor.u32 %v727, %v730
    %732 = vrot.lane.b32.xlu0 %v731, 48
    %v733 = vpop.permute.xlu0 %732
    %vm735 = vcmask 519554
    %736 = vst.msk [vmem:[#allocation3] sm:$0xc] %vm735, %v733
    %v737 = vld [vmem:[%s405] sm:$0x7]
    %v739 = vunpack.c.l.b16 %v737
    %v740 = vpack.c.b16 %v739, %v739
    %v742 = vshrl.u32 %v740, 16
    %v744 = vrot.slane %v742, 4
    %v745 = vshll.u32 %v740, 16
    %v747 = vrot.slane %v745, 5
    %v748 = vor.u32 %v744, %v747
    %749 = vrot.lane.b32.xlu0 %v748, 48
    %v750 = vpop.permute.xlu0 %749
    %vm752 = vcmask 521604
    %753 = vst.msk [vmem:[#allocation3] sm:$0x30] %vm752, %v750
    %v754 = vld [vmem:[%s658] sm:$0x7]
    %v756 = vunpack.c.l.b16 %v754
    %v757 = vpack.c.b16 %v756, %v756
    %v759 = vshrl.u32 %v757, 16
    %v761 = vrot.slane %v759, 2
    %v762 = vshll.u32 %v757, 16
    %v764 = vrot.slane %v762, 3
    %v765 = vor.u32 %v761, %v764
    %766 = vrot.lane.b32.xlu0 %v765, 48
    %v767 = vpop.permute.xlu0 %766
    %vm769 = vcmask 523654
    %770 = vst.msk [vmem:[#allocation3] sm:$0xc0] %vm769, %v767
    %v771 = vld [vmem:[%s477] sm:$0x7]
    %v773 = vunpack.c.l.b16 %v771
    %v774 = vpack.c.b16 %v773, %v773
    %v776 = vshrl.u32 %v774, 16
    %v778 = vshll.u32 %v774, 16
    %v780 = vrot.slane %v778, 1
    %v781 = vor.u32 %v776, %v780
    %782 = vrot.lane.b32.xlu0 %v781, 48
    %v783 = vpop.permute.xlu0 %782
    %785 = vst.msk [vmem:[#allocation3 + $0x8] sm:$0x3] %vm718, %v783
    %v786 = vld [vmem:[%s485] sm:$0x7]
    %v788 = vunpack.c.l.b16 %v786
    %v789 = vpack.c.b16 %v788, %v788
    %v791 = vshrl.u32 %v789, 16
    %v793 = vrot.slane %v791, 6
    %v794 = vshll.u32 %v789, 16
    %v796 = vrot.slane %v794, 7
    %v797 = vor.u32 %v793, %v796
    %798 = vrot.lane.b32.xlu0 %v797, 48
    %v799 = vpop.permute.xlu0 %798
    %801 = vst.msk [vmem:[#allocation3 + $0x8] sm:$0xc] %vm735, %v799
    %v802 = vld [vmem:[%s492] sm:$0x7]
    %v804 = vunpack.c.l.b16 %v802
    %v805 = vpack.c.b16 %v804, %v804
    %v807 = vshrl.u32 %v805, 16
    %v809 = vrot.slane %v807, 4
    %v810 = vshll.u32 %v805, 16
    %v812 = vrot.slane %v810, 5
    %v813 = vor.u32 %v809, %v812
    %814 = vrot.lane.b32.xlu0 %v813, 48
    %v815 = vpop.permute.xlu0 %814
    %817 = vst.msk [vmem:[#allocation3 + $0x8] sm:$0x30] %vm752, %v815
    %v818 = vld [vmem:[%s694] sm:$0x7]
    %v820 = vunpack.c.l.b16 %v818
    %v821 = vpack.c.b16 %v820, %v820
    %v823 = vshrl.u32 %v821, 16
    %v825 = vrot.slane %v823, 2
    %v826 = vshll.u32 %v821, 16
    %v828 = vrot.slane %v826, 3
    %v829 = vor.u32 %v825, %v828
    %830 = vrot.lane.b32.xlu0 %v829, 48
    %v831 = vpop.permute.xlu0 %830
    %833 = vst.msk [vmem:[#allocation3 + $0x8] sm:$0xc0] %vm769, %v831
    %v834 = vld [vmem:[#allocation3] sm:$0xff]
    %v835 = vld [vmem:[#allocation3 + $0x8] sm:$0xff]
    %v836 = vld [vmem:[#allocation8] sm:$0xff]
    %v837 = vld [vmem:[#allocation8 + $0x8] sm:$0xff]
    %v838 = vld [vmem:[#allocation8 + $0x10] sm:$0xff]
    %v839 = vld [vmem:[#allocation8 + $0x18] sm:$0xff]
    %v840 = vld [vmem:[#allocation8 + $0x20] sm:$0xff]
    %v841 = vld [vmem:[#allocation8 + $0x28] sm:$0xff]
    %v842 = vld [vmem:[#allocation8 + $0x30] sm:$0xff]
    %v843 = vld [vmem:[#allocation8 + $0x38] sm:$0xff]
    %v844 = vld [vmem:[#allocation8 + $0x40] sm:$0xff]
    %v845 = vld [vmem:[#allocation8 + $0x48] sm:$0xff]
    %v846 = vld [vmem:[#allocation8 + $0x50] sm:$0xff]
    %v847 = vld [vmem:[#allocation8 + $0x58] sm:$0xff]
    %v848 = vld [vmem:[#allocation8 + $0x60] sm:$0xff]
    %v849 = vld [vmem:[#allocation8 + $0x68] sm:$0xff]
    %v850 = vld [vmem:[#allocation8 + $0x70] sm:$0xff]
    %v851 = vld [vmem:[#allocation8 + $0x78] sm:$0xff]
    %v868 = vunpack.c.l.b16 %v836
    %v869 = vunpack.c.h.b16 %v836
    %v870 = vunpack.c.l.b16 %v837
    %v871 = vunpack.c.h.b16 %v837
    %v872 = vunpack.c.l.b16 %v838
    %v873 = vunpack.c.h.b16 %v838
    %v874 = vunpack.c.l.b16 %v839
    %v875 = vunpack.c.h.b16 %v839
    %v876 = vunpack.c.l.b16 %v840
    %v877 = vunpack.c.h.b16 %v840
    %v878 = vunpack.c.l.b16 %v841
    %v879 = vunpack.c.h.b16 %v841
    %v880 = vunpack.c.l.b16 %v842
    %v881 = vunpack.c.h.b16 %v842
    %v882 = vunpack.c.l.b16 %v843
    %v883 = vunpack.c.h.b16 %v843
    %v884 = vunpack.c.l.b16 %v844
    %v885 = vunpack.c.h.b16 %v844
    %v886 = vunpack.c.l.b16 %v845
    %v887 = vunpack.c.h.b16 %v845
    %v888 = vunpack.c.l.b16 %v846
    %v889 = vunpack.c.h.b16 %v846
    %v890 = vunpack.c.l.b16 %v847
    %v891 = vunpack.c.h.b16 %v847
    %v892 = vunpack.c.l.b16 %v848
    %v893 = vunpack.c.h.b16 %v848
    %v894 = vunpack.c.l.b16 %v849
    %v895 = vunpack.c.h.b16 %v849
    %v896 = vunpack.c.l.b16 %v850
    %v897 = vunpack.c.h.b16 %v850
    %v898 = vunpack.c.l.b16 %v851
    %v899 = vunpack.c.h.b16 %v851
    %v900 = vpack.c.b16 %v872, %v868
    %v901 = vpack.c.b16 %v873, %v869
    %v902 = vpack.c.b16 %v874, %v870
    %v903 = vpack.c.b16 %v875, %v871
    %v904 = vpack.c.b16 %v880, %v876
    %v905 = vpack.c.b16 %v881, %v877
    %v906 = vpack.c.b16 %v882, %v878
    %v907 = vpack.c.b16 %v883, %v879
    %v908 = vpack.c.b16 %v888, %v884
    %v909 = vpack.c.b16 %v889, %v885
    %v910 = vpack.c.b16 %v890, %v886
    %v911 = vpack.c.b16 %v891, %v887
    %v912 = vpack.c.b16 %v896, %v892
    %v913 = vpack.c.b16 %v897, %v893
    %v914 = vpack.c.b16 %v898, %v894
    %v915 = vpack.c.b16 %v899, %v895
    %vm932 = vcmask 523264
    %v934 = vsel %vm932, %v834, 0
    %v937 = vsel %vm932, %v835, 0
    %939 = vmatprep.subr.bf16.mxu0 %v901
    %940 = vmatpush1.bf16.msra.mxu0 %v900
    %941 = vmatprep.subr.bf16.mxu0 %v905
    %942 = vmatpush1.bf16.msra.mxu0 %v904
    %943 = vmatprep.subr.bf16.mxu0 %v909
    %944 = vmatpush1.bf16.msra.mxu0 %v908
    %945 = vmatprep.subr.bf16.mxu0 %v913
    %946 = vmatpush1.bf16.msra.mxu0 %v912
    %947 = vmatprep.subr.bf16.mxu0 0
    %948 = vmatpush1.bf16.msra.mxu0 0
    %949 = vmatprep.subr.bf16.mxu0 0
    %950 = vmatpush1.bf16.msra.mxu0 0
    %951 = vmatprep.subr.bf16.mxu0 0
    %952 = vmatpush1.bf16.msra.mxu0 0
    %953 = vmatprep.subr.bf16.mxu0 0
    %954 = vmatpush1.bf16.msra.mxu0 0
    %955 = vmatprep.subr.bf16.mxu0 0
    %956 = vmatpush1.bf16.msra.mxu0 0
    %957 = vmatprep.subr.bf16.mxu0 0
    %958 = vmatpush1.bf16.msra.mxu0 0
    %959 = vmatprep.subr.bf16.mxu0 0
    %960 = vmatpush1.bf16.msra.mxu0 0
    %961 = vmatprep.subr.bf16.mxu0 0
    %962 = vmatpush1.bf16.msra.mxu0 0
    %963 = vmatprep.subr.bf16.mxu0 0
    %964 = vmatpush1.bf16.msra.mxu0 0
    %965 = vmatprep.subr.bf16.mxu0 0
    %966 = vmatpush1.bf16.msra.mxu0 0
    %967 = vmatprep.subr.bf16.mxu0 0
    %968 = vmatpush1.bf16.msra.mxu0 0
    %969 = vmatprep.subr.bf16.mxu0 0
    %970 = vmatpush1.bf16.msra.mxu0 0
    %971 = vmatprep.mubr.bf16.mxu0 0
    %972 = vmatmul.mubr.bf16.gmra.mrb[0].mxu0 %v934
    %v973 = vpop.f32.mrb[0].mxu0
    %v974 = vadd.f32 0.0, %v973
    %v975 = vpop.f32.mrb[0].mxu0
    %v976 = vadd.f32 0.0, %v975
    %v977 = vpop.f32.mrb[0].mxu0
    %v978 = vadd.f32 0.0, %v977
    %v979 = vpop.f32.mrb[0].mxu0
    %v980 = vadd.f32 0.0, %v979
    %981 = vmatprep.mubr.bf16.mxu0 0
    %982 = vmatmul.mubr.bf16.gmra.mrb[0].mxu0 %v937
    %v983 = vpop.f32.mrb[0].mxu0
    %v984 = vadd.f32 0.0, %v983
    %v985 = vpop.f32.mrb[0].mxu0
    %v986 = vadd.f32 0.0, %v985
    %v987 = vpop.f32.mrb[0].mxu0
    %v988 = vadd.f32 0.0, %v987
    %v989 = vpop.f32.mrb[0].mxu0
    %v990 = vadd.f32 0.0, %v989
    %991 = vdwg.mxu0
    %992 = vmatprep.subr.bf16.mxu0 %v903
    %993 = vmatpush1.bf16.msra.mxu0 %v902
    %994 = vmatprep.subr.bf16.mxu0 %v907
    %995 = vmatpush1.bf16.msra.mxu0 %v906
    %996 = vmatprep.subr.bf16.mxu0 %v911
    %997 = vmatpush1.bf16.msra.mxu0 %v910
    %998 = vmatprep.subr.bf16.mxu0 %v915
    %999 = vmatpush1.bf16.msra.mxu0 %v914
    %1000 = vmatprep.subr.bf16.mxu0 0
    %1001 = vmatpush1.bf16.msra.mxu0 0
    %1002 = vmatprep.subr.bf16.mxu0 0
    %1003 = vmatpush1.bf16.msra.mxu0 0
    %1004 = vmatprep.subr.bf16.mxu0 0
    %1005 = vmatpush1.bf16.msra.mxu0 0
    %1006 = vmatprep.subr.bf16.mxu0 0
    %1007 = vmatpush1.bf16.msra.mxu0 0
    %1008 = vmatprep.subr.bf16.mxu0 0
    %1009 = vmatpush1.bf16.msra.mxu0 0
    %1010 = vmatprep.subr.bf16.mxu0 0
    %1011 = vmatpush1.bf16.msra.mxu0 0
    %1012 = vmatprep.subr.bf16.mxu0 0
    %1013 = vmatpush1.bf16.msra.mxu0 0
    %1014 = vmatprep.subr.bf16.mxu0 0
    %1015 = vmatpush1.bf16.msra.mxu0 0
    %1016 = vmatprep.subr.bf16.mxu0 0
    %1017 = vmatpush1.bf16.msra.mxu0 0
    %1018 = vmatprep.subr.bf16.mxu0 0
    %1019 = vmatpush1.bf16.msra.mxu0 0
    %1020 = vmatprep.subr.bf16.mxu0 0
    %1021 = vmatpush1.bf16.msra.mxu0 0
    %1022 = vmatprep.subr.bf16.mxu0 0
    %1023 = vmatpush1.bf16.msra.mxu0 0
    %1024 = vmatprep.mubr.bf16.mxu0 0
    %1025 = vmatmul.mubr.bf16.gmra.mrb[0].mxu0 %v934
    %v1026 = vpop.f32.mrb[0].mxu0
    %v1027 = vadd.f32 0.0, %v1026
    %v1028 = vpop.f32.mrb[0].mxu0
    %v1029 = vadd.f32 0.0, %v1028
    %v1030 = vpop.f32.mrb[0].mxu0
    %v1031 = vadd.f32 0.0, %v1030
    %v1032 = vpop.f32.mrb[0].mxu0
    %v1033 = vadd.f32 0.0, %v1032
    %1034 = vmatprep.mubr.bf16.mxu0 0
    %1035 = vmatmul.mubr.bf16.gmra.mrb[0].mxu0 %v937
    %v1036 = vpop.f32.mrb[0].mxu0
    %v1037 = vadd.f32 0.0, %v1036
    %v1038 = vpop.f32.mrb[0].mxu0
    %v1039 = vadd.f32 0.0, %v1038
    %v1040 = vpop.f32.mrb[0].mxu0
    %v1041 = vadd.f32 0.0, %v1040
    %v1042 = vpop.f32.mrb[0].mxu0
    %v1043 = vadd.f32 0.0, %v1042
    %1044 = vdwg.mxu0
    %v1045 = vadd.f32 %v974, %v976
    %v1046 = vadd.f32 %v978, %v980
    %v1047 = vadd.f32 %v984, %v986
    %v1048 = vadd.f32 %v988, %v990
    %v1049 = vadd.f32 %v1045, %v1027
    %v1050 = vadd.f32 %v1046, %v1031
    %v1051 = vadd.f32 %v1047, %v1037
    %v1052 = vadd.f32 %v1048, %v1041
    %v1053 = vadd.f32 %v1049, %v1029
    %v1054 = vadd.f32 %v1050, %v1033
    %v1055 = vadd.f32 %v1051, %v1039
    %v1056 = vadd.f32 %v1052, %v1043
    %v1057 = vmul.f32 %v974, %v974
    %v1058 = vmul.f32 %v978, %v978
    %v1059 = vmul.f32 %v984, %v984
    %v1060 = vmul.f32 %v988, %v988
    %v1061 = vmul.f32 %v976, %v976
    %v1062 = vmul.f32 %v980, %v980
    %v1063 = vmul.f32 %v986, %v986
    %v1064 = vmul.f32 %v990, %v990
    %v1065 = vadd.f32 %v1057, %v1061
    %v1066 = vadd.f32 %v1058, %v1062
    %v1067 = vadd.f32 %v1059, %v1063
    %v1068 = vadd.f32 %v1060, %v1064
    %v1069 = vmul.f32 %v1027, %v1027
    %v1070 = vmul.f32 %v1031, %v1031
    %v1071 = vmul.f32 %v1037, %v1037
    %v1072 = vmul.f32 %v1041, %v1041
    %v1073 = vadd.f32 %v1065, %v1069
    %v1074 = vadd.f32 %v1066, %v1070
    %v1075 = vadd.f32 %v1067, %v1071
    %v1076 = vadd.f32 %v1068, %v1072
    %v1077 = vmul.f32 %v1029, %v1029
    %v1078 = vmul.f32 %v1033, %v1033
    %v1079 = vmul.f32 %v1039, %v1039
    %v1080 = vmul.f32 %v1043, %v1043
    %v1081 = vadd.f32 %v1073, %v1077
    %v1082 = vadd.f32 %v1074, %v1078
    %v1083 = vadd.f32 %v1075, %v1079
    %v1084 = vadd.f32 %v1076, %v1080
    %v1085 = vsel %vm98, %v1053, 0.0
    %v1086 = vsel %vm98, %v1054, 0.0
    %v1087 = vadd.f32 %v1085, %v1086
    %v1088 = vsel %vm98, %v1055, 0.0
    %v1089 = vadd.f32 %v1087, %v1088
    %v1090 = vsel %vm98, %v1056, 0.0
    %v1091 = vadd.f32 %v1089, %v1090
    %v1092 = vrot.slane %v1091, 4
    %v1093 = vadd.f32 %v1091, %v1092
    %v1094 = vrot.slane %v1093, 2
    %v1095 = vadd.f32 %v1093, %v1094
    %v1096 = vrot.slane %v1095, 1
    %v1097 = vadd.f32 %v1095, %v1096
    %v1098 = vmul.f32 %v1097, 0.0078125
    %v1099 = vsel %vm98, %v1081, 0.0
    %v1100 = vsel %vm98, %v1082, 0.0
    %v1101 = vadd.f32 %v1099, %v1100
    %v1102 = vsel %vm98, %v1083, 0.0
    %v1103 = vadd.f32 %v1101, %v1102
    %v1104 = vsel %vm98, %v1084, 0.0
    %v1105 = vadd.f32 %v1103, %v1104
    %v1106 = vrot.slane %v1105, 4
    %v1107 = vadd.f32 %v1105, %v1106
    %v1108 = vrot.slane %v1107, 2
    %v1109 = vadd.f32 %v1107, %v1108
    %v1110 = vrot.slane %v1109, 1
    %v1111 = vadd.f32 %v1109, %v1110
    %v1112 = vmul.f32 %v1111, 0.0078125
    %v1113 = vmul.f32 %v1098, %v1098
    %v1114 = vsub.f32 %v1112, %v1113
    %v1115 = vadd.f32 %v1114, 1e-05
    %v1116 = vrsqrt.pop %v1115
    %v1117 = vld [vmem:[%s4] sm:$0x1]
    %v1118 = vmul.f32 %v1116, %v1117
    %v1119 = vld [vmem:[#allocation10] sm:$0x1]
    %v1120 = vmul.f32 %v1098, %v1118
    %v1121 = vsub.f32 %v1119, %v1120
    %v1122 = vlaneseq
    %v1123 = vshrl.u32 %v1122, 7
    %v1124 = vsub.s32 0, %v1123
    %v1125 = vrot.slane %v1118, %v1124
    %v1126 = vmul.f32 %v974, %v1125
    %v1127 = vmul.f32 %v978, %v1125
    %v1128 = vmul.f32 %v984, %v1125
    %v1129 = vmul.f32 %v988, %v1125
    %v1131 = vlaneseq
    %v1132 = vshrl.u32 %v1131, 7
    %v1133 = vsub.s32 0, %v1132
    %v1134 = vrot.slane %v1121, %v1133
    %v1136 = vadd.f32 %v1126, %v1134
    %v1137 = vadd.f32 %v1127, %v1134
    %v1138 = vadd.f32 %v1128, %v1134
    %v1139 = vadd.f32 %v1129, %v1134
    %v1140 = vmax.f32 %v1136, 0.0
    %v1141 = vmax.f32 %v1137, 0.0
    %v1142 = vmax.f32 %v1138, 0.0
    %v1143 = vmax.f32 %v1139, 0.0
    %v1144 = vpack.c.bf16 %v1141, %v1140
    %v1145 = vpack.c.bf16 %v1143, %v1142
    %v1146 = vmul.f32 %v976, %v1125
    %v1147 = vmul.f32 %v980, %v1125
    %v1148 = vmul.f32 %v986, %v1125
    %v1149 = vmul.f32 %v990, %v1125
    %v1150 = vadd.f32 %v1146, %v1134
    %v1151 = vadd.f32 %v1147, %v1134
    %v1152 = vadd.f32 %v1148, %v1134
    %v1153 = vadd.f32 %v1149, %v1134
    %v1154 = vmax.f32 %v1150, 0.0
    %v1155 = vmax.f32 %v1151, 0.0
    %v1156 = vmax.f32 %v1152, 0.0
    %v1157 = vmax.f32 %v1153, 0.0
    %v1158 = vpack.c.bf16 %v1155, %v1154
    %v1159 = vpack.c.bf16 %v1157, %v1156
    %v1160 = vmul.f32 %v1027, %v1125
    %v1161 = vmul.f32 %v1031, %v1125
    %v1162 = vmul.f32 %v1037, %v1125
    %v1163 = vmul.f32 %v1041, %v1125
    %v1164 = vadd.f32 %v1160, %v1134
    %v1165 = vadd.f32 %v1161, %v1134
    %v1166 = vadd.f32 %v1162, %v1134
    %v1167 = vadd.f32 %v1163, %v1134
    %v1168 = vmax.f32 %v1164, 0.0
    %v1169 = vmax.f32 %v1165, 0.0
    %v1170 = vmax.f32 %v1166, 0.0
    %v1171 = vmax.f32 %v1167, 0.0
    %v1172 = vpack.c.bf16 %v1169, %v1168
    %v1173 = vpack.c.bf16 %v1171, %v1170
    %v1174 = vmul.f32 %v1029, %v1125
    %v1175 = vmul.f32 %v1033, %v1125
    %v1176 = vmul.f32 %v1039, %v1125
    %v1177 = vmul.f32 %v1043, %v1125
    %v1178 = vadd.f32 %v1174, %v1134
    %v1179 = vadd.f32 %v1175, %v1134
    %v1180 = vadd.f32 %v1176, %v1134
    %v1181 = vadd.f32 %v1177, %v1134
    %v1182 = vmax.f32 %v1178, 0.0
    %v1183 = vmax.f32 %v1179, 0.0
    %v1184 = vmax.f32 %v1180, 0.0
    %v1185 = vmax.f32 %v1181, 0.0
    %v1186 = vpack.c.bf16 %v1183, %v1182
    %v1187 = vpack.c.bf16 %v1185, %v1184
    %vm1188 = vcmask 60416
    %1189 = vst.msk [vmem:[#allocation4] sm:$0xf] %vm1188, 0
    %vm1190 = vcmask 57344
    %vm1191 = vmand %vm1190, %vm221
    %v1192 = vld [vmem:[#allocation4 + $0x4] sm:$0x1]
    %v1193 = vsel %vm1191, 0, %v1192
    %1194 = vst [vmem:[#allocation4 + $0x4] sm:$0x1] %v1193
    %1195 = vst.msk [vmem:[#allocation4 + $0x8] sm:$0xf] %vm1188, 0
    %v1196 = vld [vmem:[#allocation4 + $0xc] sm:$0x1]
    %v1197 = vsel %vm1191, 0, %v1196
    %1198 = vst [vmem:[#allocation4 + $0xc] sm:$0x1] %v1197
    %1199 = vst.msk [vmem:[#allocation4 + $0x10] sm:$0xf] %vm1188, 0
    %v1200 = vld [vmem:[#allocation4 + $0x14] sm:$0x1]
    %v1201 = vsel %vm1191, 0, %v1200
    %1202 = vst [vmem:[#allocation4 + $0x14] sm:$0x1] %v1201
    %1203 = vst.msk [vmem:[#allocation4 + $0x18] sm:$0xf] %vm1188, 0
    %v1204 = vld [vmem:[#allocation4 + $0x1c] sm:$0x1]
    %v1205 = vsel %vm1191, 0, %v1204
    %1206 = vst [vmem:[#allocation4 + $0x1c] sm:$0x1] %v1205
    %1207 = vst.msk [vmem:[#allocation4 + $0x20] sm:$0xf] %vm1188, 0
    %v1208 = vld [vmem:[#allocation4 + $0x24] sm:$0x1]
    %v1209 = vsel %vm1191, 0, %v1208
    %1210 = vst [vmem:[#allocation4 + $0x24] sm:$0x1] %v1209
    %1211 = vst.msk [vmem:[#allocation4 + $0x28] sm:$0xf] %vm1188, 0
    %v1212 = vld [vmem:[#allocation4 + $0x2c] sm:$0x1]
    %v1213 = vsel %vm1191, 0, %v1212
    %1214 = vst [vmem:[#allocation4 + $0x2c] sm:$0x1] %v1213
    %1215 = vst.msk [vmem:[#allocation4 + $0x30] sm:$0xf] %vm1188, 0
    %v1216 = vld [vmem:[#allocation4 + $0x34] sm:$0x1]
    %v1217 = vsel %vm1191, 0, %v1216
    %1218 = vst [vmem:[#allocation4 + $0x34] sm:$0x1] %v1217
    %1219 = vst.msk [vmem:[#allocation4 + $0x38] sm:$0xf] %vm1188, 0
    %v1220 = vld [vmem:[#allocation4 + $0x3c] sm:$0x1]
    %v1221 = vsel %vm1191, 0, %v1220
    %1222 = vst [vmem:[#allocation4 + $0x3c] sm:$0x1] %v1221
    %1223 = vst.msk [vmem:[#allocation4 + $0x40] sm:$0xf] %vm1188, 0
    %v1224 = vld [vmem:[#allocation4 + $0x44] sm:$0x1]
    %v1225 = vsel %vm1191, 0, %v1224
    %1226 = vst [vmem:[#allocation4 + $0x44] sm:$0x1] %v1225
    %1227 = vst.msk [vmem:[#allocation4 + $0x48] sm:$0xf] %vm1188, 0
    %v1228 = vld [vmem:[#allocation4 + $0x4c] sm:$0x1]
    %v1229 = vsel %vm1191, 0, %v1228
    %1230 = vst [vmem:[#allocation4 + $0x4c] sm:$0x1] %v1229
    %1231 = vst.msk [vmem:[#allocation4 + $0x50] sm:$0xf] %vm1188, 0
    %v1232 = vld [vmem:[#allocation4 + $0x54] sm:$0x1]
    %v1233 = vsel %vm1191, 0, %v1232
    %1234 = vst [vmem:[#allocation4 + $0x54] sm:$0x1] %v1233
    %1235 = vst.msk [vmem:[#allocation4 + $0x58] sm:$0xf] %vm1188, 0
    %v1236 = vld [vmem:[#allocation4 + $0x5c] sm:$0x1]
    %v1237 = vsel %vm1191, 0, %v1236
    %1238 = vst [vmem:[#allocation4 + $0x5c] sm:$0x1] %v1237
    %1239 = vst.msk [vmem:[#allocation4 + $0x60] sm:$0xf] %vm1188, 0
    %v1240 = vld [vmem:[#allocation4 + $0x64] sm:$0x1]
    %v1241 = vsel %vm1191, 0, %v1240
    %1242 = vst [vmem:[#allocation4 + $0x64] sm:$0x1] %v1241
    %1243 = vst.msk [vmem:[#allocation4 + $0x68] sm:$0xf] %vm1188, 0
    %v1244 = vld [vmem:[#allocation4 + $0x6c] sm:$0x1]
    %v1245 = vsel %vm1191, 0, %v1244
    %1246 = vst [vmem:[#allocation4 + $0x6c] sm:$0x1] %v1245
    %1247 = vst.msk [vmem:[#allocation4 + $0x70] sm:$0xf] %vm1188, 0
    %v1248 = vld [vmem:[#allocation4 + $0x74] sm:$0x1]
    %v1249 = vsel %vm1191, 0, %v1248
    %1250 = vst [vmem:[#allocation4 + $0x74] sm:$0x1] %v1249
    %1251 = vst.msk [vmem:[#allocation4 + $0x78] sm:$0xf] %vm1188, 0
    %v1252 = vld [vmem:[#allocation4 + $0x7c] sm:$0x1]
    %v1253 = vsel %vm1191, 0, %v1252
    %1254 = vst [vmem:[#allocation4 + $0x7c] sm:$0x1] %v1253
    %1255 = vst.msk [vmem:[#allocation4 + $0x80] sm:$0xf] %vm1188, 0
    %v1256 = vld [vmem:[#allocation4 + $0x84] sm:$0x1]
    %v1257 = vsel %vm1191, 0, %v1256
    %1258 = vst [vmem:[#allocation4 + $0x84] sm:$0x1] %v1257
    %1259 = vst.msk [vmem:[#allocation4 + $0x88] sm:$0xf] %vm1188, 0
    %v1260 = vld [vmem:[#allocation4 + $0x8c] sm:$0x1]
    %v1261 = vsel %vm1191, 0, %v1260
    %1262 = vst [vmem:[#allocation4 + $0x8c] sm:$0x1] %v1261
    %v1263 = vld [vmem:[#allocation4] sm:$0x1]
    %v1264 = vsel %vm1191, %v1144, %v1263
    %1265 = vst [vmem:[#allocation4] sm:$0x1] %v1264
    %v1267 = vunpack.c.l.b16 %v1144
    %v1268 = vpack.c.b16 %v1267, %v1267
    %v1270 = vshrl.u32 %v1268, 16
    %v1272 = vrot.slane %v1270, 7
    %vm1274 = vcmask 58369
    %vm1275 = vmand %vm1274, %vm250
    %v1276 = vld [vmem:[#allocation4] sm:$0x2]
    %v1277 = vsel %vm1275, %v1272, %v1276
    %1278 = vst [vmem:[#allocation4] sm:$0x2] %v1277
    %v1279 = vrot.slane %v1268, 7
    %vm1281 = vcmask 59394
    %vm1282 = vmand %vm1281, %vm153
    %v1283 = vld [vmem:[#allocation4] sm:$0x4]
    %v1284 = vsel %vm1282, %v1279, %v1283
    %1285 = vst [vmem:[#allocation4] sm:$0x4] %v1284
    %v1286 = vrot.slane %v1270, 6
    %vm1288 = vcmask 60419
    %vm1289 = vsmask.f32 3328
    %vm1290 = vmand %vm1288, %vm1289
    %v1291 = vld [vmem:[#allocation4] sm:$0x8]
    %v1292 = vsel %vm1290, %v1286, %v1291
    %1293 = vst [vmem:[#allocation4] sm:$0x8] %v1292
    %v1294 = vrot.slane %v1268, 6
    %v1295 = vrot.slane %v1294, 4
    %s1297 = scalar_lea.vmem [#allocation4], 16
    %v1298 = vld [vmem:[%s1297] sm:$0x1]
    %v1299 = vsel %vm1191, %v1295, %v1298
    %1300 = vst [vmem:[%s1297] sm:$0x1] %v1299
    %v1301 = vrot.slane %v1270, 5
    %v1302 = vrot.slane %v1301, 4
    %v1304 = vld [vmem:[%s1297] sm:$0x2]
    %v1305 = vsel %vm1275, %v1302, %v1304
    %1306 = vst [vmem:[%s1297] sm:$0x2] %v1305
    %v1307 = vrot.slane %v1268, 5
    %v1308 = vrot.slane %v1307, 4
    %v1310 = vld [vmem:[%s1297] sm:$0x4]
    %v1311 = vsel %vm1282, %v1308, %v1310
    %1312 = vst [vmem:[%s1297] sm:$0x4] %v1311
    %v1313 = vrot.slane %v1270, 4
    %v1314 = vrot.slane %v1313, 4
    %v1316 = vld [vmem:[%s1297] sm:$0x8]
    %v1317 = vsel %vm1290, %v1314, %v1316
    %1318 = vst [vmem:[%s1297] sm:$0x8] %v1317
    %v1319 = vunpack.c.h.b16 %v1144
    %v1320 = vpack.c.b16 %v1319, %v1319
    %s1322 = scalar_lea.vmem [#allocation4], 32
    %v1323 = vld [vmem:[%s1322] sm:$0x1]
    %v1324 = vsel %vm1191, %v1320, %v1323
    %1325 = vst [vmem:[%s1322] sm:$0x1] %v1324
    %v1327 = vshrl.u32 %v1320, 16
    %v1329 = vrot.slane %v1327, 7
    %v1331 = vld [vmem:[%s1322] sm:$0x2]
    %v1332 = vsel %vm1275, %v1329, %v1331
    %1333 = vst [vmem:[%s1322] sm:$0x2] %v1332
    %v1334 = vrot.slane %v1320, 7
    %v1336 = vld [vmem:[%s1322] sm:$0x4]
    %v1337 = vsel %vm1282, %v1334, %v1336
    %1338 = vst [vmem:[%s1322] sm:$0x4] %v1337
    %v1339 = vrot.slane %v1327, 6
    %v1341 = vld [vmem:[%s1322] sm:$0x8]
    %v1342 = vsel %vm1290, %v1339, %v1341
    %1343 = vst [vmem:[%s1322] sm:$0x8] %v1342
    %v1344 = vrot.slane %v1320, 6
    %v1345 = vrot.slane %v1344, 4
    %s1347 = scalar_lea.vmem [#allocation4], 48
    %v1348 = vld [vmem:[%s1347] sm:$0x1]
    %v1349 = vsel %vm1191, %v1345, %v1348
    %1350 = vst [vmem:[%s1347] sm:$0x1] %v1349
    %v1351 = vrot.slane %v1327, 5
    %v1352 = vrot.slane %v1351, 4
    %v1354 = vld [vmem:[%s1347] sm:$0x2]
    %v1355 = vsel %vm1275, %v1352, %v1354
    %1356 = vst [vmem:[%s1347] sm:$0x2] %v1355
    %v1357 = vrot.slane %v1320, 5
    %v1358 = vrot.slane %v1357, 4
    %v1360 = vld [vmem:[%s1347] sm:$0x4]
    %v1361 = vsel %vm1282, %v1358, %v1360
    %1362 = vst [vmem:[%s1347] sm:$0x4] %v1361
    %v1363 = vrot.slane %v1327, 4
    %v1364 = vrot.slane %v1363, 4
    %v1366 = vld [vmem:[%s1347] sm:$0x8]
    %v1367 = vsel %vm1290, %v1364, %v1366
    %1368 = vst [vmem:[%s1347] sm:$0x8] %v1367
    %s1369 = scalar_lea.vmem [#allocation4], 72
    %v1370 = vld [vmem:[%s1369] sm:$0x1]
    %v1371 = vsel %vm1191, %v1145, %v1370
    %1372 = vst [vmem:[%s1369] sm:$0x1] %v1371
    %v1374 = vunpack.c.l.b16 %v1145
    %v1375 = vpack.c.b16 %v1374, %v1374
    %v1377 = vshrl.u32 %v1375, 16
    %v1379 = vrot.slane %v1377, 7
    %v1381 = vld [vmem:[%s1369] sm:$0x2]
    %v1382 = vsel %vm1275, %v1379, %v1381
    %1383 = vst [vmem:[%s1369] sm:$0x2] %v1382
    %v1384 = vrot.slane %v1375, 7
    %v1386 = vld [vmem:[%s1369] sm:$0x4]
    %v1387 = vsel %vm1282, %v1384, %v1386
    %1388 = vst [vmem:[%s1369] sm:$0x4] %v1387
    %v1389 = vrot.slane %v1377, 6
    %v1391 = vld [vmem:[%s1369] sm:$0x8]
    %v1392 = vsel %vm1290, %v1389, %v1391
    %1393 = vst [vmem:[%s1369] sm:$0x8] %v1392
    %v1394 = vrot.slane %v1375, 6
    %v1395 = vrot.slane %v1394, 4
    %s1397 = scalar_lea.vmem [#allocation4], 88
    %v1398 = vld [vmem:[%s1397] sm:$0x1]
    %v1399 = vsel %vm1191, %v1395, %v1398
    %1400 = vst [vmem:[%s1397] sm:$0x1] %v1399
    %v1401 = vrot.slane %v1377, 5
    %v1402 = vrot.slane %v1401, 4
    %v1404 = vld [vmem:[%s1397] sm:$0x2]
    %v1405 = vsel %vm1275, %v1402, %v1404
    %1406 = vst [vmem:[%s1397] sm:$0x2] %v1405
    %v1407 = vrot.slane %v1375, 5
    %v1408 = vrot.slane %v1407, 4
    %v1410 = vld [vmem:[%s1397] sm:$0x4]
    %v1411 = vsel %vm1282, %v1408, %v1410
    %1412 = vst [vmem:[%s1397] sm:$0x4] %v1411
    %v1413 = vrot.slane %v1377, 4
    %v1414 = vrot.slane %v1413, 4
    %v1416 = vld [vmem:[%s1397] sm:$0x8]
    %v1417 = vsel %vm1290, %v1414, %v1416
    %1418 = vst [vmem:[%s1397] sm:$0x8] %v1417
    %v1419 = vunpack.c.h.b16 %v1145
    %v1420 = vpack.c.b16 %v1419, %v1419
    %s1422 = scalar_lea.vmem [#allocation4], 104
    %v1423 = vld [vmem:[%s1422] sm:$0x1]
    %v1424 = vsel %vm1191, %v1420, %v1423
    %1425 = vst [vmem:[%s1422] sm:$0x1] %v1424
    %v1427 = vshrl.u32 %v1420, 16
    %v1429 = vrot.slane %v1427, 7
    %v1431 = vld [vmem:[%s1422] sm:$0x2]
    %v1432 = vsel %vm1275, %v1429, %v1431
    %1433 = vst [vmem:[%s1422] sm:$0x2] %v1432
    %v1434 = vrot.slane %v1420, 7
    %v1436 = vld [vmem:[%s1422] sm:$0x4]
    %v1437 = vsel %vm1282, %v1434, %v1436
    %1438 = vst [vmem:[%s1422] sm:$0x4] %v1437
    %v1439 = vrot.slane %v1427, 6
    %v1441 = vld [vmem:[%s1422] sm:$0x8]
    %v1442 = vsel %vm1290, %v1439, %v1441
    %1443 = vst [vmem:[%s1422] sm:$0x8] %v1442
    %v1444 = vrot.slane %v1420, 6
    %v1445 = vrot.slane %v1444, 4
    %s1447 = scalar_lea.vmem [#allocation4], 120
    %v1448 = vld [vmem:[%s1447] sm:$0x1]
    %v1449 = vsel %vm1191, %v1445, %v1448
    %1450 = vst [vmem:[%s1447] sm:$0x1] %v1449
    %v1451 = vrot.slane %v1427, 5
    %v1452 = vrot.slane %v1451, 4
    %v1454 = vld [vmem:[%s1447] sm:$0x2]
    %v1455 = vsel %vm1275, %v1452, %v1454
    %1456 = vst [vmem:[%s1447] sm:$0x2] %v1455
    %v1457 = vrot.slane %v1420, 5
    %v1458 = vrot.slane %v1457, 4
    %v1460 = vld [vmem:[%s1447] sm:$0x4]
    %v1461 = vsel %vm1282, %v1458, %v1460
    %1462 = vst [vmem:[%s1447] sm:$0x4] %v1461
    %v1463 = vrot.slane %v1427, 4
    %v1464 = vrot.slane %v1463, 4
    %v1466 = vld [vmem:[%s1447] sm:$0x8]
    %v1467 = vsel %vm1290, %v1464, %v1466
    %1468 = vst [vmem:[%s1447] sm:$0x8] %v1467
    %v1470 = vunpack.c.l.b16 %v1158
    %v1471 = vpack.c.b16 %v1470, %v1470
    %v1473 = vshll.u32 %v1471, 16
    %vm1476 = vmand %vm1190, %vm235
    %v1477 = vld [vmem:[#allocation4] sm:$0x1]
    %v1478 = vsel %vm1476, %v1473, %v1477
    %1479 = vst [vmem:[#allocation4] sm:$0x1] %v1478
    %v1480 = vrot.slane %v1471, 7
    %vm1482 = vmand %vm1274, %vm264
    %v1483 = vld [vmem:[#allocation4] sm:$0x2]
    %v1484 = vsel %vm1482, %v1480, %v1483
    %1485 = vst [vmem:[#allocation4] sm:$0x2] %v1484
    %v1486 = vrot.slane %v1473, 7
    %vm1488 = vsmask.f32 7946
    %vm1489 = vmand %vm1281, %vm1488
    %v1490 = vld [vmem:[#allocation4] sm:$0x4]
    %v1491 = vsel %vm1489, %v1486, %v1490
    %1492 = vst [vmem:[#allocation4] sm:$0x4] %v1491
    %v1493 = vrot.slane %v1471, 6
    %vm1495 = vsmask.f32 7950
    %vm1496 = vmand %vm1288, %vm1495
    %v1497 = vld [vmem:[#allocation4] sm:$0x8]
    %v1498 = vsel %vm1496, %v1493, %v1497
    %1499 = vst [vmem:[#allocation4] sm:$0x8] %v1498
    %v1500 = vrot.slane %v1473, 6
    %v1501 = vrot.slane %v1500, 4
    %v1503 = vld [vmem:[%s1297] sm:$0x1]
    %v1504 = vsel %vm1476, %v1501, %v1503
    %1505 = vst [vmem:[%s1297] sm:$0x1] %v1504
    %v1506 = vrot.slane %v1471, 5
    %v1507 = vrot.slane %v1506, 4
    %v1509 = vld [vmem:[%s1297] sm:$0x2]
    %v1510 = vsel %vm1482, %v1507, %v1509
    %1511 = vst [vmem:[%s1297] sm:$0x2] %v1510
    %v1512 = vrot.slane %v1473, 5
    %v1513 = vrot.slane %v1512, 4
    %v1515 = vld [vmem:[%s1297] sm:$0x4]
    %v1516 = vsel %vm1489, %v1513, %v1515
    %1517 = vst [vmem:[%s1297] sm:$0x4] %v1516
    %v1518 = vld [vmem:[%s1297] sm:$0x8]
    %v1519 = vsel %vm1496, %v1158, %v1518
    %1520 = vst [vmem:[%s1297] sm:$0x8] %v1519
    %v1521 = vunpack.c.h.b16 %v1158
    %v1522 = vpack.c.b16 %v1521, %v1521
    %v1524 = vshll.u32 %v1522, 16
    %v1527 = vld [vmem:[%s1322] sm:$0x1]
    %v1528 = vsel %vm1476, %v1524, %v1527
    %1529 = vst [vmem:[%s1322] sm:$0x1] %v1528
    %v1530 = vrot.slane %v1522, 7
    %v1532 = vld [vmem:[%s1322] sm:$0x2]
    %v1533 = vsel %vm1482, %v1530, %v1532
    %1534 = vst [vmem:[%s1322] sm:$0x2] %v1533
    %v1535 = vrot.slane %v1524, 7
    %v1537 = vld [vmem:[%s1322] sm:$0x4]
    %v1538 = vsel %vm1489, %v1535, %v1537
    %1539 = vst [vmem:[%s1322] sm:$0x4] %v1538
    %v1540 = vrot.slane %v1522, 6
    %v1542 = vld [vmem:[%s1322] sm:$0x8]
    %v1543 = vsel %vm1496, %v1540, %v1542
    %1544 = vst [vmem:[%s1322] sm:$0x8] %v1543
    %v1545 = vrot.slane %v1524, 6
    %v1546 = vrot.slane %v1545, 4
    %v1548 = vld [vmem:[%s1347] sm:$0x1]
    %v1549 = vsel %vm1476, %v1546, %v1548
    %1550 = vst [vmem:[%s1347] sm:$0x1] %v1549
    %v1551 = vrot.slane %v1522, 5
    %v1552 = vrot.slane %v1551, 4
    %v1554 = vld [vmem:[%s1347] sm:$0x2]
    %v1555 = vsel %vm1482, %v1552, %v1554
    %1556 = vst [vmem:[%s1347] sm:$0x2] %v1555
    %v1557 = vrot.slane %v1524, 5
    %v1558 = vrot.slane %v1557, 4
    %v1560 = vld [vmem:[%s1347] sm:$0x4]
    %v1561 = vsel %vm1489, %v1558, %v1560
    %1562 = vst [vmem:[%s1347] sm:$0x4] %v1561
    %v1564 = vld [vmem:[%s1347] sm:$0x8]
    %v1565 = vsel %vm1496, %v1522, %v1564
    %1566 = vst [vmem:[%s1347] sm:$0x8] %v1565
    %v1568 = vunpack.c.l.b16 %v1159
    %v1569 = vpack.c.b16 %v1568, %v1568
    %v1571 = vshll.u32 %v1569, 16
    %v1574 = vld [vmem:[%s1369] sm:$0x1]
    %v1575 = vsel %vm1476, %v1571, %v1574
    %1576 = vst [vmem:[%s1369] sm:$0x1] %v1575
    %v1577 = vrot.slane %v1569, 7
    %v1579 = vld [vmem:[%s1369] sm:$0x2]
    %v1580 = vsel %vm1482, %v1577, %v1579
    %1581 = vst [vmem:[%s1369] sm:$0x2] %v1580
    %v1582 = vrot.slane %v1571, 7
    %v1584 = vld [vmem:[%s1369] sm:$0x4]
    %v1585 = vsel %vm1489, %v1582, %v1584
    %1586 = vst [vmem:[%s1369] sm:$0x4] %v1585
    %v1587 = vrot.slane %v1569, 6
    %v1589 = vld [vmem:[%s1369] sm:$0x8]
    %v1590 = vsel %vm1496, %v1587, %v1589
    %1591 = vst [vmem:[%s1369] sm:$0x8] %v1590
    %v1592 = vrot.slane %v1571, 6
    %v1593 = vrot.slane %v1592, 4
    %v1595 = vld [vmem:[%s1397] sm:$0x1]
    %v1596 = vsel %vm1476, %v1593, %v1595
    %1597 = vst [vmem:[%s1397] sm:$0x1] %v1596
    %v1598 = vrot.slane %v1569, 5
    %v1599 = vrot.slane %v1598, 4
    %v1601 = vld [vmem:[%s1397] sm:$0x2]
    %v1602 = vsel %vm1482, %v1599, %v1601
    %1603 = vst [vmem:[%s1397] sm:$0x2] %v1602
    %v1604 = vrot.slane %v1571, 5
    %v1605 = vrot.slane %v1604, 4
    %v1607 = vld [vmem:[%s1397] sm:$0x4]
    %v1608 = vsel %vm1489, %v1605, %v1607
    %1609 = vst [vmem:[%s1397] sm:$0x4] %v1608
    %v1610 = vld [vmem:[%s1397] sm:$0x8]
    %v1611 = vsel %vm1496, %v1159, %v1610
    %1612 = vst [vmem:[%s1397] sm:$0x8] %v1611
    %v1613 = vunpack.c.h.b16 %v1159
    %v1614 = vpack.c.b16 %v1613, %v1613
    %v1616 = vshll.u32 %v1614, 16
    %v1619 = vld [vmem:[%s1422] sm:$0x1]
    %v1620 = vsel %vm1476, %v1616, %v1619
    %1621 = vst [vmem:[%s1422] sm:$0x1] %v1620
    %v1622 = vrot.slane %v1614, 7
    %v1624 = vld [vmem:[%s1422] sm:$0x2]
    %v1625 = vsel %vm1482, %v1622, %v1624
    %1626 = vst [vmem:[%s1422] sm:$0x2] %v1625
    %v1627 = vrot.slane %v1616, 7
    %v1629 = vld [vmem:[%s1422] sm:$0x4]
    %v1630 = vsel %vm1489, %v1627, %v1629
    %1631 = vst [vmem:[%s1422] sm:$0x4] %v1630
    %v1632 = vrot.slane %v1614, 6
    %v1634 = vld [vmem:[%s1422] sm:$0x8]
    %v1635 = vsel %vm1496, %v1632, %v1634
    %1636 = vst [vmem:[%s1422] sm:$0x8] %v1635
    %v1637 = vrot.slane %v1616, 6
    %v1638 = vrot.slane %v1637, 4
    %v1640 = vld [vmem:[%s1447] sm:$0x1]
    %v1641 = vsel %vm1476, %v1638, %v1640
    %1642 = vst [vmem:[%s1447] sm:$0x1] %v1641
    %v1643 = vrot.slane %v1614, 5
    %v1644 = vrot.slane %v1643, 4
    %v1646 = vld [vmem:[%s1447] sm:$0x2]
    %v1647 = vsel %vm1482, %v1644, %v1646
    %1648 = vst [vmem:[%s1447] sm:$0x2] %v1647
    %v1649 = vrot.slane %v1616, 5
    %v1650 = vrot.slane %v1649, 4
    %v1652 = vld [vmem:[%s1447] sm:$0x4]
    %v1653 = vsel %vm1489, %v1650, %v1652
    %1654 = vst [vmem:[%s1447] sm:$0x4] %v1653
    %v1656 = vld [vmem:[%s1447] sm:$0x8]
    %v1657 = vsel %vm1496, %v1614, %v1656
    %1658 = vst [vmem:[%s1447] sm:$0x8] %v1657
    %s1659 = scalar_lea.vmem [#allocation4], 8
    %v1660 = vld [vmem:[%s1659] sm:$0x1]
    %v1661 = vsel %vm1191, %v1172, %v1660
    %1662 = vst [vmem:[%s1659] sm:$0x1] %v1661
    %v1664 = vunpack.c.l.b16 %v1172
    %v1665 = vpack.c.b16 %v1664, %v1664
    %v1667 = vshrl.u32 %v1665, 16
    %v1669 = vrot.slane %v1667, 7
    %v1671 = vld [vmem:[%s1659] sm:$0x2]
    %v1672 = vsel %vm1275, %v1669, %v1671
    %1673 = vst [vmem:[%s1659] sm:$0x2] %v1672
    %v1674 = vrot.slane %v1665, 7
    %v1676 = vld [vmem:[%s1659] sm:$0x4]
    %v1677 = vsel %vm1282, %v1674, %v1676
    %1678 = vst [vmem:[%s1659] sm:$0x4] %v1677
    %v1679 = vrot.slane %v1667, 6
    %v1681 = vld [vmem:[%s1659] sm:$0x8]
    %v1682 = vsel %vm1290, %v1679, %v1681
    %1683 = vst [vmem:[%s1659] sm:$0x8] %v1682
    %v1684 = vrot.slane %v1665, 6
    %v1685 = vrot.slane %v1684, 4
    %s1687 = scalar_lea.vmem [#allocation4], 24
    %v1688 = vld [vmem:[%s1687] sm:$0x1]
    %v1689 = vsel %vm1191, %v1685, %v1688
    %1690 = vst [vmem:[%s1687] sm:$0x1] %v1689
    %v1691 = vrot.slane %v1667, 5
    %v1692 = vrot.slane %v1691, 4
    %v1694 = vld [vmem:[%s1687] sm:$0x2]
    %v1695 = vsel %vm1275, %v1692, %v1694
    %1696 = vst [vmem:[%s1687] sm:$0x2] %v1695
    %v1697 = vrot.slane %v1665, 5
    %v1698 = vrot.slane %v1697, 4
    %v1700 = vld [vmem:[%s1687] sm:$0x4]
    %v1701 = vsel %vm1282, %v1698, %v1700
    %1702 = vst [vmem:[%s1687] sm:$0x4] %v1701
    %v1703 = vrot.slane %v1667, 4
    %v1704 = vrot.slane %v1703, 4
    %v1706 = vld [vmem:[%s1687] sm:$0x8]
    %v1707 = vsel %vm1290, %v1704, %v1706
    %1708 = vst [vmem:[%s1687] sm:$0x8] %v1707
    %v1709 = vunpack.c.h.b16 %v1172
    %v1710 = vpack.c.b16 %v1709, %v1709
    %s1712 = scalar_lea.vmem [#allocation4], 40
    %v1713 = vld [vmem:[%s1712] sm:$0x1]
    %v1714 = vsel %vm1191, %v1710, %v1713
    %1715 = vst [vmem:[%s1712] sm:$0x1] %v1714
    %v1717 = vshrl.u32 %v1710, 16
    %v1719 = vrot.slane %v1717, 7
    %v1721 = vld [vmem:[%s1712] sm:$0x2]
    %v1722 = vsel %vm1275, %v1719, %v1721
    %1723 = vst [vmem:[%s1712] sm:$0x2] %v1722
    %v1724 = vrot.slane %v1710, 7
    %v1726 = vld [vmem:[%s1712] sm:$0x4]
    %v1727 = vsel %vm1282, %v1724, %v1726
    %1728 = vst [vmem:[%s1712] sm:$0x4] %v1727
    %v1729 = vrot.slane %v1717, 6
    %v1731 = vld [vmem:[%s1712] sm:$0x8]
    %v1732 = vsel %vm1290, %v1729, %v1731
    %1733 = vst [vmem:[%s1712] sm:$0x8] %v1732
    %v1734 = vrot.slane %v1710, 6
    %v1735 = vrot.slane %v1734, 4
    %s1737 = scalar_lea.vmem [#allocation4], 56
    %v1738 = vld [vmem:[%s1737] sm:$0x1]
    %v1739 = vsel %vm1191, %v1735, %v1738
    %1740 = vst [vmem:[%s1737] sm:$0x1] %v1739
    %v1741 = vrot.slane %v1717, 5
    %v1742 = vrot.slane %v1741, 4
    %v1744 = vld [vmem:[%s1737] sm:$0x2]
    %v1745 = vsel %vm1275, %v1742, %v1744
    %1746 = vst [vmem:[%s1737] sm:$0x2] %v1745
    %v1747 = vrot.slane %v1710, 5
    %v1748 = vrot.slane %v1747, 4
    %v1750 = vld [vmem:[%s1737] sm:$0x4]
    %v1751 = vsel %vm1282, %v1748, %v1750
    %1752 = vst [vmem:[%s1737] sm:$0x4] %v1751
    %v1753 = vrot.slane %v1717, 4
    %v1754 = vrot.slane %v1753, 4
    %v1756 = vld [vmem:[%s1737] sm:$0x8]
    %v1757 = vsel %vm1290, %v1754, %v1756
    %1758 = vst [vmem:[%s1737] sm:$0x8] %v1757
    %s1759 = scalar_lea.vmem [#allocation4], 80
    %v1760 = vld [vmem:[%s1759] sm:$0x1]
    %v1761 = vsel %vm1191, %v1173, %v1760
    %1762 = vst [vmem:[%s1759] sm:$0x1] %v1761
    %v1764 = vunpack.c.l.b16 %v1173
    %v1765 = vpack.c.b16 %v1764, %v1764
    %v1767 = vshrl.u32 %v1765, 16
    %v1769 = vrot.slane %v1767, 7
    %v1771 = vld [vmem:[%s1759] sm:$0x2]
    %v1772 = vsel %vm1275, %v1769, %v1771
    %1773 = vst [vmem:[%s1759] sm:$0x2] %v1772
    %v1774 = vrot.slane %v1765, 7
    %v1776 = vld [vmem:[%s1759] sm:$0x4]
    %v1777 = vsel %vm1282, %v1774, %v1776
    %1778 = vst [vmem:[%s1759] sm:$0x4] %v1777
    %v1779 = vrot.slane %v1767, 6
    %v1781 = vld [vmem:[%s1759] sm:$0x8]
    %v1782 = vsel %vm1290, %v1779, %v1781
    %1783 = vst [vmem:[%s1759] sm:$0x8] %v1782
    %v1784 = vrot.slane %v1765, 6
    %v1785 = vrot.slane %v1784, 4
    %s1787 = scalar_lea.vmem [#allocation4], 96
    %v1788 = vld [vmem:[%s1787] sm:$0x1]
    %v1789 = vsel %vm1191, %v1785, %v1788
    %1790 = vst [vmem:[%s1787] sm:$0x1] %v1789
    %v1791 = vrot.slane %v1767, 5
    %v1792 = vrot.slane %v1791, 4
    %v1794 = vld [vmem:[%s1787] sm:$0x2]
    %v1795 = vsel %vm1275, %v1792, %v1794
    %1796 = vst [vmem:[%s1787] sm:$0x2] %v1795
    %v1797 = vrot.slane %v1765, 5
    %v1798 = vrot.slane %v1797, 4
    %v1800 = vld [vmem:[%s1787] sm:$0x4]
    %v1801 = vsel %vm1282, %v1798, %v1800
    %1802 = vst [vmem:[%s1787] sm:$0x4] %v1801
    %v1803 = vrot.slane %v1767, 4
    %v1804 = vrot.slane %v1803, 4
    %v1806 = vld [vmem:[%s1787] sm:$0x8]
    %v1807 = vsel %vm1290, %v1804, %v1806
    %1808 = vst [vmem:[%s1787] sm:$0x8] %v1807
    %v1809 = vunpack.c.h.b16 %v1173
    %v1810 = vpack.c.b16 %v1809, %v1809
    %s1812 = scalar_lea.vmem [#allocation4], 112
    %v1813 = vld [vmem:[%s1812] sm:$0x1]
    %v1814 = vsel %vm1191, %v1810, %v1813
    %1815 = vst [vmem:[%s1812] sm:$0x1] %v1814
    %v1817 = vshrl.u32 %v1810, 16
    %v1819 = vrot.slane %v1817, 7
    %v1821 = vld [vmem:[%s1812] sm:$0x2]
    %v1822 = vsel %vm1275, %v1819, %v1821
    %1823 = vst [vmem:[%s1812] sm:$0x2] %v1822
    %v1824 = vrot.slane %v1810, 7
    %v1826 = vld [vmem:[%s1812] sm:$0x4]
    %v1827 = vsel %vm1282, %v1824, %v1826
    %1828 = vst [vmem:[%s1812] sm:$0x4] %v1827
    %v1829 = vrot.slane %v1817, 6
    %v1831 = vld [vmem:[%s1812] sm:$0x8]
    %v1832 = vsel %vm1290, %v1829, %v1831
    %1833 = vst [vmem:[%s1812] sm:$0x8] %v1832
    %v1834 = vrot.slane %v1810, 6
    %v1835 = vrot.slane %v1834, 4
    %s1837 = scalar_lea.vmem [#allocation4], 128
    %v1838 = vld [vmem:[%s1837] sm:$0x1]
    %v1839 = vsel %vm1191, %v1835, %v1838
    %1840 = vst [vmem:[%s1837] sm:$0x1] %v1839
    %v1841 = vrot.slane %v1817, 5
    %v1842 = vrot.slane %v1841, 4
    %v1844 = vld [vmem:[%s1837] sm:$0x2]
    %v1845 = vsel %vm1275, %v1842, %v1844
    %1846 = vst [vmem:[%s1837] sm:$0x2] %v1845
    %v1847 = vrot.slane %v1810, 5
    %v1848 = vrot.slane %v1847, 4
    %v1850 = vld [vmem:[%s1837] sm:$0x4]
    %v1851 = vsel %vm1282, %v1848, %v1850
    %1852 = vst [vmem:[%s1837] sm:$0x4] %v1851
    %v1853 = vrot.slane %v1817, 4
    %v1854 = vrot.slane %v1853, 4
    %v1856 = vld [vmem:[%s1837] sm:$0x8]
    %v1857 = vsel %vm1290, %v1854, %v1856
    %1858 = vst [vmem:[%s1837] sm:$0x8] %v1857
    %v1860 = vunpack.c.l.b16 %v1186
    %v1861 = vpack.c.b16 %v1860, %v1860
    %v1863 = vshll.u32 %v1861, 16
    %v1866 = vld [vmem:[%s1659] sm:$0x1]
    %v1867 = vsel %vm1476, %v1863, %v1866
    %1868 = vst [vmem:[%s1659] sm:$0x1] %v1867
    %v1869 = vrot.slane %v1861, 7
    %v1871 = vld [vmem:[%s1659] sm:$0x2]
    %v1872 = vsel %vm1482, %v1869, %v1871
    %1873 = vst [vmem:[%s1659] sm:$0x2] %v1872
    %v1874 = vrot.slane %v1863, 7
    %v1876 = vld [vmem:[%s1659] sm:$0x4]
    %v1877 = vsel %vm1489, %v1874, %v1876
    %1878 = vst [vmem:[%s1659] sm:$0x4] %v1877
    %v1879 = vrot.slane %v1861, 6
    %v1881 = vld [vmem:[%s1659] sm:$0x8]
    %v1882 = vsel %vm1496, %v1879, %v1881
    %1883 = vst [vmem:[%s1659] sm:$0x8] %v1882
    %v1884 = vrot.slane %v1863, 6
    %v1885 = vrot.slane %v1884, 4
    %v1887 = vld [vmem:[%s1687] sm:$0x1]
    %v1888 = vsel %vm1476, %v1885, %v1887
    %1889 = vst [vmem:[%s1687] sm:$0x1] %v1888
    %v1890 = vrot.slane %v1861, 5
    %v1891 = vrot.slane %v1890, 4
    %v1893 = vld [vmem:[%s1687] sm:$0x2]
    %v1894 = vsel %vm1482, %v1891, %v1893
    %1895 = vst [vmem:[%s1687] sm:$0x2] %v1894
    %v1896 = vrot.slane %v1863, 5
    %v1897 = vrot.slane %v1896, 4
    %v1899 = vld [vmem:[%s1687] sm:$0x4]
    %v1900 = vsel %vm1489, %v1897, %v1899
    %1901 = vst [vmem:[%s1687] sm:$0x4] %v1900
    %v1902 = vld [vmem:[%s1687] sm:$0x8]
    %v1903 = vsel %vm1496, %v1186, %v1902
    %1904 = vst [vmem:[%s1687] sm:$0x8] %v1903
    %v1905 = vunpack.c.h.b16 %v1186
    %v1906 = vpack.c.b16 %v1905, %v1905
    %v1908 = vshll.u32 %v1906, 16
    %v1911 = vld [vmem:[%s1712] sm:$0x1]
    %v1912 = vsel %vm1476, %v1908, %v1911
    %1913 = vst [vmem:[%s1712] sm:$0x1] %v1912
    %v1914 = vrot.slane %v1906, 7
    %v1916 = vld [vmem:[%s1712] sm:$0x2]
    %v1917 = vsel %vm1482, %v1914, %v1916
    %1918 = vst [vmem:[%s1712] sm:$0x2] %v1917
    %v1919 = vrot.slane %v1908, 7
    %v1921 = vld [vmem:[%s1712] sm:$0x4]
    %v1922 = vsel %vm1489, %v1919, %v1921
    %1923 = vst [vmem:[%s1712] sm:$0x4] %v1922
    %v1924 = vrot.slane %v1906, 6
    %v1926 = vld [vmem:[%s1712] sm:$0x8]
    %v1927 = vsel %vm1496, %v1924, %v1926
    %1928 = vst [vmem:[%s1712] sm:$0x8] %v1927
    %v1929 = vrot.slane %v1908, 6
    %v1930 = vrot.slane %v1929, 4
    %v1932 = vld [vmem:[%s1737] sm:$0x1]
    %v1933 = vsel %vm1476, %v1930, %v1932
    %1934 = vst [vmem:[%s1737] sm:$0x1] %v1933
    %v1935 = vrot.slane %v1906, 5
    %v1936 = vrot.slane %v1935, 4
    %v1938 = vld [vmem:[%s1737] sm:$0x2]
    %v1939 = vsel %vm1482, %v1936, %v1938
    %1940 = vst [vmem:[%s1737] sm:$0x2] %v1939
    %v1941 = vrot.slane %v1908, 5
    %v1942 = vrot.slane %v1941, 4
    %v1944 = vld [vmem:[%s1737] sm:$0x4]
    %v1945 = vsel %vm1489, %v1942, %v1944
    %1946 = vst [vmem:[%s1737] sm:$0x4] %v1945
    %v1948 = vld [vmem:[%s1737] sm:$0x8]
    %v1949 = vsel %vm1496, %v1906, %v1948
    %1950 = vst [vmem:[%s1737] sm:$0x8] %v1949
    %v1952 = vunpack.c.l.b16 %v1187
    %v1953 = vpack.c.b16 %v1952, %v1952
    %v1955 = vshll.u32 %v1953, 16
    %v1958 = vld [vmem:[%s1759] sm:$0x1]
    %v1959 = vsel %vm1476, %v1955, %v1958
    %1960 = vst [vmem:[%s1759] sm:$0x1] %v1959
    %v1961 = vrot.slane %v1953, 7
    %v1963 = vld [vmem:[%s1759] sm:$0x2]
    %v1964 = vsel %vm1482, %v1961, %v1963
    %1965 = vst [vmem:[%s1759] sm:$0x2] %v1964
    %v1966 = vrot.slane %v1955, 7
    %v1968 = vld [vmem:[%s1759] sm:$0x4]
    %v1969 = vsel %vm1489, %v1966, %v1968
    %1970 = vst [vmem:[%s1759] sm:$0x4] %v1969
    %v1971 = vrot.slane %v1953, 6
    %v1973 = vld [vmem:[%s1759] sm:$0x8]
    %v1974 = vsel %vm1496, %v1971, %v1973
    %1975 = vst [vmem:[%s1759] sm:$0x8] %v1974
    %v1976 = vrot.slane %v1955, 6
    %v1977 = vrot.slane %v1976, 4
    %v1979 = vld [vmem:[%s1787] sm:$0x1]
    %v1980 = vsel %vm1476, %v1977, %v1979
    %1981 = vst [vmem:[%s1787] sm:$0x1] %v1980
    %v1982 = vrot.slane %v1953, 5
    %v1983 = vrot.slane %v1982, 4
    %v1985 = vld [vmem:[%s1787] sm:$0x2]
    %v1986 = vsel %vm1482, %v1983, %v1985
    %1987 = vst [vmem:[%s1787] sm:$0x2] %v1986
    %v1988 = vrot.slane %v1955, 5
    %v1989 = vrot.slane %v1988, 4
    %v1991 = vld [vmem:[%s1787] sm:$0x4]
    %v1992 = vsel %vm1489, %v1989, %v1991
    %1993 = vst [vmem:[%s1787] sm:$0x4] %v1992
    %v1994 = vld [vmem:[%s1787] sm:$0x8]
    %v1995 = vsel %vm1496, %v1187, %v1994
    %1996 = vst [vmem:[%s1787] sm:$0x8] %v1995
    %v1997 = vunpack.c.h.b16 %v1187
    %v1998 = vpack.c.b16 %v1997, %v1997
    %v2000 = vshll.u32 %v1998, 16
    %v2003 = vld [vmem:[%s1812] sm:$0x1]
    %v2004 = vsel %vm1476, %v2000, %v2003
    %2005 = vst [vmem:[%s1812] sm:$0x1] %v2004
    %v2006 = vrot.slane %v1998, 7
    %v2008 = vld [vmem:[%s1812] sm:$0x2]
    %v2009 = vsel %vm1482, %v2006, %v2008
    %2010 = vst [vmem:[%s1812] sm:$0x2] %v2009
    %v2011 = vrot.slane %v2000, 7
    %v2013 = vld [vmem:[%s1812] sm:$0x4]
    %v2014 = vsel %vm1489, %v2011, %v2013
    %2015 = vst [vmem:[%s1812] sm:$0x4] %v2014
    %v2016 = vrot.slane %v1998, 6
    %v2018 = vld [vmem:[%s1812] sm:$0x8]
    %v2019 = vsel %vm1496, %v2016, %v2018
    %2020 = vst [vmem:[%s1812] sm:$0x8] %v2019
    %v2021 = vrot.slane %v2000, 6
    %v2022 = vrot.slane %v2021, 4
    %v2024 = vld [vmem:[%s1837] sm:$0x1]
    %v2025 = vsel %vm1476, %v2022, %v2024
    %2026 = vst [vmem:[%s1837] sm:$0x1] %v2025
    %v2027 = vrot.slane %v1998, 5
    %v2028 = vrot.slane %v2027, 4
    %v2030 = vld [vmem:[%s1837] sm:$0x2]
    %v2031 = vsel %vm1482, %v2028, %v2030
    %2032 = vst [vmem:[%s1837] sm:$0x2] %v2031
    %v2033 = vrot.slane %v2000, 5
    %v2034 = vrot.slane %v2033, 4
    %v2036 = vld [vmem:[%s1837] sm:$0x4]
    %v2037 = vsel %vm1489, %v2034, %v2036
    %2038 = vst [vmem:[%s1837] sm:$0x4] %v2037
    %v2040 = vld [vmem:[%s1837] sm:$0x8]
    %v2041 = vsel %vm1496, %v1998, %v2040
    %2042 = vst [vmem:[%s1837] sm:$0x8] %v2041
    %v2043 = vld [vmem:[#allocation4] sm:$0xf]
    %2044 = vst.msk [vmem:[#allocation5] sm:$0xf] %vm1188, %v2043
    %v2045 = vld [vmem:[%s1659] sm:$0xf]
    %v2047 = vunpack.c.l.b16 %v2045
    %v2048 = vpack.c.b16 %v2047, %v2047
    %vm2050 = vcmask 64516
    %2051 = vst.msk [vmem:[#allocation5] sm:$0xf0] %vm2050, %v2048
    %v2052 = vld [vmem:[%s1297] sm:$0xf]
    %2053 = vst.msk [vmem:[#allocation5 + $0x8] sm:$0xf] %vm1188, %v2052
    %v2054 = vld [vmem:[%s1687] sm:$0xf]
    %v2056 = vunpack.c.l.b16 %v2054
    %v2057 = vpack.c.b16 %v2056, %v2056
    %2059 = vst.msk [vmem:[#allocation5 + $0x8] sm:$0xf0] %vm2050, %v2057
    %v2060 = vld [vmem:[%s1322] sm:$0xf]
    %2061 = vst.msk [vmem:[#allocation5 + $0x10] sm:$0xf] %vm1188, %v2060
    %v2062 = vld [vmem:[%s1712] sm:$0xf]
    %v2064 = vunpack.c.l.b16 %v2062
    %v2065 = vpack.c.b16 %v2064, %v2064
    %2067 = vst.msk [vmem:[#allocation5 + $0x10] sm:$0xf0] %vm2050, %v2065
    %v2068 = vld [vmem:[%s1347] sm:$0xf]
    %2069 = vst.msk [vmem:[#allocation5 + $0x18] sm:$0xf] %vm1188, %v2068
    %v2070 = vld [vmem:[%s1737] sm:$0xf]
    %v2072 = vunpack.c.l.b16 %v2070
    %v2073 = vpack.c.b16 %v2072, %v2072
    %2075 = vst.msk [vmem:[#allocation5 + $0x18] sm:$0xf0] %vm2050, %v2073
    %v2076 = vld [vmem:[%s1369] sm:$0xf]
    %2077 = vst.msk [vmem:[#allocation5 + $0x20] sm:$0xf] %vm1188, %v2076
    %v2078 = vld [vmem:[%s1759] sm:$0xf]
    %v2080 = vunpack.c.l.b16 %v2078
    %v2081 = vpack.c.b16 %v2080, %v2080
    %2083 = vst.msk [vmem:[#allocation5 + $0x20] sm:$0xf0] %vm2050, %v2081
    %v2084 = vld [vmem:[%s1397] sm:$0xf]
    %2085 = vst.msk [vmem:[#allocation5 + $0x28] sm:$0xf] %vm1188, %v2084
    %v2086 = vld [vmem:[%s1787] sm:$0xf]
    %v2088 = vunpack.c.l.b16 %v2086
    %v2089 = vpack.c.b16 %v2088, %v2088
    %2091 = vst.msk [vmem:[#allocation5 + $0x28] sm:$0xf0] %vm2050, %v2089
    %v2092 = vld [vmem:[%s1422] sm:$0xf]
    %2093 = vst.msk [vmem:[#allocation5 + $0x30] sm:$0xf] %vm1188, %v2092
    %v2094 = vld [vmem:[%s1812] sm:$0xf]
    %v2096 = vunpack.c.l.b16 %v2094
    %v2097 = vpack.c.b16 %v2096, %v2096
    %2099 = vst.msk [vmem:[#allocation5 + $0x30] sm:$0xf0] %vm2050, %v2097
    %v2100 = vld [vmem:[%s1447] sm:$0xf]
    %2101 = vst.msk [vmem:[#allocation5 + $0x38] sm:$0xf] %vm1188, %v2100
    %v2102 = vld [vmem:[%s1837] sm:$0xf]
    %v2104 = vunpack.c.l.b16 %v2102
    %v2105 = vpack.c.b16 %v2104, %v2104
    %2107 = vst.msk [vmem:[#allocation5 + $0x38] sm:$0xf0] %vm2050, %v2105
    %v2108 = vld [vmem:[#allocation4] sm:$0xf]
    %v2109 = vld [vmem:[#allocation4 + $0x4] sm:$0x1]
    %v2112 = vunpack.c.l.b16 %v2108
    %v2113 = vunpack.c.l.b16 %v2109
    %v2114 = vpack.c.b16 %v2113, %v2112
    %v2116 = vshrl.u32 %v2114, 16
    %v2118 = vshll.u32 %v2114, 16
    %v2120 = vrot.slane %v2118, 1
    %v2121 = vor.u32 %v2116, %v2120
    %2122 = vrot.lane.b32.xlu0 %v2121, 8
    %v2123 = vpop.permute.xlu0 %2122
    %vm2125 = vcmask 126016
    %2126 = vst.msk [vmem:[#allocation5] sm:$0xf] %vm2125, %v2123
    %v2127 = vld [vmem:[%s1659] sm:$0xf]
    %v2128 = vld [vmem:[%s1659 + $0x4] sm:$0x1]
    %v2131 = vunpack.c.l.b16 %v2127
    %v2132 = vunpack.c.l.b16 %v2128
    %v2133 = vpack.c.b16 %v2132, %v2131
    %v2135 = vshrl.u32 %v2133, 16
    %v2137 = vrot.slane %v2135, 4
    %v2138 = vshll.u32 %v2133, 16
    %v2140 = vrot.slane %v2138, 5
    %v2141 = vor.u32 %v2137, %v2140
    %2142 = vrot.lane.b32.xlu0 %v2141, 8
    %v2143 = vpop.permute.xlu0 %2142
    %vm2145 = vcmask 130116
    %2146 = vst.msk [vmem:[#allocation5] sm:$0xf0] %vm2145, %v2143
    %v2147 = vld [vmem:[%s1297] sm:$0xf]
    %v2148 = vld [vmem:[%s1297 + $0x4] sm:$0x1]
    %v2151 = vunpack.c.l.b16 %v2147
    %v2152 = vunpack.c.l.b16 %v2148
    %v2153 = vpack.c.b16 %v2152, %v2151
    %v2155 = vshrl.u32 %v2153, 16
    %v2157 = vshll.u32 %v2153, 16
    %v2159 = vrot.slane %v2157, 1
    %v2160 = vor.u32 %v2155, %v2159
    %2161 = vrot.lane.b32.xlu0 %v2160, 8
    %v2162 = vpop.permute.xlu0 %2161
    %2164 = vst.msk [vmem:[#allocation5 + $0x8] sm:$0xf] %vm2125, %v2162
    %v2165 = vld [vmem:[%s1687] sm:$0xf]
    %v2166 = vld [vmem:[%s1687 + $0x4] sm:$0x1]
    %v2169 = vunpack.c.l.b16 %v2165
    %v2170 = vunpack.c.l.b16 %v2166
    %v2171 = vpack.c.b16 %v2170, %v2169
    %v2173 = vshrl.u32 %v2171, 16
    %v2175 = vrot.slane %v2173, 4
    %v2176 = vshll.u32 %v2171, 16
    %v2178 = vrot.slane %v2176, 5
    %v2179 = vor.u32 %v2175, %v2178
    %2180 = vrot.lane.b32.xlu0 %v2179, 8
    %v2181 = vpop.permute.xlu0 %2180
    %2183 = vst.msk [vmem:[#allocation5 + $0x8] sm:$0xf0] %vm2145, %v2181
    %v2184 = vld [vmem:[%s1322] sm:$0xf]
    %v2185 = vld [vmem:[%s1322 + $0x4] sm:$0x1]
    %v2188 = vunpack.c.l.b16 %v2184
    %v2189 = vunpack.c.l.b16 %v2185
    %v2190 = vpack.c.b16 %v2189, %v2188
    %v2192 = vshrl.u32 %v2190, 16
    %v2194 = vshll.u32 %v2190, 16
    %v2196 = vrot.slane %v2194, 1
    %v2197 = vor.u32 %v2192, %v2196
    %2198 = vrot.lane.b32.xlu0 %v2197, 8
    %v2199 = vpop.permute.xlu0 %2198
    %2201 = vst.msk [vmem:[#allocation5 + $0x10] sm:$0xf] %vm2125, %v2199
    %v2202 = vld [vmem:[%s1712] sm:$0xf]
    %v2203 = vld [vmem:[%s1712 + $0x4] sm:$0x1]
    %v2206 = vunpack.c.l.b16 %v2202
    %v2207 = vunpack.c.l.b16 %v2203
    %v2208 = vpack.c.b16 %v2207, %v2206
    %v2210 = vshrl.u32 %v2208, 16
    %v2212 = vrot.slane %v2210, 4
    %v2213 = vshll.u32 %v2208, 16
    %v2215 = vrot.slane %v2213, 5
    %v2216 = vor.u32 %v2212, %v2215
    %2217 = vrot.lane.b32.xlu0 %v2216, 8
    %v2218 = vpop.permute.xlu0 %2217
    %2220 = vst.msk [vmem:[#allocation5 + $0x10] sm:$0xf0] %vm2145, %v2218
    %v2221 = vld [vmem:[%s1347] sm:$0xf]
    %v2222 = vld [vmem:[%s1347 + $0x4] sm:$0x1]
    %v2225 = vunpack.c.l.b16 %v2221
    %v2226 = vunpack.c.l.b16 %v2222
    %v2227 = vpack.c.b16 %v2226, %v2225
    %v2229 = vshrl.u32 %v2227, 16
    %v2231 = vshll.u32 %v2227, 16
    %v2233 = vrot.slane %v2231, 1
    %v2234 = vor.u32 %v2229, %v2233
    %2235 = vrot.lane.b32.xlu0 %v2234, 8
    %v2236 = vpop.permute.xlu0 %2235
    %2238 = vst.msk [vmem:[#allocation5 + $0x18] sm:$0xf] %vm2125, %v2236
    %v2239 = vld [vmem:[%s1737] sm:$0xf]
    %v2240 = vld [vmem:[%s1737 + $0x4] sm:$0x1]
    %v2243 = vunpack.c.l.b16 %v2239
    %v2244 = vunpack.c.l.b16 %v2240
    %v2245 = vpack.c.b16 %v2244, %v2243
    %v2247 = vshrl.u32 %v2245, 16
    %v2249 = vrot.slane %v2247, 4
    %v2250 = vshll.u32 %v2245, 16
    %v2252 = vrot.slane %v2250, 5
    %v2253 = vor.u32 %v2249, %v2252
    %2254 = vrot.lane.b32.xlu0 %v2253, 8
    %v2255 = vpop.permute.xlu0 %2254
    %2257 = vst.msk [vmem:[#allocation5 + $0x18] sm:$0xf0] %vm2145, %v2255
    %v2258 = vld [vmem:[%s1369] sm:$0xf]
    %v2259 = vld [vmem:[%s1369 + $0x4] sm:$0x1]
    %v2262 = vunpack.c.l.b16 %v2258
    %v2263 = vunpack.c.l.b16 %v2259
    %v2264 = vpack.c.b16 %v2263, %v2262
    %v2266 = vshrl.u32 %v2264, 16
    %v2268 = vshll.u32 %v2264, 16
    %v2270 = vrot.slane %v2268, 1
    %v2271 = vor.u32 %v2266, %v2270
    %2272 = vrot.lane.b32.xlu0 %v2271, 8
    %v2273 = vpop.permute.xlu0 %2272
    %2275 = vst.msk [vmem:[#allocation5 + $0x20] sm:$0xf] %vm2125, %v2273
    %v2276 = vld [vmem:[%s1759] sm:$0xf]
    %v2277 = vld [vmem:[%s1759 + $0x4] sm:$0x1]
    %v2280 = vunpack.c.l.b16 %v2276
    %v2281 = vunpack.c.l.b16 %v2277
    %v2282 = vpack.c.b16 %v2281, %v2280
    %v2284 = vshrl.u32 %v2282, 16
    %v2286 = vrot.slane %v2284, 4
    %v2287 = vshll.u32 %v2282, 16
    %v2289 = vrot.slane %v2287, 5
    %v2290 = vor.u32 %v2286, %v2289
    %2291 = vrot.lane.b32.xlu0 %v2290, 8
    %v2292 = vpop.permute.xlu0 %2291
    %2294 = vst.msk [vmem:[#allocation5 + $0x20] sm:$0xf0] %vm2145, %v2292
    %v2295 = vld [vmem:[%s1397] sm:$0xf]
    %v2296 = vld [vmem:[%s1397 + $0x4] sm:$0x1]
    %v2299 = vunpack.c.l.b16 %v2295
    %v2300 = vunpack.c.l.b16 %v2296
    %v2301 = vpack.c.b16 %v2300, %v2299
    %v2303 = vshrl.u32 %v2301, 16
    %v2305 = vshll.u32 %v2301, 16
    %v2307 = vrot.slane %v2305, 1
    %v2308 = vor.u32 %v2303, %v2307
    %2309 = vrot.lane.b32.xlu0 %v2308, 8
    %v2310 = vpop.permute.xlu0 %2309
    %2312 = vst.msk [vmem:[#allocation5 + $0x28] sm:$0xf] %vm2125, %v2310
    %v2313 = vld [vmem:[%s1787] sm:$0xf]
    %v2314 = vld [vmem:[%s1787 + $0x4] sm:$0x1]
    %v2317 = vunpack.c.l.b16 %v2313
    %v2318 = vunpack.c.l.b16 %v2314
    %v2319 = vpack.c.b16 %v2318, %v2317
    %v2321 = vshrl.u32 %v2319, 16
    %v2323 = vrot.slane %v2321, 4
    %v2324 = vshll.u32 %v2319, 16
    %v2326 = vrot.slane %v2324, 5
    %v2327 = vor.u32 %v2323, %v2326
    %2328 = vrot.lane.b32.xlu0 %v2327, 8
    %v2329 = vpop.permute.xlu0 %2328
    %2331 = vst.msk [vmem:[#allocation5 + $0x28] sm:$0xf0] %vm2145, %v2329
    %v2332 = vld [vmem:[%s1422] sm:$0xf]
    %v2333 = vld [vmem:[%s1422 + $0x4] sm:$0x1]
    %v2336 = vunpack.c.l.b16 %v2332
    %v2337 = vunpack.c.l.b16 %v2333
    %v2338 = vpack.c.b16 %v2337, %v2336
    %v2340 = vshrl.u32 %v2338, 16
    %v2342 = vshll.u32 %v2338, 16
    %v2344 = vrot.slane %v2342, 1
    %v2345 = vor.u32 %v2340, %v2344
    %2346 = vrot.lane.b32.xlu0 %v2345, 8
    %v2347 = vpop.permute.xlu0 %2346
    %2349 = vst.msk [vmem:[#allocation5 + $0x30] sm:$0xf] %vm2125, %v2347
    %v2350 = vld [vmem:[%s1812] sm:$0xf]
    %v2351 = vld [vmem:[%s1812 + $0x4] sm:$0x1]
    %v2354 = vunpack.c.l.b16 %v2350
    %v2355 = vunpack.c.l.b16 %v2351
    %v2356 = vpack.c.b16 %v2355, %v2354
    %v2358 = vshrl.u32 %v2356, 16
    %v2360 = vrot.slane %v2358, 4
    %v2361 = vshll.u32 %v2356, 16
    %v2363 = vrot.slane %v2361, 5
    %v2364 = vor.u32 %v2360, %v2363
    %2365 = vrot.lane.b32.xlu0 %v2364, 8
    %v2366 = vpop.permute.xlu0 %2365
    %2368 = vst.msk [vmem:[#allocation5 + $0x30] sm:$0xf0] %vm2145, %v2366
    %v2369 = vld [vmem:[%s1447] sm:$0xf]
    %v2370 = vld [vmem:[%s1447 + $0x4] sm:$0x1]
    %v2373 = vunpack.c.l.b16 %v2369
    %v2374 = vunpack.c.l.b16 %v2370
    %v2375 = vpack.c.b16 %v2374, %v2373
    %v2377 = vshrl.u32 %v2375, 16
    %v2379 = vshll.u32 %v2375, 16
    %v2381 = vrot.slane %v2379, 1
    %v2382 = vor.u32 %v2377, %v2381
    %2383 = vrot.lane.b32.xlu0 %v2382, 8
    %v2384 = vpop.permute.xlu0 %2383
    %2386 = vst.msk [vmem:[#allocation5 + $0x38] sm:$0xf] %vm2125, %v2384
    %v2387 = vld [vmem:[%s1837] sm:$0xf]
    %v2388 = vld [vmem:[%s1837 + $0x4] sm:$0x1]
    %v2391 = vunpack.c.l.b16 %v2387
    %v2392 = vunpack.c.l.b16 %v2388
    %v2393 = vpack.c.b16 %v2392, %v2391
    %v2395 = vshrl.u32 %v2393, 16
    %v2397 = vrot.slane %v2395, 4
    %v2398 = vshll.u32 %v2393, 16
    %v2400 = vrot.slane %v2398, 5
    %v2401 = vor.u32 %v2397, %v2400
    %2402 = vrot.lane.b32.xlu0 %v2401, 8
    %v2403 = vpop.permute.xlu0 %2402
    %2405 = vst.msk [vmem:[#allocation5 + $0x38] sm:$0xf0] %vm2145, %v2403
    %v2406 = vld [vmem:[%s1659] sm:$0xf]
    %v2408 = vunpack.c.l.b16 %v2406
    %v2409 = vpack.c.b16 %v2408, %v2408
    %2410 = vrot.lane.b32.xlu0 %v2409, 16
    %v2411 = vpop.permute.xlu0 %2410
    %vm2413 = vcmask 191616
    %2414 = vst.msk [vmem:[#allocation5] sm:$0xf] %vm2413, %v2411
    %v2415 = vld [vmem:[%s1297] sm:$0xf]
    %v2417 = vunpack.c.l.b16 %v2415
    %v2418 = vpack.c.b16 %v2417, %v2417
    %2419 = vrot.lane.b32.xlu0 %v2418, 16
    %v2420 = vpop.permute.xlu0 %2419
    %vm2422 = vcmask 195716
    %2423 = vst.msk [vmem:[#allocation5] sm:$0xf0] %vm2422, %v2420
    %v2424 = vld [vmem:[%s1687] sm:$0xf]
    %v2426 = vunpack.c.l.b16 %v2424
    %v2427 = vpack.c.b16 %v2426, %v2426
    %2428 = vrot.lane.b32.xlu0 %v2427, 16
    %v2429 = vpop.permute.xlu0 %2428
    %2431 = vst.msk [vmem:[#allocation5 + $0x8] sm:$0xf] %vm2413, %v2429
    %v2432 = vld [vmem:[%s1322] sm:$0xf]
    %v2434 = vunpack.c.l.b16 %v2432
    %v2435 = vpack.c.b16 %v2434, %v2434
    %2436 = vrot.lane.b32.xlu0 %v2435, 16
    %v2437 = vpop.permute.xlu0 %2436
    %2439 = vst.msk [vmem:[#allocation5 + $0x8] sm:$0xf0] %vm2422, %v2437
    %v2440 = vld [vmem:[%s1712] sm:$0xf]
    %v2442 = vunpack.c.l.b16 %v2440
    %v2443 = vpack.c.b16 %v2442, %v2442
    %2444 = vrot.lane.b32.xlu0 %v2443, 16
    %v2445 = vpop.permute.xlu0 %2444
    %2447 = vst.msk [vmem:[#allocation5 + $0x10] sm:$0xf] %vm2413, %v2445
    %v2448 = vld [vmem:[%s1347] sm:$0xf]
    %v2450 = vunpack.c.l.b16 %v2448
    %v2451 = vpack.c.b16 %v2450, %v2450
    %2452 = vrot.lane.b32.xlu0 %v2451, 16
    %v2453 = vpop.permute.xlu0 %2452
    %2455 = vst.msk [vmem:[#allocation5 + $0x10] sm:$0xf0] %vm2422, %v2453
    %v2456 = vld [vmem:[%s1737] sm:$0xf]
    %v2458 = vunpack.c.l.b16 %v2456
    %v2459 = vpack.c.b16 %v2458, %v2458
    %2460 = vrot.lane.b32.xlu0 %v2459, 16
    %v2461 = vpop.permute.xlu0 %2460
    %2463 = vst.msk [vmem:[#allocation5 + $0x18] sm:$0xf] %vm2413, %v2461
    %s2464 = scalar_lea.vmem [#allocation4], 64
    %v2465 = vld [vmem:[%s2464] sm:$0xf]
    %v2467 = vunpack.c.l.b16 %v2465
    %v2468 = vpack.c.b16 %v2467, %v2467
    %2469 = vrot.lane.b32.xlu0 %v2468, 16
    %v2470 = vpop.permute.xlu0 %2469
    %2472 = vst.msk [vmem:[#allocation5 + $0x18] sm:$0xf0] %vm2422, %v2470
    %v2473 = vld [vmem:[%s1759] sm:$0xf]
    %v2475 = vunpack.c.l.b16 %v2473
    %v2476 = vpack.c.b16 %v2475, %v2475
    %2477 = vrot.lane.b32.xlu0 %v2476, 16
    %v2478 = vpop.permute.xlu0 %2477
    %2480 = vst.msk [vmem:[#allocation5 + $0x20] sm:$0xf] %vm2413, %v2478
    %v2481 = vld [vmem:[%s1397] sm:$0xf]
    %v2483 = vunpack.c.l.b16 %v2481
    %v2484 = vpack.c.b16 %v2483, %v2483
    %2485 = vrot.lane.b32.xlu0 %v2484, 16
    %v2486 = vpop.permute.xlu0 %2485
    %2488 = vst.msk [vmem:[#allocation5 + $0x20] sm:$0xf0] %vm2422, %v2486
    %v2489 = vld [vmem:[%s1787] sm:$0xf]
    %v2491 = vunpack.c.l.b16 %v2489
    %v2492 = vpack.c.b16 %v2491, %v2491
    %2493 = vrot.lane.b32.xlu0 %v2492, 16
    %v2494 = vpop.permute.xlu0 %2493
    %2496 = vst.msk [vmem:[#allocation5 + $0x28] sm:$0xf] %vm2413, %v2494
    %v2497 = vld [vmem:[%s1422] sm:$0xf]
    %v2499 = vunpack.c.l.b16 %v2497
    %v2500 = vpack.c.b16 %v2499, %v2499
    %2501 = vrot.lane.b32.xlu0 %v2500, 16
    %v2502 = vpop.permute.xlu0 %2501
    %2504 = vst.msk [vmem:[#allocation5 + $0x28] sm:$0xf0] %vm2422, %v2502
    %v2505 = vld [vmem:[%s1812] sm:$0xf]
    %v2507 = vunpack.c.l.b16 %v2505
    %v2508 = vpack.c.b16 %v2507, %v2507
    %2509 = vrot.lane.b32.xlu0 %v2508, 16
    %v2510 = vpop.permute.xlu0 %2509
    %2512 = vst.msk [vmem:[#allocation5 + $0x30] sm:$0xf] %vm2413, %v2510
    %v2513 = vld [vmem:[%s1447] sm:$0xf]
    %v2515 = vunpack.c.l.b16 %v2513
    %v2516 = vpack.c.b16 %v2515, %v2515
    %2517 = vrot.lane.b32.xlu0 %v2516, 16
    %v2518 = vpop.permute.xlu0 %2517
    %2520 = vst.msk [vmem:[#allocation5 + $0x30] sm:$0xf0] %vm2422, %v2518
    %v2521 = vld [vmem:[%s1837] sm:$0xf]
    %v2523 = vunpack.c.l.b16 %v2521
    %v2524 = vpack.c.b16 %v2523, %v2523
    %2525 = vrot.lane.b32.xlu0 %v2524, 16
    %v2526 = vpop.permute.xlu0 %2525
    %2528 = vst.msk [vmem:[#allocation5 + $0x38] sm:$0xf] %vm2413, %v2526
    %s2529 = scalar_lea.vmem [#allocation4], 136
    %v2530 = vld [vmem:[%s2529] sm:$0xf]
    %v2532 = vunpack.c.l.b16 %v2530
    %v2533 = vpack.c.b16 %v2532, %v2532
    %2534 = vrot.lane.b32.xlu0 %v2533, 16
    %v2535 = vpop.permute.xlu0 %2534
    %2537 = vst.msk [vmem:[#allocation5 + $0x38] sm:$0xf0] %vm2422, %v2535
    %v2538 = vld [vmem:[%s1659] sm:$0xf]
    %v2539 = vld [vmem:[%s1659 + $0x4] sm:$0x1]
    %v2542 = vunpack.c.l.b16 %v2538
    %v2543 = vunpack.c.l.b16 %v2539
    %v2544 = vpack.c.b16 %v2543, %v2542
    %v2546 = vshrl.u32 %v2544, 16
    %v2548 = vshll.u32 %v2544, 16
    %v2550 = vrot.slane %v2548, 1
    %v2551 = vor.u32 %v2546, %v2550
    %2552 = vrot.lane.b32.xlu0 %v2551, 24
    %v2553 = vpop.permute.xlu0 %2552
    %vm2555 = vcmask 257216
    %2556 = vst.msk [vmem:[#allocation5] sm:$0xf] %vm2555, %v2553
    %v2557 = vld [vmem:[%s1297] sm:$0xf]
    %v2558 = vld [vmem:[%s1297 + $0x4] sm:$0x1]
    %v2561 = vunpack.c.l.b16 %v2557
    %v2562 = vunpack.c.l.b16 %v2558
    %v2563 = vpack.c.b16 %v2562, %v2561
    %v2565 = vshrl.u32 %v2563, 16
    %v2567 = vrot.slane %v2565, 4
    %v2568 = vshll.u32 %v2563, 16
    %v2570 = vrot.slane %v2568, 5
    %v2571 = vor.u32 %v2567, %v2570
    %2572 = vrot.lane.b32.xlu0 %v2571, 24
    %v2573 = vpop.permute.xlu0 %2572
    %vm2575 = vcmask 261316
    %2576 = vst.msk [vmem:[#allocation5] sm:$0xf0] %vm2575, %v2573
    %v2577 = vld [vmem:[%s1687] sm:$0xf]
    %v2578 = vld [vmem:[%s1687 + $0x4] sm:$0x1]
    %v2581 = vunpack.c.l.b16 %v2577
    %v2582 = vunpack.c.l.b16 %v2578
    %v2583 = vpack.c.b16 %v2582, %v2581
    %v2585 = vshrl.u32 %v2583, 16
    %v2587 = vshll.u32 %v2583, 16
    %v2589 = vrot.slane %v2587, 1
    %v2590 = vor.u32 %v2585, %v2589
    %2591 = vrot.lane.b32.xlu0 %v2590, 24
    %v2592 = vpop.permute.xlu0 %2591
    %2594 = vst.msk [vmem:[#allocation5 + $0x8] sm:$0xf] %vm2555, %v2592
    %v2595 = vld [vmem:[%s1322] sm:$0xf]
    %v2596 = vld [vmem:[%s1322 + $0x4] sm:$0x1]
    %v2599 = vunpack.c.l.b16 %v2595
    %v2600 = vunpack.c.l.b16 %v2596
    %v2601 = vpack.c.b16 %v2600, %v2599
    %v2603 = vshrl.u32 %v2601, 16
    %v2605 = vrot.slane %v2603, 4
    %v2606 = vshll.u32 %v2601, 16
    %v2608 = vrot.slane %v2606, 5
    %v2609 = vor.u32 %v2605, %v2608
    %2610 = vrot.lane.b32.xlu0 %v2609, 24
    %v2611 = vpop.permute.xlu0 %2610
    %2613 = vst.msk [vmem:[#allocation5 + $0x8] sm:$0xf0] %vm2575, %v2611
    %v2614 = vld [vmem:[%s1712] sm:$0xf]
    %v2615 = vld [vmem:[%s1712 + $0x4] sm:$0x1]
    %v2618 = vunpack.c.l.b16 %v2614
    %v2619 = vunpack.c.l.b16 %v2615
    %v2620 = vpack.c.b16 %v2619, %v2618
    %v2622 = vshrl.u32 %v2620, 16
    %v2624 = vshll.u32 %v2620, 16
    %v2626 = vrot.slane %v2624, 1
    %v2627 = vor.u32 %v2622, %v2626
    %2628 = vrot.lane.b32.xlu0 %v2627, 24
    %v2629 = vpop.permute.xlu0 %2628
    %2631 = vst.msk [vmem:[#allocation5 + $0x10] sm:$0xf] %vm2555, %v2629
    %v2632 = vld [vmem:[%s1347] sm:$0xf]
    %v2633 = vld [vmem:[%s1347 + $0x4] sm:$0x1]
    %v2636 = vunpack.c.l.b16 %v2632
    %v2637 = vunpack.c.l.b16 %v2633
    %v2638 = vpack.c.b16 %v2637, %v2636
    %v2640 = vshrl.u32 %v2638, 16
    %v2642 = vrot.slane %v2640, 4
    %v2643 = vshll.u32 %v2638, 16
    %v2645 = vrot.slane %v2643, 5
    %v2646 = vor.u32 %v2642, %v2645
    %2647 = vrot.lane.b32.xlu0 %v2646, 24
    %v2648 = vpop.permute.xlu0 %2647
    %2650 = vst.msk [vmem:[#allocation5 + $0x10] sm:$0xf0] %vm2575, %v2648
    %v2651 = vld [vmem:[%s1737] sm:$0xf]
    %v2652 = vld [vmem:[%s1737 + $0x4] sm:$0x1]
    %v2655 = vunpack.c.l.b16 %v2651
    %v2656 = vunpack.c.l.b16 %v2652
    %v2657 = vpack.c.b16 %v2656, %v2655
    %v2659 = vshrl.u32 %v2657, 16
    %v2661 = vshll.u32 %v2657, 16
    %v2663 = vrot.slane %v2661, 1
    %v2664 = vor.u32 %v2659, %v2663
    %2665 = vrot.lane.b32.xlu0 %v2664, 24
    %v2666 = vpop.permute.xlu0 %2665
    %2668 = vst.msk [vmem:[#allocation5 + $0x18] sm:$0xf] %vm2555, %v2666
    %v2669 = vld [vmem:[%s2464] sm:$0xf]
    %v2670 = vld [vmem:[%s2464 + $0x4] sm:$0x1]
    %v2673 = vunpack.c.l.b16 %v2669
    %v2674 = vunpack.c.l.b16 %v2670
    %v2675 = vpack.c.b16 %v2674, %v2673
    %v2677 = vshrl.u32 %v2675, 16
    %v2679 = vrot.slane %v2677, 4
    %v2680 = vshll.u32 %v2675, 16
    %v2682 = vrot.slane %v2680, 5
    %v2683 = vor.u32 %v2679, %v2682
    %2684 = vrot.lane.b32.xlu0 %v2683, 24
    %v2685 = vpop.permute.xlu0 %2684
    %2687 = vst.msk [vmem:[#allocation5 + $0x18] sm:$0xf0] %vm2575, %v2685
    %v2688 = vld [vmem:[%s1759] sm:$0xf]
    %v2689 = vld [vmem:[%s1759 + $0x4] sm:$0x1]
    %v2692 = vunpack.c.l.b16 %v2688
    %v2693 = vunpack.c.l.b16 %v2689
    %v2694 = vpack.c.b16 %v2693, %v2692
    %v2696 = vshrl.u32 %v2694, 16
    %v2698 = vshll.u32 %v2694, 16
    %v2700 = vrot.slane %v2698, 1
    %v2701 = vor.u32 %v2696, %v2700
    %2702 = vrot.lane.b32.xlu0 %v2701, 24
    %v2703 = vpop.permute.xlu0 %2702
    %2705 = vst.msk [vmem:[#allocation5 + $0x20] sm:$0xf] %vm2555, %v2703
    %v2706 = vld [vmem:[%s1397] sm:$0xf]
    %v2707 = vld [vmem:[%s1397 + $0x4] sm:$0x1]
    %v2710 = vunpack.c.l.b16 %v2706
    %v2711 = vunpack.c.l.b16 %v2707
    %v2712 = vpack.c.b16 %v2711, %v2710
    %v2714 = vshrl.u32 %v2712, 16
    %v2716 = vrot.slane %v2714, 4
    %v2717 = vshll.u32 %v2712, 16
    %v2719 = vrot.slane %v2717, 5
    %v2720 = vor.u32 %v2716, %v2719
    %2721 = vrot.lane.b32.xlu0 %v2720, 24
    %v2722 = vpop.permute.xlu0 %2721
    %2724 = vst.msk [vmem:[#allocation5 + $0x20] sm:$0xf0] %vm2575, %v2722
    %v2725 = vld [vmem:[%s1787] sm:$0xf]
    %v2726 = vld [vmem:[%s1787 + $0x4] sm:$0x1]
    %v2729 = vunpack.c.l.b16 %v2725
    %v2730 = vunpack.c.l.b16 %v2726
    %v2731 = vpack.c.b16 %v2730, %v2729
    %v2733 = vshrl.u32 %v2731, 16
    %v2735 = vshll.u32 %v2731, 16
    %v2737 = vrot.slane %v2735, 1
    %v2738 = vor.u32 %v2733, %v2737
    %2739 = vrot.lane.b32.xlu0 %v2738, 24
    %v2740 = vpop.permute.xlu0 %2739
    %2742 = vst.msk [vmem:[#allocation5 + $0x28] sm:$0xf] %vm2555, %v2740
    %v2743 = vld [vmem:[%s1422] sm:$0xf]
    %v2744 = vld [vmem:[%s1422 + $0x4] sm:$0x1]
    %v2747 = vunpack.c.l.b16 %v2743
    %v2748 = vunpack.c.l.b16 %v2744
    %v2749 = vpack.c.b16 %v2748, %v2747
    %v2751 = vshrl.u32 %v2749, 16
    %v2753 = vrot.slane %v2751, 4
    %v2754 = vshll.u32 %v2749, 16
    %v2756 = vrot.slane %v2754, 5
    %v2757 = vor.u32 %v2753, %v2756
    %2758 = vrot.lane.b32.xlu0 %v2757, 24
    %v2759 = vpop.permute.xlu0 %2758
    %2761 = vst.msk [vmem:[#allocation5 + $0x28] sm:$0xf0] %vm2575, %v2759
    %v2762 = vld [vmem:[%s1812] sm:$0xf]
    %v2763 = vld [vmem:[%s1812 + $0x4] sm:$0x1]
    %v2766 = vunpack.c.l.b16 %v2762
    %v2767 = vunpack.c.l.b16 %v2763
    %v2768 = vpack.c.b16 %v2767, %v2766
    %v2770 = vshrl.u32 %v2768, 16
    %v2772 = vshll.u32 %v2768, 16
    %v2774 = vrot.slane %v2772, 1
    %v2775 = vor.u32 %v2770, %v2774
    %2776 = vrot.lane.b32.xlu0 %v2775, 24
    %v2777 = vpop.permute.xlu0 %2776
    %2779 = vst.msk [vmem:[#allocation5 + $0x30] sm:$0xf] %vm2555, %v2777
    %v2780 = vld [vmem:[%s1447] sm:$0xf]
    %v2781 = vld [vmem:[%s1447 + $0x4] sm:$0x1]
    %v2784 = vunpack.c.l.b16 %v2780
    %v2785 = vunpack.c.l.b16 %v2781
    %v2786 = vpack.c.b16 %v2785, %v2784
    %v2788 = vshrl.u32 %v2786, 16
    %v2790 = vrot.slane %v2788, 4
    %v2791 = vshll.u32 %v2786, 16
    %v2793 = vrot.slane %v2791, 5
    %v2794 = vor.u32 %v2790, %v2793
    %2795 = vrot.lane.b32.xlu0 %v2794, 24
    %v2796 = vpop.permute.xlu0 %2795
    %2798 = vst.msk [vmem:[#allocation5 + $0x30] sm:$0xf0] %vm2575, %v2796
    %v2799 = vld [vmem:[%s1837] sm:$0xf]
    %v2800 = vld [vmem:[%s1837 + $0x4] sm:$0x1]
    %v2803 = vunpack.c.l.b16 %v2799
    %v2804 = vunpack.c.l.b16 %v2800
    %v2805 = vpack.c.b16 %v2804, %v2803
    %v2807 = vshrl.u32 %v2805, 16
    %v2809 = vshll.u32 %v2805, 16
    %v2811 = vrot.slane %v2809, 1
    %v2812 = vor.u32 %v2807, %v2811
    %2813 = vrot.lane.b32.xlu0 %v2812, 24
    %v2814 = vpop.permute.xlu0 %2813
    %2816 = vst.msk [vmem:[#allocation5 + $0x38] sm:$0xf] %vm2555, %v2814
    %v2817 = vld [vmem:[%s2529] sm:$0xf]
    %v2818 = vld [vmem:[%s2529 + $0x4] sm:$0x1]
    %v2821 = vunpack.c.l.b16 %v2817
    %v2822 = vunpack.c.l.b16 %v2818
    %v2823 = vpack.c.b16 %v2822, %v2821
    %v2825 = vshrl.u32 %v2823, 16
    %v2827 = vrot.slane %v2825, 4
    %v2828 = vshll.u32 %v2823, 16
    %v2830 = vrot.slane %v2828, 5
    %v2831 = vor.u32 %v2827, %v2830
    %2832 = vrot.lane.b32.xlu0 %v2831, 24
    %v2833 = vpop.permute.xlu0 %2832
    %2835 = vst.msk [vmem:[#allocation5 + $0x38] sm:$0xf0] %vm2575, %v2833
    %v2836 = vld [vmem:[#allocation5] sm:$0xff]
    %v2837 = vld [vmem:[#allocation5 + $0x8] sm:$0xff]
    %v2838 = vld [vmem:[#allocation5 + $0x10] sm:$0xff]
    %v2839 = vld [vmem:[#allocation5 + $0x18] sm:$0xff]
    %v2840 = vld [vmem:[#allocation5 + $0x20] sm:$0xff]
    %v2841 = vld [vmem:[#allocation5 + $0x28] sm:$0xff]
    %v2842 = vld [vmem:[#allocation5 + $0x30] sm:$0xff]
    %v2843 = vld [vmem:[#allocation5 + $0x38] sm:$0xff]
    %v2844 = vld [vmem:[#allocation11] sm:$0xff]
    %v2845 = vld [vmem:[#allocation11 + $0x8] sm:$0xff]
    %v2846 = vld [vmem:[#allocation11 + $0x10] sm:$0xff]
    %v2847 = vld [vmem:[#allocation11 + $0x18] sm:$0xff]
    %v2848 = vld [vmem:[#allocation11 + $0x20] sm:$0xff]
    %v2849 = vld [vmem:[#allocation11 + $0x28] sm:$0xff]
    %v2850 = vld [vmem:[#allocation11 + $0x30] sm:$0xff]
    %v2851 = vld [vmem:[#allocation11 + $0x38] sm:$0xff]
    %v2860 = vunpack.c.l.b16 %v2844
    %v2861 = vunpack.c.h.b16 %v2844
    %v2862 = vunpack.c.l.b16 %v2845
    %v2863 = vunpack.c.h.b16 %v2845
    %v2864 = vunpack.c.l.b16 %v2846
    %v2865 = vunpack.c.h.b16 %v2846
    %v2866 = vunpack.c.l.b16 %v2847
    %v2867 = vunpack.c.h.b16 %v2847
    %v2868 = vunpack.c.l.b16 %v2848
    %v2869 = vunpack.c.h.b16 %v2848
    %v2870 = vunpack.c.l.b16 %v2849
    %v2871 = vunpack.c.h.b16 %v2849
    %v2872 = vunpack.c.l.b16 %v2850
    %v2873 = vunpack.c.h.b16 %v2850
    %v2874 = vunpack.c.l.b16 %v2851
    %v2875 = vunpack.c.h.b16 %v2851
    %v2876 = vpack.c.b16 %v2864, %v2860
    %v2877 = vpack.c.b16 %v2865, %v2861
    %v2878 = vpack.c.b16 %v2866, %v2862
    %v2879 = vpack.c.b16 %v2867, %v2863
    %v2880 = vpack.c.b16 %v2872, %v2868
    %v2881 = vpack.c.b16 %v2873, %v2869
    %v2882 = vpack.c.b16 %v2874, %v2870
    %v2883 = vpack.c.b16 %v2875, %v2871
    %vm2892 = vcmask 261120
    %v2894 = vsel %vm2892, %v2836, 0
    %v2897 = vsel %vm2892, %v2837, 0
    %v2900 = vsel %vm2892, %v2838, 0
    %v2903 = vsel %vm2892, %v2839, 0
    %v2906 = vsel %vm2892, %v2840, 0
    %v2909 = vsel %vm2892, %v2841, 0
    %v2912 = vsel %vm2892, %v2842, 0
    %v2915 = vsel %vm2892, %v2843, 0
    %2917 = vmatprep.subr.bf16.mxu0 %v2877
    %2918 = vmatpush1.bf16.msra.mxu0 %v2876
    %2919 = vmatprep.subr.bf16.mxu0 %v2881
    %2920 = vmatpush1.bf16.msra.mxu0 %v2880
    %2921 = vmatprep.subr.bf16.mxu0 0
    %2922 = vmatpush1.bf16.msra.mxu0 0
    %2923 = vmatprep.subr.bf16.mxu0 0
    %2924 = vmatpush1.bf16.msra.mxu0 0
    %2925 = vmatprep.subr.bf16.mxu0 0
    %2926 = vmatpush1.bf16.msra.mxu0 0
    %2927 = vmatprep.subr.bf16.mxu0 0
    %2928 = vmatpush1.bf16.msra.mxu0 0
    %2929 = vmatprep.subr.bf16.mxu0 0
    %2930 = vmatpush1.bf16.msra.mxu0 0
    %2931 = vmatprep.subr.bf16.mxu0 0
    %2932 = vmatpush1.bf16.msra.mxu0 0
    %2933 = vmatprep.subr.bf16.mxu0 0
    %2934 = vmatpush1.bf16.msra.mxu0 0
    %2935 = vmatprep.subr.bf16.mxu0 0
    %2936 = vmatpush1.bf16.msra.mxu0 0
    %2937 = vmatprep.subr.bf16.mxu0 0
    %2938 = vmatpush1.bf16.msra.mxu0 0
    %2939 = vmatprep.subr.bf16.mxu0 0
    %2940 = vmatpush1.bf16.msra.mxu0 0
    %2941 = vmatprep.subr.bf16.mxu0 0
    %2942 = vmatpush1.bf16.msra.mxu0 0
    %2943 = vmatprep.subr.bf16.mxu0 0
    %2944 = vmatpush1.bf16.msra.mxu0 0
    %2945 = vmatprep.subr.bf16.mxu0 0
    %2946 = vmatpush1.bf16.msra.mxu0 0
    %2947 = vmatprep.subr.bf16.mxu0 0
    %2948 = vmatpush1.bf16.msra.mxu0 0
    %2949 = vmatprep.mubr.bf16.mxu0 0
    %2950 = vmatmul.mubr.bf16.gmra.mrb[0].mxu0 %v2894
    %v2951 = vpop.f32.mrb[0].mxu0
    %v2952 = vadd.f32 0.0, %v2951
    %v2953 = vpop.f32.mrb[0].mxu0
    %v2954 = vadd.f32 0.0, %v2953
    %v2955 = vpop.f32.mrb[0].mxu0
    %v2956 = vadd.f32 0.0, %v2955
    %v2957 = vpop.f32.mrb[0].mxu0
    %v2958 = vadd.f32 0.0, %v2957
    %2959 = vmatprep.mubr.bf16.mxu0 0
    %2960 = vmatmul.mubr.bf16.gmra.mrb[0].mxu0 %v2897
    %v2961 = vpop.f32.mrb[0].mxu0
    %v2962 = vadd.f32 0.0, %v2961
    %v2963 = vpop.f32.mrb[0].mxu0
    %v2964 = vadd.f32 0.0, %v2963
    %v2965 = vpop.f32.mrb[0].mxu0
    %v2966 = vadd.f32 0.0, %v2965
    %v2967 = vpop.f32.mrb[0].mxu0
    %v2968 = vadd.f32 0.0, %v2967
    %2969 = vmatprep.mubr.bf16.mxu0 0
    %2970 = vmatmul.mubr.bf16.gmra.mrb[0].mxu0 %v2900
    %v2971 = vpop.f32.mrb[0].mxu0
    %v2972 = vadd.f32 0.0, %v2971
    %v2973 = vpop.f32.mrb[0].mxu0
    %v2974 = vadd.f32 0.0, %v2973
    %v2975 = vpop.f32.mrb[0].mxu0
    %v2976 = vadd.f32 0.0, %v2975
    %v2977 = vpop.f32.mrb[0].mxu0
    %v2978 = vadd.f32 0.0, %v2977
    %2979 = vmatprep.mubr.bf16.mxu0 0
    %2980 = vmatmul.mubr.bf16.gmra.mrb[0].mxu0 %v2903
    %v2981 = vpop.f32.mrb[0].mxu0
    %v2982 = vadd.f32 0.0, %v2981
    %v2983 = vpop.f32.mrb[0].mxu0
    %v2984 = vadd.f32 0.0, %v2983
    %v2985 = vpop.f32.mrb[0].mxu0
    %v2986 = vadd.f32 0.0, %v2985
    %v2987 = vpop.f32.mrb[0].mxu0
    %v2988 = vadd.f32 0.0, %v2987
    %2989 = vmatprep.mubr.bf16.mxu0 0
    %2990 = vmatmul.mubr.bf16.gmra.mrb[0].mxu0 %v2906
    %v2991 = vpop.f32.mrb[0].mxu0
    %v2992 = vadd.f32 0.0, %v2991
    %v2993 = vpop.f32.mrb[0].mxu0
    %v2994 = vadd.f32 0.0, %v2993
    %v2995 = vpop.f32.mrb[0].mxu0
    %v2996 = vadd.f32 0.0, %v2995
    %v2997 = vpop.f32.mrb[0].mxu0
    %v2998 = vadd.f32 0.0, %v2997
    %2999 = vmatprep.mubr.bf16.mxu0 0
    %3000 = vmatmul.mubr.bf16.gmra.mrb[0].mxu0 %v2909
    %v3001 = vpop.f32.mrb[0].mxu0
    %v3002 = vadd.f32 0.0, %v3001
    %v3003 = vpop.f32.mrb[0].mxu0
    %v3004 = vadd.f32 0.0, %v3003
    %v3005 = vpop.f32.mrb[0].mxu0
    %v3006 = vadd.f32 0.0, %v3005
    %v3007 = vpop.f32.mrb[0].mxu0
    %v3008 = vadd.f32 0.0, %v3007
    %3009 = vmatprep.mubr.bf16.mxu0 0
    %3010 = vmatmul.mubr.bf16.gmra.mrb[0].mxu0 %v2912
    %v3011 = vpop.f32.mrb[0].mxu0
    %v3012 = vadd.f32 0.0, %v3011
    %v3013 = vpop.f32.mrb[0].mxu0
    %v3014 = vadd.f32 0.0, %v3013
    %v3015 = vpop.f32.mrb[0].mxu0
    %v3016 = vadd.f32 0.0, %v3015
    %v3017 = vpop.f32.mrb[0].mxu0
    %v3018 = vadd.f32 0.0, %v3017
    %3019 = vmatprep.mubr.bf16.mxu0 0
    %3020 = vmatmul.mubr.bf16.gmra.mrb[0].mxu0 %v2915
    %v3021 = vpop.f32.mrb[0].mxu0
    %v3022 = vadd.f32 0.0, %v3021
    %v3023 = vpop.f32.mrb[0].mxu0
    %v3024 = vadd.f32 0.0, %v3023
    %v3025 = vpop.f32.mrb[0].mxu0
    %v3026 = vadd.f32 0.0, %v3025
    %v3027 = vpop.f32.mrb[0].mxu0
    %v3028 = vadd.f32 0.0, %v3027
    %3029 = vdwg.mxu0
    %3030 = vmatprep.subr.bf16.mxu0 %v2879
    %3031 = vmatpush1.bf16.msra.mxu0 %v2878
    %3032 = vmatprep.subr.bf16.mxu0 %v2883
    %3033 = vmatpush1.bf16.msra.mxu0 %v2882
    %3034 = vmatprep.subr.bf16.mxu0 0
    %3035 = vmatpush1.bf16.msra.mxu0 0
    %3036 = vmatprep.subr.bf16.mxu0 0
    %3037 = vmatpush1.bf16.msra.mxu0 0
    %3038 = vmatprep.subr.bf16.mxu0 0
    %3039 = vmatpush1.bf16.msra.mxu0 0
    %3040 = vmatprep.subr.bf16.mxu0 0
    %3041 = vmatpush1.bf16.msra.mxu0 0
    %3042 = vmatprep.subr.bf16.mxu0 0
    %3043 = vmatpush1.bf16.msra.mxu0 0
    %3044 = vmatprep.subr.bf16.mxu0 0
    %3045 = vmatpush1.bf16.msra.mxu0 0
    %3046 = vmatprep.subr.bf16.mxu0 0
    %3047 = vmatpush1.bf16.msra.mxu0 0
    %3048 = vmatprep.subr.bf16.mxu0 0
    %3049 = vmatpush1.bf16.msra.mxu0 0
    %3050 = vmatprep.subr.bf16.mxu0 0
    %3051 = vmatpush1.bf16.msra.mxu0 0
    %3052 = vmatprep.subr.bf16.mxu0 0
    %3053 = vmatpush1.bf16.msra.mxu0 0
    %3054 = vmatprep.subr.bf16.mxu0 0
    %3055 = vmatpush1.bf16.msra.mxu0 0
    %3056 = vmatprep.subr.bf16.mxu0 0
    %3057 = vmatpush1.bf16.msra.mxu0 0
    %3058 = vmatprep.subr.bf16.mxu0 0
    %3059 = vmatpush1.bf16.msra.mxu0 0
    %3060 = vmatprep.subr.bf16.mxu0 0
    %3061 = vmatpush1.bf16.msra.mxu0 0
    %3062 = vmatprep.mubr.bf16.mxu0 0
    %3063 = vmatmul.mubr.bf16.gmra.mrb[0].mxu0 %v2894
    %v3064 = vpop.f32.mrb[0].mxu0
    %v3065 = vadd.f32 0.0, %v3064
    %v3066 = vpop.f32.mrb[0].mxu0
    %v3067 = vadd.f32 0.0, %v3066
    %v3068 = vpop.f32.mrb[0].mxu0
    %v3069 = vadd.f32 0.0, %v3068
    %v3070 = vpop.f32.mrb[0].mxu0
    %v3071 = vadd.f32 0.0, %v3070
    %3072 = vmatprep.mubr.bf16.mxu0 0
    %3073 = vmatmul.mubr.bf16.gmra.mrb[0].mxu0 %v2897
    %v3074 = vpop.f32.mrb[0].mxu0
    %v3075 = vadd.f32 0.0, %v3074
    %v3076 = vpop.f32.mrb[0].mxu0
    %v3077 = vadd.f32 0.0, %v3076
    %v3078 = vpop.f32.mrb[0].mxu0
    %v3079 = vadd.f32 0.0, %v3078
    %v3080 = vpop.f32.mrb[0].mxu0
    %v3081 = vadd.f32 0.0, %v3080
    %3082 = vmatprep.mubr.bf16.mxu0 0
    %3083 = vmatmul.mubr.bf16.gmra.mrb[0].mxu0 %v2900
    %v3084 = vpop.f32.mrb[0].mxu0
    %v3085 = vadd.f32 0.0, %v3084
    %v3086 = vpop.f32.mrb[0].mxu0
    %v3087 = vadd.f32 0.0, %v3086
    %v3088 = vpop.f32.mrb[0].mxu0
    %v3089 = vadd.f32 0.0, %v3088
    %v3090 = vpop.f32.mrb[0].mxu0
    %v3091 = vadd.f32 0.0, %v3090
    %3092 = vmatprep.mubr.bf16.mxu0 0
    %3093 = vmatmul.mubr.bf16.gmra.mrb[0].mxu0 %v2903
    %v3094 = vpop.f32.mrb[0].mxu0
    %v3095 = vadd.f32 0.0, %v3094
    %v3096 = vpop.f32.mrb[0].mxu0
    %v3097 = vadd.f32 0.0, %v3096
    %v3098 = vpop.f32.mrb[0].mxu0
    %v3099 = vadd.f32 0.0, %v3098
    %v3100 = vpop.f32.mrb[0].mxu0
    %v3101 = vadd.f32 0.0, %v3100
    %3102 = vmatprep.mubr.bf16.mxu0 0
    %3103 = vmatmul.mubr.bf16.gmra.mrb[0].mxu0 %v2906
    %v3104 = vpop.f32.mrb[0].mxu0
    %v3105 = vadd.f32 0.0, %v3104
    %v3106 = vpop.f32.mrb[0].mxu0
    %v3107 = vadd.f32 0.0, %v3106
    %v3108 = vpop.f32.mrb[0].mxu0
    %v3109 = vadd.f32 0.0, %v3108
    %v3110 = vpop.f32.mrb[0].mxu0
    %v3111 = vadd.f32 0.0, %v3110
    %3112 = vmatprep.mubr.bf16.mxu0 0
    %3113 = vmatmul.mubr.bf16.gmra.mrb[0].mxu0 %v2909
    %v3114 = vpop.f32.mrb[0].mxu0
    %v3115 = vadd.f32 0.0, %v3114
    %v3116 = vpop.f32.mrb[0].mxu0
    %v3117 = vadd.f32 0.0, %v3116
    %v3118 = vpop.f32.mrb[0].mxu0
    %v3119 = vadd.f32 0.0, %v3118
    %v3120 = vpop.f32.mrb[0].mxu0
    %v3121 = vadd.f32 0.0, %v3120
    %3122 = vmatprep.mubr.bf16.mxu0 0
    %3123 = vmatmul.mubr.bf16.gmra.mrb[0].mxu0 %v2912
    %v3124 = vpop.f32.mrb[0].mxu0
    %v3125 = vadd.f32 0.0, %v3124
    %v3126 = vpop.f32.mrb[0].mxu0
    %v3127 = vadd.f32 0.0, %v3126
    %v3128 = vpop.f32.mrb[0].mxu0
    %v3129 = vadd.f32 0.0, %v3128
    %v3130 = vpop.f32.mrb[0].mxu0
    %v3131 = vadd.f32 0.0, %v3130
    %3132 = vmatprep.mubr.bf16.mxu0 0
    %3133 = vmatmul.mubr.bf16.gmra.mrb[0].mxu0 %v2915
    %v3134 = vpop.f32.mrb[0].mxu0
    %v3135 = vadd.f32 0.0, %v3134
    %v3136 = vpop.f32.mrb[0].mxu0
    %v3137 = vadd.f32 0.0, %v3136
    %v3138 = vpop.f32.mrb[0].mxu0
    %v3139 = vadd.f32 0.0, %v3138
    %v3140 = vpop.f32.mrb[0].mxu0
    %v3141 = vadd.f32 0.0, %v3140
    %3142 = vdwg.mxu0
    %v3143 = vtanh.pop %v2952
    %v3144 = vtanh.pop %v2956
    %v3145 = vtanh.pop %v2962
    %v3146 = vtanh.pop %v2966
    %v3147 = vtanh.pop %v2972
    %v3148 = vtanh.pop %v2976
    %v3149 = vtanh.pop %v2982
    %v3150 = vtanh.pop %v2986
    %v3151 = vtanh.pop %v2992
    %v3152 = vtanh.pop %v2996
    %v3153 = vtanh.pop %v3002
    %v3154 = vtanh.pop %v3006
    %v3155 = vtanh.pop %v3012
    %v3156 = vtanh.pop %v3016
    %v3157 = vtanh.pop %v3022
    %v3158 = vtanh.pop %v3026
    %3159 = vst [vmem:[%s7] sm:$0xff] %v3143
    %3160 = vst [vmem:[%s7 + $0x8] sm:$0xff] %v3144
    %3161 = vst [vmem:[%s7 + $0x10] sm:$0xff] %v3145
    %3162 = vst [vmem:[%s7 + $0x18] sm:$0xff] %v3146
    %3163 = vst [vmem:[%s7 + $0x20] sm:$0xff] %v3147
    %3164 = vst [vmem:[%s7 + $0x28] sm:$0xff] %v3148
    %3165 = vst [vmem:[%s7 + $0x30] sm:$0xff] %v3149
    %3166 = vst [vmem:[%s7 + $0x38] sm:$0xff] %v3150
    %3167 = vst [vmem:[%s7 + $0x40] sm:$0xff] %v3151
    %3168 = vst [vmem:[%s7 + $0x48] sm:$0xff] %v3152
    %3169 = vst [vmem:[%s7 + $0x50] sm:$0xff] %v3153
    %3170 = vst [vmem:[%s7 + $0x58] sm:$0xff] %v3154
    %3171 = vst [vmem:[%s7 + $0x60] sm:$0xff] %v3155
    %3172 = vst [vmem:[%s7 + $0x68] sm:$0xff] %v3156
    %3173 = vst [vmem:[%s7 + $0x70] sm:$0xff] %v3157
    %3174 = vst [vmem:[%s7 + $0x78] sm:$0xff] %v3158
    %v3175 = vtanh.pop %v2954
    %v3176 = vtanh.pop %v2958
    %v3177 = vtanh.pop %v2964
    %v3178 = vtanh.pop %v2968
    %v3179 = vtanh.pop %v2974
    %v3180 = vtanh.pop %v2978
    %v3181 = vtanh.pop %v2984
    %v3182 = vtanh.pop %v2988
    %v3183 = vtanh.pop %v2994
    %v3184 = vtanh.pop %v2998
    %v3185 = vtanh.pop %v3004
    %v3186 = vtanh.pop %v3008
    %v3187 = vtanh.pop %v3014
    %v3188 = vtanh.pop %v3018
    %v3189 = vtanh.pop %v3024
    %v3190 = vtanh.pop %v3028
    %s3191 = scalar_lea.vmem %s7, 128
    %3192 = vst [vmem:[%s3191] sm:$0xff] %v3175
    %3193 = vst [vmem:[%s3191 + $0x8] sm:$0xff] %v3176
    %3194 = vst [vmem:[%s3191 + $0x10] sm:$0xff] %v3177
    %3195 = vst [vmem:[%s3191 + $0x18] sm:$0xff] %v3178
    %3196 = vst [vmem:[%s3191 + $0x20] sm:$0xff] %v3179
    %3197 = vst [vmem:[%s3191 + $0x28] sm:$0xff] %v3180
    %3198 = vst [vmem:[%s3191 + $0x30] sm:$0xff] %v3181
    %3199 = vst [vmem:[%s3191 + $0x38] sm:$0xff] %v3182
    %3200 = vst [vmem:[%s3191 + $0x40] sm:$0xff] %v3183
    %3201 = vst [vmem:[%s3191 + $0x48] sm:$0xff] %v3184
    %3202 = vst [vmem:[%s3191 + $0x50] sm:$0xff] %v3185
    %3203 = vst [vmem:[%s3191 + $0x58] sm:$0xff] %v3186
    %3204 = vst [vmem:[%s3191 + $0x60] sm:$0xff] %v3187
    %3205 = vst [vmem:[%s3191 + $0x68] sm:$0xff] %v3188
    %3206 = vst [vmem:[%s3191 + $0x70] sm:$0xff] %v3189
    %3207 = vst [vmem:[%s3191 + $0x78] sm:$0xff] %v3190
    %v3208 = vtanh.pop %v3065
    %v3209 = vtanh.pop %v3069
    %v3210 = vtanh.pop %v3075
    %v3211 = vtanh.pop %v3079
    %v3212 = vtanh.pop %v3085
    %v3213 = vtanh.pop %v3089
    %v3214 = vtanh.pop %v3095
    %v3215 = vtanh.pop %v3099
    %v3216 = vtanh.pop %v3105
    %v3217 = vtanh.pop %v3109
    %v3218 = vtanh.pop %v3115
    %v3219 = vtanh.pop %v3119
    %v3220 = vtanh.pop %v3125
    %v3221 = vtanh.pop %v3129
    %v3222 = vtanh.pop %v3135
    %v3223 = vtanh.pop %v3139
    %s3224 = scalar_lea.vmem %s7, 256
    %3225 = vst [vmem:[%s3224] sm:$0xff] %v3208
    %3226 = vst [vmem:[%s3224 + $0x8] sm:$0xff] %v3209
    %3227 = vst [vmem:[%s3224 + $0x10] sm:$0xff] %v3210
    %3228 = vst [vmem:[%s3224 + $0x18] sm:$0xff] %v3211
    %3229 = vst [vmem:[%s3224 + $0x20] sm:$0xff] %v3212
    %3230 = vst [vmem:[%s3224 + $0x28] sm:$0xff] %v3213
    %3231 = vst [vmem:[%s3224 + $0x30] sm:$0xff] %v3214
    %3232 = vst [vmem:[%s3224 + $0x38] sm:$0xff] %v3215
    %3233 = vst [vmem:[%s3224 + $0x40] sm:$0xff] %v3216
    %3234 = vst [vmem:[%s3224 + $0x48] sm:$0xff] %v3217
    %3235 = vst [vmem:[%s3224 + $0x50] sm:$0xff] %v3218
    %3236 = vst [vmem:[%s3224 + $0x58] sm:$0xff] %v3219
    %3237 = vst [vmem:[%s3224 + $0x60] sm:$0xff] %v3220
    %3238 = vst [vmem:[%s3224 + $0x68] sm:$0xff] %v3221
    %3239 = vst [vmem:[%s3224 + $0x70] sm:$0xff] %v3222
    %3240 = vst [vmem:[%s3224 + $0x78] sm:$0xff] %v3223
    %v3241 = vtanh.pop %v3067
    %v3242 = vtanh.pop %v3071
    %v3243 = vtanh.pop %v3077
    %v3244 = vtanh.pop %v3081
    %v3245 = vtanh.pop %v3087
    %v3246 = vtanh.pop %v3091
    %v3247 = vtanh.pop %v3097
    %v3248 = vtanh.pop %v3101
    %v3249 = vtanh.pop %v3107
    %v3250 = vtanh.pop %v3111
    %v3251 = vtanh.pop %v3117
    %v3252 = vtanh.pop %v3121
    %v3253 = vtanh.pop %v3127
    %v3254 = vtanh.pop %v3131
    %v3255 = vtanh.pop %v3137
    %v3256 = vtanh.pop %v3141
    %s3257 = scalar_lea.vmem %s7, 384
    %3258 = vst [vmem:[%s3257] sm:$0xff] %v3241
    %3259 = vst [vmem:[%s3257 + $0x8] sm:$0xff] %v3242
    %3260 = vst [vmem:[%s3257 + $0x10] sm:$0xff] %v3243
    %3261 = vst [vmem:[%s3257 + $0x18] sm:$0xff] %v3244
    %3262 = vst [vmem:[%s3257 + $0x20] sm:$0xff] %v3245
    %3263 = vst [vmem:[%s3257 + $0x28] sm:$0xff] %v3246
    %3264 = vst [vmem:[%s3257 + $0x30] sm:$0xff] %v3247
    %3265 = vst [vmem:[%s3257 + $0x38] sm:$0xff] %v3248
    %3266 = vst [vmem:[%s3257 + $0x40] sm:$0xff] %v3249
    %3267 = vst [vmem:[%s3257 + $0x48] sm:$0xff] %v3250
    %3268 = vst [vmem:[%s3257 + $0x50] sm:$0xff] %v3251
    %3269 = vst [vmem:[%s3257 + $0x58] sm:$0xff] %v3252
    %3270 = vst [vmem:[%s3257 + $0x60] sm:$0xff] %v3253
    %3271 = vst [vmem:[%s3257 + $0x68] sm:$0xff] %v3254
    %3272 = vst [vmem:[%s3257 + $0x70] sm:$0xff] %v3255
    %3273 = vst [vmem:[%s3257 + $0x78] sm:$0xff] %v3256
    // Predicated region
    $region46: #{_lambda_.1} parent=1 // pred_check
      _
    $region47: #{_lambda_.1} parent=1 // pred_check_branch
      %3275 = sbr.rel (0) target = $region49
    $region48: #{_lambda_.1} parent=1 // pred_region
      _
    $region49: #{_lambda_.1} parent=1 // pred_fallthru
      _
    // Predicated region
    $region50: #{_lambda_.1} parent=1 // pred_check
      _
    $region51: #{_lambda_.1} parent=1 // pred_check_branch
      %3277 = sbr.rel (0) target = $region53
    $region52: #{_lambda_.1} parent=1 // pred_region
      _
    $region53: #{_lambda_.1} parent=1 // pred_fallthru
      _
    %3278 = vsyncpa [#allocation7], 1
    %3279 = vsyncpa [#allocation9], 1
    %3280 = vsyncpa [#allocation12], 1

</llo_original>
